<compile_context>
chip_gen: v7x
topology: tpu7x:2x2x1
jax: 0.10.0
libtpu: 0.0.40
codegen_flags: <defaults>
</compile_context>

<pallas_src>
import numpy as np
import jax
import jax.numpy as jnp
from jax.experimental import pallas as pl
from jax.experimental.pallas import tpu as pltpu

IMG_LEN = 6
BN_EPS = 1e-5
DIMS = [1024, 512, 256, 128, 32]

SUBLANE = 8      # f32 sublane tile height; each batch block is padded to this
K_CHUNKS = 4     # gc1 weight K-split (its DMA cannot hide behind earlier compute)


def _softplus(x):
    # numerically stable log(1 + exp(x)) == torch.nn.Softplus (beta=1)
    return jnp.maximum(x, 0.0) + jnp.log1p(jnp.exp(-jnp.abs(x)))


def _layer_plan():
    """(weight_name, bn_base_name_or_None, use_block_residual, starts_block) in exec order."""
    plan = []
    for i in range(4):
        plan.append((f'gc{i+1}_w', f'bn{i+1}', False, True))
        for j in range(3):
            plan.append((f'hgcn{i+1}_gc{j+1}_w', f'hgcn{i+1}_bn{j+1}', True, False))
    plan.append(('gc5_w', None, False, False))
    return plan


# ----------------------------------------------------------------------------
# Fused Pallas kernel: whole HGCNNet forward + score in one invocation
# ----------------------------------------------------------------------------
def _make_fused_kernel(B, N, NP, cfgs, max_cin, max_cout):
    """cfgs: per-layer dicts with cin/cout/bn/res/block_start/stream (all static)."""
    BNP = B * NP
    n_layers = len(cfgs)

    stream_lis = [li for li, c in enumerate(cfgs) if c['stream']]
    slot_of = {li: k % 2 for k, li in enumerate(stream_lis)}
    next_of = {li: (stream_lis[k + 1] if k + 1 < len(stream_lis) else None)
               for k, li in enumerate(stream_lis)}
    first_stream = stream_lis[0] if stream_lis else None
    chunk_first = (first_stream == 0 and cfgs[0]['cin'] % K_CHUNKS == 0
                   and (cfgs[0]['cin'] // K_CHUNKS) % 16 == 0)
    ck = cfgs[0]['cin'] // K_CHUNKS if chunk_first else 0

    def kernel(*refs):
        x_ref = refs[0]                       # (BNP, 1024) f32, batch folded into rows
        g_ref = refs[1]                       # (BNP, BNP)  f32 block-diag propagation
        gamma_ref = refs[2]                   # (NP, num_bn) f32, lane-dense
        beta_ref = refs[3]                    # (NP, num_bn) f32
        w_refs = refs[4:4 + n_layers]         # bf16 HBM refs (streamed) / f32 VMEM refs
        o_ref = refs[4 + n_layers]            # (B, 1) final score
        wbuf = refs[4 + n_layers + 1]         # (2*max_cin, max_cout) bf16 double buffer
        dsem = refs[4 + n_layers + 2]         # DMA sems, one per slot
        csem = refs[4 + n_layers + 3]         # DMA sems for gc1 K-chunks

        def w_copy(li, slot):
            cin, cout = cfgs[li]['cin'], cfgs[li]['cout']
            base = slot * max_cin
            return pltpu.make_async_copy(
                w_refs[li], wbuf.at[base:base + cin, 0:cout], dsem.at[slot])

        def chunk_copy(c):
            cout0 = cfgs[0]['cout']
            return pltpu.make_async_copy(
                w_refs[0].at[c * ck:(c + 1) * ck, :],
                wbuf.at[c * ck:(c + 1) * ck, 0:cout0],
                csem.at[c])

        # Kick off the first streamed weight's DMA(s) immediately.
        if first_stream is not None:
            if chunk_first:
                for c in range(K_CHUNKS):
                    chunk_copy(c).start()
            else:
                w_copy(first_stream, slot_of[first_stream]).start()

        x = x_ref[...]                        # activation, VMEM/vreg-resident for all layers
        gblk = g_ref[...]
        gamma = gamma_ref[...]
        beta = beta_ref[...]
        block_in = None

        for li, cfg in enumerate(cfgs):
            cin, cout = cfg['cin'], cfg['cout']

            # ---- GraphConvolution: support = x @ W (MXU, M = B*NP) ----
            if cfg['stream']:
                slot = slot_of[li]
                nxt = next_of[li]
                if nxt is not None:           # prefetch next weight into the other slot
                    w_copy(nxt, slot_of[nxt]).start()
                if li == first_stream and chunk_first:
                    # gc1: accumulate partial dots as each K-chunk of W lands.
                    support = jnp.zeros((BNP, cout), jnp.float32)
                    for c in range(K_CHUNKS):
                        chunk_copy(c).wait()
                        xk = x[:, c * ck:(c + 1) * ck].astype(jnp.bfloat16)
                        wk = wbuf[c * ck:(c + 1) * ck, 0:cout]
                        support = support + jnp.dot(
                            xk, wk, preferred_element_type=jnp.float32)
                else:
                    w_copy(li, slot).wait()
                    base = slot * max_cin
                    w = wbuf[base:base + cin, 0:cout]
                    support = jnp.dot(x.astype(jnp.bfloat16), w,
                                      preferred_element_type=jnp.float32)
            else:
                # tiny tail weights: f32, VMEM-resident (no streaming benefit)
                support = jnp.dot(x, w_refs[li][...],
                                  preferred_element_type=jnp.float32)

            # ---- Hypergraph propagation: out = G @ support on the (idle) MXU ----
            # Padded rows/cols of gblk are zero, so padded rows of `out` stay 0.
            out = jnp.dot(gblk, support, preferred_element_type=jnp.float32)

            # ---- nn.BatchNorm1d(img_len) on (B, N, C): per-node stats over (B, C),
            #      biased variance (training mode).  All slices are tile-aligned. ----
            if cfg['bn'] is not None:
                bn_idx = cfg['bn']
                inv_cnt = 1.0 / float(B * cout)
                row_sum = jnp.sum(out, axis=1, keepdims=True)          # (BNP, 1)
                row_sq = jnp.sum(out * out, axis=1, keepdims=True)     # (BNP, 1)
                node_sum = row_sum[0:NP, :]
                node_sq = row_sq[0:NP, :]
                for b in range(1, B):                                  # aligned 8-row views
                    node_sum = node_sum + row_sum[b * NP:(b + 1) * NP, :]
                    node_sq = node_sq + row_sq[b * NP:(b + 1) * NP, :]
                mean = node_sum * inv_cnt                              # (NP, 1)
                var = jnp.maximum(node_sq * inv_cnt - mean * mean, 0.0)
                g_n = gamma[:, bn_idx:bn_idx + 1]                      # (NP, 1)
                b_n = beta[:, bn_idx:bn_idx + 1]
                scale_n = g_n * jax.lax.rsqrt(var + BN_EPS)            # gamma folded in
                shift_n = b_n - mean * scale_n
                scale = jnp.concatenate([scale_n] * B, axis=0)         # (BNP, 1)
                shift = jnp.concatenate([shift_n] * B, axis=0)
                out = out * scale + shift                              # one full-width FMA

            # HGCN_layer residual: the block input, added before Softplus
            if cfg['res']:
                out = out + block_in

            out = _softplus(out)

            if cfg['block_start']:
                block_in = out
            x = out

        # ---- Final score: mean over the N real nodes per batch (padded rows excluded) ----
        inv_n = 1.0 / float(N)
        scores = []
        for b in range(B):
            scores.append(jnp.sum(x[b * NP:b * NP + N, :], axis=0, keepdims=True) * inv_n)
        o_ref[...] = jnp.concatenate(scores, axis=0).astype(o_ref.dtype)

    return kernel


# ----------------------------------------------------------------------------
# Wrapper: builds padded / packed inputs and issues a single pallas_call
# ----------------------------------------------------------------------------
def pcnet_forward_pallas(params, feat, G):
    """feat: (B, N, 1024) node features; G: (B, N, N) hypergraph propagation. -> (B, 1)."""
    B, N, Cin = feat.shape
    NP = ((N + SUBLANE - 1) // SUBLANE) * SUBLANE      # pad each batch block to 8 rows
    BNP = B * NP
    plan = _layer_plan()

    cfgs, w_list, gammas, betas = [], [], [], []
    bn_count = 0
    for (w_name, bn_name, use_res, starts_block) in plan:
        w = params[w_name]
        cin, cout = int(w.shape[0]), int(w.shape[1])
        # stream-from-HBM (bf16) only for DMA-friendly shapes; tiny tails stay f32 in VMEM
        stream = (cin % 16 == 0) and (cout % 128 == 0)
        w_list.append(w.astype(jnp.bfloat16) if stream else w.astype(jnp.float32))
        if bn_name is not None:
            gammas.append(jnp.pad(params[bn_name + '_g'].astype(jnp.float32), (0, NP - N)))
            betas.append(jnp.pad(params[bn_name + '_b'].astype(jnp.float32), (0, NP - N)))
            bn_idx = bn_count
            bn_count += 1
        else:
            bn_idx = None
        cfgs.append(dict(cin=cin, cout=cout, bn=bn_idx, res=use_res,
                         block_start=starts_block, stream=stream))

    gamma_all = jnp.stack(gammas, axis=1)    # (NP, num_bn), lane-dense
    beta_all = jnp.stack(betas, axis=1)      # (NP, num_bn)

    # Fold batch into rows (padded to 8-row blocks); block-diagonal padded propagation.
    x_pad = jnp.zeros((B, NP, Cin), jnp.float32).at[:, :N, :].set(feat.astype(jnp.float32))
    x2d = x_pad.reshape(BNP, Cin)
    gblk = jnp.zeros((BNP, BNP), jnp.float32)
    for b in range(B):
        gblk = gblk.at[b * NP:b * NP + N, b * NP:b * NP + N].set(G[b].astype(jnp.float32))

    streamed = [c for c in cfgs if c['stream']]
    max_cin = max([c['cin'] for c in streamed], default=2 * SUBLANE)
    max_cout = max([c['cout'] for c in streamed], default=128)

    vm = pl.BlockSpec(memory_space=pltpu.MemorySpace.VMEM)
    hbm = pl.BlockSpec(memory_space=pl.ANY)
    in_specs = [vm, vm, vm, vm] + [hbm if c['stream'] else vm for c in cfgs]

    out = pl.pallas_call(
        _make_fused_kernel(B, N, NP, cfgs, max_cin, max_cout),
        out_shape=jax.ShapeDtypeStruct((B, 1), jnp.float32),
        in_specs=in_specs,
        out_specs=vm,
        scratch_shapes=[
            pltpu.VMEM((2 * max_cin, max_cout), jnp.bfloat16),   # 2-slot weight double buffer
            pltpu.SemaphoreType.DMA((2,)),
            pltpu.SemaphoreType.DMA((K_CHUNKS,)),
        ],
        compiler_params=pltpu.CompilerParams(vmem_limit_bytes=12 * 1024 * 1024),
    )(x2d, gblk, gamma_all, beta_all, *w_list)
    return out


# ----------------------------------------------------------------------------
# Pure-JAX reference (for correctness check) -- exact f32 module semantics
# ----------------------------------------------------------------------------
def ref_layer(x, G, w, gamma, beta, res):
    support = jnp.einsum('bnc,cd->bnd', x, w, preferred_element_type=jnp.float32)
    out = jnp.einsum('bnm,bmd->bnd', G, support, preferred_element_type=jnp.float32)
    if gamma is not None:
        mean = jnp.mean(out, axis=(0, 2), keepdims=True)
        var = jnp.mean((out - mean) ** 2, axis=(0, 2), keepdims=True)
        out = (out - mean) / jnp.sqrt(var + BN_EPS)
        out = out * gamma.reshape(1, -1, 1) + beta.reshape(1, -1, 1)
    if res is not None:
        out = out + res
    return _softplus(out)


def ref_score(x):
    return jnp.mean(x.reshape(x.shape[0], -1), axis=1, keepdims=True)


def ref_forward(params, feat, G):
    x = feat
    block_in = None
    for (w_name, bn_name, use_res, starts_block) in _layer_plan():
        gamma = params[bn_name + '_g'] if bn_name is not None else None
        beta = params[bn_name + '_b'] if bn_name is not None else None
        res = block_in if use_res else None
        x = ref_layer(x, G, params[w_name], gamma, beta, res)
        if starts_block:
            block_in = x
    return ref_score(x)


# ----------------------------------------------------------------------------
# Parameter init (matches nn.init.xavier_normal_ on GraphConvolution weights)
# ----------------------------------------------------------------------------
def init_params(key):
    def xavier(k, shape):
        fan_in, fan_out = shape
        std = float(np.sqrt(2.0 / (fan_in + fan_out)))
        return std * jax.random.normal(k, shape, dtype=jnp.float32)

    keys = jax.random.split(key, 32)
    ki = 0
    params = {}
    for i in range(4):
        cin, cout = DIMS[i], DIMS[i + 1]
        params[f'gc{i+1}_w'] = xavier(keys[ki], (cin, cout)); ki += 1
        params[f'bn{i+1}_g'] = jnp.ones((IMG_LEN,), jnp.float32)
        params[f'bn{i+1}_b'] = jnp.zeros((IMG_LEN,), jnp.float32)
        for j in range(3):
            params[f'hgcn{i+1}_gc{j+1}_w'] = xavier(keys[ki], (cout, cout)); ki += 1
            params[f'hgcn{i+1}_bn{j+1}_g'] = jnp.ones((IMG_LEN,), jnp.float32)
            params[f'hgcn{i+1}_bn{j+1}_b'] = jnp.zeros((IMG_LEN,), jnp.float32)
    params['gc5_w'] = xavier(keys[ki], (DIMS[-1], 1)); ki += 1
    return params


# ----------------------------------------------------------------------------
# Host-side hypergraph construction (CPU numpy glue, matching PCNet.KNN /
# similarity / hyperG).
# ----------------------------------------------------------------------------
def build_G(X, W, n_neighbors=1):
    n = X.shape[0]
    diff = X[:, None, :] - X[None, :, :]
    m_dist = np.sqrt(np.maximum((diff * diff).sum(-1), 0.0))
    avg = m_dist.mean()

    # KNN incidence: column j = hyperedge of node j, entries at its k+1 nearest nodes
    knn = np.zeros((n, n))
    order = np.argsort(m_dist, axis=1)
    for j in range(n):
        nbrs = list(order[j, : n_neighbors + 1])
        if j not in nbrs:
            nbrs[-1] = j
        for i in nbrs:
            knn[i, j] = np.exp(-(m_dist[j, i] ** 2) / (avg ** 2))

    # TODO(synk): l1_representation requires a cvxpy L1 sparse-coding solver; use its
    # self-loop (identity) component as a deterministic stand-in.
    l1 = np.eye(n)

    # cosine-similarity incidence
    norms = np.linalg.norm(X, axis=1)
    cos = (X @ X.T) / np.maximum(norms[:, None] * norms[None, :], 1e-12)
    sim = np.zeros((n, n))
    for i in range(n):
        top = np.argsort(-cos[i])[: n_neighbors + 1]
        sim[i, top] = 1.0

    H = np.concatenate([knn, l1, sim], axis=1)            # (n, 3n)
    DV = H.sum(axis=1)
    DE = H.sum(axis=0)
    invDE = np.diag(np.where(DE > 0, 1.0 / np.maximum(DE, 1e-12), 0.0))
    DV2 = np.diag(np.power(np.maximum(DV, 1e-12), -0.5))
    G = DV2 @ H @ np.diag(W) @ invDE @ H.T @ DV2
    return G.astype(np.float32)


# ----------------------------------------------------------------------------
if __name__ == "__main__":
    B = 2
    key = jax.random.PRNGKey(0)
    k_feat, k_par = jax.random.split(key)

    # TODO(synk): Pointnet2 backbone is not provided in the module; generate the
    # (B, img_len, 1024) per-view features it would produce directly.
    feat = jax.random.normal(k_feat, (B, IMG_LEN, 1024), dtype=jnp.float32)

    # PCNet.W = ones(img_len * 3), used only in hypergraph normalization
    W_hyper = np.ones(IMG_LEN * 3, dtype=np.float32)
    X_np = np.asarray(feat)
    G = jnp.asarray(np.stack([build_G(X_np[b], W_hyper) for b in range(B)], axis=0))

    params = init_params(k_par)

    score = pcnet_forward_pallas(params, feat, G)
    score = jax.block_until_ready(score)

    ref = ref_forward(params, feat, G)
    ref = jax.block_until_ready(ref)

    assert score.shape == (B, 1)
    assert bool(jnp.all(jnp.isfinite(score)))
    # bf16 weight streaming introduces a small, intentional quantization error
    np.testing.assert_allclose(np.asarray(score), np.asarray(ref), rtol=2e-2, atol=2e-2)
    print("KERNEL_OK")
</pallas_src>

<mosaic_0001>
module attributes {stable_mosaic.version = 11 : i64} {
  func.func @kernel(%arg0: memref<16x1024xf32, #tpu.memory_space<vmem>>, %arg1: memref<16x16xf32, #tpu.memory_space<vmem>>, %arg2: memref<8x16xf32, #tpu.memory_space<vmem>>, %arg3: memref<8x16xf32, #tpu.memory_space<vmem>>, %arg4: memref<1024x512xbf16, #tpu.memory_space<any>>, %arg5: memref<512x512xbf16, #tpu.memory_space<any>>, %arg6: memref<512x512xbf16, #tpu.memory_space<any>>, %arg7: memref<512x512xbf16, #tpu.memory_space<any>>, %arg8: memref<512x256xbf16, #tpu.memory_space<any>>, %arg9: memref<256x256xbf16, #tpu.memory_space<any>>, %arg10: memref<256x256xbf16, #tpu.memory_space<any>>, %arg11: memref<256x256xbf16, #tpu.memory_space<any>>, %arg12: memref<256x128xbf16, #tpu.memory_space<any>>, %arg13: memref<128x128xbf16, #tpu.memory_space<any>>, %arg14: memref<128x128xbf16, #tpu.memory_space<any>>, %arg15: memref<128x128xbf16, #tpu.memory_space<any>>, %arg16: memref<128x32xf32, #tpu.memory_space<vmem>>, %arg17: memref<32x32xf32, #tpu.memory_space<vmem>>, %arg18: memref<32x32xf32, #tpu.memory_space<vmem>>, %arg19: memref<32x32xf32, #tpu.memory_space<vmem>>, %arg20: memref<32x1xf32, #tpu.memory_space<vmem>>, %arg21: memref<2x1xf32, #tpu.memory_space<vmem>>, %arg22: memref<2048x512xbf16, #tpu.memory_space<vmem>>, %arg23: memref<2x!tpu.dma_semaphore, #tpu.memory_space<semaphore_mem>>, %arg24: memref<4x!tpu.dma_semaphore, #tpu.memory_space<semaphore_mem>>) attributes {dimension_semantics = [], scalar_prefetch = 0 : i64, scratch_operands = 3 : i64, tpu.core_type = #tpu.core_type<tc>} {
    %c0_i32 = arith.constant 0 : i32
    %c0_i32_0 = arith.constant 0 : i32
    %c0_i32_1 = arith.constant 0 : i32
    %0 = tpu.memref_slice %arg4[%c0_i32_0, %c0_i32_1] : memref<1024x512xbf16, #tpu.memory_space<any>> -> memref<256x512xbf16, #tpu.memory_space<any>>
    %c0_i32_2 = arith.constant 0 : i32
    %c0_i32_3 = arith.constant 0 : i32
    %1 = tpu.memref_slice %arg22[%c0_i32_2, %c0_i32_3] : memref<2048x512xbf16, #tpu.memory_space<vmem>> -> memref<256x512xbf16, #tpu.memory_space<vmem>>
    %2 = tpu.memref_slice %arg24[%c0_i32] : memref<4x!tpu.dma_semaphore, #tpu.memory_space<semaphore_mem>> -> memref<1x!tpu.dma_semaphore, #tpu.memory_space<semaphore_mem>>
    %3 = tpu.memref_squeeze %2 : memref<1x!tpu.dma_semaphore, #tpu.memory_space<semaphore_mem>> -> memref<!tpu.dma_semaphore, #tpu.memory_space<semaphore_mem>>
    tpu.enqueue_dma source(%0 : memref<256x512xbf16, #tpu.memory_space<any>>) target(%1 : memref<256x512xbf16, #tpu.memory_space<vmem>>) target_semaphore(%3 : memref<!tpu.dma_semaphore, #tpu.memory_space<semaphore_mem>>)
    %c1_i32 = arith.constant 1 : i32
    %c256_i32 = arith.constant 256 : i32
    %c0_i32_4 = arith.constant 0 : i32
    %4 = tpu.memref_slice %arg4[%c256_i32, %c0_i32_4] : memref<1024x512xbf16, #tpu.memory_space<any>> -> memref<256x512xbf16, #tpu.memory_space<any>>
    %c256_i32_5 = arith.constant 256 : i32
    %c0_i32_6 = arith.constant 0 : i32
    %5 = tpu.memref_slice %arg22[%c256_i32_5, %c0_i32_6] : memref<2048x512xbf16, #tpu.memory_space<vmem>> -> memref<256x512xbf16, #tpu.memory_space<vmem>>
    %6 = tpu.memref_slice %arg24[%c1_i32] : memref<4x!tpu.dma_semaphore, #tpu.memory_space<semaphore_mem>> -> memref<1x!tpu.dma_semaphore, #tpu.memory_space<semaphore_mem>>
    %7 = tpu.memref_squeeze %6 : memref<1x!tpu.dma_semaphore, #tpu.memory_space<semaphore_mem>> -> memref<!tpu.dma_semaphore, #tpu.memory_space<semaphore_mem>>
    tpu.enqueue_dma source(%4 : memref<256x512xbf16, #tpu.memory_space<any>>) target(%5 : memref<256x512xbf16, #tpu.memory_space<vmem>>) target_semaphore(%7 : memref<!tpu.dma_semaphore, #tpu.memory_space<semaphore_mem>>)
    %c2_i32 = arith.constant 2 : i32
    %c512_i32 = arith.constant 512 : i32
    %c0_i32_7 = arith.constant 0 : i32
    %8 = tpu.memref_slice %arg4[%c512_i32, %c0_i32_7] : memref<1024x512xbf16, #tpu.memory_space<any>> -> memref<256x512xbf16, #tpu.memory_space<any>>
    %c512_i32_8 = arith.constant 512 : i32
    %c0_i32_9 = arith.constant 0 : i32
    %9 = tpu.memref_slice %arg22[%c512_i32_8, %c0_i32_9] : memref<2048x512xbf16, #tpu.memory_space<vmem>> -> memref<256x512xbf16, #tpu.memory_space<vmem>>
    %10 = tpu.memref_slice %arg24[%c2_i32] : memref<4x!tpu.dma_semaphore, #tpu.memory_space<semaphore_mem>> -> memref<1x!tpu.dma_semaphore, #tpu.memory_space<semaphore_mem>>
    %11 = tpu.memref_squeeze %10 : memref<1x!tpu.dma_semaphore, #tpu.memory_space<semaphore_mem>> -> memref<!tpu.dma_semaphore, #tpu.memory_space<semaphore_mem>>
    tpu.enqueue_dma source(%8 : memref<256x512xbf16, #tpu.memory_space<any>>) target(%9 : memref<256x512xbf16, #tpu.memory_space<vmem>>) target_semaphore(%11 : memref<!tpu.dma_semaphore, #tpu.memory_space<semaphore_mem>>)
    %c3_i32 = arith.constant 3 : i32
    %c768_i32 = arith.constant 768 : i32
    %c0_i32_10 = arith.constant 0 : i32
    %12 = tpu.memref_slice %arg4[%c768_i32, %c0_i32_10] : memref<1024x512xbf16, #tpu.memory_space<any>> -> memref<256x512xbf16, #tpu.memory_space<any>>
    %c768_i32_11 = arith.constant 768 : i32
    %c0_i32_12 = arith.constant 0 : i32
    %13 = tpu.memref_slice %arg22[%c768_i32_11, %c0_i32_12] : memref<2048x512xbf16, #tpu.memory_space<vmem>> -> memref<256x512xbf16, #tpu.memory_space<vmem>>
    %14 = tpu.memref_slice %arg24[%c3_i32] : memref<4x!tpu.dma_semaphore, #tpu.memory_space<semaphore_mem>> -> memref<1x!tpu.dma_semaphore, #tpu.memory_space<semaphore_mem>>
    %15 = tpu.memref_squeeze %14 : memref<1x!tpu.dma_semaphore, #tpu.memory_space<semaphore_mem>> -> memref<!tpu.dma_semaphore, #tpu.memory_space<semaphore_mem>>
    tpu.enqueue_dma source(%12 : memref<256x512xbf16, #tpu.memory_space<any>>) target(%13 : memref<256x512xbf16, #tpu.memory_space<vmem>>) target_semaphore(%15 : memref<!tpu.dma_semaphore, #tpu.memory_space<semaphore_mem>>)
    %c0 = arith.constant 0 : index
    %c0_13 = arith.constant 0 : index
    %16 = vector.load %arg0[%c0, %c0_13] : memref<16x1024xf32, #tpu.memory_space<vmem>>, vector<16x1024xf32>
    %c0_14 = arith.constant 0 : index
    %c0_15 = arith.constant 0 : index
    %17 = vector.load %arg1[%c0_14, %c0_15] : memref<16x16xf32, #tpu.memory_space<vmem>>, vector<16x16xf32>
    %c0_16 = arith.constant 0 : index
    %c0_17 = arith.constant 0 : index
    %18 = vector.load %arg2[%c0_16, %c0_17] : memref<8x16xf32, #tpu.memory_space<vmem>>, vector<8x16xf32>
    %c0_18 = arith.constant 0 : index
    %c0_19 = arith.constant 0 : index
    %19 = vector.load %arg3[%c0_18, %c0_19] : memref<8x16xf32, #tpu.memory_space<vmem>>, vector<8x16xf32>
    %c1_i32_20 = arith.constant 1 : i32
    %c1024_i32 = arith.constant 1024 : i32
    %c0_i32_21 = arith.constant 0 : i32
    %20 = tpu.memref_slice %arg22[%c1024_i32, %c0_i32_21] : memref<2048x512xbf16, #tpu.memory_space<vmem>> -> memref<512x512xbf16, #tpu.memory_space<vmem>>
    %21 = tpu.memref_slice %arg23[%c1_i32_20] : memref<2x!tpu.dma_semaphore, #tpu.memory_space<semaphore_mem>> -> memref<1x!tpu.dma_semaphore, #tpu.memory_space<semaphore_mem>>
    %22 = tpu.memref_squeeze %21 : memref<1x!tpu.dma_semaphore, #tpu.memory_space<semaphore_mem>> -> memref<!tpu.dma_semaphore, #tpu.memory_space<semaphore_mem>>
    tpu.enqueue_dma source(%arg5 : memref<512x512xbf16, #tpu.memory_space<any>>) target(%20 : memref<512x512xbf16, #tpu.memory_space<vmem>>) target_semaphore(%22 : memref<!tpu.dma_semaphore, #tpu.memory_space<semaphore_mem>>)
    %cst = arith.constant 0.000000e+00 : f32
    %23 = vector.broadcast %cst : f32 to vector<16x512xf32>
    %c0_i32_22 = arith.constant 0 : i32
    %c0_i32_23 = arith.constant 0 : i32
    %c0_i32_24 = arith.constant 0 : i32
    %24 = tpu.memref_slice %arg4[%c0_i32_23, %c0_i32_24] : memref<1024x512xbf16, #tpu.memory_space<any>> -> memref<256x512xbf16, #tpu.memory_space<any>>
    %c0_i32_25 = arith.constant 0 : i32
    %c0_i32_26 = arith.constant 0 : i32
    %25 = tpu.memref_slice %arg22[%c0_i32_25, %c0_i32_26] : memref<2048x512xbf16, #tpu.memory_space<vmem>> -> memref<256x512xbf16, #tpu.memory_space<vmem>>
    %26 = tpu.memref_slice %arg24[%c0_i32_22] : memref<4x!tpu.dma_semaphore, #tpu.memory_space<semaphore_mem>> -> memref<1x!tpu.dma_semaphore, #tpu.memory_space<semaphore_mem>>
    %27 = tpu.memref_squeeze %26 : memref<1x!tpu.dma_semaphore, #tpu.memory_space<semaphore_mem>> -> memref<!tpu.dma_semaphore, #tpu.memory_space<semaphore_mem>>
    tpu.wait_dma2 semaphore(%27 : memref<!tpu.dma_semaphore, #tpu.memory_space<semaphore_mem>>) src(%24 : memref<256x512xbf16, #tpu.memory_space<any>>) dst(%25 : memref<256x512xbf16, #tpu.memory_space<vmem>>)
    %28 = vector.extract_strided_slice %16 {offsets = [0, 0], sizes = [16, 256], strides = [1, 1]} : vector<16x1024xf32> to vector<16x256xf32>
    %29 = arith.truncf %28 : vector<16x256xf32> to vector<16x256xbf16>
    %c0_27 = arith.constant 0 : index
    %c0_28 = arith.constant 0 : index
    %30 = vector.load %arg22[%c0_27, %c0_28] : memref<2048x512xbf16, #tpu.memory_space<vmem>>, vector<256x512xbf16>
    %cst_29 = arith.constant dense<0.000000e+00> : vector<16x512xf32>
    %31 = tpu.matmul %29, %30, %cst_29 {dimension_numbers = #tpu.dot_dimension_numbers<[1], [0], [0], [1], [0, 0, 1, 1], [], []>} : vector<16x256xbf16>, vector<256x512xbf16>, vector<16x512xf32> -> vector<16x512xf32>
    %32 = arith.addf %23, %31 : vector<16x512xf32>
    %c1_i32_30 = arith.constant 1 : i32
    %c256_i32_31 = arith.constant 256 : i32
    %c0_i32_32 = arith.constant 0 : i32
    %33 = tpu.memref_slice %arg4[%c256_i32_31, %c0_i32_32] : memref<1024x512xbf16, #tpu.memory_space<any>> -> memref<256x512xbf16, #tpu.memory_space<any>>
    %c256_i32_33 = arith.constant 256 : i32
    %c0_i32_34 = arith.constant 0 : i32
    %34 = tpu.memref_slice %arg22[%c256_i32_33, %c0_i32_34] : memref<2048x512xbf16, #tpu.memory_space<vmem>> -> memref<256x512xbf16, #tpu.memory_space<vmem>>
    %35 = tpu.memref_slice %arg24[%c1_i32_30] : memref<4x!tpu.dma_semaphore, #tpu.memory_space<semaphore_mem>> -> memref<1x!tpu.dma_semaphore, #tpu.memory_space<semaphore_mem>>
    %36 = tpu.memref_squeeze %35 : memref<1x!tpu.dma_semaphore, #tpu.memory_space<semaphore_mem>> -> memref<!tpu.dma_semaphore, #tpu.memory_space<semaphore_mem>>
    tpu.wait_dma2 semaphore(%36 : memref<!tpu.dma_semaphore, #tpu.memory_space<semaphore_mem>>) src(%33 : memref<256x512xbf16, #tpu.memory_space<any>>) dst(%34 : memref<256x512xbf16, #tpu.memory_space<vmem>>)
    %37 = vector.extract_strided_slice %16 {offsets = [0, 256], sizes = [16, 256], strides = [1, 1]} : vector<16x1024xf32> to vector<16x256xf32>
    %38 = arith.truncf %37 : vector<16x256xf32> to vector<16x256xbf16>
    %c256 = arith.constant 256 : index
    %c0_35 = arith.constant 0 : index
    %39 = vector.load %arg22[%c256, %c0_35] : memref<2048x512xbf16, #tpu.memory_space<vmem>>, vector<256x512xbf16>
    %cst_36 = arith.constant dense<0.000000e+00> : vector<16x512xf32>
    %40 = tpu.matmul %38, %39, %cst_36 {dimension_numbers = #tpu.dot_dimension_numbers<[1], [0], [0], [1], [0, 0, 1, 1], [], []>} : vector<16x256xbf16>, vector<256x512xbf16>, vector<16x512xf32> -> vector<16x512xf32>
    %41 = arith.addf %32, %40 : vector<16x512xf32>
    %c2_i32_37 = arith.constant 2 : i32
    %c512_i32_38 = arith.constant 512 : i32
    %c0_i32_39 = arith.constant 0 : i32
    %42 = tpu.memref_slice %arg4[%c512_i32_38, %c0_i32_39] : memref<1024x512xbf16, #tpu.memory_space<any>> -> memref<256x512xbf16, #tpu.memory_space<any>>
    %c512_i32_40 = arith.constant 512 : i32
    %c0_i32_41 = arith.constant 0 : i32
    %43 = tpu.memref_slice %arg22[%c512_i32_40, %c0_i32_41] : memref<2048x512xbf16, #tpu.memory_space<vmem>> -> memref<256x512xbf16, #tpu.memory_space<vmem>>
    %44 = tpu.memref_slice %arg24[%c2_i32_37] : memref<4x!tpu.dma_semaphore, #tpu.memory_space<semaphore_mem>> -> memref<1x!tpu.dma_semaphore, #tpu.memory_space<semaphore_mem>>
    %45 = tpu.memref_squeeze %44 : memref<1x!tpu.dma_semaphore, #tpu.memory_space<semaphore_mem>> -> memref<!tpu.dma_semaphore, #tpu.memory_space<semaphore_mem>>
    tpu.wait_dma2 semaphore(%45 : memref<!tpu.dma_semaphore, #tpu.memory_space<semaphore_mem>>) src(%42 : memref<256x512xbf16, #tpu.memory_space<any>>) dst(%43 : memref<256x512xbf16, #tpu.memory_space<vmem>>)
    %46 = vector.extract_strided_slice %16 {offsets = [0, 512], sizes = [16, 256], strides = [1, 1]} : vector<16x1024xf32> to vector<16x256xf32>
    %47 = arith.truncf %46 : vector<16x256xf32> to vector<16x256xbf16>
    %c512 = arith.constant 512 : index
    %c0_42 = arith.constant 0 : index
    %48 = vector.load %arg22[%c512, %c0_42] : memref<2048x512xbf16, #tpu.memory_space<vmem>>, vector<256x512xbf16>
    %cst_43 = arith.constant dense<0.000000e+00> : vector<16x512xf32>
    %49 = tpu.matmul %47, %48, %cst_43 {dimension_numbers = #tpu.dot_dimension_numbers<[1], [0], [0], [1], [0, 0, 1, 1], [], []>} : vector<16x256xbf16>, vector<256x512xbf16>, vector<16x512xf32> -> vector<16x512xf32>
    %50 = arith.addf %41, %49 : vector<16x512xf32>
    %c3_i32_44 = arith.constant 3 : i32
    %c768_i32_45 = arith.constant 768 : i32
    %c0_i32_46 = arith.constant 0 : i32
    %51 = tpu.memref_slice %arg4[%c768_i32_45, %c0_i32_46] : memref<1024x512xbf16, #tpu.memory_space<any>> -> memref<256x512xbf16, #tpu.memory_space<any>>
    %c768_i32_47 = arith.constant 768 : i32
    %c0_i32_48 = arith.constant 0 : i32
    %52 = tpu.memref_slice %arg22[%c768_i32_47, %c0_i32_48] : memref<2048x512xbf16, #tpu.memory_space<vmem>> -> memref<256x512xbf16, #tpu.memory_space<vmem>>
    %53 = tpu.memref_slice %arg24[%c3_i32_44] : memref<4x!tpu.dma_semaphore, #tpu.memory_space<semaphore_mem>> -> memref<1x!tpu.dma_semaphore, #tpu.memory_space<semaphore_mem>>
    %54 = tpu.memref_squeeze %53 : memref<1x!tpu.dma_semaphore, #tpu.memory_space<semaphore_mem>> -> memref<!tpu.dma_semaphore, #tpu.memory_space<semaphore_mem>>
    tpu.wait_dma2 semaphore(%54 : memref<!tpu.dma_semaphore, #tpu.memory_space<semaphore_mem>>) src(%51 : memref<256x512xbf16, #tpu.memory_space<any>>) dst(%52 : memref<256x512xbf16, #tpu.memory_space<vmem>>)
    %55 = vector.extract_strided_slice %16 {offsets = [0, 768], sizes = [16, 256], strides = [1, 1]} : vector<16x1024xf32> to vector<16x256xf32>
    %56 = arith.truncf %55 : vector<16x256xf32> to vector<16x256xbf16>
    %c768 = arith.constant 768 : index
    %c0_49 = arith.constant 0 : index
    %57 = vector.load %arg22[%c768, %c0_49] : memref<2048x512xbf16, #tpu.memory_space<vmem>>, vector<256x512xbf16>
    %cst_50 = arith.constant dense<0.000000e+00> : vector<16x512xf32>
    %58 = tpu.matmul %56, %57, %cst_50 {dimension_numbers = #tpu.dot_dimension_numbers<[1], [0], [0], [1], [0, 0, 1, 1], [], []>} : vector<16x256xbf16>, vector<256x512xbf16>, vector<16x512xf32> -> vector<16x512xf32>
    %59 = arith.addf %50, %58 : vector<16x512xf32>
    %cst_51 = arith.constant dense<0.000000e+00> : vector<16x512xf32>
    %60 = tpu.matmul %17, %59, %cst_51 {dimension_numbers = #tpu.dot_dimension_numbers<[1], [0], [0], [1], [0, 0, 1, 1], [], []>} : vector<16x16xf32>, vector<16x512xf32>, vector<16x512xf32> -> vector<16x512xf32>
    %cst_52 = arith.constant dense<0.000000e+00> : vector<16xf32>
    %61 = vector.multi_reduction <add>, %60, %cst_52 [1] : vector<16x512xf32> to vector<16xf32>
    %62 = vector.shape_cast %61 : vector<16xf32> to vector<16x1xf32>
    %63 = arith.mulf %60, %60 : vector<16x512xf32>
    %cst_53 = arith.constant dense<0.000000e+00> : vector<16xf32>
    %64 = vector.multi_reduction <add>, %63, %cst_53 [1] : vector<16x512xf32> to vector<16xf32>
    %65 = vector.shape_cast %64 : vector<16xf32> to vector<16x1xf32>
    %66 = vector.extract_strided_slice %62 {offsets = [0, 0], sizes = [8, 1], strides = [1, 1]} : vector<16x1xf32> to vector<8x1xf32>
    %67 = vector.extract_strided_slice %65 {offsets = [0, 0], sizes = [8, 1], strides = [1, 1]} : vector<16x1xf32> to vector<8x1xf32>
    %68 = vector.extract_strided_slice %62 {offsets = [8, 0], sizes = [8, 1], strides = [1, 1]} : vector<16x1xf32> to vector<8x1xf32>
    %69 = arith.addf %66, %68 : vector<8x1xf32>
    %70 = vector.extract_strided_slice %65 {offsets = [8, 0], sizes = [8, 1], strides = [1, 1]} : vector<16x1xf32> to vector<8x1xf32>
    %71 = arith.addf %67, %70 : vector<8x1xf32>
    %cst_54 = arith.constant 9.765625E-4 : f32
    %72 = vector.broadcast %cst_54 : f32 to vector<8x1xf32>
    %73 = arith.mulf %69, %72 : vector<8x1xf32>
    %cst_55 = arith.constant 9.765625E-4 : f32
    %74 = vector.broadcast %cst_55 : f32 to vector<8x1xf32>
    %75 = arith.mulf %71, %74 : vector<8x1xf32>
    %76 = arith.mulf %73, %73 : vector<8x1xf32>
    %77 = arith.subf %75, %76 : vector<8x1xf32>
    %cst_56 = arith.constant 0.000000e+00 : f32
    %78 = vector.broadcast %cst_56 : f32 to vector<8x1xf32>
    %79 = arith.maximumf %77, %78 : vector<8x1xf32>
    %80 = vector.extract_strided_slice %18 {offsets = [0, 0], sizes = [8, 1], strides = [1, 1]} : vector<8x16xf32> to vector<8x1xf32>
    %81 = vector.extract_strided_slice %19 {offsets = [0, 0], sizes = [8, 1], strides = [1, 1]} : vector<8x16xf32> to vector<8x1xf32>
    %cst_57 = arith.constant 9.99999974E-6 : f32
    %82 = vector.broadcast %cst_57 : f32 to vector<8x1xf32>
    %83 = arith.addf %79, %82 : vector<8x1xf32>
    %84 = math.rsqrt %83 : vector<8x1xf32>
    %85 = arith.mulf %80, %84 : vector<8x1xf32>
    %86 = arith.mulf %73, %85 : vector<8x1xf32>
    %87 = arith.subf %81, %86 : vector<8x1xf32>
    %88 = tpu.concatenate %85, %85 in 0 : vector<8x1xf32>, vector<8x1xf32> -> vector<16x1xf32>
    %89 = tpu.concatenate %87, %87 in 0 : vector<8x1xf32>, vector<8x1xf32> -> vector<16x1xf32>
    %90 = vector.broadcast %88 : vector<16x1xf32> to vector<16x512xf32>
    %91 = arith.mulf %60, %90 : vector<16x512xf32>
    %92 = vector.broadcast %89 : vector<16x1xf32> to vector<16x512xf32>
    %93 = arith.addf %91, %92 : vector<16x512xf32>
    %cst_58 = arith.constant 0.000000e+00 : f32
    %94 = vector.broadcast %cst_58 : f32 to vector<16x512xf32>
    %95 = arith.maximumf %93, %94 : vector<16x512xf32>
    %96 = math.absf %93 : vector<16x512xf32>
    %cst_59 = arith.constant 0.000000e+00 : f32
    %97 = vector.broadcast %cst_59 : f32 to vector<16x512xf32>
    %98 = arith.subf %97, %96 : vector<16x512xf32>
    %99 = math.exp %98 : vector<16x512xf32>
    %100 = math.log1p %99 : vector<16x512xf32>
    %101 = arith.addf %95, %100 : vector<16x512xf32>
    %c0_i32_60 = arith.constant 0 : i32
    %c0_i32_61 = arith.constant 0 : i32
    %c0_i32_62 = arith.constant 0 : i32
    %102 = tpu.memref_slice %arg22[%c0_i32_61, %c0_i32_62] : memref<2048x512xbf16, #tpu.memory_space<vmem>> -> memref<512x512xbf16, #tpu.memory_space<vmem>>
    %103 = tpu.memref_slice %arg23[%c0_i32_60] : memref<2x!tpu.dma_semaphore, #tpu.memory_space<semaphore_mem>> -> memref<1x!tpu.dma_semaphore, #tpu.memory_space<semaphore_mem>>
    %104 = tpu.memref_squeeze %103 : memref<1x!tpu.dma_semaphore, #tpu.memory_space<semaphore_mem>> -> memref<!tpu.dma_semaphore, #tpu.memory_space<semaphore_mem>>
    tpu.enqueue_dma source(%arg6 : memref<512x512xbf16, #tpu.memory_space<any>>) target(%102 : memref<512x512xbf16, #tpu.memory_space<vmem>>) target_semaphore(%104 : memref<!tpu.dma_semaphore, #tpu.memory_space<semaphore_mem>>)
    %c1_i32_63 = arith.constant 1 : i32
    %c1024_i32_64 = arith.constant 1024 : i32
    %c0_i32_65 = arith.constant 0 : i32
    %105 = tpu.memref_slice %arg22[%c1024_i32_64, %c0_i32_65] : memref<2048x512xbf16, #tpu.memory_space<vmem>> -> memref<512x512xbf16, #tpu.memory_space<vmem>>
    %106 = tpu.memref_slice %arg23[%c1_i32_63] : memref<2x!tpu.dma_semaphore, #tpu.memory_space<semaphore_mem>> -> memref<1x!tpu.dma_semaphore, #tpu.memory_space<semaphore_mem>>
    %107 = tpu.memref_squeeze %106 : memref<1x!tpu.dma_semaphore, #tpu.memory_space<semaphore_mem>> -> memref<!tpu.dma_semaphore, #tpu.memory_space<semaphore_mem>>
    tpu.wait_dma2 semaphore(%107 : memref<!tpu.dma_semaphore, #tpu.memory_space<semaphore_mem>>) src(%arg5 : memref<512x512xbf16, #tpu.memory_space<any>>) dst(%105 : memref<512x512xbf16, #tpu.memory_space<vmem>>)
    %c1024 = arith.constant 1024 : index
    %c0_66 = arith.constant 0 : index
    %108 = vector.load %arg22[%c1024, %c0_66] : memref<2048x512xbf16, #tpu.memory_space<vmem>>, vector<512x512xbf16>
    %109 = arith.truncf %101 : vector<16x512xf32> to vector<16x512xbf16>
    %cst_67 = arith.constant dense<0.000000e+00> : vector<16x512xf32>
    %110 = tpu.matmul %109, %108, %cst_67 {dimension_numbers = #tpu.dot_dimension_numbers<[1], [0], [0], [1], [0, 0, 1, 1], [], []>} : vector<16x512xbf16>, vector<512x512xbf16>, vector<16x512xf32> -> vector<16x512xf32>
    %cst_68 = arith.constant dense<0.000000e+00> : vector<16x512xf32>
    %111 = tpu.matmul %17, %110, %cst_68 {dimension_numbers = #tpu.dot_dimension_numbers<[1], [0], [0], [1], [0, 0, 1, 1], [], []>} : vector<16x16xf32>, vector<16x512xf32>, vector<16x512xf32> -> vector<16x512xf32>
    %cst_69 = arith.constant dense<0.000000e+00> : vector<16xf32>
    %112 = vector.multi_reduction <add>, %111, %cst_69 [1] : vector<16x512xf32> to vector<16xf32>
    %113 = vector.shape_cast %112 : vector<16xf32> to vector<16x1xf32>
    %114 = arith.mulf %111, %111 : vector<16x512xf32>
    %cst_70 = arith.constant dense<0.000000e+00> : vector<16xf32>
    %115 = vector.multi_reduction <add>, %114, %cst_70 [1] : vector<16x512xf32> to vector<16xf32>
    %116 = vector.shape_cast %115 : vector<16xf32> to vector<16x1xf32>
    %117 = vector.extract_strided_slice %113 {offsets = [0, 0], sizes = [8, 1], strides = [1, 1]} : vector<16x1xf32> to vector<8x1xf32>
    %118 = vector.extract_strided_slice %116 {offsets = [0, 0], sizes = [8, 1], strides = [1, 1]} : vector<16x1xf32> to vector<8x1xf32>
    %119 = vector.extract_strided_slice %113 {offsets = [8, 0], sizes = [8, 1], strides = [1, 1]} : vector<16x1xf32> to vector<8x1xf32>
    %120 = arith.addf %117, %119 : vector<8x1xf32>
    %121 = vector.extract_strided_slice %116 {offsets = [8, 0], sizes = [8, 1], strides = [1, 1]} : vector<16x1xf32> to vector<8x1xf32>
    %122 = arith.addf %118, %121 : vector<8x1xf32>
    %cst_71 = arith.constant 9.765625E-4 : f32
    %123 = vector.broadcast %cst_71 : f32 to vector<8x1xf32>
    %124 = arith.mulf %120, %123 : vector<8x1xf32>
    %cst_72 = arith.constant 9.765625E-4 : f32
    %125 = vector.broadcast %cst_72 : f32 to vector<8x1xf32>
    %126 = arith.mulf %122, %125 : vector<8x1xf32>
    %127 = arith.mulf %124, %124 : vector<8x1xf32>
    %128 = arith.subf %126, %127 : vector<8x1xf32>
    %cst_73 = arith.constant 0.000000e+00 : f32
    %129 = vector.broadcast %cst_73 : f32 to vector<8x1xf32>
    %130 = arith.maximumf %128, %129 : vector<8x1xf32>
    %131 = vector.extract_strided_slice %18 {offsets = [0, 1], sizes = [8, 1], strides = [1, 1]} : vector<8x16xf32> to vector<8x1xf32>
    %132 = vector.extract_strided_slice %19 {offsets = [0, 1], sizes = [8, 1], strides = [1, 1]} : vector<8x16xf32> to vector<8x1xf32>
    %cst_74 = arith.constant 9.99999974E-6 : f32
    %133 = vector.broadcast %cst_74 : f32 to vector<8x1xf32>
    %134 = arith.addf %130, %133 : vector<8x1xf32>
    %135 = math.rsqrt %134 : vector<8x1xf32>
    %136 = arith.mulf %131, %135 : vector<8x1xf32>
    %137 = arith.mulf %124, %136 : vector<8x1xf32>
    %138 = arith.subf %132, %137 : vector<8x1xf32>
    %139 = tpu.concatenate %136, %136 in 0 : vector<8x1xf32>, vector<8x1xf32> -> vector<16x1xf32>
    %140 = tpu.concatenate %138, %138 in 0 : vector<8x1xf32>, vector<8x1xf32> -> vector<16x1xf32>
    %141 = vector.broadcast %139 : vector<16x1xf32> to vector<16x512xf32>
    %142 = arith.mulf %111, %141 : vector<16x512xf32>
    %143 = vector.broadcast %140 : vector<16x1xf32> to vector<16x512xf32>
    %144 = arith.addf %142, %143 : vector<16x512xf32>
    %145 = arith.addf %144, %101 : vector<16x512xf32>
    %cst_75 = arith.constant 0.000000e+00 : f32
    %146 = vector.broadcast %cst_75 : f32 to vector<16x512xf32>
    %147 = arith.maximumf %145, %146 : vector<16x512xf32>
    %148 = math.absf %145 : vector<16x512xf32>
    %cst_76 = arith.constant 0.000000e+00 : f32
    %149 = vector.broadcast %cst_76 : f32 to vector<16x512xf32>
    %150 = arith.subf %149, %148 : vector<16x512xf32>
    %151 = math.exp %150 : vector<16x512xf32>
    %152 = math.log1p %151 : vector<16x512xf32>
    %153 = arith.addf %147, %152 : vector<16x512xf32>
    %c1_i32_77 = arith.constant 1 : i32
    %c1024_i32_78 = arith.constant 1024 : i32
    %c0_i32_79 = arith.constant 0 : i32
    %154 = tpu.memref_slice %arg22[%c1024_i32_78, %c0_i32_79] : memref<2048x512xbf16, #tpu.memory_space<vmem>> -> memref<512x512xbf16, #tpu.memory_space<vmem>>
    %155 = tpu.memref_slice %arg23[%c1_i32_77] : memref<2x!tpu.dma_semaphore, #tpu.memory_space<semaphore_mem>> -> memref<1x!tpu.dma_semaphore, #tpu.memory_space<semaphore_mem>>
    %156 = tpu.memref_squeeze %155 : memref<1x!tpu.dma_semaphore, #tpu.memory_space<semaphore_mem>> -> memref<!tpu.dma_semaphore, #tpu.memory_space<semaphore_mem>>
    tpu.enqueue_dma source(%arg7 : memref<512x512xbf16, #tpu.memory_space<any>>) target(%154 : memref<512x512xbf16, #tpu.memory_space<vmem>>) target_semaphore(%156 : memref<!tpu.dma_semaphore, #tpu.memory_space<semaphore_mem>>)
    %c0_i32_80 = arith.constant 0 : i32
    %c0_i32_81 = arith.constant 0 : i32
    %c0_i32_82 = arith.constant 0 : i32
    %157 = tpu.memref_slice %arg22[%c0_i32_81, %c0_i32_82] : memref<2048x512xbf16, #tpu.memory_space<vmem>> -> memref<512x512xbf16, #tpu.memory_space<vmem>>
    %158 = tpu.memref_slice %arg23[%c0_i32_80] : memref<2x!tpu.dma_semaphore, #tpu.memory_space<semaphore_mem>> -> memref<1x!tpu.dma_semaphore, #tpu.memory_space<semaphore_mem>>
    %159 = tpu.memref_squeeze %158 : memref<1x!tpu.dma_semaphore, #tpu.memory_space<semaphore_mem>> -> memref<!tpu.dma_semaphore, #tpu.memory_space<semaphore_mem>>
    tpu.wait_dma2 semaphore(%159 : memref<!tpu.dma_semaphore, #tpu.memory_space<semaphore_mem>>) src(%arg6 : memref<512x512xbf16, #tpu.memory_space<any>>) dst(%157 : memref<512x512xbf16, #tpu.memory_space<vmem>>)
    %c0_83 = arith.constant 0 : index
    %c0_84 = arith.constant 0 : index
    %160 = vector.load %arg22[%c0_83, %c0_84] : memref<2048x512xbf16, #tpu.memory_space<vmem>>, vector<512x512xbf16>
    %161 = arith.truncf %153 : vector<16x512xf32> to vector<16x512xbf16>
    %cst_85 = arith.constant dense<0.000000e+00> : vector<16x512xf32>
    %162 = tpu.matmul %161, %160, %cst_85 {dimension_numbers = #tpu.dot_dimension_numbers<[1], [0], [0], [1], [0, 0, 1, 1], [], []>} : vector<16x512xbf16>, vector<512x512xbf16>, vector<16x512xf32> -> vector<16x512xf32>
    %cst_86 = arith.constant dense<0.000000e+00> : vector<16x512xf32>
    %163 = tpu.matmul %17, %162, %cst_86 {dimension_numbers = #tpu.dot_dimension_numbers<[1], [0], [0], [1], [0, 0, 1, 1], [], []>} : vector<16x16xf32>, vector<16x512xf32>, vector<16x512xf32> -> vector<16x512xf32>
    %cst_87 = arith.constant dense<0.000000e+00> : vector<16xf32>
    %164 = vector.multi_reduction <add>, %163, %cst_87 [1] : vector<16x512xf32> to vector<16xf32>
    %165 = vector.shape_cast %164 : vector<16xf32> to vector<16x1xf32>
    %166 = arith.mulf %163, %163 : vector<16x512xf32>
    %cst_88 = arith.constant dense<0.000000e+00> : vector<16xf32>
    %167 = vector.multi_reduction <add>, %166, %cst_88 [1] : vector<16x512xf32> to vector<16xf32>
    %168 = vector.shape_cast %167 : vector<16xf32> to vector<16x1xf32>
    %169 = vector.extract_strided_slice %165 {offsets = [0, 0], sizes = [8, 1], strides = [1, 1]} : vector<16x1xf32> to vector<8x1xf32>
    %170 = vector.extract_strided_slice %168 {offsets = [0, 0], sizes = [8, 1], strides = [1, 1]} : vector<16x1xf32> to vector<8x1xf32>
    %171 = vector.extract_strided_slice %165 {offsets = [8, 0], sizes = [8, 1], strides = [1, 1]} : vector<16x1xf32> to vector<8x1xf32>
    %172 = arith.addf %169, %171 : vector<8x1xf32>
    %173 = vector.extract_strided_slice %168 {offsets = [8, 0], sizes = [8, 1], strides = [1, 1]} : vector<16x1xf32> to vector<8x1xf32>
    %174 = arith.addf %170, %173 : vector<8x1xf32>
    %cst_89 = arith.constant 9.765625E-4 : f32
    %175 = vector.broadcast %cst_89 : f32 to vector<8x1xf32>
    %176 = arith.mulf %172, %175 : vector<8x1xf32>
    %cst_90 = arith.constant 9.765625E-4 : f32
    %177 = vector.broadcast %cst_90 : f32 to vector<8x1xf32>
    %178 = arith.mulf %174, %177 : vector<8x1xf32>
    %179 = arith.mulf %176, %176 : vector<8x1xf32>
    %180 = arith.subf %178, %179 : vector<8x1xf32>
    %cst_91 = arith.constant 0.000000e+00 : f32
    %181 = vector.broadcast %cst_91 : f32 to vector<8x1xf32>
    %182 = arith.maximumf %180, %181 : vector<8x1xf32>
    %183 = vector.extract_strided_slice %18 {offsets = [0, 2], sizes = [8, 1], strides = [1, 1]} : vector<8x16xf32> to vector<8x1xf32>
    %184 = vector.extract_strided_slice %19 {offsets = [0, 2], sizes = [8, 1], strides = [1, 1]} : vector<8x16xf32> to vector<8x1xf32>
    %cst_92 = arith.constant 9.99999974E-6 : f32
    %185 = vector.broadcast %cst_92 : f32 to vector<8x1xf32>
    %186 = arith.addf %182, %185 : vector<8x1xf32>
    %187 = math.rsqrt %186 : vector<8x1xf32>
    %188 = arith.mulf %183, %187 : vector<8x1xf32>
    %189 = arith.mulf %176, %188 : vector<8x1xf32>
    %190 = arith.subf %184, %189 : vector<8x1xf32>
    %191 = tpu.concatenate %188, %188 in 0 : vector<8x1xf32>, vector<8x1xf32> -> vector<16x1xf32>
    %192 = tpu.concatenate %190, %190 in 0 : vector<8x1xf32>, vector<8x1xf32> -> vector<16x1xf32>
    %193 = vector.broadcast %191 : vector<16x1xf32> to vector<16x512xf32>
    %194 = arith.mulf %163, %193 : vector<16x512xf32>
    %195 = vector.broadcast %192 : vector<16x1xf32> to vector<16x512xf32>
    %196 = arith.addf %194, %195 : vector<16x512xf32>
    %197 = arith.addf %196, %101 : vector<16x512xf32>
    %cst_93 = arith.constant 0.000000e+00 : f32
    %198 = vector.broadcast %cst_93 : f32 to vector<16x512xf32>
    %199 = arith.maximumf %197, %198 : vector<16x512xf32>
    %200 = math.absf %197 : vector<16x512xf32>
    %cst_94 = arith.constant 0.000000e+00 : f32
    %201 = vector.broadcast %cst_94 : f32 to vector<16x512xf32>
    %202 = arith.subf %201, %200 : vector<16x512xf32>
    %203 = math.exp %202 : vector<16x512xf32>
    %204 = math.log1p %203 : vector<16x512xf32>
    %205 = arith.addf %199, %204 : vector<16x512xf32>
    %c0_i32_95 = arith.constant 0 : i32
    %c0_i32_96 = arith.constant 0 : i32
    %c0_i32_97 = arith.constant 0 : i32
    %206 = tpu.memref_slice %arg22[%c0_i32_96, %c0_i32_97] : memref<2048x512xbf16, #tpu.memory_space<vmem>> -> memref<512x256xbf16, #tpu.memory_space<vmem>>
    %207 = tpu.memref_slice %arg23[%c0_i32_95] : memref<2x!tpu.dma_semaphore, #tpu.memory_space<semaphore_mem>> -> memref<1x!tpu.dma_semaphore, #tpu.memory_space<semaphore_mem>>
    %208 = tpu.memref_squeeze %207 : memref<1x!tpu.dma_semaphore, #tpu.memory_space<semaphore_mem>> -> memref<!tpu.dma_semaphore, #tpu.memory_space<semaphore_mem>>
    tpu.enqueue_dma source(%arg8 : memref<512x256xbf16, #tpu.memory_space<any>>) target(%206 : memref<512x256xbf16, #tpu.memory_space<vmem>>) target_semaphore(%208 : memref<!tpu.dma_semaphore, #tpu.memory_space<semaphore_mem>>)
    %c1_i32_98 = arith.constant 1 : i32
    %c1024_i32_99 = arith.constant 1024 : i32
    %c0_i32_100 = arith.constant 0 : i32
    %209 = tpu.memref_slice %arg22[%c1024_i32_99, %c0_i32_100] : memref<2048x512xbf16, #tpu.memory_space<vmem>> -> memref<512x512xbf16, #tpu.memory_space<vmem>>
    %210 = tpu.memref_slice %arg23[%c1_i32_98] : memref<2x!tpu.dma_semaphore, #tpu.memory_space<semaphore_mem>> -> memref<1x!tpu.dma_semaphore, #tpu.memory_space<semaphore_mem>>
    %211 = tpu.memref_squeeze %210 : memref<1x!tpu.dma_semaphore, #tpu.memory_space<semaphore_mem>> -> memref<!tpu.dma_semaphore, #tpu.memory_space<semaphore_mem>>
    tpu.wait_dma2 semaphore(%211 : memref<!tpu.dma_semaphore, #tpu.memory_space<semaphore_mem>>) src(%arg7 : memref<512x512xbf16, #tpu.memory_space<any>>) dst(%209 : memref<512x512xbf16, #tpu.memory_space<vmem>>)
    %c1024_101 = arith.constant 1024 : index
    %c0_102 = arith.constant 0 : index
    %212 = vector.load %arg22[%c1024_101, %c0_102] : memref<2048x512xbf16, #tpu.memory_space<vmem>>, vector<512x512xbf16>
    %213 = arith.truncf %205 : vector<16x512xf32> to vector<16x512xbf16>
    %cst_103 = arith.constant dense<0.000000e+00> : vector<16x512xf32>
    %214 = tpu.matmul %213, %212, %cst_103 {dimension_numbers = #tpu.dot_dimension_numbers<[1], [0], [0], [1], [0, 0, 1, 1], [], []>} : vector<16x512xbf16>, vector<512x512xbf16>, vector<16x512xf32> -> vector<16x512xf32>
    %cst_104 = arith.constant dense<0.000000e+00> : vector<16x512xf32>
    %215 = tpu.matmul %17, %214, %cst_104 {dimension_numbers = #tpu.dot_dimension_numbers<[1], [0], [0], [1], [0, 0, 1, 1], [], []>} : vector<16x16xf32>, vector<16x512xf32>, vector<16x512xf32> -> vector<16x512xf32>
    %cst_105 = arith.constant dense<0.000000e+00> : vector<16xf32>
    %216 = vector.multi_reduction <add>, %215, %cst_105 [1] : vector<16x512xf32> to vector<16xf32>
    %217 = vector.shape_cast %216 : vector<16xf32> to vector<16x1xf32>
    %218 = arith.mulf %215, %215 : vector<16x512xf32>
    %cst_106 = arith.constant dense<0.000000e+00> : vector<16xf32>
    %219 = vector.multi_reduction <add>, %218, %cst_106 [1] : vector<16x512xf32> to vector<16xf32>
    %220 = vector.shape_cast %219 : vector<16xf32> to vector<16x1xf32>
    %221 = vector.extract_strided_slice %217 {offsets = [0, 0], sizes = [8, 1], strides = [1, 1]} : vector<16x1xf32> to vector<8x1xf32>
    %222 = vector.extract_strided_slice %220 {offsets = [0, 0], sizes = [8, 1], strides = [1, 1]} : vector<16x1xf32> to vector<8x1xf32>
    %223 = vector.extract_strided_slice %217 {offsets = [8, 0], sizes = [8, 1], strides = [1, 1]} : vector<16x1xf32> to vector<8x1xf32>
    %224 = arith.addf %221, %223 : vector<8x1xf32>
    %225 = vector.extract_strided_slice %220 {offsets = [8, 0], sizes = [8, 1], strides = [1, 1]} : vector<16x1xf32> to vector<8x1xf32>
    %226 = arith.addf %222, %225 : vector<8x1xf32>
    %cst_107 = arith.constant 9.765625E-4 : f32
    %227 = vector.broadcast %cst_107 : f32 to vector<8x1xf32>
    %228 = arith.mulf %224, %227 : vector<8x1xf32>
    %cst_108 = arith.constant 9.765625E-4 : f32
    %229 = vector.broadcast %cst_108 : f32 to vector<8x1xf32>
    %230 = arith.mulf %226, %229 : vector<8x1xf32>
    %231 = arith.mulf %228, %228 : vector<8x1xf32>
    %232 = arith.subf %230, %231 : vector<8x1xf32>
    %cst_109 = arith.constant 0.000000e+00 : f32
    %233 = vector.broadcast %cst_109 : f32 to vector<8x1xf32>
    %234 = arith.maximumf %232, %233 : vector<8x1xf32>
    %235 = vector.extract_strided_slice %18 {offsets = [0, 3], sizes = [8, 1], strides = [1, 1]} : vector<8x16xf32> to vector<8x1xf32>
    %236 = vector.extract_strided_slice %19 {offsets = [0, 3], sizes = [8, 1], strides = [1, 1]} : vector<8x16xf32> to vector<8x1xf32>
    %cst_110 = arith.constant 9.99999974E-6 : f32
    %237 = vector.broadcast %cst_110 : f32 to vector<8x1xf32>
    %238 = arith.addf %234, %237 : vector<8x1xf32>
    %239 = math.rsqrt %238 : vector<8x1xf32>
    %240 = arith.mulf %235, %239 : vector<8x1xf32>
    %241 = arith.mulf %228, %240 : vector<8x1xf32>
    %242 = arith.subf %236, %241 : vector<8x1xf32>
    %243 = tpu.concatenate %240, %240 in 0 : vector<8x1xf32>, vector<8x1xf32> -> vector<16x1xf32>
    %244 = tpu.concatenate %242, %242 in 0 : vector<8x1xf32>, vector<8x1xf32> -> vector<16x1xf32>
    %245 = vector.broadcast %243 : vector<16x1xf32> to vector<16x512xf32>
    %246 = arith.mulf %215, %245 : vector<16x512xf32>
    %247 = vector.broadcast %244 : vector<16x1xf32> to vector<16x512xf32>
    %248 = arith.addf %246, %247 : vector<16x512xf32>
    %249 = arith.addf %248, %101 : vector<16x512xf32>
    %cst_111 = arith.constant 0.000000e+00 : f32
    %250 = vector.broadcast %cst_111 : f32 to vector<16x512xf32>
    %251 = arith.maximumf %249, %250 : vector<16x512xf32>
    %252 = math.absf %249 : vector<16x512xf32>
    %cst_112 = arith.constant 0.000000e+00 : f32
    %253 = vector.broadcast %cst_112 : f32 to vector<16x512xf32>
    %254 = arith.subf %253, %252 : vector<16x512xf32>
    %255 = math.exp %254 : vector<16x512xf32>
    %256 = math.log1p %255 : vector<16x512xf32>
    %257 = arith.addf %251, %256 : vector<16x512xf32>
    %c1_i32_113 = arith.constant 1 : i32
    %c1024_i32_114 = arith.constant 1024 : i32
    %c0_i32_115 = arith.constant 0 : i32
    %258 = tpu.memref_slice %arg22[%c1024_i32_114, %c0_i32_115] : memref<2048x512xbf16, #tpu.memory_space<vmem>> -> memref<256x256xbf16, #tpu.memory_space<vmem>>
    %259 = tpu.memref_slice %arg23[%c1_i32_113] : memref<2x!tpu.dma_semaphore, #tpu.memory_space<semaphore_mem>> -> memref<1x!tpu.dma_semaphore, #tpu.memory_space<semaphore_mem>>
    %260 = tpu.memref_squeeze %259 : memref<1x!tpu.dma_semaphore, #tpu.memory_space<semaphore_mem>> -> memref<!tpu.dma_semaphore, #tpu.memory_space<semaphore_mem>>
    tpu.enqueue_dma source(%arg9 : memref<256x256xbf16, #tpu.memory_space<any>>) target(%258 : memref<256x256xbf16, #tpu.memory_space<vmem>>) target_semaphore(%260 : memref<!tpu.dma_semaphore, #tpu.memory_space<semaphore_mem>>)
    %c0_i32_116 = arith.constant 0 : i32
    %c0_i32_117 = arith.constant 0 : i32
    %c0_i32_118 = arith.constant 0 : i32
    %261 = tpu.memref_slice %arg22[%c0_i32_117, %c0_i32_118] : memref<2048x512xbf16, #tpu.memory_space<vmem>> -> memref<512x256xbf16, #tpu.memory_space<vmem>>
    %262 = tpu.memref_slice %arg23[%c0_i32_116] : memref<2x!tpu.dma_semaphore, #tpu.memory_space<semaphore_mem>> -> memref<1x!tpu.dma_semaphore, #tpu.memory_space<semaphore_mem>>
    %263 = tpu.memref_squeeze %262 : memref<1x!tpu.dma_semaphore, #tpu.memory_space<semaphore_mem>> -> memref<!tpu.dma_semaphore, #tpu.memory_space<semaphore_mem>>
    tpu.wait_dma2 semaphore(%263 : memref<!tpu.dma_semaphore, #tpu.memory_space<semaphore_mem>>) src(%arg8 : memref<512x256xbf16, #tpu.memory_space<any>>) dst(%261 : memref<512x256xbf16, #tpu.memory_space<vmem>>)
    %c0_119 = arith.constant 0 : index
    %c0_120 = arith.constant 0 : index
    %264 = vector.load %arg22[%c0_119, %c0_120] : memref<2048x512xbf16, #tpu.memory_space<vmem>>, vector<512x256xbf16>
    %265 = arith.truncf %257 : vector<16x512xf32> to vector<16x512xbf16>
    %cst_121 = arith.constant dense<0.000000e+00> : vector<16x256xf32>
    %266 = tpu.matmul %265, %264, %cst_121 {dimension_numbers = #tpu.dot_dimension_numbers<[1], [0], [0], [1], [0, 0, 1, 1], [], []>} : vector<16x512xbf16>, vector<512x256xbf16>, vector<16x256xf32> -> vector<16x256xf32>
    %cst_122 = arith.constant dense<0.000000e+00> : vector<16x256xf32>
    %267 = tpu.matmul %17, %266, %cst_122 {dimension_numbers = #tpu.dot_dimension_numbers<[1], [0], [0], [1], [0, 0, 1, 1], [], []>} : vector<16x16xf32>, vector<16x256xf32>, vector<16x256xf32> -> vector<16x256xf32>
    %cst_123 = arith.constant dense<0.000000e+00> : vector<16xf32>
    %268 = vector.multi_reduction <add>, %267, %cst_123 [1] : vector<16x256xf32> to vector<16xf32>
    %269 = vector.shape_cast %268 : vector<16xf32> to vector<16x1xf32>
    %270 = arith.mulf %267, %267 : vector<16x256xf32>
    %cst_124 = arith.constant dense<0.000000e+00> : vector<16xf32>
    %271 = vector.multi_reduction <add>, %270, %cst_124 [1] : vector<16x256xf32> to vector<16xf32>
    %272 = vector.shape_cast %271 : vector<16xf32> to vector<16x1xf32>
    %273 = vector.extract_strided_slice %269 {offsets = [0, 0], sizes = [8, 1], strides = [1, 1]} : vector<16x1xf32> to vector<8x1xf32>
    %274 = vector.extract_strided_slice %272 {offsets = [0, 0], sizes = [8, 1], strides = [1, 1]} : vector<16x1xf32> to vector<8x1xf32>
    %275 = vector.extract_strided_slice %269 {offsets = [8, 0], sizes = [8, 1], strides = [1, 1]} : vector<16x1xf32> to vector<8x1xf32>
    %276 = arith.addf %273, %275 : vector<8x1xf32>
    %277 = vector.extract_strided_slice %272 {offsets = [8, 0], sizes = [8, 1], strides = [1, 1]} : vector<16x1xf32> to vector<8x1xf32>
    %278 = arith.addf %274, %277 : vector<8x1xf32>
    %cst_125 = arith.constant 0.001953125 : f32
    %279 = vector.broadcast %cst_125 : f32 to vector<8x1xf32>
    %280 = arith.mulf %276, %279 : vector<8x1xf32>
    %cst_126 = arith.constant 0.001953125 : f32
    %281 = vector.broadcast %cst_126 : f32 to vector<8x1xf32>
    %282 = arith.mulf %278, %281 : vector<8x1xf32>
    %283 = arith.mulf %280, %280 : vector<8x1xf32>
    %284 = arith.subf %282, %283 : vector<8x1xf32>
    %cst_127 = arith.constant 0.000000e+00 : f32
    %285 = vector.broadcast %cst_127 : f32 to vector<8x1xf32>
    %286 = arith.maximumf %284, %285 : vector<8x1xf32>
    %287 = vector.extract_strided_slice %18 {offsets = [0, 4], sizes = [8, 1], strides = [1, 1]} : vector<8x16xf32> to vector<8x1xf32>
    %288 = vector.extract_strided_slice %19 {offsets = [0, 4], sizes = [8, 1], strides = [1, 1]} : vector<8x16xf32> to vector<8x1xf32>
    %cst_128 = arith.constant 9.99999974E-6 : f32
    %289 = vector.broadcast %cst_128 : f32 to vector<8x1xf32>
    %290 = arith.addf %286, %289 : vector<8x1xf32>
    %291 = math.rsqrt %290 : vector<8x1xf32>
    %292 = arith.mulf %287, %291 : vector<8x1xf32>
    %293 = arith.mulf %280, %292 : vector<8x1xf32>
    %294 = arith.subf %288, %293 : vector<8x1xf32>
    %295 = tpu.concatenate %292, %292 in 0 : vector<8x1xf32>, vector<8x1xf32> -> vector<16x1xf32>
    %296 = tpu.concatenate %294, %294 in 0 : vector<8x1xf32>, vector<8x1xf32> -> vector<16x1xf32>
    %297 = vector.broadcast %295 : vector<16x1xf32> to vector<16x256xf32>
    %298 = arith.mulf %267, %297 : vector<16x256xf32>
    %299 = vector.broadcast %296 : vector<16x1xf32> to vector<16x256xf32>
    %300 = arith.addf %298, %299 : vector<16x256xf32>
    %cst_129 = arith.constant 0.000000e+00 : f32
    %301 = vector.broadcast %cst_129 : f32 to vector<16x256xf32>
    %302 = arith.maximumf %300, %301 : vector<16x256xf32>
    %303 = math.absf %300 : vector<16x256xf32>
    %cst_130 = arith.constant 0.000000e+00 : f32
    %304 = vector.broadcast %cst_130 : f32 to vector<16x256xf32>
    %305 = arith.subf %304, %303 : vector<16x256xf32>
    %306 = math.exp %305 : vector<16x256xf32>
    %307 = math.log1p %306 : vector<16x256xf32>
    %308 = arith.addf %302, %307 : vector<16x256xf32>
    %c0_i32_131 = arith.constant 0 : i32
    %c0_i32_132 = arith.constant 0 : i32
    %c0_i32_133 = arith.constant 0 : i32
    %309 = tpu.memref_slice %arg22[%c0_i32_132, %c0_i32_133] : memref<2048x512xbf16, #tpu.memory_space<vmem>> -> memref<256x256xbf16, #tpu.memory_space<vmem>>
    %310 = tpu.memref_slice %arg23[%c0_i32_131] : memref<2x!tpu.dma_semaphore, #tpu.memory_space<semaphore_mem>> -> memref<1x!tpu.dma_semaphore, #tpu.memory_space<semaphore_mem>>
    %311 = tpu.memref_squeeze %310 : memref<1x!tpu.dma_semaphore, #tpu.memory_space<semaphore_mem>> -> memref<!tpu.dma_semaphore, #tpu.memory_space<semaphore_mem>>
    tpu.enqueue_dma source(%arg10 : memref<256x256xbf16, #tpu.memory_space<any>>) target(%309 : memref<256x256xbf16, #tpu.memory_space<vmem>>) target_semaphore(%311 : memref<!tpu.dma_semaphore, #tpu.memory_space<semaphore_mem>>)
    %c1_i32_134 = arith.constant 1 : i32
    %c1024_i32_135 = arith.constant 1024 : i32
    %c0_i32_136 = arith.constant 0 : i32
    %312 = tpu.memref_slice %arg22[%c1024_i32_135, %c0_i32_136] : memref<2048x512xbf16, #tpu.memory_space<vmem>> -> memref<256x256xbf16, #tpu.memory_space<vmem>>
    %313 = tpu.memref_slice %arg23[%c1_i32_134] : memref<2x!tpu.dma_semaphore, #tpu.memory_space<semaphore_mem>> -> memref<1x!tpu.dma_semaphore, #tpu.memory_space<semaphore_mem>>
    %314 = tpu.memref_squeeze %313 : memref<1x!tpu.dma_semaphore, #tpu.memory_space<semaphore_mem>> -> memref<!tpu.dma_semaphore, #tpu.memory_space<semaphore_mem>>
    tpu.wait_dma2 semaphore(%314 : memref<!tpu.dma_semaphore, #tpu.memory_space<semaphore_mem>>) src(%arg9 : memref<256x256xbf16, #tpu.memory_space<any>>) dst(%312 : memref<256x256xbf16, #tpu.memory_space<vmem>>)
    %c1024_137 = arith.constant 1024 : index
    %c0_138 = arith.constant 0 : index
    %315 = vector.load %arg22[%c1024_137, %c0_138] : memref<2048x512xbf16, #tpu.memory_space<vmem>>, vector<256x256xbf16>
    %316 = arith.truncf %308 : vector<16x256xf32> to vector<16x256xbf16>
    %cst_139 = arith.constant dense<0.000000e+00> : vector<16x256xf32>
    %317 = tpu.matmul %316, %315, %cst_139 {dimension_numbers = #tpu.dot_dimension_numbers<[1], [0], [0], [1], [0, 0, 1, 1], [], []>} : vector<16x256xbf16>, vector<256x256xbf16>, vector<16x256xf32> -> vector<16x256xf32>
    %cst_140 = arith.constant dense<0.000000e+00> : vector<16x256xf32>
    %318 = tpu.matmul %17, %317, %cst_140 {dimension_numbers = #tpu.dot_dimension_numbers<[1], [0], [0], [1], [0, 0, 1, 1], [], []>} : vector<16x16xf32>, vector<16x256xf32>, vector<16x256xf32> -> vector<16x256xf32>
    %cst_141 = arith.constant dense<0.000000e+00> : vector<16xf32>
    %319 = vector.multi_reduction <add>, %318, %cst_141 [1] : vector<16x256xf32> to vector<16xf32>
    %320 = vector.shape_cast %319 : vector<16xf32> to vector<16x1xf32>
    %321 = arith.mulf %318, %318 : vector<16x256xf32>
    %cst_142 = arith.constant dense<0.000000e+00> : vector<16xf32>
    %322 = vector.multi_reduction <add>, %321, %cst_142 [1] : vector<16x256xf32> to vector<16xf32>
    %323 = vector.shape_cast %322 : vector<16xf32> to vector<16x1xf32>
    %324 = vector.extract_strided_slice %320 {offsets = [0, 0], sizes = [8, 1], strides = [1, 1]} : vector<16x1xf32> to vector<8x1xf32>
    %325 = vector.extract_strided_slice %323 {offsets = [0, 0], sizes = [8, 1], strides = [1, 1]} : vector<16x1xf32> to vector<8x1xf32>
    %326 = vector.extract_strided_slice %320 {offsets = [8, 0], sizes = [8, 1], strides = [1, 1]} : vector<16x1xf32> to vector<8x1xf32>
    %327 = arith.addf %324, %326 : vector<8x1xf32>
    %328 = vector.extract_strided_slice %323 {offsets = [8, 0], sizes = [8, 1], strides = [1, 1]} : vector<16x1xf32> to vector<8x1xf32>
    %329 = arith.addf %325, %328 : vector<8x1xf32>
    %cst_143 = arith.constant 0.001953125 : f32
    %330 = vector.broadcast %cst_143 : f32 to vector<8x1xf32>
    %331 = arith.mulf %327, %330 : vector<8x1xf32>
    %cst_144 = arith.constant 0.001953125 : f32
    %332 = vector.broadcast %cst_144 : f32 to vector<8x1xf32>
    %333 = arith.mulf %329, %332 : vector<8x1xf32>
    %334 = arith.mulf %331, %331 : vector<8x1xf32>
    %335 = arith.subf %333, %334 : vector<8x1xf32>
    %cst_145 = arith.constant 0.000000e+00 : f32
    %336 = vector.broadcast %cst_145 : f32 to vector<8x1xf32>
    %337 = arith.maximumf %335, %336 : vector<8x1xf32>
    %338 = vector.extract_strided_slice %18 {offsets = [0, 5], sizes = [8, 1], strides = [1, 1]} : vector<8x16xf32> to vector<8x1xf32>
    %339 = vector.extract_strided_slice %19 {offsets = [0, 5], sizes = [8, 1], strides = [1, 1]} : vector<8x16xf32> to vector<8x1xf32>
    %cst_146 = arith.constant 9.99999974E-6 : f32
    %340 = vector.broadcast %cst_146 : f32 to vector<8x1xf32>
    %341 = arith.addf %337, %340 : vector<8x1xf32>
    %342 = math.rsqrt %341 : vector<8x1xf32>
    %343 = arith.mulf %338, %342 : vector<8x1xf32>
    %344 = arith.mulf %331, %343 : vector<8x1xf32>
    %345 = arith.subf %339, %344 : vector<8x1xf32>
    %346 = tpu.concatenate %343, %343 in 0 : vector<8x1xf32>, vector<8x1xf32> -> vector<16x1xf32>
    %347 = tpu.concatenate %345, %345 in 0 : vector<8x1xf32>, vector<8x1xf32> -> vector<16x1xf32>
    %348 = vector.broadcast %346 : vector<16x1xf32> to vector<16x256xf32>
    %349 = arith.mulf %318, %348 : vector<16x256xf32>
    %350 = vector.broadcast %347 : vector<16x1xf32> to vector<16x256xf32>
    %351 = arith.addf %349, %350 : vector<16x256xf32>
    %352 = arith.addf %351, %308 : vector<16x256xf32>
    %cst_147 = arith.constant 0.000000e+00 : f32
    %353 = vector.broadcast %cst_147 : f32 to vector<16x256xf32>
    %354 = arith.maximumf %352, %353 : vector<16x256xf32>
    %355 = math.absf %352 : vector<16x256xf32>
    %cst_148 = arith.constant 0.000000e+00 : f32
    %356 = vector.broadcast %cst_148 : f32 to vector<16x256xf32>
    %357 = arith.subf %356, %355 : vector<16x256xf32>
    %358 = math.exp %357 : vector<16x256xf32>
    %359 = math.log1p %358 : vector<16x256xf32>
    %360 = arith.addf %354, %359 : vector<16x256xf32>
    %c1_i32_149 = arith.constant 1 : i32
    %c1024_i32_150 = arith.constant 1024 : i32
    %c0_i32_151 = arith.constant 0 : i32
    %361 = tpu.memref_slice %arg22[%c1024_i32_150, %c0_i32_151] : memref<2048x512xbf16, #tpu.memory_space<vmem>> -> memref<256x256xbf16, #tpu.memory_space<vmem>>
    %362 = tpu.memref_slice %arg23[%c1_i32_149] : memref<2x!tpu.dma_semaphore, #tpu.memory_space<semaphore_mem>> -> memref<1x!tpu.dma_semaphore, #tpu.memory_space<semaphore_mem>>
    %363 = tpu.memref_squeeze %362 : memref<1x!tpu.dma_semaphore, #tpu.memory_space<semaphore_mem>> -> memref<!tpu.dma_semaphore, #tpu.memory_space<semaphore_mem>>
    tpu.enqueue_dma source(%arg11 : memref<256x256xbf16, #tpu.memory_space<any>>) target(%361 : memref<256x256xbf16, #tpu.memory_space<vmem>>) target_semaphore(%363 : memref<!tpu.dma_semaphore, #tpu.memory_space<semaphore_mem>>)
    %c0_i32_152 = arith.constant 0 : i32
    %c0_i32_153 = arith.constant 0 : i32
    %c0_i32_154 = arith.constant 0 : i32
    %364 = tpu.memref_slice %arg22[%c0_i32_153, %c0_i32_154] : memref<2048x512xbf16, #tpu.memory_space<vmem>> -> memref<256x256xbf16, #tpu.memory_space<vmem>>
    %365 = tpu.memref_slice %arg23[%c0_i32_152] : memref<2x!tpu.dma_semaphore, #tpu.memory_space<semaphore_mem>> -> memref<1x!tpu.dma_semaphore, #tpu.memory_space<semaphore_mem>>
    %366 = tpu.memref_squeeze %365 : memref<1x!tpu.dma_semaphore, #tpu.memory_space<semaphore_mem>> -> memref<!tpu.dma_semaphore, #tpu.memory_space<semaphore_mem>>
    tpu.wait_dma2 semaphore(%366 : memref<!tpu.dma_semaphore, #tpu.memory_space<semaphore_mem>>) src(%arg10 : memref<256x256xbf16, #tpu.memory_space<any>>) dst(%364 : memref<256x256xbf16, #tpu.memory_space<vmem>>)
    %c0_155 = arith.constant 0 : index
    %c0_156 = arith.constant 0 : index
    %367 = vector.load %arg22[%c0_155, %c0_156] : memref<2048x512xbf16, #tpu.memory_space<vmem>>, vector<256x256xbf16>
    %368 = arith.truncf %360 : vector<16x256xf32> to vector<16x256xbf16>
    %cst_157 = arith.constant dense<0.000000e+00> : vector<16x256xf32>
    %369 = tpu.matmul %368, %367, %cst_157 {dimension_numbers = #tpu.dot_dimension_numbers<[1], [0], [0], [1], [0, 0, 1, 1], [], []>} : vector<16x256xbf16>, vector<256x256xbf16>, vector<16x256xf32> -> vector<16x256xf32>
    %cst_158 = arith.constant dense<0.000000e+00> : vector<16x256xf32>
    %370 = tpu.matmul %17, %369, %cst_158 {dimension_numbers = #tpu.dot_dimension_numbers<[1], [0], [0], [1], [0, 0, 1, 1], [], []>} : vector<16x16xf32>, vector<16x256xf32>, vector<16x256xf32> -> vector<16x256xf32>
    %cst_159 = arith.constant dense<0.000000e+00> : vector<16xf32>
    %371 = vector.multi_reduction <add>, %370, %cst_159 [1] : vector<16x256xf32> to vector<16xf32>
    %372 = vector.shape_cast %371 : vector<16xf32> to vector<16x1xf32>
    %373 = arith.mulf %370, %370 : vector<16x256xf32>
    %cst_160 = arith.constant dense<0.000000e+00> : vector<16xf32>
    %374 = vector.multi_reduction <add>, %373, %cst_160 [1] : vector<16x256xf32> to vector<16xf32>
    %375 = vector.shape_cast %374 : vector<16xf32> to vector<16x1xf32>
    %376 = vector.extract_strided_slice %372 {offsets = [0, 0], sizes = [8, 1], strides = [1, 1]} : vector<16x1xf32> to vector<8x1xf32>
    %377 = vector.extract_strided_slice %375 {offsets = [0, 0], sizes = [8, 1], strides = [1, 1]} : vector<16x1xf32> to vector<8x1xf32>
    %378 = vector.extract_strided_slice %372 {offsets = [8, 0], sizes = [8, 1], strides = [1, 1]} : vector<16x1xf32> to vector<8x1xf32>
    %379 = arith.addf %376, %378 : vector<8x1xf32>
    %380 = vector.extract_strided_slice %375 {offsets = [8, 0], sizes = [8, 1], strides = [1, 1]} : vector<16x1xf32> to vector<8x1xf32>
    %381 = arith.addf %377, %380 : vector<8x1xf32>
    %cst_161 = arith.constant 0.001953125 : f32
    %382 = vector.broadcast %cst_161 : f32 to vector<8x1xf32>
    %383 = arith.mulf %379, %382 : vector<8x1xf32>
    %cst_162 = arith.constant 0.001953125 : f32
    %384 = vector.broadcast %cst_162 : f32 to vector<8x1xf32>
    %385 = arith.mulf %381, %384 : vector<8x1xf32>
    %386 = arith.mulf %383, %383 : vector<8x1xf32>
    %387 = arith.subf %385, %386 : vector<8x1xf32>
    %cst_163 = arith.constant 0.000000e+00 : f32
    %388 = vector.broadcast %cst_163 : f32 to vector<8x1xf32>
    %389 = arith.maximumf %387, %388 : vector<8x1xf32>
    %390 = vector.extract_strided_slice %18 {offsets = [0, 6], sizes = [8, 1], strides = [1, 1]} : vector<8x16xf32> to vector<8x1xf32>
    %391 = vector.extract_strided_slice %19 {offsets = [0, 6], sizes = [8, 1], strides = [1, 1]} : vector<8x16xf32> to vector<8x1xf32>
    %cst_164 = arith.constant 9.99999974E-6 : f32
    %392 = vector.broadcast %cst_164 : f32 to vector<8x1xf32>
    %393 = arith.addf %389, %392 : vector<8x1xf32>
    %394 = math.rsqrt %393 : vector<8x1xf32>
    %395 = arith.mulf %390, %394 : vector<8x1xf32>
    %396 = arith.mulf %383, %395 : vector<8x1xf32>
    %397 = arith.subf %391, %396 : vector<8x1xf32>
    %398 = tpu.concatenate %395, %395 in 0 : vector<8x1xf32>, vector<8x1xf32> -> vector<16x1xf32>
    %399 = tpu.concatenate %397, %397 in 0 : vector<8x1xf32>, vector<8x1xf32> -> vector<16x1xf32>
    %400 = vector.broadcast %398 : vector<16x1xf32> to vector<16x256xf32>
    %401 = arith.mulf %370, %400 : vector<16x256xf32>
    %402 = vector.broadcast %399 : vector<16x1xf32> to vector<16x256xf32>
    %403 = arith.addf %401, %402 : vector<16x256xf32>
    %404 = arith.addf %403, %308 : vector<16x256xf32>
    %cst_165 = arith.constant 0.000000e+00 : f32
    %405 = vector.broadcast %cst_165 : f32 to vector<16x256xf32>
    %406 = arith.maximumf %404, %405 : vector<16x256xf32>
    %407 = math.absf %404 : vector<16x256xf32>
    %cst_166 = arith.constant 0.000000e+00 : f32
    %408 = vector.broadcast %cst_166 : f32 to vector<16x256xf32>
    %409 = arith.subf %408, %407 : vector<16x256xf32>
    %410 = math.exp %409 : vector<16x256xf32>
    %411 = math.log1p %410 : vector<16x256xf32>
    %412 = arith.addf %406, %411 : vector<16x256xf32>
    %c0_i32_167 = arith.constant 0 : i32
    %c0_i32_168 = arith.constant 0 : i32
    %c0_i32_169 = arith.constant 0 : i32
    %413 = tpu.memref_slice %arg22[%c0_i32_168, %c0_i32_169] : memref<2048x512xbf16, #tpu.memory_space<vmem>> -> memref<256x128xbf16, #tpu.memory_space<vmem>>
    %414 = tpu.memref_slice %arg23[%c0_i32_167] : memref<2x!tpu.dma_semaphore, #tpu.memory_space<semaphore_mem>> -> memref<1x!tpu.dma_semaphore, #tpu.memory_space<semaphore_mem>>
    %415 = tpu.memref_squeeze %414 : memref<1x!tpu.dma_semaphore, #tpu.memory_space<semaphore_mem>> -> memref<!tpu.dma_semaphore, #tpu.memory_space<semaphore_mem>>
    tpu.enqueue_dma source(%arg12 : memref<256x128xbf16, #tpu.memory_space<any>>) target(%413 : memref<256x128xbf16, #tpu.memory_space<vmem>>) target_semaphore(%415 : memref<!tpu.dma_semaphore, #tpu.memory_space<semaphore_mem>>)
    %c1_i32_170 = arith.constant 1 : i32
    %c1024_i32_171 = arith.constant 1024 : i32
    %c0_i32_172 = arith.constant 0 : i32
    %416 = tpu.memref_slice %arg22[%c1024_i32_171, %c0_i32_172] : memref<2048x512xbf16, #tpu.memory_space<vmem>> -> memref<256x256xbf16, #tpu.memory_space<vmem>>
    %417 = tpu.memref_slice %arg23[%c1_i32_170] : memref<2x!tpu.dma_semaphore, #tpu.memory_space<semaphore_mem>> -> memref<1x!tpu.dma_semaphore, #tpu.memory_space<semaphore_mem>>
    %418 = tpu.memref_squeeze %417 : memref<1x!tpu.dma_semaphore, #tpu.memory_space<semaphore_mem>> -> memref<!tpu.dma_semaphore, #tpu.memory_space<semaphore_mem>>
    tpu.wait_dma2 semaphore(%418 : memref<!tpu.dma_semaphore, #tpu.memory_space<semaphore_mem>>) src(%arg11 : memref<256x256xbf16, #tpu.memory_space<any>>) dst(%416 : memref<256x256xbf16, #tpu.memory_space<vmem>>)
    %c1024_173 = arith.constant 1024 : index
    %c0_174 = arith.constant 0 : index
    %419 = vector.load %arg22[%c1024_173, %c0_174] : memref<2048x512xbf16, #tpu.memory_space<vmem>>, vector<256x256xbf16>
    %420 = arith.truncf %412 : vector<16x256xf32> to vector<16x256xbf16>
    %cst_175 = arith.constant dense<0.000000e+00> : vector<16x256xf32>
    %421 = tpu.matmul %420, %419, %cst_175 {dimension_numbers = #tpu.dot_dimension_numbers<[1], [0], [0], [1], [0, 0, 1, 1], [], []>} : vector<16x256xbf16>, vector<256x256xbf16>, vector<16x256xf32> -> vector<16x256xf32>
    %cst_176 = arith.constant dense<0.000000e+00> : vector<16x256xf32>
    %422 = tpu.matmul %17, %421, %cst_176 {dimension_numbers = #tpu.dot_dimension_numbers<[1], [0], [0], [1], [0, 0, 1, 1], [], []>} : vector<16x16xf32>, vector<16x256xf32>, vector<16x256xf32> -> vector<16x256xf32>
    %cst_177 = arith.constant dense<0.000000e+00> : vector<16xf32>
    %423 = vector.multi_reduction <add>, %422, %cst_177 [1] : vector<16x256xf32> to vector<16xf32>
    %424 = vector.shape_cast %423 : vector<16xf32> to vector<16x1xf32>
    %425 = arith.mulf %422, %422 : vector<16x256xf32>
    %cst_178 = arith.constant dense<0.000000e+00> : vector<16xf32>
    %426 = vector.multi_reduction <add>, %425, %cst_178 [1] : vector<16x256xf32> to vector<16xf32>
    %427 = vector.shape_cast %426 : vector<16xf32> to vector<16x1xf32>
    %428 = vector.extract_strided_slice %424 {offsets = [0, 0], sizes = [8, 1], strides = [1, 1]} : vector<16x1xf32> to vector<8x1xf32>
    %429 = vector.extract_strided_slice %427 {offsets = [0, 0], sizes = [8, 1], strides = [1, 1]} : vector<16x1xf32> to vector<8x1xf32>
    %430 = vector.extract_strided_slice %424 {offsets = [8, 0], sizes = [8, 1], strides = [1, 1]} : vector<16x1xf32> to vector<8x1xf32>
    %431 = arith.addf %428, %430 : vector<8x1xf32>
    %432 = vector.extract_strided_slice %427 {offsets = [8, 0], sizes = [8, 1], strides = [1, 1]} : vector<16x1xf32> to vector<8x1xf32>
    %433 = arith.addf %429, %432 : vector<8x1xf32>
    %cst_179 = arith.constant 0.001953125 : f32
    %434 = vector.broadcast %cst_179 : f32 to vector<8x1xf32>
    %435 = arith.mulf %431, %434 : vector<8x1xf32>
    %cst_180 = arith.constant 0.001953125 : f32
    %436 = vector.broadcast %cst_180 : f32 to vector<8x1xf32>
    %437 = arith.mulf %433, %436 : vector<8x1xf32>
    %438 = arith.mulf %435, %435 : vector<8x1xf32>
    %439 = arith.subf %437, %438 : vector<8x1xf32>
    %cst_181 = arith.constant 0.000000e+00 : f32
    %440 = vector.broadcast %cst_181 : f32 to vector<8x1xf32>
    %441 = arith.maximumf %439, %440 : vector<8x1xf32>
    %442 = vector.extract_strided_slice %18 {offsets = [0, 7], sizes = [8, 1], strides = [1, 1]} : vector<8x16xf32> to vector<8x1xf32>
    %443 = vector.extract_strided_slice %19 {offsets = [0, 7], sizes = [8, 1], strides = [1, 1]} : vector<8x16xf32> to vector<8x1xf32>
    %cst_182 = arith.constant 9.99999974E-6 : f32
    %444 = vector.broadcast %cst_182 : f32 to vector<8x1xf32>
    %445 = arith.addf %441, %444 : vector<8x1xf32>
    %446 = math.rsqrt %445 : vector<8x1xf32>
    %447 = arith.mulf %442, %446 : vector<8x1xf32>
    %448 = arith.mulf %435, %447 : vector<8x1xf32>
    %449 = arith.subf %443, %448 : vector<8x1xf32>
    %450 = tpu.concatenate %447, %447 in 0 : vector<8x1xf32>, vector<8x1xf32> -> vector<16x1xf32>
    %451 = tpu.concatenate %449, %449 in 0 : vector<8x1xf32>, vector<8x1xf32> -> vector<16x1xf32>
    %452 = vector.broadcast %450 : vector<16x1xf32> to vector<16x256xf32>
    %453 = arith.mulf %422, %452 : vector<16x256xf32>
    %454 = vector.broadcast %451 : vector<16x1xf32> to vector<16x256xf32>
    %455 = arith.addf %453, %454 : vector<16x256xf32>
    %456 = arith.addf %455, %308 : vector<16x256xf32>
    %cst_183 = arith.constant 0.000000e+00 : f32
    %457 = vector.broadcast %cst_183 : f32 to vector<16x256xf32>
    %458 = arith.maximumf %456, %457 : vector<16x256xf32>
    %459 = math.absf %456 : vector<16x256xf32>
    %cst_184 = arith.constant 0.000000e+00 : f32
    %460 = vector.broadcast %cst_184 : f32 to vector<16x256xf32>
    %461 = arith.subf %460, %459 : vector<16x256xf32>
    %462 = math.exp %461 : vector<16x256xf32>
    %463 = math.log1p %462 : vector<16x256xf32>
    %464 = arith.addf %458, %463 : vector<16x256xf32>
    %c1_i32_185 = arith.constant 1 : i32
    %c1024_i32_186 = arith.constant 1024 : i32
    %c0_i32_187 = arith.constant 0 : i32
    %465 = tpu.memref_slice %arg22[%c1024_i32_186, %c0_i32_187] : memref<2048x512xbf16, #tpu.memory_space<vmem>> -> memref<128x128xbf16, #tpu.memory_space<vmem>>
    %466 = tpu.memref_slice %arg23[%c1_i32_185] : memref<2x!tpu.dma_semaphore, #tpu.memory_space<semaphore_mem>> -> memref<1x!tpu.dma_semaphore, #tpu.memory_space<semaphore_mem>>
    %467 = tpu.memref_squeeze %466 : memref<1x!tpu.dma_semaphore, #tpu.memory_space<semaphore_mem>> -> memref<!tpu.dma_semaphore, #tpu.memory_space<semaphore_mem>>
    tpu.enqueue_dma source(%arg13 : memref<128x128xbf16, #tpu.memory_space<any>>) target(%465 : memref<128x128xbf16, #tpu.memory_space<vmem>>) target_semaphore(%467 : memref<!tpu.dma_semaphore, #tpu.memory_space<semaphore_mem>>)
    %c0_i32_188 = arith.constant 0 : i32
    %c0_i32_189 = arith.constant 0 : i32
    %c0_i32_190 = arith.constant 0 : i32
    %468 = tpu.memref_slice %arg22[%c0_i32_189, %c0_i32_190] : memref<2048x512xbf16, #tpu.memory_space<vmem>> -> memref<256x128xbf16, #tpu.memory_space<vmem>>
    %469 = tpu.memref_slice %arg23[%c0_i32_188] : memref<2x!tpu.dma_semaphore, #tpu.memory_space<semaphore_mem>> -> memref<1x!tpu.dma_semaphore, #tpu.memory_space<semaphore_mem>>
    %470 = tpu.memref_squeeze %469 : memref<1x!tpu.dma_semaphore, #tpu.memory_space<semaphore_mem>> -> memref<!tpu.dma_semaphore, #tpu.memory_space<semaphore_mem>>
    tpu.wait_dma2 semaphore(%470 : memref<!tpu.dma_semaphore, #tpu.memory_space<semaphore_mem>>) src(%arg12 : memref<256x128xbf16, #tpu.memory_space<any>>) dst(%468 : memref<256x128xbf16, #tpu.memory_space<vmem>>)
    %c0_191 = arith.constant 0 : index
    %c0_192 = arith.constant 0 : index
    %471 = vector.load %arg22[%c0_191, %c0_192] : memref<2048x512xbf16, #tpu.memory_space<vmem>>, vector<256x128xbf16>
    %472 = arith.truncf %464 : vector<16x256xf32> to vector<16x256xbf16>
    %cst_193 = arith.constant dense<0.000000e+00> : vector<16x128xf32>
    %473 = tpu.matmul %472, %471, %cst_193 {dimension_numbers = #tpu.dot_dimension_numbers<[1], [0], [0], [1], [0, 0, 1, 1], [], []>} : vector<16x256xbf16>, vector<256x128xbf16>, vector<16x128xf32> -> vector<16x128xf32>
    %cst_194 = arith.constant dense<0.000000e+00> : vector<16x128xf32>
    %474 = tpu.matmul %17, %473, %cst_194 {dimension_numbers = #tpu.dot_dimension_numbers<[1], [0], [0], [1], [0, 0, 1, 1], [], []>} : vector<16x16xf32>, vector<16x128xf32>, vector<16x128xf32> -> vector<16x128xf32>
    %cst_195 = arith.constant dense<0.000000e+00> : vector<16xf32>
    %475 = vector.multi_reduction <add>, %474, %cst_195 [1] : vector<16x128xf32> to vector<16xf32>
    %476 = vector.shape_cast %475 : vector<16xf32> to vector<16x1xf32>
    %477 = arith.mulf %474, %474 : vector<16x128xf32>
    %cst_196 = arith.constant dense<0.000000e+00> : vector<16xf32>
    %478 = vector.multi_reduction <add>, %477, %cst_196 [1] : vector<16x128xf32> to vector<16xf32>
    %479 = vector.shape_cast %478 : vector<16xf32> to vector<16x1xf32>
    %480 = vector.extract_strided_slice %476 {offsets = [0, 0], sizes = [8, 1], strides = [1, 1]} : vector<16x1xf32> to vector<8x1xf32>
    %481 = vector.extract_strided_slice %479 {offsets = [0, 0], sizes = [8, 1], strides = [1, 1]} : vector<16x1xf32> to vector<8x1xf32>
    %482 = vector.extract_strided_slice %476 {offsets = [8, 0], sizes = [8, 1], strides = [1, 1]} : vector<16x1xf32> to vector<8x1xf32>
    %483 = arith.addf %480, %482 : vector<8x1xf32>
    %484 = vector.extract_strided_slice %479 {offsets = [8, 0], sizes = [8, 1], strides = [1, 1]} : vector<16x1xf32> to vector<8x1xf32>
    %485 = arith.addf %481, %484 : vector<8x1xf32>
    %cst_197 = arith.constant 3.906250e-03 : f32
    %486 = vector.broadcast %cst_197 : f32 to vector<8x1xf32>
    %487 = arith.mulf %483, %486 : vector<8x1xf32>
    %cst_198 = arith.constant 3.906250e-03 : f32
    %488 = vector.broadcast %cst_198 : f32 to vector<8x1xf32>
    %489 = arith.mulf %485, %488 : vector<8x1xf32>
    %490 = arith.mulf %487, %487 : vector<8x1xf32>
    %491 = arith.subf %489, %490 : vector<8x1xf32>
    %cst_199 = arith.constant 0.000000e+00 : f32
    %492 = vector.broadcast %cst_199 : f32 to vector<8x1xf32>
    %493 = arith.maximumf %491, %492 : vector<8x1xf32>
    %494 = vector.extract_strided_slice %18 {offsets = [0, 8], sizes = [8, 1], strides = [1, 1]} : vector<8x16xf32> to vector<8x1xf32>
    %495 = vector.extract_strided_slice %19 {offsets = [0, 8], sizes = [8, 1], strides = [1, 1]} : vector<8x16xf32> to vector<8x1xf32>
    %cst_200 = arith.constant 9.99999974E-6 : f32
    %496 = vector.broadcast %cst_200 : f32 to vector<8x1xf32>
    %497 = arith.addf %493, %496 : vector<8x1xf32>
    %498 = math.rsqrt %497 : vector<8x1xf32>
    %499 = arith.mulf %494, %498 : vector<8x1xf32>
    %500 = arith.mulf %487, %499 : vector<8x1xf32>
    %501 = arith.subf %495, %500 : vector<8x1xf32>
    %502 = tpu.concatenate %499, %499 in 0 : vector<8x1xf32>, vector<8x1xf32> -> vector<16x1xf32>
    %503 = tpu.concatenate %501, %501 in 0 : vector<8x1xf32>, vector<8x1xf32> -> vector<16x1xf32>
    %504 = vector.broadcast %502 : vector<16x1xf32> to vector<16x128xf32>
    %505 = arith.mulf %474, %504 : vector<16x128xf32>
    %506 = vector.broadcast %503 : vector<16x1xf32> to vector<16x128xf32>
    %507 = arith.addf %505, %506 : vector<16x128xf32>
    %cst_201 = arith.constant 0.000000e+00 : f32
    %508 = vector.broadcast %cst_201 : f32 to vector<16x128xf32>
    %509 = arith.maximumf %507, %508 : vector<16x128xf32>
    %510 = math.absf %507 : vector<16x128xf32>
    %cst_202 = arith.constant 0.000000e+00 : f32
    %511 = vector.broadcast %cst_202 : f32 to vector<16x128xf32>
    %512 = arith.subf %511, %510 : vector<16x128xf32>
    %513 = math.exp %512 : vector<16x128xf32>
    %514 = math.log1p %513 : vector<16x128xf32>
    %515 = arith.addf %509, %514 : vector<16x128xf32>
    %c0_i32_203 = arith.constant 0 : i32
    %c0_i32_204 = arith.constant 0 : i32
    %c0_i32_205 = arith.constant 0 : i32
    %516 = tpu.memref_slice %arg22[%c0_i32_204, %c0_i32_205] : memref<2048x512xbf16, #tpu.memory_space<vmem>> -> memref<128x128xbf16, #tpu.memory_space<vmem>>
    %517 = tpu.memref_slice %arg23[%c0_i32_203] : memref<2x!tpu.dma_semaphore, #tpu.memory_space<semaphore_mem>> -> memref<1x!tpu.dma_semaphore, #tpu.memory_space<semaphore_mem>>
    %518 = tpu.memref_squeeze %517 : memref<1x!tpu.dma_semaphore, #tpu.memory_space<semaphore_mem>> -> memref<!tpu.dma_semaphore, #tpu.memory_space<semaphore_mem>>
    tpu.enqueue_dma source(%arg14 : memref<128x128xbf16, #tpu.memory_space<any>>) target(%516 : memref<128x128xbf16, #tpu.memory_space<vmem>>) target_semaphore(%518 : memref<!tpu.dma_semaphore, #tpu.memory_space<semaphore_mem>>)
    %c1_i32_206 = arith.constant 1 : i32
    %c1024_i32_207 = arith.constant 1024 : i32
    %c0_i32_208 = arith.constant 0 : i32
    %519 = tpu.memref_slice %arg22[%c1024_i32_207, %c0_i32_208] : memref<2048x512xbf16, #tpu.memory_space<vmem>> -> memref<128x128xbf16, #tpu.memory_space<vmem>>
    %520 = tpu.memref_slice %arg23[%c1_i32_206] : memref<2x!tpu.dma_semaphore, #tpu.memory_space<semaphore_mem>> -> memref<1x!tpu.dma_semaphore, #tpu.memory_space<semaphore_mem>>
    %521 = tpu.memref_squeeze %520 : memref<1x!tpu.dma_semaphore, #tpu.memory_space<semaphore_mem>> -> memref<!tpu.dma_semaphore, #tpu.memory_space<semaphore_mem>>
    tpu.wait_dma2 semaphore(%521 : memref<!tpu.dma_semaphore, #tpu.memory_space<semaphore_mem>>) src(%arg13 : memref<128x128xbf16, #tpu.memory_space<any>>) dst(%519 : memref<128x128xbf16, #tpu.memory_space<vmem>>)
    %c1024_209 = arith.constant 1024 : index
    %c0_210 = arith.constant 0 : index
    %522 = vector.load %arg22[%c1024_209, %c0_210] : memref<2048x512xbf16, #tpu.memory_space<vmem>>, vector<128x128xbf16>
    %523 = arith.truncf %515 : vector<16x128xf32> to vector<16x128xbf16>
    %cst_211 = arith.constant dense<0.000000e+00> : vector<16x128xf32>
    %524 = tpu.matmul %523, %522, %cst_211 {dimension_numbers = #tpu.dot_dimension_numbers<[1], [0], [0], [1], [0, 0, 1, 1], [], []>} : vector<16x128xbf16>, vector<128x128xbf16>, vector<16x128xf32> -> vector<16x128xf32>
    %cst_212 = arith.constant dense<0.000000e+00> : vector<16x128xf32>
    %525 = tpu.matmul %17, %524, %cst_212 {dimension_numbers = #tpu.dot_dimension_numbers<[1], [0], [0], [1], [0, 0, 1, 1], [], []>} : vector<16x16xf32>, vector<16x128xf32>, vector<16x128xf32> -> vector<16x128xf32>
    %cst_213 = arith.constant dense<0.000000e+00> : vector<16xf32>
    %526 = vector.multi_reduction <add>, %525, %cst_213 [1] : vector<16x128xf32> to vector<16xf32>
    %527 = vector.shape_cast %526 : vector<16xf32> to vector<16x1xf32>
    %528 = arith.mulf %525, %525 : vector<16x128xf32>
    %cst_214 = arith.constant dense<0.000000e+00> : vector<16xf32>
    %529 = vector.multi_reduction <add>, %528, %cst_214 [1] : vector<16x128xf32> to vector<16xf32>
    %530 = vector.shape_cast %529 : vector<16xf32> to vector<16x1xf32>
    %531 = vector.extract_strided_slice %527 {offsets = [0, 0], sizes = [8, 1], strides = [1, 1]} : vector<16x1xf32> to vector<8x1xf32>
    %532 = vector.extract_strided_slice %530 {offsets = [0, 0], sizes = [8, 1], strides = [1, 1]} : vector<16x1xf32> to vector<8x1xf32>
    %533 = vector.extract_strided_slice %527 {offsets = [8, 0], sizes = [8, 1], strides = [1, 1]} : vector<16x1xf32> to vector<8x1xf32>
    %534 = arith.addf %531, %533 : vector<8x1xf32>
    %535 = vector.extract_strided_slice %530 {offsets = [8, 0], sizes = [8, 1], strides = [1, 1]} : vector<16x1xf32> to vector<8x1xf32>
    %536 = arith.addf %532, %535 : vector<8x1xf32>
    %cst_215 = arith.constant 3.906250e-03 : f32
    %537 = vector.broadcast %cst_215 : f32 to vector<8x1xf32>
    %538 = arith.mulf %534, %537 : vector<8x1xf32>
    %cst_216 = arith.constant 3.906250e-03 : f32
    %539 = vector.broadcast %cst_216 : f32 to vector<8x1xf32>
    %540 = arith.mulf %536, %539 : vector<8x1xf32>
    %541 = arith.mulf %538, %538 : vector<8x1xf32>
    %542 = arith.subf %540, %541 : vector<8x1xf32>
    %cst_217 = arith.constant 0.000000e+00 : f32
    %543 = vector.broadcast %cst_217 : f32 to vector<8x1xf32>
    %544 = arith.maximumf %542, %543 : vector<8x1xf32>
    %545 = vector.extract_strided_slice %18 {offsets = [0, 9], sizes = [8, 1], strides = [1, 1]} : vector<8x16xf32> to vector<8x1xf32>
    %546 = vector.extract_strided_slice %19 {offsets = [0, 9], sizes = [8, 1], strides = [1, 1]} : vector<8x16xf32> to vector<8x1xf32>
    %cst_218 = arith.constant 9.99999974E-6 : f32
    %547 = vector.broadcast %cst_218 : f32 to vector<8x1xf32>
    %548 = arith.addf %544, %547 : vector<8x1xf32>
    %549 = math.rsqrt %548 : vector<8x1xf32>
    %550 = arith.mulf %545, %549 : vector<8x1xf32>
    %551 = arith.mulf %538, %550 : vector<8x1xf32>
    %552 = arith.subf %546, %551 : vector<8x1xf32>
    %553 = tpu.concatenate %550, %550 in 0 : vector<8x1xf32>, vector<8x1xf32> -> vector<16x1xf32>
    %554 = tpu.concatenate %552, %552 in 0 : vector<8x1xf32>, vector<8x1xf32> -> vector<16x1xf32>
    %555 = vector.broadcast %553 : vector<16x1xf32> to vector<16x128xf32>
    %556 = arith.mulf %525, %555 : vector<16x128xf32>
    %557 = vector.broadcast %554 : vector<16x1xf32> to vector<16x128xf32>
    %558 = arith.addf %556, %557 : vector<16x128xf32>
    %559 = arith.addf %558, %515 : vector<16x128xf32>
    %cst_219 = arith.constant 0.000000e+00 : f32
    %560 = vector.broadcast %cst_219 : f32 to vector<16x128xf32>
    %561 = arith.maximumf %559, %560 : vector<16x128xf32>
    %562 = math.absf %559 : vector<16x128xf32>
    %cst_220 = arith.constant 0.000000e+00 : f32
    %563 = vector.broadcast %cst_220 : f32 to vector<16x128xf32>
    %564 = arith.subf %563, %562 : vector<16x128xf32>
    %565 = math.exp %564 : vector<16x128xf32>
    %566 = math.log1p %565 : vector<16x128xf32>
    %567 = arith.addf %561, %566 : vector<16x128xf32>
    %c1_i32_221 = arith.constant 1 : i32
    %c1024_i32_222 = arith.constant 1024 : i32
    %c0_i32_223 = arith.constant 0 : i32
    %568 = tpu.memref_slice %arg22[%c1024_i32_222, %c0_i32_223] : memref<2048x512xbf16, #tpu.memory_space<vmem>> -> memref<128x128xbf16, #tpu.memory_space<vmem>>
    %569 = tpu.memref_slice %arg23[%c1_i32_221] : memref<2x!tpu.dma_semaphore, #tpu.memory_space<semaphore_mem>> -> memref<1x!tpu.dma_semaphore, #tpu.memory_space<semaphore_mem>>
    %570 = tpu.memref_squeeze %569 : memref<1x!tpu.dma_semaphore, #tpu.memory_space<semaphore_mem>> -> memref<!tpu.dma_semaphore, #tpu.memory_space<semaphore_mem>>
    tpu.enqueue_dma source(%arg15 : memref<128x128xbf16, #tpu.memory_space<any>>) target(%568 : memref<128x128xbf16, #tpu.memory_space<vmem>>) target_semaphore(%570 : memref<!tpu.dma_semaphore, #tpu.memory_space<semaphore_mem>>)
    %c0_i32_224 = arith.constant 0 : i32
    %c0_i32_225 = arith.constant 0 : i32
    %c0_i32_226 = arith.constant 0 : i32
    %571 = tpu.memref_slice %arg22[%c0_i32_225, %c0_i32_226] : memref<2048x512xbf16, #tpu.memory_space<vmem>> -> memref<128x128xbf16, #tpu.memory_space<vmem>>
    %572 = tpu.memref_slice %arg23[%c0_i32_224] : memref<2x!tpu.dma_semaphore, #tpu.memory_space<semaphore_mem>> -> memref<1x!tpu.dma_semaphore, #tpu.memory_space<semaphore_mem>>
    %573 = tpu.memref_squeeze %572 : memref<1x!tpu.dma_semaphore, #tpu.memory_space<semaphore_mem>> -> memref<!tpu.dma_semaphore, #tpu.memory_space<semaphore_mem>>
    tpu.wait_dma2 semaphore(%573 : memref<!tpu.dma_semaphore, #tpu.memory_space<semaphore_mem>>) src(%arg14 : memref<128x128xbf16, #tpu.memory_space<any>>) dst(%571 : memref<128x128xbf16, #tpu.memory_space<vmem>>)
    %c0_227 = arith.constant 0 : index
    %c0_228 = arith.constant 0 : index
    %574 = vector.load %arg22[%c0_227, %c0_228] : memref<2048x512xbf16, #tpu.memory_space<vmem>>, vector<128x128xbf16>
    %575 = arith.truncf %567 : vector<16x128xf32> to vector<16x128xbf16>
    %cst_229 = arith.constant dense<0.000000e+00> : vector<16x128xf32>
    %576 = tpu.matmul %575, %574, %cst_229 {dimension_numbers = #tpu.dot_dimension_numbers<[1], [0], [0], [1], [0, 0, 1, 1], [], []>} : vector<16x128xbf16>, vector<128x128xbf16>, vector<16x128xf32> -> vector<16x128xf32>
    %cst_230 = arith.constant dense<0.000000e+00> : vector<16x128xf32>
    %577 = tpu.matmul %17, %576, %cst_230 {dimension_numbers = #tpu.dot_dimension_numbers<[1], [0], [0], [1], [0, 0, 1, 1], [], []>} : vector<16x16xf32>, vector<16x128xf32>, vector<16x128xf32> -> vector<16x128xf32>
    %cst_231 = arith.constant dense<0.000000e+00> : vector<16xf32>
    %578 = vector.multi_reduction <add>, %577, %cst_231 [1] : vector<16x128xf32> to vector<16xf32>
    %579 = vector.shape_cast %578 : vector<16xf32> to vector<16x1xf32>
    %580 = arith.mulf %577, %577 : vector<16x128xf32>
    %cst_232 = arith.constant dense<0.000000e+00> : vector<16xf32>
    %581 = vector.multi_reduction <add>, %580, %cst_232 [1] : vector<16x128xf32> to vector<16xf32>
    %582 = vector.shape_cast %581 : vector<16xf32> to vector<16x1xf32>
    %583 = vector.extract_strided_slice %579 {offsets = [0, 0], sizes = [8, 1], strides = [1, 1]} : vector<16x1xf32> to vector<8x1xf32>
    %584 = vector.extract_strided_slice %582 {offsets = [0, 0], sizes = [8, 1], strides = [1, 1]} : vector<16x1xf32> to vector<8x1xf32>
    %585 = vector.extract_strided_slice %579 {offsets = [8, 0], sizes = [8, 1], strides = [1, 1]} : vector<16x1xf32> to vector<8x1xf32>
    %586 = arith.addf %583, %585 : vector<8x1xf32>
    %587 = vector.extract_strided_slice %582 {offsets = [8, 0], sizes = [8, 1], strides = [1, 1]} : vector<16x1xf32> to vector<8x1xf32>
    %588 = arith.addf %584, %587 : vector<8x1xf32>
    %cst_233 = arith.constant 3.906250e-03 : f32
    %589 = vector.broadcast %cst_233 : f32 to vector<8x1xf32>
    %590 = arith.mulf %586, %589 : vector<8x1xf32>
    %cst_234 = arith.constant 3.906250e-03 : f32
    %591 = vector.broadcast %cst_234 : f32 to vector<8x1xf32>
    %592 = arith.mulf %588, %591 : vector<8x1xf32>
    %593 = arith.mulf %590, %590 : vector<8x1xf32>
    %594 = arith.subf %592, %593 : vector<8x1xf32>
    %cst_235 = arith.constant 0.000000e+00 : f32
    %595 = vector.broadcast %cst_235 : f32 to vector<8x1xf32>
    %596 = arith.maximumf %594, %595 : vector<8x1xf32>
    %597 = vector.extract_strided_slice %18 {offsets = [0, 10], sizes = [8, 1], strides = [1, 1]} : vector<8x16xf32> to vector<8x1xf32>
    %598 = vector.extract_strided_slice %19 {offsets = [0, 10], sizes = [8, 1], strides = [1, 1]} : vector<8x16xf32> to vector<8x1xf32>
    %cst_236 = arith.constant 9.99999974E-6 : f32
    %599 = vector.broadcast %cst_236 : f32 to vector<8x1xf32>
    %600 = arith.addf %596, %599 : vector<8x1xf32>
    %601 = math.rsqrt %600 : vector<8x1xf32>
    %602 = arith.mulf %597, %601 : vector<8x1xf32>
    %603 = arith.mulf %590, %602 : vector<8x1xf32>
    %604 = arith.subf %598, %603 : vector<8x1xf32>
    %605 = tpu.concatenate %602, %602 in 0 : vector<8x1xf32>, vector<8x1xf32> -> vector<16x1xf32>
    %606 = tpu.concatenate %604, %604 in 0 : vector<8x1xf32>, vector<8x1xf32> -> vector<16x1xf32>
    %607 = vector.broadcast %605 : vector<16x1xf32> to vector<16x128xf32>
    %608 = arith.mulf %577, %607 : vector<16x128xf32>
    %609 = vector.broadcast %606 : vector<16x1xf32> to vector<16x128xf32>
    %610 = arith.addf %608, %609 : vector<16x128xf32>
    %611 = arith.addf %610, %515 : vector<16x128xf32>
    %cst_237 = arith.constant 0.000000e+00 : f32
    %612 = vector.broadcast %cst_237 : f32 to vector<16x128xf32>
    %613 = arith.maximumf %611, %612 : vector<16x128xf32>
    %614 = math.absf %611 : vector<16x128xf32>
    %cst_238 = arith.constant 0.000000e+00 : f32
    %615 = vector.broadcast %cst_238 : f32 to vector<16x128xf32>
    %616 = arith.subf %615, %614 : vector<16x128xf32>
    %617 = math.exp %616 : vector<16x128xf32>
    %618 = math.log1p %617 : vector<16x128xf32>
    %619 = arith.addf %613, %618 : vector<16x128xf32>
    %c1_i32_239 = arith.constant 1 : i32
    %c1024_i32_240 = arith.constant 1024 : i32
    %c0_i32_241 = arith.constant 0 : i32
    %620 = tpu.memref_slice %arg22[%c1024_i32_240, %c0_i32_241] : memref<2048x512xbf16, #tpu.memory_space<vmem>> -> memref<128x128xbf16, #tpu.memory_space<vmem>>
    %621 = tpu.memref_slice %arg23[%c1_i32_239] : memref<2x!tpu.dma_semaphore, #tpu.memory_space<semaphore_mem>> -> memref<1x!tpu.dma_semaphore, #tpu.memory_space<semaphore_mem>>
    %622 = tpu.memref_squeeze %621 : memref<1x!tpu.dma_semaphore, #tpu.memory_space<semaphore_mem>> -> memref<!tpu.dma_semaphore, #tpu.memory_space<semaphore_mem>>
    tpu.wait_dma2 semaphore(%622 : memref<!tpu.dma_semaphore, #tpu.memory_space<semaphore_mem>>) src(%arg15 : memref<128x128xbf16, #tpu.memory_space<any>>) dst(%620 : memref<128x128xbf16, #tpu.memory_space<vmem>>)
    %c1024_242 = arith.constant 1024 : index
    %c0_243 = arith.constant 0 : index
    %623 = vector.load %arg22[%c1024_242, %c0_243] : memref<2048x512xbf16, #tpu.memory_space<vmem>>, vector<128x128xbf16>
    %624 = arith.truncf %619 : vector<16x128xf32> to vector<16x128xbf16>
    %cst_244 = arith.constant dense<0.000000e+00> : vector<16x128xf32>
    %625 = tpu.matmul %624, %623, %cst_244 {dimension_numbers = #tpu.dot_dimension_numbers<[1], [0], [0], [1], [0, 0, 1, 1], [], []>} : vector<16x128xbf16>, vector<128x128xbf16>, vector<16x128xf32> -> vector<16x128xf32>
    %cst_245 = arith.constant dense<0.000000e+00> : vector<16x128xf32>
    %626 = tpu.matmul %17, %625, %cst_245 {dimension_numbers = #tpu.dot_dimension_numbers<[1], [0], [0], [1], [0, 0, 1, 1], [], []>} : vector<16x16xf32>, vector<16x128xf32>, vector<16x128xf32> -> vector<16x128xf32>
    %cst_246 = arith.constant dense<0.000000e+00> : vector<16xf32>
    %627 = vector.multi_reduction <add>, %626, %cst_246 [1] : vector<16x128xf32> to vector<16xf32>
    %628 = vector.shape_cast %627 : vector<16xf32> to vector<16x1xf32>
    %629 = arith.mulf %626, %626 : vector<16x128xf32>
    %cst_247 = arith.constant dense<0.000000e+00> : vector<16xf32>
    %630 = vector.multi_reduction <add>, %629, %cst_247 [1] : vector<16x128xf32> to vector<16xf32>
    %631 = vector.shape_cast %630 : vector<16xf32> to vector<16x1xf32>
    %632 = vector.extract_strided_slice %628 {offsets = [0, 0], sizes = [8, 1], strides = [1, 1]} : vector<16x1xf32> to vector<8x1xf32>
    %633 = vector.extract_strided_slice %631 {offsets = [0, 0], sizes = [8, 1], strides = [1, 1]} : vector<16x1xf32> to vector<8x1xf32>
    %634 = vector.extract_strided_slice %628 {offsets = [8, 0], sizes = [8, 1], strides = [1, 1]} : vector<16x1xf32> to vector<8x1xf32>
    %635 = arith.addf %632, %634 : vector<8x1xf32>
    %636 = vector.extract_strided_slice %631 {offsets = [8, 0], sizes = [8, 1], strides = [1, 1]} : vector<16x1xf32> to vector<8x1xf32>
    %637 = arith.addf %633, %636 : vector<8x1xf32>
    %cst_248 = arith.constant 3.906250e-03 : f32
    %638 = vector.broadcast %cst_248 : f32 to vector<8x1xf32>
    %639 = arith.mulf %635, %638 : vector<8x1xf32>
    %cst_249 = arith.constant 3.906250e-03 : f32
    %640 = vector.broadcast %cst_249 : f32 to vector<8x1xf32>
    %641 = arith.mulf %637, %640 : vector<8x1xf32>
    %642 = arith.mulf %639, %639 : vector<8x1xf32>
    %643 = arith.subf %641, %642 : vector<8x1xf32>
    %cst_250 = arith.constant 0.000000e+00 : f32
    %644 = vector.broadcast %cst_250 : f32 to vector<8x1xf32>
    %645 = arith.maximumf %643, %644 : vector<8x1xf32>
    %646 = vector.extract_strided_slice %18 {offsets = [0, 11], sizes = [8, 1], strides = [1, 1]} : vector<8x16xf32> to vector<8x1xf32>
    %647 = vector.extract_strided_slice %19 {offsets = [0, 11], sizes = [8, 1], strides = [1, 1]} : vector<8x16xf32> to vector<8x1xf32>
    %cst_251 = arith.constant 9.99999974E-6 : f32
    %648 = vector.broadcast %cst_251 : f32 to vector<8x1xf32>
    %649 = arith.addf %645, %648 : vector<8x1xf32>
    %650 = math.rsqrt %649 : vector<8x1xf32>
    %651 = arith.mulf %646, %650 : vector<8x1xf32>
    %652 = arith.mulf %639, %651 : vector<8x1xf32>
    %653 = arith.subf %647, %652 : vector<8x1xf32>
    %654 = tpu.concatenate %651, %651 in 0 : vector<8x1xf32>, vector<8x1xf32> -> vector<16x1xf32>
    %655 = tpu.concatenate %653, %653 in 0 : vector<8x1xf32>, vector<8x1xf32> -> vector<16x1xf32>
    %656 = vector.broadcast %654 : vector<16x1xf32> to vector<16x128xf32>
    %657 = arith.mulf %626, %656 : vector<16x128xf32>
    %658 = vector.broadcast %655 : vector<16x1xf32> to vector<16x128xf32>
    %659 = arith.addf %657, %658 : vector<16x128xf32>
    %660 = arith.addf %659, %515 : vector<16x128xf32>
    %cst_252 = arith.constant 0.000000e+00 : f32
    %661 = vector.broadcast %cst_252 : f32 to vector<16x128xf32>
    %662 = arith.maximumf %660, %661 : vector<16x128xf32>
    %663 = math.absf %660 : vector<16x128xf32>
    %cst_253 = arith.constant 0.000000e+00 : f32
    %664 = vector.broadcast %cst_253 : f32 to vector<16x128xf32>
    %665 = arith.subf %664, %663 : vector<16x128xf32>
    %666 = math.exp %665 : vector<16x128xf32>
    %667 = math.log1p %666 : vector<16x128xf32>
    %668 = arith.addf %662, %667 : vector<16x128xf32>
    %c0_254 = arith.constant 0 : index
    %c0_255 = arith.constant 0 : index
    %669 = vector.load %arg16[%c0_254, %c0_255] : memref<128x32xf32, #tpu.memory_space<vmem>>, vector<128x32xf32>
    %cst_256 = arith.constant dense<0.000000e+00> : vector<16x32xf32>
    %670 = tpu.matmul %668, %669, %cst_256 {dimension_numbers = #tpu.dot_dimension_numbers<[1], [0], [0], [1], [0, 0, 1, 1], [], []>} : vector<16x128xf32>, vector<128x32xf32>, vector<16x32xf32> -> vector<16x32xf32>
    %cst_257 = arith.constant dense<0.000000e+00> : vector<16x32xf32>
    %671 = tpu.matmul %17, %670, %cst_257 {dimension_numbers = #tpu.dot_dimension_numbers<[1], [0], [0], [1], [0, 0, 1, 1], [], []>} : vector<16x16xf32>, vector<16x32xf32>, vector<16x32xf32> -> vector<16x32xf32>
    %cst_258 = arith.constant dense<0.000000e+00> : vector<16xf32>
    %672 = vector.multi_reduction <add>, %671, %cst_258 [1] : vector<16x32xf32> to vector<16xf32>
    %673 = vector.shape_cast %672 : vector<16xf32> to vector<16x1xf32>
    %674 = arith.mulf %671, %671 : vector<16x32xf32>
    %cst_259 = arith.constant dense<0.000000e+00> : vector<16xf32>
    %675 = vector.multi_reduction <add>, %674, %cst_259 [1] : vector<16x32xf32> to vector<16xf32>
    %676 = vector.shape_cast %675 : vector<16xf32> to vector<16x1xf32>
    %677 = vector.extract_strided_slice %673 {offsets = [0, 0], sizes = [8, 1], strides = [1, 1]} : vector<16x1xf32> to vector<8x1xf32>
    %678 = vector.extract_strided_slice %676 {offsets = [0, 0], sizes = [8, 1], strides = [1, 1]} : vector<16x1xf32> to vector<8x1xf32>
    %679 = vector.extract_strided_slice %673 {offsets = [8, 0], sizes = [8, 1], strides = [1, 1]} : vector<16x1xf32> to vector<8x1xf32>
    %680 = arith.addf %677, %679 : vector<8x1xf32>
    %681 = vector.extract_strided_slice %676 {offsets = [8, 0], sizes = [8, 1], strides = [1, 1]} : vector<16x1xf32> to vector<8x1xf32>
    %682 = arith.addf %678, %681 : vector<8x1xf32>
    %cst_260 = arith.constant 1.562500e-02 : f32
    %683 = vector.broadcast %cst_260 : f32 to vector<8x1xf32>
    %684 = arith.mulf %680, %683 : vector<8x1xf32>
    %cst_261 = arith.constant 1.562500e-02 : f32
    %685 = vector.broadcast %cst_261 : f32 to vector<8x1xf32>
    %686 = arith.mulf %682, %685 : vector<8x1xf32>
    %687 = arith.mulf %684, %684 : vector<8x1xf32>
    %688 = arith.subf %686, %687 : vector<8x1xf32>
    %cst_262 = arith.constant 0.000000e+00 : f32
    %689 = vector.broadcast %cst_262 : f32 to vector<8x1xf32>
    %690 = arith.maximumf %688, %689 : vector<8x1xf32>
    %691 = vector.extract_strided_slice %18 {offsets = [0, 12], sizes = [8, 1], strides = [1, 1]} : vector<8x16xf32> to vector<8x1xf32>
    %692 = vector.extract_strided_slice %19 {offsets = [0, 12], sizes = [8, 1], strides = [1, 1]} : vector<8x16xf32> to vector<8x1xf32>
    %cst_263 = arith.constant 9.99999974E-6 : f32
    %693 = vector.broadcast %cst_263 : f32 to vector<8x1xf32>
    %694 = arith.addf %690, %693 : vector<8x1xf32>
    %695 = math.rsqrt %694 : vector<8x1xf32>
    %696 = arith.mulf %691, %695 : vector<8x1xf32>
    %697 = arith.mulf %684, %696 : vector<8x1xf32>
    %698 = arith.subf %692, %697 : vector<8x1xf32>
    %699 = tpu.concatenate %696, %696 in 0 : vector<8x1xf32>, vector<8x1xf32> -> vector<16x1xf32>
    %700 = tpu.concatenate %698, %698 in 0 : vector<8x1xf32>, vector<8x1xf32> -> vector<16x1xf32>
    %701 = vector.broadcast %699 : vector<16x1xf32> to vector<16x32xf32>
    %702 = arith.mulf %671, %701 : vector<16x32xf32>
    %703 = vector.broadcast %700 : vector<16x1xf32> to vector<16x32xf32>
    %704 = arith.addf %702, %703 : vector<16x32xf32>
    %cst_264 = arith.constant 0.000000e+00 : f32
    %705 = vector.broadcast %cst_264 : f32 to vector<16x32xf32>
    %706 = arith.maximumf %704, %705 : vector<16x32xf32>
    %707 = math.absf %704 : vector<16x32xf32>
    %cst_265 = arith.constant 0.000000e+00 : f32
    %708 = vector.broadcast %cst_265 : f32 to vector<16x32xf32>
    %709 = arith.subf %708, %707 : vector<16x32xf32>
    %710 = math.exp %709 : vector<16x32xf32>
    %711 = math.log1p %710 : vector<16x32xf32>
    %712 = arith.addf %706, %711 : vector<16x32xf32>
    %c0_266 = arith.constant 0 : index
    %c0_267 = arith.constant 0 : index
    %713 = vector.load %arg17[%c0_266, %c0_267] : memref<32x32xf32, #tpu.memory_space<vmem>>, vector<32x32xf32>
    %cst_268 = arith.constant dense<0.000000e+00> : vector<16x32xf32>
    %714 = tpu.matmul %712, %713, %cst_268 {dimension_numbers = #tpu.dot_dimension_numbers<[1], [0], [0], [1], [0, 0, 1, 1], [], []>} : vector<16x32xf32>, vector<32x32xf32>, vector<16x32xf32> -> vector<16x32xf32>
    %cst_269 = arith.constant dense<0.000000e+00> : vector<16x32xf32>
    %715 = tpu.matmul %17, %714, %cst_269 {dimension_numbers = #tpu.dot_dimension_numbers<[1], [0], [0], [1], [0, 0, 1, 1], [], []>} : vector<16x16xf32>, vector<16x32xf32>, vector<16x32xf32> -> vector<16x32xf32>
    %cst_270 = arith.constant dense<0.000000e+00> : vector<16xf32>
    %716 = vector.multi_reduction <add>, %715, %cst_270 [1] : vector<16x32xf32> to vector<16xf32>
    %717 = vector.shape_cast %716 : vector<16xf32> to vector<16x1xf32>
    %718 = arith.mulf %715, %715 : vector<16x32xf32>
    %cst_271 = arith.constant dense<0.000000e+00> : vector<16xf32>
    %719 = vector.multi_reduction <add>, %718, %cst_271 [1] : vector<16x32xf32> to vector<16xf32>
    %720 = vector.shape_cast %719 : vector<16xf32> to vector<16x1xf32>
    %721 = vector.extract_strided_slice %717 {offsets = [0, 0], sizes = [8, 1], strides = [1, 1]} : vector<16x1xf32> to vector<8x1xf32>
    %722 = vector.extract_strided_slice %720 {offsets = [0, 0], sizes = [8, 1], strides = [1, 1]} : vector<16x1xf32> to vector<8x1xf32>
    %723 = vector.extract_strided_slice %717 {offsets = [8, 0], sizes = [8, 1], strides = [1, 1]} : vector<16x1xf32> to vector<8x1xf32>
    %724 = arith.addf %721, %723 : vector<8x1xf32>
    %725 = vector.extract_strided_slice %720 {offsets = [8, 0], sizes = [8, 1], strides = [1, 1]} : vector<16x1xf32> to vector<8x1xf32>
    %726 = arith.addf %722, %725 : vector<8x1xf32>
    %cst_272 = arith.constant 1.562500e-02 : f32
    %727 = vector.broadcast %cst_272 : f32 to vector<8x1xf32>
    %728 = arith.mulf %724, %727 : vector<8x1xf32>
    %cst_273 = arith.constant 1.562500e-02 : f32
    %729 = vector.broadcast %cst_273 : f32 to vector<8x1xf32>
    %730 = arith.mulf %726, %729 : vector<8x1xf32>
    %731 = arith.mulf %728, %728 : vector<8x1xf32>
    %732 = arith.subf %730, %731 : vector<8x1xf32>
    %cst_274 = arith.constant 0.000000e+00 : f32
    %733 = vector.broadcast %cst_274 : f32 to vector<8x1xf32>
    %734 = arith.maximumf %732, %733 : vector<8x1xf32>
    %735 = vector.extract_strided_slice %18 {offsets = [0, 13], sizes = [8, 1], strides = [1, 1]} : vector<8x16xf32> to vector<8x1xf32>
    %736 = vector.extract_strided_slice %19 {offsets = [0, 13], sizes = [8, 1], strides = [1, 1]} : vector<8x16xf32> to vector<8x1xf32>
    %cst_275 = arith.constant 9.99999974E-6 : f32
    %737 = vector.broadcast %cst_275 : f32 to vector<8x1xf32>
    %738 = arith.addf %734, %737 : vector<8x1xf32>
    %739 = math.rsqrt %738 : vector<8x1xf32>
    %740 = arith.mulf %735, %739 : vector<8x1xf32>
    %741 = arith.mulf %728, %740 : vector<8x1xf32>
    %742 = arith.subf %736, %741 : vector<8x1xf32>
    %743 = tpu.concatenate %740, %740 in 0 : vector<8x1xf32>, vector<8x1xf32> -> vector<16x1xf32>
    %744 = tpu.concatenate %742, %742 in 0 : vector<8x1xf32>, vector<8x1xf32> -> vector<16x1xf32>
    %745 = vector.broadcast %743 : vector<16x1xf32> to vector<16x32xf32>
    %746 = arith.mulf %715, %745 : vector<16x32xf32>
    %747 = vector.broadcast %744 : vector<16x1xf32> to vector<16x32xf32>
    %748 = arith.addf %746, %747 : vector<16x32xf32>
    %749 = arith.addf %748, %712 : vector<16x32xf32>
    %cst_276 = arith.constant 0.000000e+00 : f32
    %750 = vector.broadcast %cst_276 : f32 to vector<16x32xf32>
    %751 = arith.maximumf %749, %750 : vector<16x32xf32>
    %752 = math.absf %749 : vector<16x32xf32>
    %cst_277 = arith.constant 0.000000e+00 : f32
    %753 = vector.broadcast %cst_277 : f32 to vector<16x32xf32>
    %754 = arith.subf %753, %752 : vector<16x32xf32>
    %755 = math.exp %754 : vector<16x32xf32>
    %756 = math.log1p %755 : vector<16x32xf32>
    %757 = arith.addf %751, %756 : vector<16x32xf32>
    %c0_278 = arith.constant 0 : index
    %c0_279 = arith.constant 0 : index
    %758 = vector.load %arg18[%c0_278, %c0_279] : memref<32x32xf32, #tpu.memory_space<vmem>>, vector<32x32xf32>
    %cst_280 = arith.constant dense<0.000000e+00> : vector<16x32xf32>
    %759 = tpu.matmul %757, %758, %cst_280 {dimension_numbers = #tpu.dot_dimension_numbers<[1], [0], [0], [1], [0, 0, 1, 1], [], []>} : vector<16x32xf32>, vector<32x32xf32>, vector<16x32xf32> -> vector<16x32xf32>
    %cst_281 = arith.constant dense<0.000000e+00> : vector<16x32xf32>
    %760 = tpu.matmul %17, %759, %cst_281 {dimension_numbers = #tpu.dot_dimension_numbers<[1], [0], [0], [1], [0, 0, 1, 1], [], []>} : vector<16x16xf32>, vector<16x32xf32>, vector<16x32xf32> -> vector<16x32xf32>
    %cst_282 = arith.constant dense<0.000000e+00> : vector<16xf32>
    %761 = vector.multi_reduction <add>, %760, %cst_282 [1] : vector<16x32xf32> to vector<16xf32>
    %762 = vector.shape_cast %761 : vector<16xf32> to vector<16x1xf32>
    %763 = arith.mulf %760, %760 : vector<16x32xf32>
    %cst_283 = arith.constant dense<0.000000e+00> : vector<16xf32>
    %764 = vector.multi_reduction <add>, %763, %cst_283 [1] : vector<16x32xf32> to vector<16xf32>
    %765 = vector.shape_cast %764 : vector<16xf32> to vector<16x1xf32>
    %766 = vector.extract_strided_slice %762 {offsets = [0, 0], sizes = [8, 1], strides = [1, 1]} : vector<16x1xf32> to vector<8x1xf32>
    %767 = vector.extract_strided_slice %765 {offsets = [0, 0], sizes = [8, 1], strides = [1, 1]} : vector<16x1xf32> to vector<8x1xf32>
    %768 = vector.extract_strided_slice %762 {offsets = [8, 0], sizes = [8, 1], strides = [1, 1]} : vector<16x1xf32> to vector<8x1xf32>
    %769 = arith.addf %766, %768 : vector<8x1xf32>
    %770 = vector.extract_strided_slice %765 {offsets = [8, 0], sizes = [8, 1], strides = [1, 1]} : vector<16x1xf32> to vector<8x1xf32>
    %771 = arith.addf %767, %770 : vector<8x1xf32>
    %cst_284 = arith.constant 1.562500e-02 : f32
    %772 = vector.broadcast %cst_284 : f32 to vector<8x1xf32>
    %773 = arith.mulf %769, %772 : vector<8x1xf32>
    %cst_285 = arith.constant 1.562500e-02 : f32
    %774 = vector.broadcast %cst_285 : f32 to vector<8x1xf32>
    %775 = arith.mulf %771, %774 : vector<8x1xf32>
    %776 = arith.mulf %773, %773 : vector<8x1xf32>
    %777 = arith.subf %775, %776 : vector<8x1xf32>
    %cst_286 = arith.constant 0.000000e+00 : f32
    %778 = vector.broadcast %cst_286 : f32 to vector<8x1xf32>
    %779 = arith.maximumf %777, %778 : vector<8x1xf32>
    %780 = vector.extract_strided_slice %18 {offsets = [0, 14], sizes = [8, 1], strides = [1, 1]} : vector<8x16xf32> to vector<8x1xf32>
    %781 = vector.extract_strided_slice %19 {offsets = [0, 14], sizes = [8, 1], strides = [1, 1]} : vector<8x16xf32> to vector<8x1xf32>
    %cst_287 = arith.constant 9.99999974E-6 : f32
    %782 = vector.broadcast %cst_287 : f32 to vector<8x1xf32>
    %783 = arith.addf %779, %782 : vector<8x1xf32>
    %784 = math.rsqrt %783 : vector<8x1xf32>
    %785 = arith.mulf %780, %784 : vector<8x1xf32>
    %786 = arith.mulf %773, %785 : vector<8x1xf32>
    %787 = arith.subf %781, %786 : vector<8x1xf32>
    %788 = tpu.concatenate %785, %785 in 0 : vector<8x1xf32>, vector<8x1xf32> -> vector<16x1xf32>
    %789 = tpu.concatenate %787, %787 in 0 : vector<8x1xf32>, vector<8x1xf32> -> vector<16x1xf32>
    %790 = vector.broadcast %788 : vector<16x1xf32> to vector<16x32xf32>
    %791 = arith.mulf %760, %790 : vector<16x32xf32>
    %792 = vector.broadcast %789 : vector<16x1xf32> to vector<16x32xf32>
    %793 = arith.addf %791, %792 : vector<16x32xf32>
    %794 = arith.addf %793, %712 : vector<16x32xf32>
    %cst_288 = arith.constant 0.000000e+00 : f32
    %795 = vector.broadcast %cst_288 : f32 to vector<16x32xf32>
    %796 = arith.maximumf %794, %795 : vector<16x32xf32>
    %797 = math.absf %794 : vector<16x32xf32>
    %cst_289 = arith.constant 0.000000e+00 : f32
    %798 = vector.broadcast %cst_289 : f32 to vector<16x32xf32>
    %799 = arith.subf %798, %797 : vector<16x32xf32>
    %800 = math.exp %799 : vector<16x32xf32>
    %801 = math.log1p %800 : vector<16x32xf32>
    %802 = arith.addf %796, %801 : vector<16x32xf32>
    %c0_290 = arith.constant 0 : index
    %c0_291 = arith.constant 0 : index
    %803 = vector.load %arg19[%c0_290, %c0_291] : memref<32x32xf32, #tpu.memory_space<vmem>>, vector<32x32xf32>
    %cst_292 = arith.constant dense<0.000000e+00> : vector<16x32xf32>
    %804 = tpu.matmul %802, %803, %cst_292 {dimension_numbers = #tpu.dot_dimension_numbers<[1], [0], [0], [1], [0, 0, 1, 1], [], []>} : vector<16x32xf32>, vector<32x32xf32>, vector<16x32xf32> -> vector<16x32xf32>
    %cst_293 = arith.constant dense<0.000000e+00> : vector<16x32xf32>
    %805 = tpu.matmul %17, %804, %cst_293 {dimension_numbers = #tpu.dot_dimension_numbers<[1], [0], [0], [1], [0, 0, 1, 1], [], []>} : vector<16x16xf32>, vector<16x32xf32>, vector<16x32xf32> -> vector<16x32xf32>
    %cst_294 = arith.constant dense<0.000000e+00> : vector<16xf32>
    %806 = vector.multi_reduction <add>, %805, %cst_294 [1] : vector<16x32xf32> to vector<16xf32>
    %807 = vector.shape_cast %806 : vector<16xf32> to vector<16x1xf32>
    %808 = arith.mulf %805, %805 : vector<16x32xf32>
    %cst_295 = arith.constant dense<0.000000e+00> : vector<16xf32>
    %809 = vector.multi_reduction <add>, %808, %cst_295 [1] : vector<16x32xf32> to vector<16xf32>
    %810 = vector.shape_cast %809 : vector<16xf32> to vector<16x1xf32>
    %811 = vector.extract_strided_slice %807 {offsets = [0, 0], sizes = [8, 1], strides = [1, 1]} : vector<16x1xf32> to vector<8x1xf32>
    %812 = vector.extract_strided_slice %810 {offsets = [0, 0], sizes = [8, 1], strides = [1, 1]} : vector<16x1xf32> to vector<8x1xf32>
    %813 = vector.extract_strided_slice %807 {offsets = [8, 0], sizes = [8, 1], strides = [1, 1]} : vector<16x1xf32> to vector<8x1xf32>
    %814 = arith.addf %811, %813 : vector<8x1xf32>
    %815 = vector.extract_strided_slice %810 {offsets = [8, 0], sizes = [8, 1], strides = [1, 1]} : vector<16x1xf32> to vector<8x1xf32>
    %816 = arith.addf %812, %815 : vector<8x1xf32>
    %cst_296 = arith.constant 1.562500e-02 : f32
    %817 = vector.broadcast %cst_296 : f32 to vector<8x1xf32>
    %818 = arith.mulf %814, %817 : vector<8x1xf32>
    %cst_297 = arith.constant 1.562500e-02 : f32
    %819 = vector.broadcast %cst_297 : f32 to vector<8x1xf32>
    %820 = arith.mulf %816, %819 : vector<8x1xf32>
    %821 = arith.mulf %818, %818 : vector<8x1xf32>
    %822 = arith.subf %820, %821 : vector<8x1xf32>
    %cst_298 = arith.constant 0.000000e+00 : f32
    %823 = vector.broadcast %cst_298 : f32 to vector<8x1xf32>
    %824 = arith.maximumf %822, %823 : vector<8x1xf32>
    %825 = vector.extract_strided_slice %18 {offsets = [0, 15], sizes = [8, 1], strides = [1, 1]} : vector<8x16xf32> to vector<8x1xf32>
    %826 = vector.extract_strided_slice %19 {offsets = [0, 15], sizes = [8, 1], strides = [1, 1]} : vector<8x16xf32> to vector<8x1xf32>
    %cst_299 = arith.constant 9.99999974E-6 : f32
    %827 = vector.broadcast %cst_299 : f32 to vector<8x1xf32>
    %828 = arith.addf %824, %827 : vector<8x1xf32>
    %829 = math.rsqrt %828 : vector<8x1xf32>
    %830 = arith.mulf %825, %829 : vector<8x1xf32>
    %831 = arith.mulf %818, %830 : vector<8x1xf32>
    %832 = arith.subf %826, %831 : vector<8x1xf32>
    %833 = tpu.concatenate %830, %830 in 0 : vector<8x1xf32>, vector<8x1xf32> -> vector<16x1xf32>
    %834 = tpu.concatenate %832, %832 in 0 : vector<8x1xf32>, vector<8x1xf32> -> vector<16x1xf32>
    %835 = vector.broadcast %833 : vector<16x1xf32> to vector<16x32xf32>
    %836 = arith.mulf %805, %835 : vector<16x32xf32>
    %837 = vector.broadcast %834 : vector<16x1xf32> to vector<16x32xf32>
    %838 = arith.addf %836, %837 : vector<16x32xf32>
    %839 = arith.addf %838, %712 : vector<16x32xf32>
    %cst_300 = arith.constant 0.000000e+00 : f32
    %840 = vector.broadcast %cst_300 : f32 to vector<16x32xf32>
    %841 = arith.maximumf %839, %840 : vector<16x32xf32>
    %842 = math.absf %839 : vector<16x32xf32>
    %cst_301 = arith.constant 0.000000e+00 : f32
    %843 = vector.broadcast %cst_301 : f32 to vector<16x32xf32>
    %844 = arith.subf %843, %842 : vector<16x32xf32>
    %845 = math.exp %844 : vector<16x32xf32>
    %846 = math.log1p %845 : vector<16x32xf32>
    %847 = arith.addf %841, %846 : vector<16x32xf32>
    %c0_302 = arith.constant 0 : index
    %c0_303 = arith.constant 0 : index
    %848 = vector.load %arg20[%c0_302, %c0_303] : memref<32x1xf32, #tpu.memory_space<vmem>>, vector<32x1xf32>
    %cst_304 = arith.constant dense<0.000000e+00> : vector<16x1xf32>
    %849 = tpu.matmul %847, %848, %cst_304 {dimension_numbers = #tpu.dot_dimension_numbers<[1], [0], [0], [1], [0, 0, 1, 1], [], []>} : vector<16x32xf32>, vector<32x1xf32>, vector<16x1xf32> -> vector<16x1xf32>
    %cst_305 = arith.constant dense<0.000000e+00> : vector<16x1xf32>
    %850 = tpu.matmul %17, %849, %cst_305 {dimension_numbers = #tpu.dot_dimension_numbers<[1], [0], [0], [1], [0, 0, 1, 1], [], []>} : vector<16x16xf32>, vector<16x1xf32>, vector<16x1xf32> -> vector<16x1xf32>
    %cst_306 = arith.constant 0.000000e+00 : f32
    %851 = vector.broadcast %cst_306 : f32 to vector<16x1xf32>
    %852 = arith.maximumf %850, %851 : vector<16x1xf32>
    %853 = math.absf %850 : vector<16x1xf32>
    %cst_307 = arith.constant 0.000000e+00 : f32
    %854 = vector.broadcast %cst_307 : f32 to vector<16x1xf32>
    %855 = arith.subf %854, %853 : vector<16x1xf32>
    %856 = math.exp %855 : vector<16x1xf32>
    %857 = math.log1p %856 : vector<16x1xf32>
    %858 = arith.addf %852, %857 : vector<16x1xf32>
    %859 = vector.extract_strided_slice %858 {offsets = [0, 0], sizes = [6, 1], strides = [1, 1]} : vector<16x1xf32> to vector<6x1xf32>
    %cst_308 = arith.constant dense<0.000000e+00> : vector<1xf32>
    %860 = vector.multi_reduction <add>, %859, %cst_308 [0] : vector<6x1xf32> to vector<1xf32>
    %861 = vector.shape_cast %860 : vector<1xf32> to vector<1x1xf32>
    %cst_309 = arith.constant 0.166666672 : f32
    %862 = vector.broadcast %cst_309 : f32 to vector<1x1xf32>
    %863 = arith.mulf %861, %862 : vector<1x1xf32>
    %864 = vector.extract_strided_slice %858 {offsets = [8, 0], sizes = [6, 1], strides = [1, 1]} : vector<16x1xf32> to vector<6x1xf32>
    %cst_310 = arith.constant dense<0.000000e+00> : vector<1xf32>
    %865 = vector.multi_reduction <add>, %864, %cst_310 [0] : vector<6x1xf32> to vector<1xf32>
    %866 = vector.shape_cast %865 : vector<1xf32> to vector<1x1xf32>
    %cst_311 = arith.constant 0.166666672 : f32
    %867 = vector.broadcast %cst_311 : f32 to vector<1x1xf32>
    %868 = arith.mulf %866, %867 : vector<1x1xf32>
    %869 = tpu.concatenate %863, %868 in 0 : vector<1x1xf32>, vector<1x1xf32> -> vector<2x1xf32>
    %c0_312 = arith.constant 0 : index
    %c0_313 = arith.constant 0 : index
    %870 = vector.load %arg21[%c0_312, %c0_313] : memref<2x1xf32, #tpu.memory_space<vmem>>, vector<2x1xf32>
    tpu.vector_store %arg21[%c0_312, %c0_313], %869 {strides = array<i32>} : memref<2x1xf32, #tpu.memory_space<vmem>>, vector<2x1xf32>,
    return
  }
}

</mosaic_0001>

<llo_original>
// kernel: tpu_custom_call.1
$region0: #{tpu_custom_call.1}
  #allocation0 [shape = 'u32[]', space=smem, size = 0x4, offset = 0x4, fixed_abs, tag = 'smem constant byte address 0x4 - core index']
  #allocation1 [shape = 'u32[144,128]{1,0:T(1,128)}', space=vmem, size = 0x12000, scoped, tag = 'internal scratch']
  #allocation2 [shape = 'bf16[2048,512]{1,0:T(16,128)(2,1)}', space=vmem, size = 0x200000, scoped, tag = 'scratch operand']
  #allocation3 [shape = 's32[2]{0}', space=sflag, size = 0x8, scoped, tag = 'scratch operand']
  #allocation4 [shape = 's32[4]{0}', space=sflag, size = 0x10, scoped, tag = 'scratch operand']
  #allocation12 [shape = 's32[]', space=sflag, size = 0x4, offset = 0, fixed_abs, tag = 'sflag constant byte address 0x0 - dummy sync flag']
  #allocation14 [shape = 's32[]', space=sflag, size = 0x4, offset = 0, fixed_abs, tag = 'sflag constant byte address 0x0 - dummy sync flag']
  #allocation16 [shape = 's32[]', space=sflag, size = 0x4, offset = 0, fixed_abs, tag = 'sflag constant byte address 0x0 - dummy sync flag']
  #allocation18 [shape = 's32[]', space=sflag, size = 0x4, offset = 0, fixed_abs, tag = 'sflag constant byte address 0x0 - dummy sync flag']
  #allocation20 [shape = 's32[]', space=sflag, size = 0x4, offset = 0, fixed_abs, tag = 'sflag constant byte address 0x0 - dummy sync flag']
  #allocation22 [shape = 's32[]', space=sflag, size = 0x4, offset = 0, fixed_abs, tag = 'sflag constant byte address 0x0 - dummy sync flag']
  #allocation24 [shape = 's32[]', space=sflag, size = 0x4, offset = 0, fixed_abs, tag = 'sflag constant byte address 0x0 - dummy sync flag']
  #allocation26 [shape = 's32[]', space=sflag, size = 0x4, offset = 0, fixed_abs, tag = 'sflag constant byte address 0x0 - dummy sync flag']
  #allocation28 [shape = 's32[]', space=sflag, size = 0x4, offset = 0, fixed_abs, tag = 'sflag constant byte address 0x0 - dummy sync flag']
  #allocation30 [shape = 's32[]', space=sflag, size = 0x4, offset = 0, fixed_abs, tag = 'sflag constant byte address 0x0 - dummy sync flag']
  #allocation32 [shape = 's32[]', space=sflag, size = 0x4, offset = 0, fixed_abs, tag = 'sflag constant byte address 0x0 - dummy sync flag']
  #allocation34 [shape = 's32[]', space=sflag, size = 0x4, offset = 0, fixed_abs, tag = 'sflag constant byte address 0x0 - dummy sync flag']
  #allocation35 [shape = 's32[]', space=sflag, size = 0x4, offset = 0, fixed_abs, tag = 'sflag constant byte address 0x0 - dummy sync flag']
  #allocation36 [shape = 's32[]', space=sflag, size = 0x4, offset = 0, fixed_abs, tag = 'sflag constant byte address 0x0 - dummy sync flag']
  #allocation37 [shape = 's32[]', space=sflag, size = 0x4, offset = 0, fixed_abs, tag = 'sflag constant byte address 0x0 - dummy sync flag']
  %s0 = inlined_call_operand.vmem [shape: f32[16,1024], index: 0, kind: input, shape index: {}]
  %s1 = inlined_call_operand.hbm [shape: f32[16,16], index: 1, kind: input, shape index: {}]
  %s2 = inlined_call_operand.hbm [shape: f32[8,16], index: 2, kind: input, shape index: {}]
  %s3 = inlined_call_operand.hbm [shape: f32[8,16], index: 3, kind: input, shape index: {}]
  %s4 = inlined_call_operand.hbm [shape: bf16[1024,512], index: 4, kind: input, shape index: {}]
  %s5 = inlined_call_operand.hbm [shape: bf16[512,512], index: 5, kind: input, shape index: {}]
  %s6 = inlined_call_operand.hbm [shape: bf16[512,512], index: 6, kind: input, shape index: {}]
  %s7 = inlined_call_operand.hbm [shape: bf16[512,512], index: 7, kind: input, shape index: {}]
  %s8 = inlined_call_operand.hbm [shape: bf16[512,256], index: 8, kind: input, shape index: {}]
  %s9 = inlined_call_operand.hbm [shape: bf16[256,256], index: 9, kind: input, shape index: {}]
  %s10 = inlined_call_operand.hbm [shape: bf16[256,256], index: 10, kind: input, shape index: {}]
  %s11 = inlined_call_operand.hbm [shape: bf16[256,256], index: 11, kind: input, shape index: {}]
  %s12 = inlined_call_operand.hbm [shape: bf16[256,128], index: 12, kind: input, shape index: {}]
  %s13 = inlined_call_operand.vmem [shape: bf16[128,128], index: 13, kind: input, shape index: {}]
  %s14 = inlined_call_operand.hbm [shape: bf16[128,128], index: 14, kind: input, shape index: {}]
  %s15 = inlined_call_operand.hbm [shape: bf16[128,128], index: 15, kind: input, shape index: {}]
  %s16 = inlined_call_operand.vmem [shape: f32[128,32], index: 16, kind: input, shape index: {}]
  %s17 = inlined_call_operand.vmem [shape: f32[32,32], index: 17, kind: input, shape index: {}]
  %s18 = inlined_call_operand.vmem [shape: f32[32,32], index: 18, kind: input, shape index: {}]
  %s19 = inlined_call_operand.hbm [shape: f32[32,32], index: 19, kind: input, shape index: {}]
  %s20 = inlined_call_operand.vmem [shape: f32[32,1], index: 20, kind: input, shape index: {}]
  %s21 = inlined_call_operand.vmem [shape: f32[2,1], index: 21, kind: output, shape index: {}]
  %s22 = sld [smem:[#allocation0]]
  $region96: #{tpu_custom_call.1} parent=0
    _
  %s24 = ssub.s32 1, %s22
  %s25 = scalar_select 0, %s24, %s22
  $region1: #{tpu_custom_call.1} parent=0
    #allocation5 [shape = 'u8[8192]{0}', space=vmem, size = 0x2000, scoped, tag = 'input window, operand 1, single buffered']
    #allocation6 [shape = 's32[1]{0}', space=sflag, size = 0x4, scoped, tag = 'scoped memory for tpu_custom_call.1']
    #allocation7 [shape = 'u8[4096]{0}', space=vmem, size = 0x1000, scoped, tag = 'input window, operand 2, single buffered']
    #allocation8 [shape = 's32[1]{0}', space=sflag, size = 0x4, scoped, tag = 'scoped memory for tpu_custom_call.1']
    #allocation9 [shape = 'u8[4096]{0}', space=vmem, size = 0x1000, scoped, tag = 'input window, operand 3, single buffered']
    #allocation10 [shape = 'u8[16384]{0}', space=vmem, size = 0x4000, scoped, tag = 'input window, operand 19, single buffered']
    #allocation11 [shape = 's32[1]{0}', space=sflag, size = 0x4, scoped, tag = 'scoped memory for tpu_custom_call.1']
    #allocation13 [shape = 'u32[9]{0}', space=smem, size = 0x24, scoped, tag = 'DMA stride descriptor']
    #allocation15 [shape = 'u32[9]{0}', space=smem, size = 0x24, scoped, tag = 'DMA stride descriptor']
    #allocation17 [shape = 'u32[9]{0}', space=smem, size = 0x24, scoped, tag = 'DMA stride descriptor']
    #allocation19 [shape = 'u32[9]{0}', space=smem, size = 0x24, scoped, tag = 'DMA stride descriptor']
    #allocation21 [shape = 'u32[9]{0}', space=smem, size = 0x24, scoped, tag = 'DMA stride descriptor']
    #allocation23 [shape = 'u32[9]{0}', space=smem, size = 0x24, scoped, tag = 'DMA stride descriptor']
    #allocation25 [shape = 'u32[9]{0}', space=smem, size = 0x24, scoped, tag = 'DMA stride descriptor']
    #allocation27 [shape = 'u32[9]{0}', space=smem, size = 0x24, scoped, tag = 'DMA stride descriptor']
    #allocation29 [shape = 'u32[9]{0}', space=smem, size = 0x24, scoped, tag = 'DMA stride descriptor']
    #allocation31 [shape = 'u32[9]{0}', space=smem, size = 0x24, scoped, tag = 'DMA stride descriptor']
    #allocation33 [shape = 'u32[9]{0}', space=smem, size = 0x24, scoped, tag = 'DMA stride descriptor']
    %26 = vsyncpa [#allocation6], 0
    %27 = vsyncpa [#allocation8], 0
    %28 = vsyncpa [#allocation11], 0
    // Predicated region
    $region2: #{tpu_custom_call.1} parent=1 // pred_check
      _
    $region3: #{tpu_custom_call.1} parent=1 // pred_check_branch
      %30 = sbr.rel (0) target = $region5
    $region4: #{tpu_custom_call.1} parent=1 // pred_region
      _
    $region5: #{tpu_custom_call.1} parent=1 // pred_fallthru
      _
    // Predicated region
    $region6: #{tpu_custom_call.1} parent=1 // pred_check
      _
    $region7: #{tpu_custom_call.1} parent=1 // pred_check_branch
      %32 = sbr.rel (0) target = $region9
    $region8: #{tpu_custom_call.1} parent=1 // pred_region
      %s34 = ssub.s32 256, 256
      %35 = vsyncadd [#allocation6], %s34
      %s36 = sshll.u32 [#allocation5], 4
      %s37 = int_to_ptr.vmem [resolvable:$true] %s36
      %42 = dma.hbm_to_vmem [thread:$0]  %s1, 256, %s37, [#allocation6], 128, 128, 8
    $region9: #{tpu_custom_call.1} parent=1 // pred_fallthru
      _
    // Predicated region
    $region10: #{tpu_custom_call.1} parent=1 // pred_check
      _
    $region11: #{tpu_custom_call.1} parent=1 // pred_check_branch
      %44 = sbr.rel (0) target = $region13
    $region12: #{tpu_custom_call.1} parent=1 // pred_region
      %s46 = ssub.s32 128, 128
      %47 = vsyncadd [#allocation8], %s46
      %s49 = sshll.u32 [#allocation7], 4
      %s50 = int_to_ptr.vmem [resolvable:$true] %s49
      %52 = dma.hbm_to_vmem [thread:$0]  %s2, 128, %s50, [#allocation8]
    $region13: #{tpu_custom_call.1} parent=1 // pred_fallthru
      _
    // Predicated region
    $region14: #{tpu_custom_call.1} parent=1 // pred_check
      _
    $region15: #{tpu_custom_call.1} parent=1 // pred_check_branch
      %54 = sbr.rel (0) target = $region17
    $region16: #{tpu_custom_call.1} parent=1 // pred_region
      %s56 = ssub.s32 128, 128
      %57 = vsyncadd [#allocation8], %s56
      %s59 = sshll.u32 [#allocation9], 4
      %s60 = int_to_ptr.vmem [resolvable:$true] %s59
      %62 = dma.hbm_to_vmem [thread:$0]  %s3, 128, %s60, [#allocation8]
    $region17: #{tpu_custom_call.1} parent=1 // pred_fallthru
      _
    // Predicated region
    $region18: #{tpu_custom_call.1} parent=1 // pred_check
      _
    $region19: #{tpu_custom_call.1} parent=1 // pred_check_branch
      %64 = sbr.rel (0) target = $region21
    $region20: #{tpu_custom_call.1} parent=1 // pred_region
      _
    $region21: #{tpu_custom_call.1} parent=1 // pred_fallthru
      _
    // Predicated region
    $region22: #{tpu_custom_call.1} parent=1 // pred_check
      _
    $region23: #{tpu_custom_call.1} parent=1 // pred_check_branch
      %66 = sbr.rel (0) target = $region25
    $region24: #{tpu_custom_call.1} parent=1 // pred_region
      _
    $region25: #{tpu_custom_call.1} parent=1 // pred_fallthru
      _
    // Predicated region
    $region26: #{tpu_custom_call.1} parent=1 // pred_check
      _
    $region27: #{tpu_custom_call.1} parent=1 // pred_check_branch
      %68 = sbr.rel (0) target = $region29
    $region28: #{tpu_custom_call.1} parent=1 // pred_region
      _
    $region29: #{tpu_custom_call.1} parent=1 // pred_fallthru
      _
    // Predicated region
    $region30: #{tpu_custom_call.1} parent=1 // pred_check
      _
    $region31: #{tpu_custom_call.1} parent=1 // pred_check_branch
      %70 = sbr.rel (0) target = $region33
    $region32: #{tpu_custom_call.1} parent=1 // pred_region
      %s72 = ssub.s32 512, 512
      %73 = vsyncadd [#allocation11], %s72
      %s74 = sshll.u32 [#allocation10], 4
      %s75 = int_to_ptr.vmem [resolvable:$true] %s74
      %80 = dma.hbm_to_vmem [thread:$0]  %s19, 512, %s75, [#allocation11], 128, 128, 8
    $region33: #{tpu_custom_call.1} parent=1 // pred_fallthru
      _
    // Predicated region
    $region34: #{tpu_custom_call.1} parent=1 // pred_check
      _
    $region35: #{tpu_custom_call.1} parent=1 // pred_check_branch
      %82 = sbr.rel (0) target = $region37
    $region36: #{tpu_custom_call.1} parent=1 // pred_region
      _
    $region37: #{tpu_custom_call.1} parent=1 // pred_fallthru
      _
    // Predicated region
    $region38: #{tpu_custom_call.1} parent=1 // pred_check
      _
    $region39: #{tpu_custom_call.1} parent=1 // pred_check_branch
      %84 = sbr.rel (0) target = $region41
    $region40: #{tpu_custom_call.1} parent=1 // pred_region
      %85 = dma.done [#allocation6], 256
    $region41: #{tpu_custom_call.1} parent=1 // pred_fallthru
      _
    // Predicated region
    $region42: #{tpu_custom_call.1} parent=1 // pred_check
      _
    $region43: #{tpu_custom_call.1} parent=1 // pred_check_branch
      %87 = sbr.rel (0) target = $region45
    $region44: #{tpu_custom_call.1} parent=1 // pred_region
      %88 = dma.done [#allocation8], 128
    $region45: #{tpu_custom_call.1} parent=1 // pred_fallthru
      _
    // Predicated region
    $region46: #{tpu_custom_call.1} parent=1 // pred_check
      _
    $region47: #{tpu_custom_call.1} parent=1 // pred_check_branch
      %90 = sbr.rel (0) target = $region49
    $region48: #{tpu_custom_call.1} parent=1 // pred_region
      %91 = dma.done [#allocation8], 128
    $region49: #{tpu_custom_call.1} parent=1 // pred_fallthru
      _
    // Predicated region
    $region50: #{tpu_custom_call.1} parent=1 // pred_check
      _
    $region51: #{tpu_custom_call.1} parent=1 // pred_check_branch
      %93 = sbr.rel (0) target = $region53
    $region52: #{tpu_custom_call.1} parent=1 // pred_region
      %94 = dma.done [#allocation11], 512
    $region53: #{tpu_custom_call.1} parent=1 // pred_fallthru
      _
    %s97 = sshll.u32 1, 14
    %s98 = sxor.u32 4294967295, %s97
    %s100 = sld [smem:[#allocation0]]
    %s101 = sadd.s32 2, %s100
    %s103 = sshll.u32 7, 26
    %s104 = sxor.u32 4294967295, %s103
    %s105 = sand.u32 0, %s104
    %s106 = sshll.u32 %s101, 26
    %s107 = sor.u32 %s105, %s106
    %s108 = sshll.u32 [#allocation2], 4
    %s109 = int_to_ptr.vmem [resolvable:$true] %s108
    %112 = sst [smem:[#allocation13]] 512
    %s113 = scalar_lea.smem [#allocation13], 1
    %114 = sst [smem:[%s113]] 512
    %s115 = scalar_lea.smem [#allocation13], 2
    %116 = sst [smem:[%s115]] 4
    %s117 = scalar_lea.smem [#allocation13], 3
    %118 = sst [smem:[%s117]] 64
    %s119 = scalar_lea.smem [#allocation13], 4
    %120 = sst [smem:[%s119]] 128
    %s121 = scalar_lea.smem [#allocation13], 5
    %122 = sst [smem:[%s121]] 2
    %s123 = scalar_lea.smem [#allocation13], 6
    %124 = sst [smem:[%s123]] 256
    %s125 = scalar_lea.smem [#allocation13], 7
    %126 = sst [smem:[%s125]] 64
    %s127 = scalar_lea.smem [#allocation13], 8
    %128 = sst [smem:[%s127]] 4
    %130 = dma.general %s4, 8192, %s109, [#allocation4], [#allocation12], [#allocation13], %s107, 0
    %s131 = scalar_lea.hbm %s4, 8192
    %s132 = scalar_lea.vmem [#allocation2], 512
    %s133 = scalar_lea.sflag [#allocation4], 1
    %s135 = sshll.u32 1, 14
    %s136 = sxor.u32 4294967295, %s135
    %s138 = sadd.s32 2, %s100
    %s140 = sshll.u32 7, 26
    %s141 = sxor.u32 4294967295, %s140
    %s142 = sand.u32 0, %s141
    %s143 = sshll.u32 %s138, 26
    %s144 = sor.u32 %s142, %s143
    %s145 = sshll.u32 %s132, 4
    %s146 = int_to_ptr.vmem [resolvable:$true] %s145
    %149 = sst [smem:[#allocation15]] 512
    %s150 = scalar_lea.smem [#allocation15], 1
    %151 = sst [smem:[%s150]] 512
    %s152 = scalar_lea.smem [#allocation15], 2
    %153 = sst [smem:[%s152]] 4
    %s154 = scalar_lea.smem [#allocation15], 3
    %155 = sst [smem:[%s154]] 64
    %s156 = scalar_lea.smem [#allocation15], 4
    %157 = sst [smem:[%s156]] 128
    %s158 = scalar_lea.smem [#allocation15], 5
    %159 = sst [smem:[%s158]] 2
    %s160 = scalar_lea.smem [#allocation15], 6
    %161 = sst [smem:[%s160]] 256
    %s162 = scalar_lea.smem [#allocation15], 7
    %163 = sst [smem:[%s162]] 64
    %s164 = scalar_lea.smem [#allocation15], 8
    %165 = sst [smem:[%s164]] 4
    %167 = dma.general %s131, 8192, %s146, %s133, [#allocation14], [#allocation15], %s144, 0
    %s168 = scalar_lea.hbm %s4, 16384
    %s169 = scalar_lea.vmem [#allocation2], 1024
    %s170 = scalar_lea.sflag [#allocation4], 2
    %s172 = sshll.u32 1, 14
    %s173 = sxor.u32 4294967295, %s172
    %s175 = sadd.s32 2, %s100
    %s177 = sshll.u32 7, 26
    %s178 = sxor.u32 4294967295, %s177
    %s179 = sand.u32 0, %s178
    %s180 = sshll.u32 %s175, 26
    %s181 = sor.u32 %s179, %s180
    %s182 = sshll.u32 %s169, 4
    %s183 = int_to_ptr.vmem [resolvable:$true] %s182
    %186 = sst [smem:[#allocation17]] 512
    %s187 = scalar_lea.smem [#allocation17], 1
    %188 = sst [smem:[%s187]] 512
    %s189 = scalar_lea.smem [#allocation17], 2
    %190 = sst [smem:[%s189]] 4
    %s191 = scalar_lea.smem [#allocation17], 3
    %192 = sst [smem:[%s191]] 64
    %s193 = scalar_lea.smem [#allocation17], 4
    %194 = sst [smem:[%s193]] 128
    %s195 = scalar_lea.smem [#allocation17], 5
    %196 = sst [smem:[%s195]] 2
    %s197 = scalar_lea.smem [#allocation17], 6
    %198 = sst [smem:[%s197]] 256
    %s199 = scalar_lea.smem [#allocation17], 7
    %200 = sst [smem:[%s199]] 64
    %s201 = scalar_lea.smem [#allocation17], 8
    %202 = sst [smem:[%s201]] 4
    %204 = dma.general %s168, 8192, %s183, %s170, [#allocation16], [#allocation17], %s181, 0
    %s205 = scalar_lea.hbm %s4, 24576
    %s206 = scalar_lea.vmem [#allocation2], 1536
    %s207 = scalar_lea.sflag [#allocation4], 3
    %s209 = sshll.u32 1, 14
    %s210 = sxor.u32 4294967295, %s209
    %s212 = sadd.s32 2, %s100
    %s214 = sshll.u32 7, 26
    %s215 = sxor.u32 4294967295, %s214
    %s216 = sand.u32 0, %s215
    %s217 = sshll.u32 %s212, 26
    %s218 = sor.u32 %s216, %s217
    %s219 = sshll.u32 %s206, 4
    %s220 = int_to_ptr.vmem [resolvable:$true] %s219
    %223 = sst [smem:[#allocation19]] 512
    %s224 = scalar_lea.smem [#allocation19], 1
    %225 = sst [smem:[%s224]] 512
    %s226 = scalar_lea.smem [#allocation19], 2
    %227 = sst [smem:[%s226]] 4
    %s228 = scalar_lea.smem [#allocation19], 3
    %229 = sst [smem:[%s228]] 64
    %s230 = scalar_lea.smem [#allocation19], 4
    %231 = sst [smem:[%s230]] 128
    %s232 = scalar_lea.smem [#allocation19], 5
    %233 = sst [smem:[%s232]] 2
    %s234 = scalar_lea.smem [#allocation19], 6
    %235 = sst [smem:[%s234]] 256
    %s236 = scalar_lea.smem [#allocation19], 7
    %237 = sst [smem:[%s236]] 64
    %s238 = scalar_lea.smem [#allocation19], 8
    %239 = sst [smem:[%s238]] 4
    %241 = dma.general %s205, 8192, %s220, %s207, [#allocation18], [#allocation19], %s218, 0
    %v242 = vld [vmem:[%s0] sm:$0xff]
    %v243 = vld [vmem:[%s0 + $0x8] sm:$0xff]
    %v244 = vld [vmem:[%s0 + $0x10] sm:$0xff]
    %v245 = vld [vmem:[%s0 + $0x18] sm:$0xff]
    %v246 = vld [vmem:[%s0 + $0x20] sm:$0xff]
    %v247 = vld [vmem:[%s0 + $0x28] sm:$0xff]
    %v248 = vld [vmem:[%s0 + $0x30] sm:$0xff]
    %v249 = vld [vmem:[%s0 + $0x38] sm:$0xff]
    %v250 = vld [vmem:[%s0 + $0x40] sm:$0xff]
    %v251 = vld [vmem:[%s0 + $0x48] sm:$0xff]
    %v252 = vld [vmem:[%s0 + $0x50] sm:$0xff]
    %v253 = vld [vmem:[%s0 + $0x58] sm:$0xff]
    %v254 = vld [vmem:[%s0 + $0x60] sm:$0xff]
    %v255 = vld [vmem:[%s0 + $0x68] sm:$0xff]
    %v256 = vld [vmem:[%s0 + $0x70] sm:$0xff]
    %v257 = vld [vmem:[%s0 + $0x78] sm:$0xff]
    %v258 = vld [vmem:[#allocation5] sm:$0xff]
    %v259 = vld [vmem:[#allocation5 + $0x8] sm:$0xff]
    %v260 = vld [vmem:[#allocation7] sm:$0xff]
    %v261 = vld [vmem:[#allocation9] sm:$0xff]
    %s262 = scalar_lea.vmem [#allocation2], 2048
    %s263 = scalar_lea.sflag [#allocation3], 1
    %s265 = sshll.u32 1, 14
    %s266 = sxor.u32 4294967295, %s265
    %s268 = sadd.s32 2, %s100
    %s270 = sshll.u32 7, 26
    %s271 = sxor.u32 4294967295, %s270
    %s272 = sand.u32 0, %s271
    %s273 = sshll.u32 %s268, 26
    %s274 = sor.u32 %s272, %s273
    %s275 = sshll.u32 %s262, 4
    %s276 = int_to_ptr.vmem [resolvable:$true] %s275
    %279 = sst [smem:[#allocation21]] 512
    %s280 = scalar_lea.smem [#allocation21], 1
    %281 = sst [smem:[%s280]] 512
    %s282 = scalar_lea.smem [#allocation21], 2
    %283 = sst [smem:[%s282]] 4
    %s284 = scalar_lea.smem [#allocation21], 3
    %285 = sst [smem:[%s284]] 64
    %s286 = scalar_lea.smem [#allocation21], 4
    %287 = sst [smem:[%s286]] 128
    %s288 = scalar_lea.smem [#allocation21], 5
    %289 = sst [smem:[%s288]] 2
    %s290 = scalar_lea.smem [#allocation21], 6
    %291 = sst [smem:[%s290]] 256
    %s292 = scalar_lea.smem [#allocation21], 7
    %293 = sst [smem:[%s292]] 64
    %s294 = scalar_lea.smem [#allocation21], 8
    %295 = sst [smem:[%s294]] 4
    %297 = dma.general %s5, 16384, %s276, %s263, [#allocation20], [#allocation21], %s274, 0
    %s298 = smul.u32 4, 32
    %s299 = smul.u32 %s298, 4
    %s300 = sshll.u32 %s299, 4
    %301 = dma.done [#allocation4], %s300
    %v302 = vpack.c.bf16 %v250, %v242
    %v303 = vpack.c.bf16 %v251, %v243
    %v304 = vld [vmem:[#allocation2] sm:$0xff]
    %v305 = vld [vmem:[#allocation2 + $0x8] sm:$0xff]
    %v306 = vld [vmem:[#allocation2 + $0x10] sm:$0xff]
    %v307 = vld [vmem:[#allocation2 + $0x18] sm:$0xff]
    %v308 = vld [vmem:[#allocation2 + $0x20] sm:$0xff]
    %v309 = vld [vmem:[#allocation2 + $0x28] sm:$0xff]
    %v310 = vld [vmem:[#allocation2 + $0x30] sm:$0xff]
    %v311 = vld [vmem:[#allocation2 + $0x38] sm:$0xff]
    %v312 = vld [vmem:[#allocation2 + $0x40] sm:$0xff]
    %v313 = vld [vmem:[#allocation2 + $0x48] sm:$0xff]
    %v314 = vld [vmem:[#allocation2 + $0x50] sm:$0xff]
    %v315 = vld [vmem:[#allocation2 + $0x58] sm:$0xff]
    %v316 = vld [vmem:[#allocation2 + $0x60] sm:$0xff]
    %v317 = vld [vmem:[#allocation2 + $0x68] sm:$0xff]
    %v318 = vld [vmem:[#allocation2 + $0x70] sm:$0xff]
    %v319 = vld [vmem:[#allocation2 + $0x78] sm:$0xff]
    %v320 = vld [vmem:[#allocation2 + $0x80] sm:$0xff]
    %v321 = vld [vmem:[#allocation2 + $0x88] sm:$0xff]
    %v322 = vld [vmem:[#allocation2 + $0x90] sm:$0xff]
    %v323 = vld [vmem:[#allocation2 + $0x98] sm:$0xff]
    %v324 = vld [vmem:[#allocation2 + $0xa0] sm:$0xff]
    %v325 = vld [vmem:[#allocation2 + $0xa8] sm:$0xff]
    %v326 = vld [vmem:[#allocation2 + $0xb0] sm:$0xff]
    %v327 = vld [vmem:[#allocation2 + $0xb8] sm:$0xff]
    %v328 = vld [vmem:[#allocation2 + $0xc0] sm:$0xff]
    %v329 = vld [vmem:[#allocation2 + $0xc8] sm:$0xff]
    %v330 = vld [vmem:[#allocation2 + $0xd0] sm:$0xff]
    %v331 = vld [vmem:[#allocation2 + $0xd8] sm:$0xff]
    %v332 = vld [vmem:[#allocation2 + $0xe0] sm:$0xff]
    %v333 = vld [vmem:[#allocation2 + $0xe8] sm:$0xff]
    %v334 = vld [vmem:[#allocation2 + $0xf0] sm:$0xff]
    %v335 = vld [vmem:[#allocation2 + $0xf8] sm:$0xff]
    %v336 = vld [vmem:[#allocation2 + $0x100] sm:$0xff]
    %v337 = vld [vmem:[#allocation2 + $0x108] sm:$0xff]
    %v338 = vld [vmem:[#allocation2 + $0x110] sm:$0xff]
    %v339 = vld [vmem:[#allocation2 + $0x118] sm:$0xff]
    %v340 = vld [vmem:[#allocation2 + $0x120] sm:$0xff]
    %v341 = vld [vmem:[#allocation2 + $0x128] sm:$0xff]
    %v342 = vld [vmem:[#allocation2 + $0x130] sm:$0xff]
    %v343 = vld [vmem:[#allocation2 + $0x138] sm:$0xff]
    %v344 = vld [vmem:[#allocation2 + $0x140] sm:$0xff]
    %v345 = vld [vmem:[#allocation2 + $0x148] sm:$0xff]
    %v346 = vld [vmem:[#allocation2 + $0x150] sm:$0xff]
    %v347 = vld [vmem:[#allocation2 + $0x158] sm:$0xff]
    %v348 = vld [vmem:[#allocation2 + $0x160] sm:$0xff]
    %v349 = vld [vmem:[#allocation2 + $0x168] sm:$0xff]
    %v350 = vld [vmem:[#allocation2 + $0x170] sm:$0xff]
    %v351 = vld [vmem:[#allocation2 + $0x178] sm:$0xff]
    %v352 = vld [vmem:[#allocation2 + $0x180] sm:$0xff]
    %v353 = vld [vmem:[#allocation2 + $0x188] sm:$0xff]
    %v354 = vld [vmem:[#allocation2 + $0x190] sm:$0xff]
    %v355 = vld [vmem:[#allocation2 + $0x198] sm:$0xff]
    %v356 = vld [vmem:[#allocation2 + $0x1a0] sm:$0xff]
    %v357 = vld [vmem:[#allocation2 + $0x1a8] sm:$0xff]
    %v358 = vld [vmem:[#allocation2 + $0x1b0] sm:$0xff]
    %v359 = vld [vmem:[#allocation2 + $0x1b8] sm:$0xff]
    %v360 = vld [vmem:[#allocation2 + $0x1c0] sm:$0xff]
    %v361 = vld [vmem:[#allocation2 + $0x1c8] sm:$0xff]
    %v362 = vld [vmem:[#allocation2 + $0x1d0] sm:$0xff]
    %v363 = vld [vmem:[#allocation2 + $0x1d8] sm:$0xff]
    %v364 = vld [vmem:[#allocation2 + $0x1e0] sm:$0xff]
    %v365 = vld [vmem:[#allocation2 + $0x1e8] sm:$0xff]
    %v366 = vld [vmem:[#allocation2 + $0x1f0] sm:$0xff]
    %v367 = vld [vmem:[#allocation2 + $0x1f8] sm:$0xff]
    %s368 = sshll.u32 %s299, 4
    %369 = dma.done %s133, %s368
    %v370 = vpack.c.bf16 %v252, %v244
    %v371 = vpack.c.bf16 %v253, %v245
    %v372 = vld [vmem:[#allocation2 + $0x200] sm:$0xff]
    %v373 = vld [vmem:[#allocation2 + $0x208] sm:$0xff]
    %v374 = vld [vmem:[#allocation2 + $0x210] sm:$0xff]
    %v375 = vld [vmem:[#allocation2 + $0x218] sm:$0xff]
    %v376 = vld [vmem:[#allocation2 + $0x220] sm:$0xff]
    %v377 = vld [vmem:[#allocation2 + $0x228] sm:$0xff]
    %v378 = vld [vmem:[#allocation2 + $0x230] sm:$0xff]
    %v379 = vld [vmem:[#allocation2 + $0x238] sm:$0xff]
    %v380 = vld [vmem:[#allocation2 + $0x240] sm:$0xff]
    %v381 = vld [vmem:[#allocation2 + $0x248] sm:$0xff]
    %v382 = vld [vmem:[#allocation2 + $0x250] sm:$0xff]
    %v383 = vld [vmem:[#allocation2 + $0x258] sm:$0xff]
    %v384 = vld [vmem:[#allocation2 + $0x260] sm:$0xff]
    %v385 = vld [vmem:[#allocation2 + $0x268] sm:$0xff]
    %v386 = vld [vmem:[#allocation2 + $0x270] sm:$0xff]
    %v387 = vld [vmem:[#allocation2 + $0x278] sm:$0xff]
    %v388 = vld [vmem:[#allocation2 + $0x280] sm:$0xff]
    %v389 = vld [vmem:[#allocation2 + $0x288] sm:$0xff]
    %v390 = vld [vmem:[#allocation2 + $0x290] sm:$0xff]
    %v391 = vld [vmem:[#allocation2 + $0x298] sm:$0xff]
    %v392 = vld [vmem:[#allocation2 + $0x2a0] sm:$0xff]
    %v393 = vld [vmem:[#allocation2 + $0x2a8] sm:$0xff]
    %v394 = vld [vmem:[#allocation2 + $0x2b0] sm:$0xff]
    %v395 = vld [vmem:[#allocation2 + $0x2b8] sm:$0xff]
    %v396 = vld [vmem:[#allocation2 + $0x2c0] sm:$0xff]
    %v397 = vld [vmem:[#allocation2 + $0x2c8] sm:$0xff]
    %v398 = vld [vmem:[#allocation2 + $0x2d0] sm:$0xff]
    %v399 = vld [vmem:[#allocation2 + $0x2d8] sm:$0xff]
    %v400 = vld [vmem:[#allocation2 + $0x2e0] sm:$0xff]
    %v401 = vld [vmem:[#allocation2 + $0x2e8] sm:$0xff]
    %v402 = vld [vmem:[#allocation2 + $0x2f0] sm:$0xff]
    %v403 = vld [vmem:[#allocation2 + $0x2f8] sm:$0xff]
    %v404 = vld [vmem:[#allocation2 + $0x300] sm:$0xff]
    %v405 = vld [vmem:[#allocation2 + $0x308] sm:$0xff]
    %v406 = vld [vmem:[#allocation2 + $0x310] sm:$0xff]
    %v407 = vld [vmem:[#allocation2 + $0x318] sm:$0xff]
    %v408 = vld [vmem:[#allocation2 + $0x320] sm:$0xff]
    %v409 = vld [vmem:[#allocation2 + $0x328] sm:$0xff]
    %v410 = vld [vmem:[#allocation2 + $0x330] sm:$0xff]
    %v411 = vld [vmem:[#allocation2 + $0x338] sm:$0xff]
    %v412 = vld [vmem:[#allocation2 + $0x340] sm:$0xff]
    %v413 = vld [vmem:[#allocation2 + $0x348] sm:$0xff]
    %v414 = vld [vmem:[#allocation2 + $0x350] sm:$0xff]
    %v415 = vld [vmem:[#allocation2 + $0x358] sm:$0xff]
    %v416 = vld [vmem:[#allocation2 + $0x360] sm:$0xff]
    %v417 = vld [vmem:[#allocation2 + $0x368] sm:$0xff]
    %v418 = vld [vmem:[#allocation2 + $0x370] sm:$0xff]
    %v419 = vld [vmem:[#allocation2 + $0x378] sm:$0xff]
    %v420 = vld [vmem:[#allocation2 + $0x380] sm:$0xff]
    %v421 = vld [vmem:[#allocation2 + $0x388] sm:$0xff]
    %v422 = vld [vmem:[#allocation2 + $0x390] sm:$0xff]
    %v423 = vld [vmem:[#allocation2 + $0x398] sm:$0xff]
    %v424 = vld [vmem:[#allocation2 + $0x3a0] sm:$0xff]
    %v425 = vld [vmem:[#allocation2 + $0x3a8] sm:$0xff]
    %v426 = vld [vmem:[#allocation2 + $0x3b0] sm:$0xff]
    %v427 = vld [vmem:[#allocation2 + $0x3b8] sm:$0xff]
    %v428 = vld [vmem:[#allocation2 + $0x3c0] sm:$0xff]
    %v429 = vld [vmem:[#allocation2 + $0x3c8] sm:$0xff]
    %v430 = vld [vmem:[#allocation2 + $0x3d0] sm:$0xff]
    %v431 = vld [vmem:[#allocation2 + $0x3d8] sm:$0xff]
    %v432 = vld [vmem:[#allocation2 + $0x3e0] sm:$0xff]
    %v433 = vld [vmem:[#allocation2 + $0x3e8] sm:$0xff]
    %v434 = vld [vmem:[#allocation2 + $0x3f0] sm:$0xff]
    %v435 = vld [vmem:[#allocation2 + $0x3f8] sm:$0xff]
    %436 = vmatprep.subr.bf16.mxu0 %v373
    %437 = vmatpush1.bf16.msra.mxu0 %v372
    %438 = vmatprep.subr.bf16.mxu0 %v377
    %439 = vmatpush1.bf16.msra.mxu0 %v376
    %440 = vmatprep.subr.bf16.mxu0 %v381
    %441 = vmatpush1.bf16.msra.mxu0 %v380
    %442 = vmatprep.subr.bf16.mxu0 %v385
    %443 = vmatpush1.bf16.msra.mxu0 %v384
    %444 = vmatprep.subr.bf16.mxu0 %v389
    %445 = vmatpush1.bf16.msra.mxu0 %v388
    %446 = vmatprep.subr.bf16.mxu0 %v393
    %447 = vmatpush1.bf16.msra.mxu0 %v392
    %448 = vmatprep.subr.bf16.mxu0 %v397
    %449 = vmatpush1.bf16.msra.mxu0 %v396
    %450 = vmatprep.subr.bf16.mxu0 %v401
    %451 = vmatpush1.bf16.msra.mxu0 %v400
    %452 = vmatprep.subr.bf16.mxu0 %v405
    %453 = vmatpush1.bf16.msra.mxu0 %v404
    %454 = vmatprep.subr.bf16.mxu0 %v409
    %455 = vmatpush1.bf16.msra.mxu0 %v408
    %456 = vmatprep.subr.bf16.mxu0 %v413
    %457 = vmatpush1.bf16.msra.mxu0 %v412
    %458 = vmatprep.subr.bf16.mxu0 %v417
    %459 = vmatpush1.bf16.msra.mxu0 %v416
    %460 = vmatprep.subr.bf16.mxu0 %v421
    %461 = vmatpush1.bf16.msra.mxu0 %v420
    %462 = vmatprep.subr.bf16.mxu0 %v425
    %463 = vmatpush1.bf16.msra.mxu0 %v424
    %464 = vmatprep.subr.bf16.mxu0 %v429
    %465 = vmatpush1.bf16.msra.mxu0 %v428
    %466 = vmatprep.subr.bf16.mxu0 %v433
    %467 = vmatpush1.bf16.msra.mxu0 %v432
    %468 = vmatprep.mubr.bf16.mxu0 %v371
    %469 = vmatmul.mubr.bf16.gmra.mrb[0].mxu0 %v370
    %v470 = vpop.f32.mrb[0].mxu0
    %v471 = vadd.f32 0.0, %v470
    %v472 = vpop.f32.mrb[0].mxu0
    %v473 = vadd.f32 0.0, %v472
    %v474 = vpop.f32.mrb[0].mxu0
    %v475 = vadd.f32 0.0, %v474
    %v476 = vpop.f32.mrb[0].mxu0
    %v477 = vadd.f32 0.0, %v476
    %478 = vdwg.mxu0
    %479 = vmatprep.subr.bf16.mxu0 %v375
    %480 = vmatpush1.bf16.msra.mxu0 %v374
    %481 = vmatprep.subr.bf16.mxu0 %v379
    %482 = vmatpush1.bf16.msra.mxu0 %v378
    %483 = vmatprep.subr.bf16.mxu0 %v383
    %484 = vmatpush1.bf16.msra.mxu0 %v382
    %485 = vmatprep.subr.bf16.mxu0 %v387
    %486 = vmatpush1.bf16.msra.mxu0 %v386
    %487 = vmatprep.subr.bf16.mxu0 %v391
    %488 = vmatpush1.bf16.msra.mxu0 %v390
    %489 = vmatprep.subr.bf16.mxu0 %v395
    %490 = vmatpush1.bf16.msra.mxu0 %v394
    %491 = vmatprep.subr.bf16.mxu0 %v399
    %492 = vmatpush1.bf16.msra.mxu0 %v398
    %493 = vmatprep.subr.bf16.mxu0 %v403
    %494 = vmatpush1.bf16.msra.mxu0 %v402
    %495 = vmatprep.subr.bf16.mxu0 %v407
    %496 = vmatpush1.bf16.msra.mxu0 %v406
    %497 = vmatprep.subr.bf16.mxu0 %v411
    %498 = vmatpush1.bf16.msra.mxu0 %v410
    %499 = vmatprep.subr.bf16.mxu0 %v415
    %500 = vmatpush1.bf16.msra.mxu0 %v414
    %501 = vmatprep.subr.bf16.mxu0 %v419
    %502 = vmatpush1.bf16.msra.mxu0 %v418
    %503 = vmatprep.subr.bf16.mxu0 %v423
    %504 = vmatpush1.bf16.msra.mxu0 %v422
    %505 = vmatprep.subr.bf16.mxu0 %v427
    %506 = vmatpush1.bf16.msra.mxu0 %v426
    %507 = vmatprep.subr.bf16.mxu0 %v431
    %508 = vmatpush1.bf16.msra.mxu0 %v430
    %509 = vmatprep.subr.bf16.mxu0 %v435
    %510 = vmatpush1.bf16.msra.mxu0 %v434
    %511 = vmatprep.mubr.bf16.mxu0 %v371
    %512 = vmatmul.mubr.bf16.gmra.mrb[0].mxu0 %v370
    %v513 = vpop.f32.mrb[0].mxu0
    %v514 = vadd.f32 0.0, %v513
    %v515 = vpop.f32.mrb[0].mxu0
    %v516 = vadd.f32 0.0, %v515
    %v517 = vpop.f32.mrb[0].mxu0
    %v518 = vadd.f32 0.0, %v517
    %v519 = vpop.f32.mrb[0].mxu0
    %v520 = vadd.f32 0.0, %v519
    %521 = vdwg.mxu0
    %522 = vmatprep.subr.bf16.mxu0 %v305
    %523 = vmatpush1.bf16.msra.mxu0 %v304
    %524 = vmatprep.subr.bf16.mxu0 %v309
    %525 = vmatpush1.bf16.msra.mxu0 %v308
    %526 = vmatprep.subr.bf16.mxu0 %v313
    %527 = vmatpush1.bf16.msra.mxu0 %v312
    %528 = vmatprep.subr.bf16.mxu0 %v317
    %529 = vmatpush1.bf16.msra.mxu0 %v316
    %530 = vmatprep.subr.bf16.mxu0 %v321
    %531 = vmatpush1.bf16.msra.mxu0 %v320
    %532 = vmatprep.subr.bf16.mxu0 %v325
    %533 = vmatpush1.bf16.msra.mxu0 %v324
    %534 = vmatprep.subr.bf16.mxu0 %v329
    %535 = vmatpush1.bf16.msra.mxu0 %v328
    %536 = vmatprep.subr.bf16.mxu0 %v333
    %537 = vmatpush1.bf16.msra.mxu0 %v332
    %538 = vmatprep.subr.bf16.mxu0 %v337
    %539 = vmatpush1.bf16.msra.mxu0 %v336
    %540 = vmatprep.subr.bf16.mxu0 %v341
    %541 = vmatpush1.bf16.msra.mxu0 %v340
    %542 = vmatprep.subr.bf16.mxu0 %v345
    %543 = vmatpush1.bf16.msra.mxu0 %v344
    %544 = vmatprep.subr.bf16.mxu0 %v349
    %545 = vmatpush1.bf16.msra.mxu0 %v348
    %546 = vmatprep.subr.bf16.mxu0 %v353
    %547 = vmatpush1.bf16.msra.mxu0 %v352
    %548 = vmatprep.subr.bf16.mxu0 %v357
    %549 = vmatpush1.bf16.msra.mxu0 %v356
    %550 = vmatprep.subr.bf16.mxu0 %v361
    %551 = vmatpush1.bf16.msra.mxu0 %v360
    %552 = vmatprep.subr.bf16.mxu0 %v365
    %553 = vmatpush1.bf16.msra.mxu0 %v364
    %554 = vmatprep.mubr.bf16.mxu0 %v303
    %555 = vmatmul.mubr.bf16.gmra.mrb[0].mxu0 %v302
    %v556 = vpop.f32.mrb[0].mxu0
    %v557 = vadd.f32 %v471, %v556
    %v558 = vpop.f32.mrb[0].mxu0
    %v559 = vadd.f32 %v473, %v558
    %v560 = vpop.f32.mrb[0].mxu0
    %v561 = vadd.f32 %v475, %v560
    %v562 = vpop.f32.mrb[0].mxu0
    %v563 = vadd.f32 %v477, %v562
    %564 = vdwg.mxu0
    %565 = vmatprep.subr.bf16.mxu0 %v307
    %566 = vmatpush1.bf16.msra.mxu0 %v306
    %567 = vmatprep.subr.bf16.mxu0 %v311
    %568 = vmatpush1.bf16.msra.mxu0 %v310
    %569 = vmatprep.subr.bf16.mxu0 %v315
    %570 = vmatpush1.bf16.msra.mxu0 %v314
    %571 = vmatprep.subr.bf16.mxu0 %v319
    %572 = vmatpush1.bf16.msra.mxu0 %v318
    %573 = vmatprep.subr.bf16.mxu0 %v323
    %574 = vmatpush1.bf16.msra.mxu0 %v322
    %575 = vmatprep.subr.bf16.mxu0 %v327
    %576 = vmatpush1.bf16.msra.mxu0 %v326
    %577 = vmatprep.subr.bf16.mxu0 %v331
    %578 = vmatpush1.bf16.msra.mxu0 %v330
    %579 = vmatprep.subr.bf16.mxu0 %v335
    %580 = vmatpush1.bf16.msra.mxu0 %v334
    %581 = vmatprep.subr.bf16.mxu0 %v339
    %582 = vmatpush1.bf16.msra.mxu0 %v338
    %583 = vmatprep.subr.bf16.mxu0 %v343
    %584 = vmatpush1.bf16.msra.mxu0 %v342
    %585 = vmatprep.subr.bf16.mxu0 %v347
    %586 = vmatpush1.bf16.msra.mxu0 %v346
    %587 = vmatprep.subr.bf16.mxu0 %v351
    %588 = vmatpush1.bf16.msra.mxu0 %v350
    %589 = vmatprep.subr.bf16.mxu0 %v355
    %590 = vmatpush1.bf16.msra.mxu0 %v354
    %591 = vmatprep.subr.bf16.mxu0 %v359
    %592 = vmatpush1.bf16.msra.mxu0 %v358
    %593 = vmatprep.subr.bf16.mxu0 %v363
    %594 = vmatpush1.bf16.msra.mxu0 %v362
    %595 = vmatprep.subr.bf16.mxu0 %v367
    %596 = vmatpush1.bf16.msra.mxu0 %v366
    %597 = vmatprep.mubr.bf16.mxu0 %v303
    %598 = vmatmul.mubr.bf16.gmra.mrb[0].mxu0 %v302
    %v599 = vpop.f32.mrb[0].mxu0
    %v600 = vadd.f32 %v514, %v599
    %v601 = vpop.f32.mrb[0].mxu0
    %v602 = vadd.f32 %v516, %v601
    %v603 = vpop.f32.mrb[0].mxu0
    %v604 = vadd.f32 %v518, %v603
    %v605 = vpop.f32.mrb[0].mxu0
    %v606 = vadd.f32 %v520, %v605
    %607 = vdwg.mxu0
    %s608 = sshll.u32 %s299, 4
    %609 = dma.done %s170, %s608
    %v610 = vpack.c.bf16 %v254, %v246
    %v611 = vpack.c.bf16 %v255, %v247
    %v612 = vld [vmem:[#allocation2 + $0x400] sm:$0xff]
    %v613 = vld [vmem:[#allocation2 + $0x408] sm:$0xff]
    %v614 = vld [vmem:[#allocation2 + $0x410] sm:$0xff]
    %v615 = vld [vmem:[#allocation2 + $0x418] sm:$0xff]
    %v616 = vld [vmem:[#allocation2 + $0x420] sm:$0xff]
    %v617 = vld [vmem:[#allocation2 + $0x428] sm:$0xff]
    %v618 = vld [vmem:[#allocation2 + $0x430] sm:$0xff]
    %v619 = vld [vmem:[#allocation2 + $0x438] sm:$0xff]
    %v620 = vld [vmem:[#allocation2 + $0x440] sm:$0xff]
    %v621 = vld [vmem:[#allocation2 + $0x448] sm:$0xff]
    %v622 = vld [vmem:[#allocation2 + $0x450] sm:$0xff]
    %v623 = vld [vmem:[#allocation2 + $0x458] sm:$0xff]
    %v624 = vld [vmem:[#allocation2 + $0x460] sm:$0xff]
    %v625 = vld [vmem:[#allocation2 + $0x468] sm:$0xff]
    %v626 = vld [vmem:[#allocation2 + $0x470] sm:$0xff]
    %v627 = vld [vmem:[#allocation2 + $0x478] sm:$0xff]
    %v628 = vld [vmem:[#allocation2 + $0x480] sm:$0xff]
    %v629 = vld [vmem:[#allocation2 + $0x488] sm:$0xff]
    %v630 = vld [vmem:[#allocation2 + $0x490] sm:$0xff]
    %v631 = vld [vmem:[#allocation2 + $0x498] sm:$0xff]
    %v632 = vld [vmem:[#allocation2 + $0x4a0] sm:$0xff]
    %v633 = vld [vmem:[#allocation2 + $0x4a8] sm:$0xff]
    %v634 = vld [vmem:[#allocation2 + $0x4b0] sm:$0xff]
    %v635 = vld [vmem:[#allocation2 + $0x4b8] sm:$0xff]
    %v636 = vld [vmem:[#allocation2 + $0x4c0] sm:$0xff]
    %v637 = vld [vmem:[#allocation2 + $0x4c8] sm:$0xff]
    %v638 = vld [vmem:[#allocation2 + $0x4d0] sm:$0xff]
    %v639 = vld [vmem:[#allocation2 + $0x4d8] sm:$0xff]
    %v640 = vld [vmem:[#allocation2 + $0x4e0] sm:$0xff]
    %v641 = vld [vmem:[#allocation2 + $0x4e8] sm:$0xff]
    %v642 = vld [vmem:[#allocation2 + $0x4f0] sm:$0xff]
    %v643 = vld [vmem:[#allocation2 + $0x4f8] sm:$0xff]
    %v644 = vld [vmem:[#allocation2 + $0x500] sm:$0xff]
    %v645 = vld [vmem:[#allocation2 + $0x508] sm:$0xff]
    %v646 = vld [vmem:[#allocation2 + $0x510] sm:$0xff]
    %v647 = vld [vmem:[#allocation2 + $0x518] sm:$0xff]
    %v648 = vld [vmem:[#allocation2 + $0x520] sm:$0xff]
    %v649 = vld [vmem:[#allocation2 + $0x528] sm:$0xff]
    %v650 = vld [vmem:[#allocation2 + $0x530] sm:$0xff]
    %v651 = vld [vmem:[#allocation2 + $0x538] sm:$0xff]
    %v652 = vld [vmem:[#allocation2 + $0x540] sm:$0xff]
    %v653 = vld [vmem:[#allocation2 + $0x548] sm:$0xff]
    %v654 = vld [vmem:[#allocation2 + $0x550] sm:$0xff]
    %v655 = vld [vmem:[#allocation2 + $0x558] sm:$0xff]
    %v656 = vld [vmem:[#allocation2 + $0x560] sm:$0xff]
    %v657 = vld [vmem:[#allocation2 + $0x568] sm:$0xff]
    %v658 = vld [vmem:[#allocation2 + $0x570] sm:$0xff]
    %v659 = vld [vmem:[#allocation2 + $0x578] sm:$0xff]
    %v660 = vld [vmem:[#allocation2 + $0x580] sm:$0xff]
    %v661 = vld [vmem:[#allocation2 + $0x588] sm:$0xff]
    %v662 = vld [vmem:[#allocation2 + $0x590] sm:$0xff]
    %v663 = vld [vmem:[#allocation2 + $0x598] sm:$0xff]
    %v664 = vld [vmem:[#allocation2 + $0x5a0] sm:$0xff]
    %v665 = vld [vmem:[#allocation2 + $0x5a8] sm:$0xff]
    %v666 = vld [vmem:[#allocation2 + $0x5b0] sm:$0xff]
    %v667 = vld [vmem:[#allocation2 + $0x5b8] sm:$0xff]
    %v668 = vld [vmem:[#allocation2 + $0x5c0] sm:$0xff]
    %v669 = vld [vmem:[#allocation2 + $0x5c8] sm:$0xff]
    %v670 = vld [vmem:[#allocation2 + $0x5d0] sm:$0xff]
    %v671 = vld [vmem:[#allocation2 + $0x5d8] sm:$0xff]
    %v672 = vld [vmem:[#allocation2 + $0x5e0] sm:$0xff]
    %v673 = vld [vmem:[#allocation2 + $0x5e8] sm:$0xff]
    %v674 = vld [vmem:[#allocation2 + $0x5f0] sm:$0xff]
    %v675 = vld [vmem:[#allocation2 + $0x5f8] sm:$0xff]
    %676 = vmatprep.subr.bf16.mxu0 %v613
    %677 = vmatpush1.bf16.msra.mxu0 %v612
    %678 = vmatprep.subr.bf16.mxu0 %v617
    %679 = vmatpush1.bf16.msra.mxu0 %v616
    %680 = vmatprep.subr.bf16.mxu0 %v621
    %681 = vmatpush1.bf16.msra.mxu0 %v620
    %682 = vmatprep.subr.bf16.mxu0 %v625
    %683 = vmatpush1.bf16.msra.mxu0 %v624
    %684 = vmatprep.subr.bf16.mxu0 %v629
    %685 = vmatpush1.bf16.msra.mxu0 %v628
    %686 = vmatprep.subr.bf16.mxu0 %v633
    %687 = vmatpush1.bf16.msra.mxu0 %v632
    %688 = vmatprep.subr.bf16.mxu0 %v637
    %689 = vmatpush1.bf16.msra.mxu0 %v636
    %690 = vmatprep.subr.bf16.mxu0 %v641
    %691 = vmatpush1.bf16.msra.mxu0 %v640
    %692 = vmatprep.subr.bf16.mxu0 %v645
    %693 = vmatpush1.bf16.msra.mxu0 %v644
    %694 = vmatprep.subr.bf16.mxu0 %v649
    %695 = vmatpush1.bf16.msra.mxu0 %v648
    %696 = vmatprep.subr.bf16.mxu0 %v653
    %697 = vmatpush1.bf16.msra.mxu0 %v652
    %698 = vmatprep.subr.bf16.mxu0 %v657
    %699 = vmatpush1.bf16.msra.mxu0 %v656
    %700 = vmatprep.subr.bf16.mxu0 %v661
    %701 = vmatpush1.bf16.msra.mxu0 %v660
    %702 = vmatprep.subr.bf16.mxu0 %v665
    %703 = vmatpush1.bf16.msra.mxu0 %v664
    %704 = vmatprep.subr.bf16.mxu0 %v669
    %705 = vmatpush1.bf16.msra.mxu0 %v668
    %706 = vmatprep.subr.bf16.mxu0 %v673
    %707 = vmatpush1.bf16.msra.mxu0 %v672
    %708 = vmatprep.mubr.bf16.mxu0 %v611
    %709 = vmatmul.mubr.bf16.gmra.mrb[0].mxu0 %v610
    %v710 = vpop.f32.mrb[0].mxu0
    %v711 = vadd.f32 0.0, %v710
    %v712 = vpop.f32.mrb[0].mxu0
    %v713 = vadd.f32 0.0, %v712
    %v714 = vpop.f32.mrb[0].mxu0
    %v715 = vadd.f32 0.0, %v714
    %v716 = vpop.f32.mrb[0].mxu0
    %v717 = vadd.f32 0.0, %v716
    %718 = vdwg.mxu0
    %719 = vmatprep.subr.bf16.mxu0 %v615
    %720 = vmatpush1.bf16.msra.mxu0 %v614
    %721 = vmatprep.subr.bf16.mxu0 %v619
    %722 = vmatpush1.bf16.msra.mxu0 %v618
    %723 = vmatprep.subr.bf16.mxu0 %v623
    %724 = vmatpush1.bf16.msra.mxu0 %v622
    %725 = vmatprep.subr.bf16.mxu0 %v627
    %726 = vmatpush1.bf16.msra.mxu0 %v626
    %727 = vmatprep.subr.bf16.mxu0 %v631
    %728 = vmatpush1.bf16.msra.mxu0 %v630
    %729 = vmatprep.subr.bf16.mxu0 %v635
    %730 = vmatpush1.bf16.msra.mxu0 %v634
    %731 = vmatprep.subr.bf16.mxu0 %v639
    %732 = vmatpush1.bf16.msra.mxu0 %v638
    %733 = vmatprep.subr.bf16.mxu0 %v643
    %734 = vmatpush1.bf16.msra.mxu0 %v642
    %735 = vmatprep.subr.bf16.mxu0 %v647
    %736 = vmatpush1.bf16.msra.mxu0 %v646
    %737 = vmatprep.subr.bf16.mxu0 %v651
    %738 = vmatpush1.bf16.msra.mxu0 %v650
    %739 = vmatprep.subr.bf16.mxu0 %v655
    %740 = vmatpush1.bf16.msra.mxu0 %v654
    %741 = vmatprep.subr.bf16.mxu0 %v659
    %742 = vmatpush1.bf16.msra.mxu0 %v658
    %743 = vmatprep.subr.bf16.mxu0 %v663
    %744 = vmatpush1.bf16.msra.mxu0 %v662
    %745 = vmatprep.subr.bf16.mxu0 %v667
    %746 = vmatpush1.bf16.msra.mxu0 %v666
    %747 = vmatprep.subr.bf16.mxu0 %v671
    %748 = vmatpush1.bf16.msra.mxu0 %v670
    %749 = vmatprep.subr.bf16.mxu0 %v675
    %750 = vmatpush1.bf16.msra.mxu0 %v674
    %751 = vmatprep.mubr.bf16.mxu0 %v611
    %752 = vmatmul.mubr.bf16.gmra.mrb[0].mxu0 %v610
    %v753 = vpop.f32.mrb[0].mxu0
    %v754 = vadd.f32 0.0, %v753
    %v755 = vpop.f32.mrb[0].mxu0
    %v756 = vadd.f32 0.0, %v755
    %v757 = vpop.f32.mrb[0].mxu0
    %v758 = vadd.f32 0.0, %v757
    %v759 = vpop.f32.mrb[0].mxu0
    %v760 = vadd.f32 0.0, %v759
    %761 = vdwg.mxu0
    %v762 = vadd.f32 %v557, %v711
    %v763 = vadd.f32 %v559, %v713
    %v764 = vadd.f32 %v600, %v754
    %v765 = vadd.f32 %v602, %v756
    %v766 = vadd.f32 %v561, %v715
    %v767 = vadd.f32 %v563, %v717
    %v768 = vadd.f32 %v604, %v758
    %v769 = vadd.f32 %v606, %v760
    %s770 = sshll.u32 %s299, 4
    %771 = dma.done %s207, %s770
    %v772 = vpack.c.bf16 %v256, %v248
    %v773 = vpack.c.bf16 %v257, %v249
    %v774 = vld [vmem:[#allocation2 + $0x600] sm:$0xff]
    %v775 = vld [vmem:[#allocation2 + $0x608] sm:$0xff]
    %v776 = vld [vmem:[#allocation2 + $0x610] sm:$0xff]
    %v777 = vld [vmem:[#allocation2 + $0x618] sm:$0xff]
    %v778 = vld [vmem:[#allocation2 + $0x620] sm:$0xff]
    %v779 = vld [vmem:[#allocation2 + $0x628] sm:$0xff]
    %v780 = vld [vmem:[#allocation2 + $0x630] sm:$0xff]
    %v781 = vld [vmem:[#allocation2 + $0x638] sm:$0xff]
    %v782 = vld [vmem:[#allocation2 + $0x640] sm:$0xff]
    %v783 = vld [vmem:[#allocation2 + $0x648] sm:$0xff]
    %v784 = vld [vmem:[#allocation2 + $0x650] sm:$0xff]
    %v785 = vld [vmem:[#allocation2 + $0x658] sm:$0xff]
    %v786 = vld [vmem:[#allocation2 + $0x660] sm:$0xff]
    %v787 = vld [vmem:[#allocation2 + $0x668] sm:$0xff]
    %v788 = vld [vmem:[#allocation2 + $0x670] sm:$0xff]
    %v789 = vld [vmem:[#allocation2 + $0x678] sm:$0xff]
    %v790 = vld [vmem:[#allocation2 + $0x680] sm:$0xff]
    %v791 = vld [vmem:[#allocation2 + $0x688] sm:$0xff]
    %v792 = vld [vmem:[#allocation2 + $0x690] sm:$0xff]
    %v793 = vld [vmem:[#allocation2 + $0x698] sm:$0xff]
    %v794 = vld [vmem:[#allocation2 + $0x6a0] sm:$0xff]
    %v795 = vld [vmem:[#allocation2 + $0x6a8] sm:$0xff]
    %v796 = vld [vmem:[#allocation2 + $0x6b0] sm:$0xff]
    %v797 = vld [vmem:[#allocation2 + $0x6b8] sm:$0xff]
    %v798 = vld [vmem:[#allocation2 + $0x6c0] sm:$0xff]
    %v799 = vld [vmem:[#allocation2 + $0x6c8] sm:$0xff]
    %v800 = vld [vmem:[#allocation2 + $0x6d0] sm:$0xff]
    %v801 = vld [vmem:[#allocation2 + $0x6d8] sm:$0xff]
    %v802 = vld [vmem:[#allocation2 + $0x6e0] sm:$0xff]
    %v803 = vld [vmem:[#allocation2 + $0x6e8] sm:$0xff]
    %v804 = vld [vmem:[#allocation2 + $0x6f0] sm:$0xff]
    %v805 = vld [vmem:[#allocation2 + $0x6f8] sm:$0xff]
    %v806 = vld [vmem:[#allocation2 + $0x700] sm:$0xff]
    %v807 = vld [vmem:[#allocation2 + $0x708] sm:$0xff]
    %v808 = vld [vmem:[#allocation2 + $0x710] sm:$0xff]
    %v809 = vld [vmem:[#allocation2 + $0x718] sm:$0xff]
    %v810 = vld [vmem:[#allocation2 + $0x720] sm:$0xff]
    %v811 = vld [vmem:[#allocation2 + $0x728] sm:$0xff]
    %v812 = vld [vmem:[#allocation2 + $0x730] sm:$0xff]
    %v813 = vld [vmem:[#allocation2 + $0x738] sm:$0xff]
    %v814 = vld [vmem:[#allocation2 + $0x740] sm:$0xff]
    %v815 = vld [vmem:[#allocation2 + $0x748] sm:$0xff]
    %v816 = vld [vmem:[#allocation2 + $0x750] sm:$0xff]
    %v817 = vld [vmem:[#allocation2 + $0x758] sm:$0xff]
    %v818 = vld [vmem:[#allocation2 + $0x760] sm:$0xff]
    %v819 = vld [vmem:[#allocation2 + $0x768] sm:$0xff]
    %v820 = vld [vmem:[#allocation2 + $0x770] sm:$0xff]
    %v821 = vld [vmem:[#allocation2 + $0x778] sm:$0xff]
    %v822 = vld [vmem:[#allocation2 + $0x780] sm:$0xff]
    %v823 = vld [vmem:[#allocation2 + $0x788] sm:$0xff]
    %v824 = vld [vmem:[#allocation2 + $0x790] sm:$0xff]
    %v825 = vld [vmem:[#allocation2 + $0x798] sm:$0xff]
    %v826 = vld [vmem:[#allocation2 + $0x7a0] sm:$0xff]
    %v827 = vld [vmem:[#allocation2 + $0x7a8] sm:$0xff]
    %v828 = vld [vmem:[#allocation2 + $0x7b0] sm:$0xff]
    %v829 = vld [vmem:[#allocation2 + $0x7b8] sm:$0xff]
    %v830 = vld [vmem:[#allocation2 + $0x7c0] sm:$0xff]
    %v831 = vld [vmem:[#allocation2 + $0x7c8] sm:$0xff]
    %v832 = vld [vmem:[#allocation2 + $0x7d0] sm:$0xff]
    %v833 = vld [vmem:[#allocation2 + $0x7d8] sm:$0xff]
    %v834 = vld [vmem:[#allocation2 + $0x7e0] sm:$0xff]
    %v835 = vld [vmem:[#allocation2 + $0x7e8] sm:$0xff]
    %v836 = vld [vmem:[#allocation2 + $0x7f0] sm:$0xff]
    %v837 = vld [vmem:[#allocation2 + $0x7f8] sm:$0xff]
    %838 = vmatprep.subr.bf16.mxu0 %v775
    %839 = vmatpush1.bf16.msra.mxu0 %v774
    %840 = vmatprep.subr.bf16.mxu0 %v779
    %841 = vmatpush1.bf16.msra.mxu0 %v778
    %842 = vmatprep.subr.bf16.mxu0 %v783
    %843 = vmatpush1.bf16.msra.mxu0 %v782
    %844 = vmatprep.subr.bf16.mxu0 %v787
    %845 = vmatpush1.bf16.msra.mxu0 %v786
    %846 = vmatprep.subr.bf16.mxu0 %v791
    %847 = vmatpush1.bf16.msra.mxu0 %v790
    %848 = vmatprep.subr.bf16.mxu0 %v795
    %849 = vmatpush1.bf16.msra.mxu0 %v794
    %850 = vmatprep.subr.bf16.mxu0 %v799
    %851 = vmatpush1.bf16.msra.mxu0 %v798
    %852 = vmatprep.subr.bf16.mxu0 %v803
    %853 = vmatpush1.bf16.msra.mxu0 %v802
    %854 = vmatprep.subr.bf16.mxu0 %v807
    %855 = vmatpush1.bf16.msra.mxu0 %v806
    %856 = vmatprep.subr.bf16.mxu0 %v811
    %857 = vmatpush1.bf16.msra.mxu0 %v810
    %858 = vmatprep.subr.bf16.mxu0 %v815
    %859 = vmatpush1.bf16.msra.mxu0 %v814
    %860 = vmatprep.subr.bf16.mxu0 %v819
    %861 = vmatpush1.bf16.msra.mxu0 %v818
    %862 = vmatprep.subr.bf16.mxu0 %v823
    %863 = vmatpush1.bf16.msra.mxu0 %v822
    %864 = vmatprep.subr.bf16.mxu0 %v827
    %865 = vmatpush1.bf16.msra.mxu0 %v826
    %866 = vmatprep.subr.bf16.mxu0 %v831
    %867 = vmatpush1.bf16.msra.mxu0 %v830
    %868 = vmatprep.subr.bf16.mxu0 %v835
    %869 = vmatpush1.bf16.msra.mxu0 %v834
    %870 = vmatprep.mubr.bf16.mxu0 %v773
    %871 = vmatmul.mubr.bf16.gmra.mrb[0].mxu0 %v772
    %v872 = vpop.f32.mrb[0].mxu0
    %v873 = vadd.f32 0.0, %v872
    %v874 = vpop.f32.mrb[0].mxu0
    %v875 = vadd.f32 0.0, %v874
    %v876 = vpop.f32.mrb[0].mxu0
    %v877 = vadd.f32 0.0, %v876
    %v878 = vpop.f32.mrb[0].mxu0
    %v879 = vadd.f32 0.0, %v878
    %880 = vdwg.mxu0
    %881 = vmatprep.subr.bf16.mxu0 %v777
    %882 = vmatpush1.bf16.msra.mxu0 %v776
    %883 = vmatprep.subr.bf16.mxu0 %v781
    %884 = vmatpush1.bf16.msra.mxu0 %v780
    %885 = vmatprep.subr.bf16.mxu0 %v785
    %886 = vmatpush1.bf16.msra.mxu0 %v784
    %887 = vmatprep.subr.bf16.mxu0 %v789
    %888 = vmatpush1.bf16.msra.mxu0 %v788
    %889 = vmatprep.subr.bf16.mxu0 %v793
    %890 = vmatpush1.bf16.msra.mxu0 %v792
    %891 = vmatprep.subr.bf16.mxu0 %v797
    %892 = vmatpush1.bf16.msra.mxu0 %v796
    %893 = vmatprep.subr.bf16.mxu0 %v801
    %894 = vmatpush1.bf16.msra.mxu0 %v800
    %895 = vmatprep.subr.bf16.mxu0 %v805
    %896 = vmatpush1.bf16.msra.mxu0 %v804
    %897 = vmatprep.subr.bf16.mxu0 %v809
    %898 = vmatpush1.bf16.msra.mxu0 %v808
    %899 = vmatprep.subr.bf16.mxu0 %v813
    %900 = vmatpush1.bf16.msra.mxu0 %v812
    %901 = vmatprep.subr.bf16.mxu0 %v817
    %902 = vmatpush1.bf16.msra.mxu0 %v816
    %903 = vmatprep.subr.bf16.mxu0 %v821
    %904 = vmatpush1.bf16.msra.mxu0 %v820
    %905 = vmatprep.subr.bf16.mxu0 %v825
    %906 = vmatpush1.bf16.msra.mxu0 %v824
    %907 = vmatprep.subr.bf16.mxu0 %v829
    %908 = vmatpush1.bf16.msra.mxu0 %v828
    %909 = vmatprep.subr.bf16.mxu0 %v833
    %910 = vmatpush1.bf16.msra.mxu0 %v832
    %911 = vmatprep.subr.bf16.mxu0 %v837
    %912 = vmatpush1.bf16.msra.mxu0 %v836
    %913 = vmatprep.mubr.bf16.mxu0 %v773
    %914 = vmatmul.mubr.bf16.gmra.mrb[0].mxu0 %v772
    %v915 = vpop.f32.mrb[0].mxu0
    %v916 = vadd.f32 0.0, %v915
    %v917 = vpop.f32.mrb[0].mxu0
    %v918 = vadd.f32 0.0, %v917
    %v919 = vpop.f32.mrb[0].mxu0
    %v920 = vadd.f32 0.0, %v919
    %v921 = vpop.f32.mrb[0].mxu0
    %v922 = vadd.f32 0.0, %v921
    %923 = vdwg.mxu0
    %v924 = vadd.f32 %v762, %v873
    %v925 = vadd.f32 %v763, %v875
    %v926 = vadd.f32 %v764, %v916
    %v927 = vadd.f32 %v765, %v918
    %v928 = vadd.f32 %v766, %v877
    %v929 = vadd.f32 %v767, %v879
    %v930 = vadd.f32 %v768, %v920
    %v931 = vadd.f32 %v769, %v922
    %vm932 = vcmask 130048
    %v934 = vsel %vm932, %v258, 0
    %v937 = vsel %vm932, %v259, 0
    %939 = vmatprep.subr.mxu0 %v925
    %940 = vmatpush1.msra.mxu0 %v924
    %941 = vmatprep.subr.mxu0 %v929
    %942 = vmatpush1.msra.mxu0 %v928
    %943 = vmatprep.subr.mxu0 0.0
    %944 = vmatpush1.msra.mxu0 0.0
    %945 = vmatprep.subr.mxu0 0.0
    %946 = vmatpush1.msra.mxu0 0.0
    %947 = vmatprep.subr.mxu0 0.0
    %948 = vmatpush1.msra.mxu0 0.0
    %949 = vmatprep.subr.mxu0 0.0
    %950 = vmatpush1.msra.mxu0 0.0
    %951 = vmatprep.subr.mxu0 0.0
    %952 = vmatpush1.msra.mxu0 0.0
    %953 = vmatprep.subr.mxu0 0.0
    %954 = vmatpush1.msra.mxu0 0.0
    %955 = vmatprep.subr.mxu0 0.0
    %956 = vmatpush1.msra.mxu0 0.0
    %957 = vmatprep.subr.mxu0 0.0
    %958 = vmatpush1.msra.mxu0 0.0
    %959 = vmatprep.subr.mxu0 0.0
    %960 = vmatpush1.msra.mxu0 0.0
    %961 = vmatprep.subr.mxu0 0.0
    %962 = vmatpush1.msra.mxu0 0.0
    %963 = vmatprep.subr.mxu0 0.0
    %964 = vmatpush1.msra.mxu0 0.0
    %965 = vmatprep.subr.mxu0 0.0
    %966 = vmatpush1.msra.mxu0 0.0
    %967 = vmatprep.subr.mxu0 0.0
    %968 = vmatpush1.msra.mxu0 0.0
    %969 = vmatprep.subr.mxu0 0.0
    %970 = vmatpush1.msra.mxu0 0.0
    %971 = vmatprep.subr.mxu0 0.0
    %972 = vmatpush1.msra.mxu0 0.0
    %973 = vmatprep.subr.mxu0 0.0
    %974 = vmatpush1.msra.mxu0 0.0
    %975 = vmatprep.subr.mxu0 0.0
    %976 = vmatpush1.msra.mxu0 0.0
    %977 = vmatprep.subr.mxu0 0.0
    %978 = vmatpush1.msra.mxu0 0.0
    %979 = vmatprep.subr.mxu0 0.0
    %980 = vmatpush1.msra.mxu0 0.0
    %981 = vmatprep.subr.mxu0 0.0
    %982 = vmatpush1.msra.mxu0 0.0
    %983 = vmatprep.subr.mxu0 0.0
    %984 = vmatpush1.msra.mxu0 0.0
    %985 = vmatprep.subr.mxu0 0.0
    %986 = vmatpush1.msra.mxu0 0.0
    %987 = vmatprep.subr.mxu0 0.0
    %988 = vmatpush1.msra.mxu0 0.0
    %989 = vmatprep.subr.mxu0 0.0
    %990 = vmatpush1.msra.mxu0 0.0
    %991 = vmatprep.subr.mxu0 0.0
    %992 = vmatpush1.msra.mxu0 0.0
    %993 = vmatprep.subr.mxu0 0.0
    %994 = vmatpush1.msra.mxu0 0.0
    %995 = vmatprep.subr.mxu0 0.0
    %996 = vmatpush1.msra.mxu0 0.0
    %997 = vmatprep.subr.mxu0 0.0
    %998 = vmatpush1.msra.mxu0 0.0
    %999 = vmatprep.subr.mxu0 0.0
    %1000 = vmatpush1.msra.mxu0 0.0
    %1001 = vmatprep.subr.mxu0 0.0
    %1002 = vmatpush1.msra.mxu0 0.0
    %1003 = vmatprep.mubr.f32.mxu0 0.0
    %1004 = vmatmul.mubr.f32.gmra.mrb[0].mxu0 %v934
    %v1005 = vpop.f32.mrb[0].mxu0
    %v1006 = vadd.f32 0.0, %v1005
    %v1007 = vpop.f32.mrb[0].mxu0
    %v1008 = vadd.f32 0.0, %v1007
    %1009 = vmatprep.mubr.f32.mxu0 0.0
    %1010 = vmatmul.mubr.f32.gmra.mrb[0].mxu0 %v937
    %v1011 = vpop.f32.mrb[0].mxu0
    %v1012 = vadd.f32 0.0, %v1011
    %v1013 = vpop.f32.mrb[0].mxu0
    %v1014 = vadd.f32 0.0, %v1013
    %1015 = vdwg.mxu0
    %1016 = vmatprep.subr.mxu0 %v927
    %1017 = vmatpush1.msra.mxu0 %v926
    %1018 = vmatprep.subr.mxu0 %v931
    %1019 = vmatpush1.msra.mxu0 %v930
    %1020 = vmatprep.subr.mxu0 0.0
    %1021 = vmatpush1.msra.mxu0 0.0
    %1022 = vmatprep.subr.mxu0 0.0
    %1023 = vmatpush1.msra.mxu0 0.0
    %1024 = vmatprep.subr.mxu0 0.0
    %1025 = vmatpush1.msra.mxu0 0.0
    %1026 = vmatprep.subr.mxu0 0.0
    %1027 = vmatpush1.msra.mxu0 0.0
    %1028 = vmatprep.subr.mxu0 0.0
    %1029 = vmatpush1.msra.mxu0 0.0
    %1030 = vmatprep.subr.mxu0 0.0
    %1031 = vmatpush1.msra.mxu0 0.0
    %1032 = vmatprep.subr.mxu0 0.0
    %1033 = vmatpush1.msra.mxu0 0.0
    %1034 = vmatprep.subr.mxu0 0.0
    %1035 = vmatpush1.msra.mxu0 0.0
    %1036 = vmatprep.subr.mxu0 0.0
    %1037 = vmatpush1.msra.mxu0 0.0
    %1038 = vmatprep.subr.mxu0 0.0
    %1039 = vmatpush1.msra.mxu0 0.0
    %1040 = vmatprep.subr.mxu0 0.0
    %1041 = vmatpush1.msra.mxu0 0.0
    %1042 = vmatprep.subr.mxu0 0.0
    %1043 = vmatpush1.msra.mxu0 0.0
    %1044 = vmatprep.subr.mxu0 0.0
    %1045 = vmatpush1.msra.mxu0 0.0
    %1046 = vmatprep.subr.mxu0 0.0
    %1047 = vmatpush1.msra.mxu0 0.0
    %1048 = vmatprep.subr.mxu0 0.0
    %1049 = vmatpush1.msra.mxu0 0.0
    %1050 = vmatprep.subr.mxu0 0.0
    %1051 = vmatpush1.msra.mxu0 0.0
    %1052 = vmatprep.subr.mxu0 0.0
    %1053 = vmatpush1.msra.mxu0 0.0
    %1054 = vmatprep.subr.mxu0 0.0
    %1055 = vmatpush1.msra.mxu0 0.0
    %1056 = vmatprep.subr.mxu0 0.0
    %1057 = vmatpush1.msra.mxu0 0.0
    %1058 = vmatprep.subr.mxu0 0.0
    %1059 = vmatpush1.msra.mxu0 0.0
    %1060 = vmatprep.subr.mxu0 0.0
    %1061 = vmatpush1.msra.mxu0 0.0
    %1062 = vmatprep.subr.mxu0 0.0
    %1063 = vmatpush1.msra.mxu0 0.0
    %1064 = vmatprep.subr.mxu0 0.0
    %1065 = vmatpush1.msra.mxu0 0.0
    %1066 = vmatprep.subr.mxu0 0.0
    %1067 = vmatpush1.msra.mxu0 0.0
    %1068 = vmatprep.subr.mxu0 0.0
    %1069 = vmatpush1.msra.mxu0 0.0
    %1070 = vmatprep.subr.mxu0 0.0
    %1071 = vmatpush1.msra.mxu0 0.0
    %1072 = vmatprep.subr.mxu0 0.0
    %1073 = vmatpush1.msra.mxu0 0.0
    %1074 = vmatprep.subr.mxu0 0.0
    %1075 = vmatpush1.msra.mxu0 0.0
    %1076 = vmatprep.subr.mxu0 0.0
    %1077 = vmatpush1.msra.mxu0 0.0
    %1078 = vmatprep.subr.mxu0 0.0
    %1079 = vmatpush1.msra.mxu0 0.0
    %1080 = vmatprep.mubr.f32.mxu0 0.0
    %1081 = vmatmul.mubr.f32.gmra.mrb[0].mxu0 %v934
    %v1082 = vpop.f32.mrb[0].mxu0
    %v1083 = vadd.f32 0.0, %v1082
    %v1084 = vpop.f32.mrb[0].mxu0
    %v1085 = vadd.f32 0.0, %v1084
    %1086 = vmatprep.mubr.f32.mxu0 0.0
    %1087 = vmatmul.mubr.f32.gmra.mrb[0].mxu0 %v937
    %v1088 = vpop.f32.mrb[0].mxu0
    %v1089 = vadd.f32 0.0, %v1088
    %v1090 = vpop.f32.mrb[0].mxu0
    %v1091 = vadd.f32 0.0, %v1090
    %1092 = vdwg.mxu0
    %v1093 = vadd.f32 %v1006, %v1008
    %v1094 = vadd.f32 %v1093, %v1083
    %v1095 = vadd.f32 %v1094, %v1085
    %1096 = vadd.xlane.f32.xlu0 %v1095
    %v1097 = vpop.xlane.xlu0 %1096
    %v1098 = vadd.f32 %v1012, %v1014
    %v1099 = vadd.f32 %v1098, %v1089
    %v1100 = vadd.f32 %v1099, %v1091
    %1101 = vadd.xlane.f32.xlu0 %v1100
    %v1102 = vpop.xlane.xlu0 %1101
    %v1103 = vmul.f32 %v1006, %v1006
    %v1104 = vmul.f32 %v1008, %v1008
    %v1105 = vmul.f32 %v1083, %v1083
    %v1106 = vmul.f32 %v1085, %v1085
    %v1107 = vmul.f32 %v1012, %v1012
    %v1108 = vmul.f32 %v1014, %v1014
    %v1109 = vmul.f32 %v1089, %v1089
    %v1110 = vmul.f32 %v1091, %v1091
    %v1111 = vadd.f32 %v1103, %v1104
    %v1112 = vadd.f32 %v1111, %v1105
    %v1113 = vadd.f32 %v1112, %v1106
    %1114 = vadd.xlane.f32.xlu0 %v1113
    %v1115 = vpop.xlane.xlu0 %1114
    %v1116 = vadd.f32 %v1107, %v1108
    %v1117 = vadd.f32 %v1116, %v1109
    %v1118 = vadd.f32 %v1117, %v1110
    %1119 = vadd.xlane.f32.xlu0 %v1118
    %v1120 = vpop.xlane.xlu0 %1119
    %v1121 = vadd.f32 %v1097, %v1102
    %v1122 = vadd.f32 %v1115, %v1120
    %v1123 = vmul.f32 %v1121, 0.0009765625
    %v1124 = vmul.f32 %v1122, 0.0009765625
    %v1125 = vmul.f32 %v1123, %v1123
    %v1126 = vsub.f32 %v1124, %v1125
    %v1127 = vmax.f32 %v1126, 0.0
    %v1128 = vadd.f32 %v1127, 1e-05
    %v1129 = vrsqrt.pop %v1128
    %v1130 = vmul.f32 %v260, %v1129
    %v1131 = vmul.f32 %v1123, %v1130
    %v1132 = vsub.f32 %v261, %v1131
    %1134 = vset.pattern.permute.xlu0 0
    %1135 = vperm.xlu0 %1134, %v1130
    %v1136 = vpop.permute.xlu0 %1135
    %v1138 = vmul.f32 %v1006, %v1136
    %v1139 = vmul.f32 %v1008, %v1136
    %v1140 = vmul.f32 %v1083, %v1136
    %v1141 = vmul.f32 %v1085, %v1136
    %v1142 = vmul.f32 %v1012, %v1136
    %v1143 = vmul.f32 %v1014, %v1136
    %v1144 = vmul.f32 %v1089, %v1136
    %v1145 = vmul.f32 %v1091, %v1136
    %1147 = vset.pattern.permute.xlu0 0
    %1148 = vperm.xlu0 %1147, %v1132
    %v1149 = vpop.permute.xlu0 %1148
    %v1151 = vadd.f32 %v1138, %v1149
    %v1152 = vadd.f32 %v1139, %v1149
    %v1153 = vadd.f32 %v1140, %v1149
    %v1154 = vadd.f32 %v1141, %v1149
    %v1155 = vadd.f32 %v1142, %v1149
    %v1156 = vadd.f32 %v1143, %v1149
    %v1157 = vadd.f32 %v1144, %v1149
    %v1158 = vadd.f32 %v1145, %v1149
    %v1159 = vmax.f32 %v1151, 0.0
    %v1160 = vmax.f32 %v1152, 0.0
    %v1161 = vmax.f32 %v1153, 0.0
    %v1162 = vmax.f32 %v1154, 0.0
    %v1163 = vmax.f32 %v1155, 0.0
    %v1164 = vmax.f32 %v1156, 0.0
    %v1165 = vmax.f32 %v1157, 0.0
    %v1166 = vmax.f32 %v1158, 0.0
    %v1167 = vand.u32 2147483647, %v1151
    %v1168 = vand.u32 2147483647, %v1152
    %v1169 = vand.u32 2147483647, %v1153
    %v1170 = vand.u32 2147483647, %v1154
    %v1171 = vand.u32 2147483647, %v1155
    %v1172 = vand.u32 2147483647, %v1156
    %v1173 = vand.u32 2147483647, %v1157
    %v1174 = vand.u32 2147483647, %v1158
    %v1175 = vsub.f32 0.0, %v1167
    %v1176 = vsub.f32 0.0, %v1168
    %v1177 = vsub.f32 0.0, %v1169
    %v1178 = vsub.f32 0.0, %v1170
    %v1179 = vsub.f32 0.0, %v1171
    %v1180 = vsub.f32 0.0, %v1172
    %v1181 = vsub.f32 0.0, %v1173
    %v1182 = vsub.f32 0.0, %v1174
    %v1183 = vmul.f32 %v1175, 1.442695
    %v1184 = vpow.pop %v1183
    %v1185 = vmul.f32 %v1176, 1.442695
    %v1186 = vpow.pop %v1185
    %v1187 = vmul.f32 %v1177, 1.442695
    %v1188 = vpow.pop %v1187
    %v1189 = vmul.f32 %v1178, 1.442695
    %v1190 = vpow.pop %v1189
    %v1191 = vmul.f32 %v1179, 1.442695
    %v1192 = vpow.pop %v1191
    %v1193 = vmul.f32 %v1180, 1.442695
    %v1194 = vpow.pop %v1193
    %v1195 = vmul.f32 %v1181, 1.442695
    %v1196 = vpow.pop %v1195
    %v1197 = vmul.f32 %v1182, 1.442695
    %v1198 = vpow.pop %v1197
    %v1199 = vadd.f32 %v1184, 1.0
    %v1200 = vlog2.pop %v1199
    %v1201 = vmul.f32 %v1200, 0.6931472
    %v1202 = vmul.f32 -0.5, %v1184
    %v1203 = vadd.f32 %v1202, 1.0
    %v1204 = vmul.f32 %v1203, %v1184
    %v1205 = vand.u32 2147483647, %v1184
    %vm1206 = vcmp.lt.f32.partialorder %v1205, 0.0004427343
    %v1207 = vsel %vm1206, %v1204, %v1201
    %v1208 = vadd.f32 %v1186, 1.0
    %v1209 = vlog2.pop %v1208
    %v1210 = vmul.f32 %v1209, 0.6931472
    %v1211 = vmul.f32 -0.5, %v1186
    %v1212 = vadd.f32 %v1211, 1.0
    %v1213 = vmul.f32 %v1212, %v1186
    %v1214 = vand.u32 2147483647, %v1186
    %vm1215 = vcmp.lt.f32.partialorder %v1214, 0.0004427343
    %v1216 = vsel %vm1215, %v1213, %v1210
    %v1217 = vadd.f32 %v1188, 1.0
    %v1218 = vlog2.pop %v1217
    %v1219 = vmul.f32 %v1218, 0.6931472
    %v1220 = vmul.f32 -0.5, %v1188
    %v1221 = vadd.f32 %v1220, 1.0
    %v1222 = vmul.f32 %v1221, %v1188
    %v1223 = vand.u32 2147483647, %v1188
    %vm1224 = vcmp.lt.f32.partialorder %v1223, 0.0004427343
    %v1225 = vsel %vm1224, %v1222, %v1219
    %v1226 = vadd.f32 %v1190, 1.0
    %v1227 = vlog2.pop %v1226
    %v1228 = vmul.f32 %v1227, 0.6931472
    %v1229 = vmul.f32 -0.5, %v1190
    %v1230 = vadd.f32 %v1229, 1.0
    %v1231 = vmul.f32 %v1230, %v1190
    %v1232 = vand.u32 2147483647, %v1190
    %vm1233 = vcmp.lt.f32.partialorder %v1232, 0.0004427343
    %v1234 = vsel %vm1233, %v1231, %v1228
    %v1235 = vadd.f32 %v1192, 1.0
    %v1236 = vlog2.pop %v1235
    %v1237 = vmul.f32 %v1236, 0.6931472
    %v1238 = vmul.f32 -0.5, %v1192
    %v1239 = vadd.f32 %v1238, 1.0
    %v1240 = vmul.f32 %v1239, %v1192
    %v1241 = vand.u32 2147483647, %v1192
    %vm1242 = vcmp.lt.f32.partialorder %v1241, 0.0004427343
    %v1243 = vsel %vm1242, %v1240, %v1237
    %v1244 = vadd.f32 %v1194, 1.0
    %v1245 = vlog2.pop %v1244
    %v1246 = vmul.f32 %v1245, 0.6931472
    %v1247 = vmul.f32 -0.5, %v1194
    %v1248 = vadd.f32 %v1247, 1.0
    %v1249 = vmul.f32 %v1248, %v1194
    %v1250 = vand.u32 2147483647, %v1194
    %vm1251 = vcmp.lt.f32.partialorder %v1250, 0.0004427343
    %v1252 = vsel %vm1251, %v1249, %v1246
    %v1253 = vadd.f32 %v1196, 1.0
    %v1254 = vlog2.pop %v1253
    %v1255 = vmul.f32 %v1254, 0.6931472
    %v1256 = vmul.f32 -0.5, %v1196
    %v1257 = vadd.f32 %v1256, 1.0
    %v1258 = vmul.f32 %v1257, %v1196
    %v1259 = vand.u32 2147483647, %v1196
    %vm1260 = vcmp.lt.f32.partialorder %v1259, 0.0004427343
    %v1261 = vsel %vm1260, %v1258, %v1255
    %v1262 = vadd.f32 %v1198, 1.0
    %v1263 = vlog2.pop %v1262
    %v1264 = vmul.f32 %v1263, 0.6931472
    %v1265 = vmul.f32 -0.5, %v1198
    %v1266 = vadd.f32 %v1265, 1.0
    %v1267 = vmul.f32 %v1266, %v1198
    %v1268 = vand.u32 2147483647, %v1198
    %vm1269 = vcmp.lt.f32.partialorder %v1268, 0.0004427343
    %v1270 = vsel %vm1269, %v1267, %v1264
    %v1271 = vadd.f32 %v1159, %v1207
    %v1272 = vadd.f32 %v1160, %v1216
    %v1273 = vadd.f32 %v1161, %v1225
    %v1274 = vadd.f32 %v1162, %v1234
    %v1275 = vadd.f32 %v1163, %v1243
    %v1276 = vadd.f32 %v1164, %v1252
    %v1277 = vadd.f32 %v1165, %v1261
    %v1278 = vadd.f32 %v1166, %v1270
    %s1280 = sshll.u32 1, 14
    %s1281 = sxor.u32 4294967295, %s1280
    %s1283 = sadd.s32 2, %s100
    %s1285 = sshll.u32 7, 26
    %s1286 = sxor.u32 4294967295, %s1285
    %s1287 = sand.u32 0, %s1286
    %s1288 = sshll.u32 %s1283, 26
    %s1289 = sor.u32 %s1287, %s1288
    %s1290 = sshll.u32 [#allocation2], 4
    %s1291 = int_to_ptr.vmem [resolvable:$true] %s1290
    %1294 = sst [smem:[#allocation23]] 512
    %s1295 = scalar_lea.smem [#allocation23], 1
    %1296 = sst [smem:[%s1295]] 512
    %s1297 = scalar_lea.smem [#allocation23], 2
    %1298 = sst [smem:[%s1297]] 4
    %s1299 = scalar_lea.smem [#allocation23], 3
    %1300 = sst [smem:[%s1299]] 64
    %s1301 = scalar_lea.smem [#allocation23], 4
    %1302 = sst [smem:[%s1301]] 128
    %s1303 = scalar_lea.smem [#allocation23], 5
    %1304 = sst [smem:[%s1303]] 2
    %s1305 = scalar_lea.smem [#allocation23], 6
    %1306 = sst [smem:[%s1305]] 256
    %s1307 = scalar_lea.smem [#allocation23], 7
    %1308 = sst [smem:[%s1307]] 64
    %s1309 = scalar_lea.smem [#allocation23], 8
    %1310 = sst [smem:[%s1309]] 4
    %1312 = dma.general %s6, 16384, %s1291, [#allocation3], [#allocation22], [#allocation23], %s1289, 0
    %s1313 = smul.u32 4, 64
    %s1314 = smul.u32 %s1313, 4
    %s1315 = sshll.u32 %s1314, 4
    %1316 = dma.done %s263, %s1315
    %v1317 = vld [vmem:[#allocation2 + $0x800] sm:$0xff]
    %v1318 = vld [vmem:[#allocation2 + $0x808] sm:$0xff]
    %v1319 = vld [vmem:[#allocation2 + $0x810] sm:$0xff]
    %v1320 = vld [vmem:[#allocation2 + $0x818] sm:$0xff]
    %v1321 = vld [vmem:[#allocation2 + $0x820] sm:$0xff]
    %v1322 = vld [vmem:[#allocation2 + $0x828] sm:$0xff]
    %v1323 = vld [vmem:[#allocation2 + $0x830] sm:$0xff]
    %v1324 = vld [vmem:[#allocation2 + $0x838] sm:$0xff]
    %v1325 = vld [vmem:[#allocation2 + $0x840] sm:$0xff]
    %v1326 = vld [vmem:[#allocation2 + $0x848] sm:$0xff]
    %v1327 = vld [vmem:[#allocation2 + $0x850] sm:$0xff]
    %v1328 = vld [vmem:[#allocation2 + $0x858] sm:$0xff]
    %v1329 = vld [vmem:[#allocation2 + $0x860] sm:$0xff]
    %v1330 = vld [vmem:[#allocation2 + $0x868] sm:$0xff]
    %v1331 = vld [vmem:[#allocation2 + $0x870] sm:$0xff]
    %v1332 = vld [vmem:[#allocation2 + $0x878] sm:$0xff]
    %v1333 = vld [vmem:[#allocation2 + $0x880] sm:$0xff]
    %v1334 = vld [vmem:[#allocation2 + $0x888] sm:$0xff]
    %v1335 = vld [vmem:[#allocation2 + $0x890] sm:$0xff]
    %v1336 = vld [vmem:[#allocation2 + $0x898] sm:$0xff]
    %v1337 = vld [vmem:[#allocation2 + $0x8a0] sm:$0xff]
    %v1338 = vld [vmem:[#allocation2 + $0x8a8] sm:$0xff]
    %v1339 = vld [vmem:[#allocation2 + $0x8b0] sm:$0xff]
    %v1340 = vld [vmem:[#allocation2 + $0x8b8] sm:$0xff]
    %v1341 = vld [vmem:[#allocation2 + $0x8c0] sm:$0xff]
    %v1342 = vld [vmem:[#allocation2 + $0x8c8] sm:$0xff]
    %v1343 = vld [vmem:[#allocation2 + $0x8d0] sm:$0xff]
    %v1344 = vld [vmem:[#allocation2 + $0x8d8] sm:$0xff]
    %v1345 = vld [vmem:[#allocation2 + $0x8e0] sm:$0xff]
    %v1346 = vld [vmem:[#allocation2 + $0x8e8] sm:$0xff]
    %v1347 = vld [vmem:[#allocation2 + $0x8f0] sm:$0xff]
    %v1348 = vld [vmem:[#allocation2 + $0x8f8] sm:$0xff]
    %v1349 = vld [vmem:[#allocation2 + $0x900] sm:$0xff]
    %v1350 = vld [vmem:[#allocation2 + $0x908] sm:$0xff]
    %v1351 = vld [vmem:[#allocation2 + $0x910] sm:$0xff]
    %v1352 = vld [vmem:[#allocation2 + $0x918] sm:$0xff]
    %v1353 = vld [vmem:[#allocation2 + $0x920] sm:$0xff]
    %v1354 = vld [vmem:[#allocation2 + $0x928] sm:$0xff]
    %v1355 = vld [vmem:[#allocation2 + $0x930] sm:$0xff]
    %v1356 = vld [vmem:[#allocation2 + $0x938] sm:$0xff]
    %v1357 = vld [vmem:[#allocation2 + $0x940] sm:$0xff]
    %v1358 = vld [vmem:[#allocation2 + $0x948] sm:$0xff]
    %v1359 = vld [vmem:[#allocation2 + $0x950] sm:$0xff]
    %v1360 = vld [vmem:[#allocation2 + $0x958] sm:$0xff]
    %v1361 = vld [vmem:[#allocation2 + $0x960] sm:$0xff]
    %v1362 = vld [vmem:[#allocation2 + $0x968] sm:$0xff]
    %v1363 = vld [vmem:[#allocation2 + $0x970] sm:$0xff]
    %v1364 = vld [vmem:[#allocation2 + $0x978] sm:$0xff]
    %v1365 = vld [vmem:[#allocation2 + $0x980] sm:$0xff]
    %v1366 = vld [vmem:[#allocation2 + $0x988] sm:$0xff]
    %v1367 = vld [vmem:[#allocation2 + $0x990] sm:$0xff]
    %v1368 = vld [vmem:[#allocation2 + $0x998] sm:$0xff]
    %v1369 = vld [vmem:[#allocation2 + $0x9a0] sm:$0xff]
    %v1370 = vld [vmem:[#allocation2 + $0x9a8] sm:$0xff]
    %v1371 = vld [vmem:[#allocation2 + $0x9b0] sm:$0xff]
    %v1372 = vld [vmem:[#allocation2 + $0x9b8] sm:$0xff]
    %v1373 = vld [vmem:[#allocation2 + $0x9c0] sm:$0xff]
    %v1374 = vld [vmem:[#allocation2 + $0x9c8] sm:$0xff]
    %v1375 = vld [vmem:[#allocation2 + $0x9d0] sm:$0xff]
    %v1376 = vld [vmem:[#allocation2 + $0x9d8] sm:$0xff]
    %v1377 = vld [vmem:[#allocation2 + $0x9e0] sm:$0xff]
    %v1378 = vld [vmem:[#allocation2 + $0x9e8] sm:$0xff]
    %v1379 = vld [vmem:[#allocation2 + $0x9f0] sm:$0xff]
    %v1380 = vld [vmem:[#allocation2 + $0x9f8] sm:$0xff]
    %v1381 = vld [vmem:[#allocation2 + $0xa00] sm:$0xff]
    %v1382 = vld [vmem:[#allocation2 + $0xa08] sm:$0xff]
    %v1383 = vld [vmem:[#allocation2 + $0xa10] sm:$0xff]
    %v1384 = vld [vmem:[#allocation2 + $0xa18] sm:$0xff]
    %v1385 = vld [vmem:[#allocation2 + $0xa20] sm:$0xff]
    %v1386 = vld [vmem:[#allocation2 + $0xa28] sm:$0xff]
    %v1387 = vld [vmem:[#allocation2 + $0xa30] sm:$0xff]
    %v1388 = vld [vmem:[#allocation2 + $0xa38] sm:$0xff]
    %v1389 = vld [vmem:[#allocation2 + $0xa40] sm:$0xff]
    %v1390 = vld [vmem:[#allocation2 + $0xa48] sm:$0xff]
    %v1391 = vld [vmem:[#allocation2 + $0xa50] sm:$0xff]
    %v1392 = vld [vmem:[#allocation2 + $0xa58] sm:$0xff]
    %v1393 = vld [vmem:[#allocation2 + $0xa60] sm:$0xff]
    %v1394 = vld [vmem:[#allocation2 + $0xa68] sm:$0xff]
    %v1395 = vld [vmem:[#allocation2 + $0xa70] sm:$0xff]
    %v1396 = vld [vmem:[#allocation2 + $0xa78] sm:$0xff]
    %v1397 = vld [vmem:[#allocation2 + $0xa80] sm:$0xff]
    %v1398 = vld [vmem:[#allocation2 + $0xa88] sm:$0xff]
    %v1399 = vld [vmem:[#allocation2 + $0xa90] sm:$0xff]
    %v1400 = vld [vmem:[#allocation2 + $0xa98] sm:$0xff]
    %v1401 = vld [vmem:[#allocation2 + $0xaa0] sm:$0xff]
    %v1402 = vld [vmem:[#allocation2 + $0xaa8] sm:$0xff]
    %v1403 = vld [vmem:[#allocation2 + $0xab0] sm:$0xff]
    %v1404 = vld [vmem:[#allocation2 + $0xab8] sm:$0xff]
    %v1405 = vld [vmem:[#allocation2 + $0xac0] sm:$0xff]
    %v1406 = vld [vmem:[#allocation2 + $0xac8] sm:$0xff]
    %v1407 = vld [vmem:[#allocation2 + $0xad0] sm:$0xff]
    %v1408 = vld [vmem:[#allocation2 + $0xad8] sm:$0xff]
    %v1409 = vld [vmem:[#allocation2 + $0xae0] sm:$0xff]
    %v1410 = vld [vmem:[#allocation2 + $0xae8] sm:$0xff]
    %v1411 = vld [vmem:[#allocation2 + $0xaf0] sm:$0xff]
    %v1412 = vld [vmem:[#allocation2 + $0xaf8] sm:$0xff]
    %v1413 = vld [vmem:[#allocation2 + $0xb00] sm:$0xff]
    %v1414 = vld [vmem:[#allocation2 + $0xb08] sm:$0xff]
    %v1415 = vld [vmem:[#allocation2 + $0xb10] sm:$0xff]
    %v1416 = vld [vmem:[#allocation2 + $0xb18] sm:$0xff]
    %v1417 = vld [vmem:[#allocation2 + $0xb20] sm:$0xff]
    %v1418 = vld [vmem:[#allocation2 + $0xb28] sm:$0xff]
    %v1419 = vld [vmem:[#allocation2 + $0xb30] sm:$0xff]
    %v1420 = vld [vmem:[#allocation2 + $0xb38] sm:$0xff]
    %v1421 = vld [vmem:[#allocation2 + $0xb40] sm:$0xff]
    %v1422 = vld [vmem:[#allocation2 + $0xb48] sm:$0xff]
    %v1423 = vld [vmem:[#allocation2 + $0xb50] sm:$0xff]
    %v1424 = vld [vmem:[#allocation2 + $0xb58] sm:$0xff]
    %v1425 = vld [vmem:[#allocation2 + $0xb60] sm:$0xff]
    %v1426 = vld [vmem:[#allocation2 + $0xb68] sm:$0xff]
    %v1427 = vld [vmem:[#allocation2 + $0xb70] sm:$0xff]
    %v1428 = vld [vmem:[#allocation2 + $0xb78] sm:$0xff]
    %v1429 = vld [vmem:[#allocation2 + $0xb80] sm:$0xff]
    %v1430 = vld [vmem:[#allocation2 + $0xb88] sm:$0xff]
    %v1431 = vld [vmem:[#allocation2 + $0xb90] sm:$0xff]
    %v1432 = vld [vmem:[#allocation2 + $0xb98] sm:$0xff]
    %v1433 = vld [vmem:[#allocation2 + $0xba0] sm:$0xff]
    %v1434 = vld [vmem:[#allocation2 + $0xba8] sm:$0xff]
    %v1435 = vld [vmem:[#allocation2 + $0xbb0] sm:$0xff]
    %v1436 = vld [vmem:[#allocation2 + $0xbb8] sm:$0xff]
    %v1437 = vld [vmem:[#allocation2 + $0xbc0] sm:$0xff]
    %v1438 = vld [vmem:[#allocation2 + $0xbc8] sm:$0xff]
    %v1439 = vld [vmem:[#allocation2 + $0xbd0] sm:$0xff]
    %v1440 = vld [vmem:[#allocation2 + $0xbd8] sm:$0xff]
    %v1441 = vld [vmem:[#allocation2 + $0xbe0] sm:$0xff]
    %v1442 = vld [vmem:[#allocation2 + $0xbe8] sm:$0xff]
    %v1443 = vld [vmem:[#allocation2 + $0xbf0] sm:$0xff]
    %v1444 = vld [vmem:[#allocation2 + $0xbf8] sm:$0xff]
    %v1445 = vpack.c.bf16 %v1275, %v1271
    %v1446 = vpack.c.bf16 %v1276, %v1272
    %v1447 = vpack.c.bf16 %v1277, %v1273
    %v1448 = vpack.c.bf16 %v1278, %v1274
    %1449 = vmatprep.subr.bf16.mxu0 %v1318
    %1450 = vmatpush1.bf16.msra.mxu0 %v1317
    %1451 = vmatprep.subr.bf16.mxu0 %v1322
    %1452 = vmatpush1.bf16.msra.mxu0 %v1321
    %1453 = vmatprep.subr.bf16.mxu0 %v1326
    %1454 = vmatpush1.bf16.msra.mxu0 %v1325
    %1455 = vmatprep.subr.bf16.mxu0 %v1330
    %1456 = vmatpush1.bf16.msra.mxu0 %v1329
    %1457 = vmatprep.subr.bf16.mxu0 %v1334
    %1458 = vmatpush1.bf16.msra.mxu0 %v1333
    %1459 = vmatprep.subr.bf16.mxu0 %v1338
    %1460 = vmatpush1.bf16.msra.mxu0 %v1337
    %1461 = vmatprep.subr.bf16.mxu0 %v1342
    %1462 = vmatpush1.bf16.msra.mxu0 %v1341
    %1463 = vmatprep.subr.bf16.mxu0 %v1346
    %1464 = vmatpush1.bf16.msra.mxu0 %v1345
    %1465 = vmatprep.subr.bf16.mxu0 %v1350
    %1466 = vmatpush1.bf16.msra.mxu0 %v1349
    %1467 = vmatprep.subr.bf16.mxu0 %v1354
    %1468 = vmatpush1.bf16.msra.mxu0 %v1353
    %1469 = vmatprep.subr.bf16.mxu0 %v1358
    %1470 = vmatpush1.bf16.msra.mxu0 %v1357
    %1471 = vmatprep.subr.bf16.mxu0 %v1362
    %1472 = vmatpush1.bf16.msra.mxu0 %v1361
    %1473 = vmatprep.subr.bf16.mxu0 %v1366
    %1474 = vmatpush1.bf16.msra.mxu0 %v1365
    %1475 = vmatprep.subr.bf16.mxu0 %v1370
    %1476 = vmatpush1.bf16.msra.mxu0 %v1369
    %1477 = vmatprep.subr.bf16.mxu0 %v1374
    %1478 = vmatpush1.bf16.msra.mxu0 %v1373
    %1479 = vmatprep.subr.bf16.mxu0 %v1378
    %1480 = vmatpush1.bf16.msra.mxu0 %v1377
    %1481 = vmatprep.mubr.bf16.mxu0 %v1446
    %1482 = vmatmul.mubr.bf16.gmra.mrb[0].mxu0 %v1445
    %v1483 = vpop.f32.mrb[0].mxu0
    %v1484 = vadd.f32 0.0, %v1483
    %v1485 = vpop.f32.mrb[0].mxu0
    %v1486 = vadd.f32 0.0, %v1485
    %v1487 = vpop.f32.mrb[0].mxu0
    %v1488 = vadd.f32 0.0, %v1487
    %v1489 = vpop.f32.mrb[0].mxu0
    %v1490 = vadd.f32 0.0, %v1489
    %1491 = vdwg.mxu0
    %1492 = vmatprep.subr.bf16.mxu0 %v1382
    %1493 = vmatpush1.bf16.msra.mxu0 %v1381
    %1494 = vmatprep.subr.bf16.mxu0 %v1386
    %1495 = vmatpush1.bf16.msra.mxu0 %v1385
    %1496 = vmatprep.subr.bf16.mxu0 %v1390
    %1497 = vmatpush1.bf16.msra.mxu0 %v1389
    %1498 = vmatprep.subr.bf16.mxu0 %v1394
    %1499 = vmatpush1.bf16.msra.mxu0 %v1393
    %1500 = vmatprep.subr.bf16.mxu0 %v1398
    %1501 = vmatpush1.bf16.msra.mxu0 %v1397
    %1502 = vmatprep.subr.bf16.mxu0 %v1402
    %1503 = vmatpush1.bf16.msra.mxu0 %v1401
    %1504 = vmatprep.subr.bf16.mxu0 %v1406
    %1505 = vmatpush1.bf16.msra.mxu0 %v1405
    %1506 = vmatprep.subr.bf16.mxu0 %v1410
    %1507 = vmatpush1.bf16.msra.mxu0 %v1409
    %1508 = vmatprep.subr.bf16.mxu0 %v1414
    %1509 = vmatpush1.bf16.msra.mxu0 %v1413
    %1510 = vmatprep.subr.bf16.mxu0 %v1418
    %1511 = vmatpush1.bf16.msra.mxu0 %v1417
    %1512 = vmatprep.subr.bf16.mxu0 %v1422
    %1513 = vmatpush1.bf16.msra.mxu0 %v1421
    %1514 = vmatprep.subr.bf16.mxu0 %v1426
    %1515 = vmatpush1.bf16.msra.mxu0 %v1425
    %1516 = vmatprep.subr.bf16.mxu0 %v1430
    %1517 = vmatpush1.bf16.msra.mxu0 %v1429
    %1518 = vmatprep.subr.bf16.mxu0 %v1434
    %1519 = vmatpush1.bf16.msra.mxu0 %v1433
    %1520 = vmatprep.subr.bf16.mxu0 %v1438
    %1521 = vmatpush1.bf16.msra.mxu0 %v1437
    %1522 = vmatprep.subr.bf16.mxu0 %v1442
    %1523 = vmatpush1.bf16.msra.mxu0 %v1441
    %1524 = vmatprep.mubr.bf16.mxu0 %v1448
    %1525 = vmatmul.mubr.bf16.gmra.mrb[0].mxu0 %v1447
    %v1526 = vpop.f32.mrb[0].mxu0
    %v1527 = vadd.f32 %v1484, %v1526
    %v1528 = vpop.f32.mrb[0].mxu0
    %v1529 = vadd.f32 %v1486, %v1528
    %v1530 = vpop.f32.mrb[0].mxu0
    %v1531 = vadd.f32 %v1488, %v1530
    %v1532 = vpop.f32.mrb[0].mxu0
    %v1533 = vadd.f32 %v1490, %v1532
    %1534 = vdwg.mxu0
    %1535 = vmatprep.subr.bf16.mxu0 %v1320
    %1536 = vmatpush1.bf16.msra.mxu0 %v1319
    %1537 = vmatprep.subr.bf16.mxu0 %v1324
    %1538 = vmatpush1.bf16.msra.mxu0 %v1323
    %1539 = vmatprep.subr.bf16.mxu0 %v1328
    %1540 = vmatpush1.bf16.msra.mxu0 %v1327
    %1541 = vmatprep.subr.bf16.mxu0 %v1332
    %1542 = vmatpush1.bf16.msra.mxu0 %v1331
    %1543 = vmatprep.subr.bf16.mxu0 %v1336
    %1544 = vmatpush1.bf16.msra.mxu0 %v1335
    %1545 = vmatprep.subr.bf16.mxu0 %v1340
    %1546 = vmatpush1.bf16.msra.mxu0 %v1339
    %1547 = vmatprep.subr.bf16.mxu0 %v1344
    %1548 = vmatpush1.bf16.msra.mxu0 %v1343
    %1549 = vmatprep.subr.bf16.mxu0 %v1348
    %1550 = vmatpush1.bf16.msra.mxu0 %v1347
    %1551 = vmatprep.subr.bf16.mxu0 %v1352
    %1552 = vmatpush1.bf16.msra.mxu0 %v1351
    %1553 = vmatprep.subr.bf16.mxu0 %v1356
    %1554 = vmatpush1.bf16.msra.mxu0 %v1355
    %1555 = vmatprep.subr.bf16.mxu0 %v1360
    %1556 = vmatpush1.bf16.msra.mxu0 %v1359
    %1557 = vmatprep.subr.bf16.mxu0 %v1364
    %1558 = vmatpush1.bf16.msra.mxu0 %v1363
    %1559 = vmatprep.subr.bf16.mxu0 %v1368
    %1560 = vmatpush1.bf16.msra.mxu0 %v1367
    %1561 = vmatprep.subr.bf16.mxu0 %v1372
    %1562 = vmatpush1.bf16.msra.mxu0 %v1371
    %1563 = vmatprep.subr.bf16.mxu0 %v1376
    %1564 = vmatpush1.bf16.msra.mxu0 %v1375
    %1565 = vmatprep.subr.bf16.mxu0 %v1380
    %1566 = vmatpush1.bf16.msra.mxu0 %v1379
    %1567 = vmatprep.mubr.bf16.mxu0 %v1446
    %1568 = vmatmul.mubr.bf16.gmra.mrb[0].mxu0 %v1445
    %v1569 = vpop.f32.mrb[0].mxu0
    %v1570 = vadd.f32 0.0, %v1569
    %v1571 = vpop.f32.mrb[0].mxu0
    %v1572 = vadd.f32 0.0, %v1571
    %v1573 = vpop.f32.mrb[0].mxu0
    %v1574 = vadd.f32 0.0, %v1573
    %v1575 = vpop.f32.mrb[0].mxu0
    %v1576 = vadd.f32 0.0, %v1575
    %1577 = vdwg.mxu0
    %1578 = vmatprep.subr.bf16.mxu0 %v1384
    %1579 = vmatpush1.bf16.msra.mxu0 %v1383
    %1580 = vmatprep.subr.bf16.mxu0 %v1388
    %1581 = vmatpush1.bf16.msra.mxu0 %v1387
    %1582 = vmatprep.subr.bf16.mxu0 %v1392
    %1583 = vmatpush1.bf16.msra.mxu0 %v1391
    %1584 = vmatprep.subr.bf16.mxu0 %v1396
    %1585 = vmatpush1.bf16.msra.mxu0 %v1395
    %1586 = vmatprep.subr.bf16.mxu0 %v1400
    %1587 = vmatpush1.bf16.msra.mxu0 %v1399
    %1588 = vmatprep.subr.bf16.mxu0 %v1404
    %1589 = vmatpush1.bf16.msra.mxu0 %v1403
    %1590 = vmatprep.subr.bf16.mxu0 %v1408
    %1591 = vmatpush1.bf16.msra.mxu0 %v1407
    %1592 = vmatprep.subr.bf16.mxu0 %v1412
    %1593 = vmatpush1.bf16.msra.mxu0 %v1411
    %1594 = vmatprep.subr.bf16.mxu0 %v1416
    %1595 = vmatpush1.bf16.msra.mxu0 %v1415
    %1596 = vmatprep.subr.bf16.mxu0 %v1420
    %1597 = vmatpush1.bf16.msra.mxu0 %v1419
    %1598 = vmatprep.subr.bf16.mxu0 %v1424
    %1599 = vmatpush1.bf16.msra.mxu0 %v1423
    %1600 = vmatprep.subr.bf16.mxu0 %v1428
    %1601 = vmatpush1.bf16.msra.mxu0 %v1427
    %1602 = vmatprep.subr.bf16.mxu0 %v1432
    %1603 = vmatpush1.bf16.msra.mxu0 %v1431
    %1604 = vmatprep.subr.bf16.mxu0 %v1436
    %1605 = vmatpush1.bf16.msra.mxu0 %v1435
    %1606 = vmatprep.subr.bf16.mxu0 %v1440
    %1607 = vmatpush1.bf16.msra.mxu0 %v1439
    %1608 = vmatprep.subr.bf16.mxu0 %v1444
    %1609 = vmatpush1.bf16.msra.mxu0 %v1443
    %1610 = vmatprep.mubr.bf16.mxu0 %v1448
    %1611 = vmatmul.mubr.bf16.gmra.mrb[0].mxu0 %v1447
    %v1612 = vpop.f32.mrb[0].mxu0
    %v1613 = vadd.f32 %v1570, %v1612
    %v1614 = vpop.f32.mrb[0].mxu0
    %v1615 = vadd.f32 %v1572, %v1614
    %v1616 = vpop.f32.mrb[0].mxu0
    %v1617 = vadd.f32 %v1574, %v1616
    %v1618 = vpop.f32.mrb[0].mxu0
    %v1619 = vadd.f32 %v1576, %v1618
    %1620 = vdwg.mxu0
    %1621 = vmatprep.subr.mxu0 %v1529
    %1622 = vmatpush1.msra.mxu0 %v1527
    %1623 = vmatprep.subr.mxu0 %v1533
    %1624 = vmatpush1.msra.mxu0 %v1531
    %1625 = vmatprep.subr.mxu0 0.0
    %1626 = vmatpush1.msra.mxu0 0.0
    %1627 = vmatprep.subr.mxu0 0.0
    %1628 = vmatpush1.msra.mxu0 0.0
    %1629 = vmatprep.subr.mxu0 0.0
    %1630 = vmatpush1.msra.mxu0 0.0
    %1631 = vmatprep.subr.mxu0 0.0
    %1632 = vmatpush1.msra.mxu0 0.0
    %1633 = vmatprep.subr.mxu0 0.0
    %1634 = vmatpush1.msra.mxu0 0.0
    %1635 = vmatprep.subr.mxu0 0.0
    %1636 = vmatpush1.msra.mxu0 0.0
    %1637 = vmatprep.subr.mxu0 0.0
    %1638 = vmatpush1.msra.mxu0 0.0
    %1639 = vmatprep.subr.mxu0 0.0
    %1640 = vmatpush1.msra.mxu0 0.0
    %1641 = vmatprep.subr.mxu0 0.0
    %1642 = vmatpush1.msra.mxu0 0.0
    %1643 = vmatprep.subr.mxu0 0.0
    %1644 = vmatpush1.msra.mxu0 0.0
    %1645 = vmatprep.subr.mxu0 0.0
    %1646 = vmatpush1.msra.mxu0 0.0
    %1647 = vmatprep.subr.mxu0 0.0
    %1648 = vmatpush1.msra.mxu0 0.0
    %1649 = vmatprep.subr.mxu0 0.0
    %1650 = vmatpush1.msra.mxu0 0.0
    %1651 = vmatprep.subr.mxu0 0.0
    %1652 = vmatpush1.msra.mxu0 0.0
    %1653 = vmatprep.subr.mxu0 0.0
    %1654 = vmatpush1.msra.mxu0 0.0
    %1655 = vmatprep.subr.mxu0 0.0
    %1656 = vmatpush1.msra.mxu0 0.0
    %1657 = vmatprep.subr.mxu0 0.0
    %1658 = vmatpush1.msra.mxu0 0.0
    %1659 = vmatprep.subr.mxu0 0.0
    %1660 = vmatpush1.msra.mxu0 0.0
    %1661 = vmatprep.subr.mxu0 0.0
    %1662 = vmatpush1.msra.mxu0 0.0
    %1663 = vmatprep.subr.mxu0 0.0
    %1664 = vmatpush1.msra.mxu0 0.0
    %1665 = vmatprep.subr.mxu0 0.0
    %1666 = vmatpush1.msra.mxu0 0.0
    %1667 = vmatprep.subr.mxu0 0.0
    %1668 = vmatpush1.msra.mxu0 0.0
    %1669 = vmatprep.subr.mxu0 0.0
    %1670 = vmatpush1.msra.mxu0 0.0
    %1671 = vmatprep.subr.mxu0 0.0
    %1672 = vmatpush1.msra.mxu0 0.0
    %1673 = vmatprep.subr.mxu0 0.0
    %1674 = vmatpush1.msra.mxu0 0.0
    %1675 = vmatprep.subr.mxu0 0.0
    %1676 = vmatpush1.msra.mxu0 0.0
    %1677 = vmatprep.subr.mxu0 0.0
    %1678 = vmatpush1.msra.mxu0 0.0
    %1679 = vmatprep.subr.mxu0 0.0
    %1680 = vmatpush1.msra.mxu0 0.0
    %1681 = vmatprep.subr.mxu0 0.0
    %1682 = vmatpush1.msra.mxu0 0.0
    %1683 = vmatprep.subr.mxu0 0.0
    %1684 = vmatpush1.msra.mxu0 0.0
    %1685 = vmatprep.mubr.f32.mxu0 0.0
    %1686 = vmatmul.mubr.f32.gmra.mrb[0].mxu0 %v934
    %v1687 = vpop.f32.mrb[0].mxu0
    %v1688 = vadd.f32 0.0, %v1687
    %v1689 = vpop.f32.mrb[0].mxu0
    %v1690 = vadd.f32 0.0, %v1689
    %1691 = vmatprep.mubr.f32.mxu0 0.0
    %1692 = vmatmul.mubr.f32.gmra.mrb[0].mxu0 %v937
    %v1693 = vpop.f32.mrb[0].mxu0
    %v1694 = vadd.f32 0.0, %v1693
    %v1695 = vpop.f32.mrb[0].mxu0
    %v1696 = vadd.f32 0.0, %v1695
    %1697 = vdwg.mxu0
    %1698 = vmatprep.subr.mxu0 %v1615
    %1699 = vmatpush1.msra.mxu0 %v1613
    %1700 = vmatprep.subr.mxu0 %v1619
    %1701 = vmatpush1.msra.mxu0 %v1617
    %1702 = vmatprep.subr.mxu0 0.0
    %1703 = vmatpush1.msra.mxu0 0.0
    %1704 = vmatprep.subr.mxu0 0.0
    %1705 = vmatpush1.msra.mxu0 0.0
    %1706 = vmatprep.subr.mxu0 0.0
    %1707 = vmatpush1.msra.mxu0 0.0
    %1708 = vmatprep.subr.mxu0 0.0
    %1709 = vmatpush1.msra.mxu0 0.0
    %1710 = vmatprep.subr.mxu0 0.0
    %1711 = vmatpush1.msra.mxu0 0.0
    %1712 = vmatprep.subr.mxu0 0.0
    %1713 = vmatpush1.msra.mxu0 0.0
    %1714 = vmatprep.subr.mxu0 0.0
    %1715 = vmatpush1.msra.mxu0 0.0
    %1716 = vmatprep.subr.mxu0 0.0
    %1717 = vmatpush1.msra.mxu0 0.0
    %1718 = vmatprep.subr.mxu0 0.0
    %1719 = vmatpush1.msra.mxu0 0.0
    %1720 = vmatprep.subr.mxu0 0.0
    %1721 = vmatpush1.msra.mxu0 0.0
    %1722 = vmatprep.subr.mxu0 0.0
    %1723 = vmatpush1.msra.mxu0 0.0
    %1724 = vmatprep.subr.mxu0 0.0
    %1725 = vmatpush1.msra.mxu0 0.0
    %1726 = vmatprep.subr.mxu0 0.0
    %1727 = vmatpush1.msra.mxu0 0.0
    %1728 = vmatprep.subr.mxu0 0.0
    %1729 = vmatpush1.msra.mxu0 0.0
    %1730 = vmatprep.subr.mxu0 0.0
    %1731 = vmatpush1.msra.mxu0 0.0
    %1732 = vmatprep.subr.mxu0 0.0
    %1733 = vmatpush1.msra.mxu0 0.0
    %1734 = vmatprep.subr.mxu0 0.0
    %1735 = vmatpush1.msra.mxu0 0.0
    %1736 = vmatprep.subr.mxu0 0.0
    %1737 = vmatpush1.msra.mxu0 0.0
    %1738 = vmatprep.subr.mxu0 0.0
    %1739 = vmatpush1.msra.mxu0 0.0
    %1740 = vmatprep.subr.mxu0 0.0
    %1741 = vmatpush1.msra.mxu0 0.0
    %1742 = vmatprep.subr.mxu0 0.0
    %1743 = vmatpush1.msra.mxu0 0.0
    %1744 = vmatprep.subr.mxu0 0.0
    %1745 = vmatpush1.msra.mxu0 0.0
    %1746 = vmatprep.subr.mxu0 0.0
    %1747 = vmatpush1.msra.mxu0 0.0
    %1748 = vmatprep.subr.mxu0 0.0
    %1749 = vmatpush1.msra.mxu0 0.0
    %1750 = vmatprep.subr.mxu0 0.0
    %1751 = vmatpush1.msra.mxu0 0.0
    %1752 = vmatprep.subr.mxu0 0.0
    %1753 = vmatpush1.msra.mxu0 0.0
    %1754 = vmatprep.subr.mxu0 0.0
    %1755 = vmatpush1.msra.mxu0 0.0
    %1756 = vmatprep.subr.mxu0 0.0
    %1757 = vmatpush1.msra.mxu0 0.0
    %1758 = vmatprep.subr.mxu0 0.0
    %1759 = vmatpush1.msra.mxu0 0.0
    %1760 = vmatprep.subr.mxu0 0.0
    %1761 = vmatpush1.msra.mxu0 0.0
    %1762 = vmatprep.mubr.f32.mxu0 0.0
    %1763 = vmatmul.mubr.f32.gmra.mrb[0].mxu0 %v934
    %v1764 = vpop.f32.mrb[0].mxu0
    %v1765 = vadd.f32 0.0, %v1764
    %v1766 = vpop.f32.mrb[0].mxu0
    %v1767 = vadd.f32 0.0, %v1766
    %1768 = vmatprep.mubr.f32.mxu0 0.0
    %1769 = vmatmul.mubr.f32.gmra.mrb[0].mxu0 %v937
    %v1770 = vpop.f32.mrb[0].mxu0
    %v1771 = vadd.f32 0.0, %v1770
    %v1772 = vpop.f32.mrb[0].mxu0
    %v1773 = vadd.f32 0.0, %v1772
    %1774 = vdwg.mxu0
    %v1775 = vadd.f32 %v1688, %v1690
    %v1776 = vadd.f32 %v1775, %v1765
    %v1777 = vadd.f32 %v1776, %v1767
    %1778 = vadd.xlane.f32.xlu0 %v1777
    %v1779 = vpop.xlane.xlu0 %1778
    %v1780 = vadd.f32 %v1694, %v1696
    %v1781 = vadd.f32 %v1780, %v1771
    %v1782 = vadd.f32 %v1781, %v1773
    %1783 = vadd.xlane.f32.xlu0 %v1782
    %v1784 = vpop.xlane.xlu0 %1783
    %v1785 = vmul.f32 %v1688, %v1688
    %v1786 = vmul.f32 %v1690, %v1690
    %v1787 = vmul.f32 %v1765, %v1765
    %v1788 = vmul.f32 %v1767, %v1767
    %v1789 = vmul.f32 %v1694, %v1694
    %v1790 = vmul.f32 %v1696, %v1696
    %v1791 = vmul.f32 %v1771, %v1771
    %v1792 = vmul.f32 %v1773, %v1773
    %v1793 = vadd.f32 %v1785, %v1786
    %v1794 = vadd.f32 %v1793, %v1787
    %v1795 = vadd.f32 %v1794, %v1788
    %1796 = vadd.xlane.f32.xlu0 %v1795
    %v1797 = vpop.xlane.xlu0 %1796
    %v1798 = vadd.f32 %v1789, %v1790
    %v1799 = vadd.f32 %v1798, %v1791
    %v1800 = vadd.f32 %v1799, %v1792
    %1801 = vadd.xlane.f32.xlu0 %v1800
    %v1802 = vpop.xlane.xlu0 %1801
    %v1803 = vadd.f32 %v1779, %v1784
    %v1804 = vadd.f32 %v1797, %v1802
    %v1805 = vmul.f32 %v1803, 0.0009765625
    %v1806 = vmul.f32 %v1804, 0.0009765625
    %v1807 = vmul.f32 %v1805, %v1805
    %v1808 = vsub.f32 %v1806, %v1807
    %v1809 = vmax.f32 %v1808, 0.0
    %v1810 = vadd.f32 %v1809, 1e-05
    %v1811 = vrsqrt.pop %v1810
    %v1812 = vmul.f32 %v260, %v1811
    %v1813 = vmul.f32 %v1805, %v1812
    %v1814 = vsub.f32 %v261, %v1813
    %1816 = vset.pattern.permute.xlu0 1
    %1817 = vperm.xlu0 %1816, %v1812
    %v1818 = vpop.permute.xlu0 %1817
    %v1820 = vmul.f32 %v1688, %v1818
    %v1821 = vmul.f32 %v1690, %v1818
    %v1822 = vmul.f32 %v1765, %v1818
    %v1823 = vmul.f32 %v1767, %v1818
    %v1824 = vmul.f32 %v1694, %v1818
    %v1825 = vmul.f32 %v1696, %v1818
    %v1826 = vmul.f32 %v1771, %v1818
    %v1827 = vmul.f32 %v1773, %v1818
    %1829 = vset.pattern.permute.xlu0 1
    %1830 = vperm.xlu0 %1829, %v1814
    %v1831 = vpop.permute.xlu0 %1830
    %v1833 = vadd.f32 %v1820, %v1831
    %v1834 = vadd.f32 %v1821, %v1831
    %v1835 = vadd.f32 %v1822, %v1831
    %v1836 = vadd.f32 %v1823, %v1831
    %v1837 = vadd.f32 %v1824, %v1831
    %v1838 = vadd.f32 %v1825, %v1831
    %v1839 = vadd.f32 %v1826, %v1831
    %v1840 = vadd.f32 %v1827, %v1831
    %v1841 = vadd.f32 %v1833, %v1271
    %v1842 = vadd.f32 %v1834, %v1272
    %v1843 = vadd.f32 %v1835, %v1273
    %v1844 = vadd.f32 %v1836, %v1274
    %v1845 = vadd.f32 %v1837, %v1275
    %v1846 = vadd.f32 %v1838, %v1276
    %v1847 = vadd.f32 %v1839, %v1277
    %v1848 = vadd.f32 %v1840, %v1278
    %v1849 = vmax.f32 %v1841, 0.0
    %v1850 = vmax.f32 %v1842, 0.0
    %v1851 = vmax.f32 %v1843, 0.0
    %v1852 = vmax.f32 %v1844, 0.0
    %v1853 = vmax.f32 %v1845, 0.0
    %v1854 = vmax.f32 %v1846, 0.0
    %v1855 = vmax.f32 %v1847, 0.0
    %v1856 = vmax.f32 %v1848, 0.0
    %v1857 = vand.u32 2147483647, %v1841
    %v1858 = vand.u32 2147483647, %v1842
    %v1859 = vand.u32 2147483647, %v1843
    %v1860 = vand.u32 2147483647, %v1844
    %v1861 = vand.u32 2147483647, %v1845
    %v1862 = vand.u32 2147483647, %v1846
    %v1863 = vand.u32 2147483647, %v1847
    %v1864 = vand.u32 2147483647, %v1848
    %v1865 = vsub.f32 0.0, %v1857
    %v1866 = vsub.f32 0.0, %v1858
    %v1867 = vsub.f32 0.0, %v1859
    %v1868 = vsub.f32 0.0, %v1860
    %v1869 = vsub.f32 0.0, %v1861
    %v1870 = vsub.f32 0.0, %v1862
    %v1871 = vsub.f32 0.0, %v1863
    %v1872 = vsub.f32 0.0, %v1864
    %v1873 = vmul.f32 %v1865, 1.442695
    %v1874 = vpow.pop %v1873
    %v1875 = vmul.f32 %v1866, 1.442695
    %v1876 = vpow.pop %v1875
    %v1877 = vmul.f32 %v1867, 1.442695
    %v1878 = vpow.pop %v1877
    %v1879 = vmul.f32 %v1868, 1.442695
    %v1880 = vpow.pop %v1879
    %v1881 = vmul.f32 %v1869, 1.442695
    %v1882 = vpow.pop %v1881
    %v1883 = vmul.f32 %v1870, 1.442695
    %v1884 = vpow.pop %v1883
    %v1885 = vmul.f32 %v1871, 1.442695
    %v1886 = vpow.pop %v1885
    %v1887 = vmul.f32 %v1872, 1.442695
    %v1888 = vpow.pop %v1887
    %v1889 = vadd.f32 %v1874, 1.0
    %v1890 = vlog2.pop %v1889
    %v1891 = vmul.f32 %v1890, 0.6931472
    %v1892 = vmul.f32 -0.5, %v1874
    %v1893 = vadd.f32 %v1892, 1.0
    %v1894 = vmul.f32 %v1893, %v1874
    %v1895 = vand.u32 2147483647, %v1874
    %vm1896 = vcmp.lt.f32.partialorder %v1895, 0.0004427343
    %v1897 = vsel %vm1896, %v1894, %v1891
    %v1898 = vadd.f32 %v1876, 1.0
    %v1899 = vlog2.pop %v1898
    %v1900 = vmul.f32 %v1899, 0.6931472
    %v1901 = vmul.f32 -0.5, %v1876
    %v1902 = vadd.f32 %v1901, 1.0
    %v1903 = vmul.f32 %v1902, %v1876
    %v1904 = vand.u32 2147483647, %v1876
    %vm1905 = vcmp.lt.f32.partialorder %v1904, 0.0004427343
    %v1906 = vsel %vm1905, %v1903, %v1900
    %v1907 = vadd.f32 %v1878, 1.0
    %v1908 = vlog2.pop %v1907
    %v1909 = vmul.f32 %v1908, 0.6931472
    %v1910 = vmul.f32 -0.5, %v1878
    %v1911 = vadd.f32 %v1910, 1.0
    %v1912 = vmul.f32 %v1911, %v1878
    %v1913 = vand.u32 2147483647, %v1878
    %vm1914 = vcmp.lt.f32.partialorder %v1913, 0.0004427343
    %v1915 = vsel %vm1914, %v1912, %v1909
    %v1916 = vadd.f32 %v1880, 1.0
    %v1917 = vlog2.pop %v1916
    %v1918 = vmul.f32 %v1917, 0.6931472
    %v1919 = vmul.f32 -0.5, %v1880
    %v1920 = vadd.f32 %v1919, 1.0
    %v1921 = vmul.f32 %v1920, %v1880
    %v1922 = vand.u32 2147483647, %v1880
    %vm1923 = vcmp.lt.f32.partialorder %v1922, 0.0004427343
    %v1924 = vsel %vm1923, %v1921, %v1918
    %v1925 = vadd.f32 %v1882, 1.0
    %v1926 = vlog2.pop %v1925
    %v1927 = vmul.f32 %v1926, 0.6931472
    %v1928 = vmul.f32 -0.5, %v1882
    %v1929 = vadd.f32 %v1928, 1.0
    %v1930 = vmul.f32 %v1929, %v1882
    %v1931 = vand.u32 2147483647, %v1882
    %vm1932 = vcmp.lt.f32.partialorder %v1931, 0.0004427343
    %v1933 = vsel %vm1932, %v1930, %v1927
    %v1934 = vadd.f32 %v1884, 1.0
    %v1935 = vlog2.pop %v1934
    %v1936 = vmul.f32 %v1935, 0.6931472
    %v1937 = vmul.f32 -0.5, %v1884
    %v1938 = vadd.f32 %v1937, 1.0
    %v1939 = vmul.f32 %v1938, %v1884
    %v1940 = vand.u32 2147483647, %v1884
    %vm1941 = vcmp.lt.f32.partialorder %v1940, 0.0004427343
    %v1942 = vsel %vm1941, %v1939, %v1936
    %v1943 = vadd.f32 %v1886, 1.0
    %v1944 = vlog2.pop %v1943
    %v1945 = vmul.f32 %v1944, 0.6931472
    %v1946 = vmul.f32 -0.5, %v1886
    %v1947 = vadd.f32 %v1946, 1.0
    %v1948 = vmul.f32 %v1947, %v1886
    %v1949 = vand.u32 2147483647, %v1886
    %vm1950 = vcmp.lt.f32.partialorder %v1949, 0.0004427343
    %v1951 = vsel %vm1950, %v1948, %v1945
    %v1952 = vadd.f32 %v1888, 1.0
    %v1953 = vlog2.pop %v1952
    %v1954 = vmul.f32 %v1953, 0.6931472
    %v1955 = vmul.f32 -0.5, %v1888
    %v1956 = vadd.f32 %v1955, 1.0
    %v1957 = vmul.f32 %v1956, %v1888
    %v1958 = vand.u32 2147483647, %v1888
    %vm1959 = vcmp.lt.f32.partialorder %v1958, 0.0004427343
    %v1960 = vsel %vm1959, %v1957, %v1954
    %v1961 = vadd.f32 %v1849, %v1897
    %v1962 = vadd.f32 %v1850, %v1906
    %v1963 = vadd.f32 %v1851, %v1915
    %v1964 = vadd.f32 %v1852, %v1924
    %v1965 = vadd.f32 %v1853, %v1933
    %v1966 = vadd.f32 %v1854, %v1942
    %v1967 = vadd.f32 %v1855, %v1951
    %v1968 = vadd.f32 %v1856, %v1960
    %s1970 = sshll.u32 1, 14
    %s1971 = sxor.u32 4294967295, %s1970
    %s1973 = sadd.s32 2, %s100
    %s1975 = sshll.u32 7, 26
    %s1976 = sxor.u32 4294967295, %s1975
    %s1977 = sand.u32 0, %s1976
    %s1978 = sshll.u32 %s1973, 26
    %s1979 = sor.u32 %s1977, %s1978
    %s1980 = sshll.u32 %s262, 4
    %s1981 = int_to_ptr.vmem [resolvable:$true] %s1980
    %1984 = sst [smem:[#allocation25]] 512
    %s1985 = scalar_lea.smem [#allocation25], 1
    %1986 = sst [smem:[%s1985]] 512
    %s1987 = scalar_lea.smem [#allocation25], 2
    %1988 = sst [smem:[%s1987]] 4
    %s1989 = scalar_lea.smem [#allocation25], 3
    %1990 = sst [smem:[%s1989]] 64
    %s1991 = scalar_lea.smem [#allocation25], 4
    %1992 = sst [smem:[%s1991]] 128
    %s1993 = scalar_lea.smem [#allocation25], 5
    %1994 = sst [smem:[%s1993]] 2
    %s1995 = scalar_lea.smem [#allocation25], 6
    %1996 = sst [smem:[%s1995]] 256
    %s1997 = scalar_lea.smem [#allocation25], 7
    %1998 = sst [smem:[%s1997]] 64
    %s1999 = scalar_lea.smem [#allocation25], 8
    %2000 = sst [smem:[%s1999]] 4
    %2002 = dma.general %s7, 16384, %s1981, %s263, [#allocation24], [#allocation25], %s1979, 0
    %s2003 = sshll.u32 %s1314, 4
    %2004 = dma.done [#allocation3], %s2003
    %v2005 = vld [vmem:[#allocation2] sm:$0xff]
    %v2006 = vld [vmem:[#allocation2 + $0x8] sm:$0xff]
    %v2007 = vld [vmem:[#allocation2 + $0x10] sm:$0xff]
    %v2008 = vld [vmem:[#allocation2 + $0x18] sm:$0xff]
    %v2009 = vld [vmem:[#allocation2 + $0x20] sm:$0xff]
    %v2010 = vld [vmem:[#allocation2 + $0x28] sm:$0xff]
    %v2011 = vld [vmem:[#allocation2 + $0x30] sm:$0xff]
    %v2012 = vld [vmem:[#allocation2 + $0x38] sm:$0xff]
    %v2013 = vld [vmem:[#allocation2 + $0x40] sm:$0xff]
    %v2014 = vld [vmem:[#allocation2 + $0x48] sm:$0xff]
    %v2015 = vld [vmem:[#allocation2 + $0x50] sm:$0xff]
    %v2016 = vld [vmem:[#allocation2 + $0x58] sm:$0xff]
    %v2017 = vld [vmem:[#allocation2 + $0x60] sm:$0xff]
    %v2018 = vld [vmem:[#allocation2 + $0x68] sm:$0xff]
    %v2019 = vld [vmem:[#allocation2 + $0x70] sm:$0xff]
    %v2020 = vld [vmem:[#allocation2 + $0x78] sm:$0xff]
    %v2021 = vld [vmem:[#allocation2 + $0x80] sm:$0xff]
    %v2022 = vld [vmem:[#allocation2 + $0x88] sm:$0xff]
    %v2023 = vld [vmem:[#allocation2 + $0x90] sm:$0xff]
    %v2024 = vld [vmem:[#allocation2 + $0x98] sm:$0xff]
    %v2025 = vld [vmem:[#allocation2 + $0xa0] sm:$0xff]
    %v2026 = vld [vmem:[#allocation2 + $0xa8] sm:$0xff]
    %v2027 = vld [vmem:[#allocation2 + $0xb0] sm:$0xff]
    %v2028 = vld [vmem:[#allocation2 + $0xb8] sm:$0xff]
    %v2029 = vld [vmem:[#allocation2 + $0xc0] sm:$0xff]
    %v2030 = vld [vmem:[#allocation2 + $0xc8] sm:$0xff]
    %v2031 = vld [vmem:[#allocation2 + $0xd0] sm:$0xff]
    %v2032 = vld [vmem:[#allocation2 + $0xd8] sm:$0xff]
    %v2033 = vld [vmem:[#allocation2 + $0xe0] sm:$0xff]
    %v2034 = vld [vmem:[#allocation2 + $0xe8] sm:$0xff]
    %v2035 = vld [vmem:[#allocation2 + $0xf0] sm:$0xff]
    %v2036 = vld [vmem:[#allocation2 + $0xf8] sm:$0xff]
    %v2037 = vld [vmem:[#allocation2 + $0x100] sm:$0xff]
    %v2038 = vld [vmem:[#allocation2 + $0x108] sm:$0xff]
    %v2039 = vld [vmem:[#allocation2 + $0x110] sm:$0xff]
    %v2040 = vld [vmem:[#allocation2 + $0x118] sm:$0xff]
    %v2041 = vld [vmem:[#allocation2 + $0x120] sm:$0xff]
    %v2042 = vld [vmem:[#allocation2 + $0x128] sm:$0xff]
    %v2043 = vld [vmem:[#allocation2 + $0x130] sm:$0xff]
    %v2044 = vld [vmem:[#allocation2 + $0x138] sm:$0xff]
    %v2045 = vld [vmem:[#allocation2 + $0x140] sm:$0xff]
    %v2046 = vld [vmem:[#allocation2 + $0x148] sm:$0xff]
    %v2047 = vld [vmem:[#allocation2 + $0x150] sm:$0xff]
    %v2048 = vld [vmem:[#allocation2 + $0x158] sm:$0xff]
    %v2049 = vld [vmem:[#allocation2 + $0x160] sm:$0xff]
    %v2050 = vld [vmem:[#allocation2 + $0x168] sm:$0xff]
    %v2051 = vld [vmem:[#allocation2 + $0x170] sm:$0xff]
    %v2052 = vld [vmem:[#allocation2 + $0x178] sm:$0xff]
    %v2053 = vld [vmem:[#allocation2 + $0x180] sm:$0xff]
    %v2054 = vld [vmem:[#allocation2 + $0x188] sm:$0xff]
    %v2055 = vld [vmem:[#allocation2 + $0x190] sm:$0xff]
    %v2056 = vld [vmem:[#allocation2 + $0x198] sm:$0xff]
    %v2057 = vld [vmem:[#allocation2 + $0x1a0] sm:$0xff]
    %v2058 = vld [vmem:[#allocation2 + $0x1a8] sm:$0xff]
    %v2059 = vld [vmem:[#allocation2 + $0x1b0] sm:$0xff]
    %v2060 = vld [vmem:[#allocation2 + $0x1b8] sm:$0xff]
    %v2061 = vld [vmem:[#allocation2 + $0x1c0] sm:$0xff]
    %v2062 = vld [vmem:[#allocation2 + $0x1c8] sm:$0xff]
    %v2063 = vld [vmem:[#allocation2 + $0x1d0] sm:$0xff]
    %v2064 = vld [vmem:[#allocation2 + $0x1d8] sm:$0xff]
    %v2065 = vld [vmem:[#allocation2 + $0x1e0] sm:$0xff]
    %v2066 = vld [vmem:[#allocation2 + $0x1e8] sm:$0xff]
    %v2067 = vld [vmem:[#allocation2 + $0x1f0] sm:$0xff]
    %v2068 = vld [vmem:[#allocation2 + $0x1f8] sm:$0xff]
    %v2069 = vld [vmem:[#allocation2 + $0x200] sm:$0xff]
    %v2070 = vld [vmem:[#allocation2 + $0x208] sm:$0xff]
    %v2071 = vld [vmem:[#allocation2 + $0x210] sm:$0xff]
    %v2072 = vld [vmem:[#allocation2 + $0x218] sm:$0xff]
    %v2073 = vld [vmem:[#allocation2 + $0x220] sm:$0xff]
    %v2074 = vld [vmem:[#allocation2 + $0x228] sm:$0xff]
    %v2075 = vld [vmem:[#allocation2 + $0x230] sm:$0xff]
    %v2076 = vld [vmem:[#allocation2 + $0x238] sm:$0xff]
    %v2077 = vld [vmem:[#allocation2 + $0x240] sm:$0xff]
    %v2078 = vld [vmem:[#allocation2 + $0x248] sm:$0xff]
    %v2079 = vld [vmem:[#allocation2 + $0x250] sm:$0xff]
    %v2080 = vld [vmem:[#allocation2 + $0x258] sm:$0xff]
    %v2081 = vld [vmem:[#allocation2 + $0x260] sm:$0xff]
    %v2082 = vld [vmem:[#allocation2 + $0x268] sm:$0xff]
    %v2083 = vld [vmem:[#allocation2 + $0x270] sm:$0xff]
    %v2084 = vld [vmem:[#allocation2 + $0x278] sm:$0xff]
    %v2085 = vld [vmem:[#allocation2 + $0x280] sm:$0xff]
    %v2086 = vld [vmem:[#allocation2 + $0x288] sm:$0xff]
    %v2087 = vld [vmem:[#allocation2 + $0x290] sm:$0xff]
    %v2088 = vld [vmem:[#allocation2 + $0x298] sm:$0xff]
    %v2089 = vld [vmem:[#allocation2 + $0x2a0] sm:$0xff]
    %v2090 = vld [vmem:[#allocation2 + $0x2a8] sm:$0xff]
    %v2091 = vld [vmem:[#allocation2 + $0x2b0] sm:$0xff]
    %v2092 = vld [vmem:[#allocation2 + $0x2b8] sm:$0xff]
    %v2093 = vld [vmem:[#allocation2 + $0x2c0] sm:$0xff]
    %v2094 = vld [vmem:[#allocation2 + $0x2c8] sm:$0xff]
    %v2095 = vld [vmem:[#allocation2 + $0x2d0] sm:$0xff]
    %v2096 = vld [vmem:[#allocation2 + $0x2d8] sm:$0xff]
    %v2097 = vld [vmem:[#allocation2 + $0x2e0] sm:$0xff]
    %v2098 = vld [vmem:[#allocation2 + $0x2e8] sm:$0xff]
    %v2099 = vld [vmem:[#allocation2 + $0x2f0] sm:$0xff]
    %v2100 = vld [vmem:[#allocation2 + $0x2f8] sm:$0xff]
    %v2101 = vld [vmem:[#allocation2 + $0x300] sm:$0xff]
    %v2102 = vld [vmem:[#allocation2 + $0x308] sm:$0xff]
    %v2103 = vld [vmem:[#allocation2 + $0x310] sm:$0xff]
    %v2104 = vld [vmem:[#allocation2 + $0x318] sm:$0xff]
    %v2105 = vld [vmem:[#allocation2 + $0x320] sm:$0xff]
    %v2106 = vld [vmem:[#allocation2 + $0x328] sm:$0xff]
    %v2107 = vld [vmem:[#allocation2 + $0x330] sm:$0xff]
    %v2108 = vld [vmem:[#allocation2 + $0x338] sm:$0xff]
    %v2109 = vld [vmem:[#allocation2 + $0x340] sm:$0xff]
    %v2110 = vld [vmem:[#allocation2 + $0x348] sm:$0xff]
    %v2111 = vld [vmem:[#allocation2 + $0x350] sm:$0xff]
    %v2112 = vld [vmem:[#allocation2 + $0x358] sm:$0xff]
    %v2113 = vld [vmem:[#allocation2 + $0x360] sm:$0xff]
    %v2114 = vld [vmem:[#allocation2 + $0x368] sm:$0xff]
    %v2115 = vld [vmem:[#allocation2 + $0x370] sm:$0xff]
    %v2116 = vld [vmem:[#allocation2 + $0x378] sm:$0xff]
    %v2117 = vld [vmem:[#allocation2 + $0x380] sm:$0xff]
    %v2118 = vld [vmem:[#allocation2 + $0x388] sm:$0xff]
    %v2119 = vld [vmem:[#allocation2 + $0x390] sm:$0xff]
    %v2120 = vld [vmem:[#allocation2 + $0x398] sm:$0xff]
    %v2121 = vld [vmem:[#allocation2 + $0x3a0] sm:$0xff]
    %v2122 = vld [vmem:[#allocation2 + $0x3a8] sm:$0xff]
    %v2123 = vld [vmem:[#allocation2 + $0x3b0] sm:$0xff]
    %v2124 = vld [vmem:[#allocation2 + $0x3b8] sm:$0xff]
    %v2125 = vld [vmem:[#allocation2 + $0x3c0] sm:$0xff]
    %v2126 = vld [vmem:[#allocation2 + $0x3c8] sm:$0xff]
    %v2127 = vld [vmem:[#allocation2 + $0x3d0] sm:$0xff]
    %v2128 = vld [vmem:[#allocation2 + $0x3d8] sm:$0xff]
    %v2129 = vld [vmem:[#allocation2 + $0x3e0] sm:$0xff]
    %v2130 = vld [vmem:[#allocation2 + $0x3e8] sm:$0xff]
    %v2131 = vld [vmem:[#allocation2 + $0x3f0] sm:$0xff]
    %v2132 = vld [vmem:[#allocation2 + $0x3f8] sm:$0xff]
    %v2133 = vpack.c.bf16 %v1965, %v1961
    %v2134 = vpack.c.bf16 %v1966, %v1962
    %v2135 = vpack.c.bf16 %v1967, %v1963
    %v2136 = vpack.c.bf16 %v1968, %v1964
    %2137 = vmatprep.subr.bf16.mxu0 %v2006
    %2138 = vmatpush1.bf16.msra.mxu0 %v2005
    %2139 = vmatprep.subr.bf16.mxu0 %v2010
    %2140 = vmatpush1.bf16.msra.mxu0 %v2009
    %2141 = vmatprep.subr.bf16.mxu0 %v2014
    %2142 = vmatpush1.bf16.msra.mxu0 %v2013
    %2143 = vmatprep.subr.bf16.mxu0 %v2018
    %2144 = vmatpush1.bf16.msra.mxu0 %v2017
    %2145 = vmatprep.subr.bf16.mxu0 %v2022
    %2146 = vmatpush1.bf16.msra.mxu0 %v2021
    %2147 = vmatprep.subr.bf16.mxu0 %v2026
    %2148 = vmatpush1.bf16.msra.mxu0 %v2025
    %2149 = vmatprep.subr.bf16.mxu0 %v2030
    %2150 = vmatpush1.bf16.msra.mxu0 %v2029
    %2151 = vmatprep.subr.bf16.mxu0 %v2034
    %2152 = vmatpush1.bf16.msra.mxu0 %v2033
    %2153 = vmatprep.subr.bf16.mxu0 %v2038
    %2154 = vmatpush1.bf16.msra.mxu0 %v2037
    %2155 = vmatprep.subr.bf16.mxu0 %v2042
    %2156 = vmatpush1.bf16.msra.mxu0 %v2041
    %2157 = vmatprep.subr.bf16.mxu0 %v2046
    %2158 = vmatpush1.bf16.msra.mxu0 %v2045
    %2159 = vmatprep.subr.bf16.mxu0 %v2050
    %2160 = vmatpush1.bf16.msra.mxu0 %v2049
    %2161 = vmatprep.subr.bf16.mxu0 %v2054
    %2162 = vmatpush1.bf16.msra.mxu0 %v2053
    %2163 = vmatprep.subr.bf16.mxu0 %v2058
    %2164 = vmatpush1.bf16.msra.mxu0 %v2057
    %2165 = vmatprep.subr.bf16.mxu0 %v2062
    %2166 = vmatpush1.bf16.msra.mxu0 %v2061
    %2167 = vmatprep.subr.bf16.mxu0 %v2066
    %2168 = vmatpush1.bf16.msra.mxu0 %v2065
    %2169 = vmatprep.mubr.bf16.mxu0 %v2134
    %2170 = vmatmul.mubr.bf16.gmra.mrb[0].mxu0 %v2133
    %v2171 = vpop.f32.mrb[0].mxu0
    %v2172 = vadd.f32 0.0, %v2171
    %v2173 = vpop.f32.mrb[0].mxu0
    %v2174 = vadd.f32 0.0, %v2173
    %v2175 = vpop.f32.mrb[0].mxu0
    %v2176 = vadd.f32 0.0, %v2175
    %v2177 = vpop.f32.mrb[0].mxu0
    %v2178 = vadd.f32 0.0, %v2177
    %2179 = vdwg.mxu0
    %2180 = vmatprep.subr.bf16.mxu0 %v2070
    %2181 = vmatpush1.bf16.msra.mxu0 %v2069
    %2182 = vmatprep.subr.bf16.mxu0 %v2074
    %2183 = vmatpush1.bf16.msra.mxu0 %v2073
    %2184 = vmatprep.subr.bf16.mxu0 %v2078
    %2185 = vmatpush1.bf16.msra.mxu0 %v2077
    %2186 = vmatprep.subr.bf16.mxu0 %v2082
    %2187 = vmatpush1.bf16.msra.mxu0 %v2081
    %2188 = vmatprep.subr.bf16.mxu0 %v2086
    %2189 = vmatpush1.bf16.msra.mxu0 %v2085
    %2190 = vmatprep.subr.bf16.mxu0 %v2090
    %2191 = vmatpush1.bf16.msra.mxu0 %v2089
    %2192 = vmatprep.subr.bf16.mxu0 %v2094
    %2193 = vmatpush1.bf16.msra.mxu0 %v2093
    %2194 = vmatprep.subr.bf16.mxu0 %v2098
    %2195 = vmatpush1.bf16.msra.mxu0 %v2097
    %2196 = vmatprep.subr.bf16.mxu0 %v2102
    %2197 = vmatpush1.bf16.msra.mxu0 %v2101
    %2198 = vmatprep.subr.bf16.mxu0 %v2106
    %2199 = vmatpush1.bf16.msra.mxu0 %v2105
    %2200 = vmatprep.subr.bf16.mxu0 %v2110
    %2201 = vmatpush1.bf16.msra.mxu0 %v2109
    %2202 = vmatprep.subr.bf16.mxu0 %v2114
    %2203 = vmatpush1.bf16.msra.mxu0 %v2113
    %2204 = vmatprep.subr.bf16.mxu0 %v2118
    %2205 = vmatpush1.bf16.msra.mxu0 %v2117
    %2206 = vmatprep.subr.bf16.mxu0 %v2122
    %2207 = vmatpush1.bf16.msra.mxu0 %v2121
    %2208 = vmatprep.subr.bf16.mxu0 %v2126
    %2209 = vmatpush1.bf16.msra.mxu0 %v2125
    %2210 = vmatprep.subr.bf16.mxu0 %v2130
    %2211 = vmatpush1.bf16.msra.mxu0 %v2129
    %2212 = vmatprep.mubr.bf16.mxu0 %v2136
    %2213 = vmatmul.mubr.bf16.gmra.mrb[0].mxu0 %v2135
    %v2214 = vpop.f32.mrb[0].mxu0
    %v2215 = vadd.f32 %v2172, %v2214
    %v2216 = vpop.f32.mrb[0].mxu0
    %v2217 = vadd.f32 %v2174, %v2216
    %v2218 = vpop.f32.mrb[0].mxu0
    %v2219 = vadd.f32 %v2176, %v2218
    %v2220 = vpop.f32.mrb[0].mxu0
    %v2221 = vadd.f32 %v2178, %v2220
    %2222 = vdwg.mxu0
    %2223 = vmatprep.subr.bf16.mxu0 %v2008
    %2224 = vmatpush1.bf16.msra.mxu0 %v2007
    %2225 = vmatprep.subr.bf16.mxu0 %v2012
    %2226 = vmatpush1.bf16.msra.mxu0 %v2011
    %2227 = vmatprep.subr.bf16.mxu0 %v2016
    %2228 = vmatpush1.bf16.msra.mxu0 %v2015
    %2229 = vmatprep.subr.bf16.mxu0 %v2020
    %2230 = vmatpush1.bf16.msra.mxu0 %v2019
    %2231 = vmatprep.subr.bf16.mxu0 %v2024
    %2232 = vmatpush1.bf16.msra.mxu0 %v2023
    %2233 = vmatprep.subr.bf16.mxu0 %v2028
    %2234 = vmatpush1.bf16.msra.mxu0 %v2027
    %2235 = vmatprep.subr.bf16.mxu0 %v2032
    %2236 = vmatpush1.bf16.msra.mxu0 %v2031
    %2237 = vmatprep.subr.bf16.mxu0 %v2036
    %2238 = vmatpush1.bf16.msra.mxu0 %v2035
    %2239 = vmatprep.subr.bf16.mxu0 %v2040
    %2240 = vmatpush1.bf16.msra.mxu0 %v2039
    %2241 = vmatprep.subr.bf16.mxu0 %v2044
    %2242 = vmatpush1.bf16.msra.mxu0 %v2043
    %2243 = vmatprep.subr.bf16.mxu0 %v2048
    %2244 = vmatpush1.bf16.msra.mxu0 %v2047
    %2245 = vmatprep.subr.bf16.mxu0 %v2052
    %2246 = vmatpush1.bf16.msra.mxu0 %v2051
    %2247 = vmatprep.subr.bf16.mxu0 %v2056
    %2248 = vmatpush1.bf16.msra.mxu0 %v2055
    %2249 = vmatprep.subr.bf16.mxu0 %v2060
    %2250 = vmatpush1.bf16.msra.mxu0 %v2059
    %2251 = vmatprep.subr.bf16.mxu0 %v2064
    %2252 = vmatpush1.bf16.msra.mxu0 %v2063
    %2253 = vmatprep.subr.bf16.mxu0 %v2068
    %2254 = vmatpush1.bf16.msra.mxu0 %v2067
    %2255 = vmatprep.mubr.bf16.mxu0 %v2134
    %2256 = vmatmul.mubr.bf16.gmra.mrb[0].mxu0 %v2133
    %v2257 = vpop.f32.mrb[0].mxu0
    %v2258 = vadd.f32 0.0, %v2257
    %v2259 = vpop.f32.mrb[0].mxu0
    %v2260 = vadd.f32 0.0, %v2259
    %v2261 = vpop.f32.mrb[0].mxu0
    %v2262 = vadd.f32 0.0, %v2261
    %v2263 = vpop.f32.mrb[0].mxu0
    %v2264 = vadd.f32 0.0, %v2263
    %2265 = vdwg.mxu0
    %2266 = vmatprep.subr.bf16.mxu0 %v2072
    %2267 = vmatpush1.bf16.msra.mxu0 %v2071
    %2268 = vmatprep.subr.bf16.mxu0 %v2076
    %2269 = vmatpush1.bf16.msra.mxu0 %v2075
    %2270 = vmatprep.subr.bf16.mxu0 %v2080
    %2271 = vmatpush1.bf16.msra.mxu0 %v2079
    %2272 = vmatprep.subr.bf16.mxu0 %v2084
    %2273 = vmatpush1.bf16.msra.mxu0 %v2083
    %2274 = vmatprep.subr.bf16.mxu0 %v2088
    %2275 = vmatpush1.bf16.msra.mxu0 %v2087
    %2276 = vmatprep.subr.bf16.mxu0 %v2092
    %2277 = vmatpush1.bf16.msra.mxu0 %v2091
    %2278 = vmatprep.subr.bf16.mxu0 %v2096
    %2279 = vmatpush1.bf16.msra.mxu0 %v2095
    %2280 = vmatprep.subr.bf16.mxu0 %v2100
    %2281 = vmatpush1.bf16.msra.mxu0 %v2099
    %2282 = vmatprep.subr.bf16.mxu0 %v2104
    %2283 = vmatpush1.bf16.msra.mxu0 %v2103
    %2284 = vmatprep.subr.bf16.mxu0 %v2108
    %2285 = vmatpush1.bf16.msra.mxu0 %v2107
    %2286 = vmatprep.subr.bf16.mxu0 %v2112
    %2287 = vmatpush1.bf16.msra.mxu0 %v2111
    %2288 = vmatprep.subr.bf16.mxu0 %v2116
    %2289 = vmatpush1.bf16.msra.mxu0 %v2115
    %2290 = vmatprep.subr.bf16.mxu0 %v2120
    %2291 = vmatpush1.bf16.msra.mxu0 %v2119
    %2292 = vmatprep.subr.bf16.mxu0 %v2124
    %2293 = vmatpush1.bf16.msra.mxu0 %v2123
    %2294 = vmatprep.subr.bf16.mxu0 %v2128
    %2295 = vmatpush1.bf16.msra.mxu0 %v2127
    %2296 = vmatprep.subr.bf16.mxu0 %v2132
    %2297 = vmatpush1.bf16.msra.mxu0 %v2131
    %2298 = vmatprep.mubr.bf16.mxu0 %v2136
    %2299 = vmatmul.mubr.bf16.gmra.mrb[0].mxu0 %v2135
    %v2300 = vpop.f32.mrb[0].mxu0
    %v2301 = vadd.f32 %v2258, %v2300
    %v2302 = vpop.f32.mrb[0].mxu0
    %v2303 = vadd.f32 %v2260, %v2302
    %v2304 = vpop.f32.mrb[0].mxu0
    %v2305 = vadd.f32 %v2262, %v2304
    %v2306 = vpop.f32.mrb[0].mxu0
    %v2307 = vadd.f32 %v2264, %v2306
    %2308 = vdwg.mxu0
    %2309 = vmatprep.subr.mxu0 %v2217
    %2310 = vmatpush1.msra.mxu0 %v2215
    %2311 = vmatprep.subr.mxu0 %v2221
    %2312 = vmatpush1.msra.mxu0 %v2219
    %2313 = vmatprep.subr.mxu0 0.0
    %2314 = vmatpush1.msra.mxu0 0.0
    %2315 = vmatprep.subr.mxu0 0.0
    %2316 = vmatpush1.msra.mxu0 0.0
    %2317 = vmatprep.subr.mxu0 0.0
    %2318 = vmatpush1.msra.mxu0 0.0
    %2319 = vmatprep.subr.mxu0 0.0
    %2320 = vmatpush1.msra.mxu0 0.0
    %2321 = vmatprep.subr.mxu0 0.0
    %2322 = vmatpush1.msra.mxu0 0.0
    %2323 = vmatprep.subr.mxu0 0.0
    %2324 = vmatpush1.msra.mxu0 0.0
    %2325 = vmatprep.subr.mxu0 0.0
    %2326 = vmatpush1.msra.mxu0 0.0
    %2327 = vmatprep.subr.mxu0 0.0
    %2328 = vmatpush1.msra.mxu0 0.0
    %2329 = vmatprep.subr.mxu0 0.0
    %2330 = vmatpush1.msra.mxu0 0.0
    %2331 = vmatprep.subr.mxu0 0.0
    %2332 = vmatpush1.msra.mxu0 0.0
    %2333 = vmatprep.subr.mxu0 0.0
    %2334 = vmatpush1.msra.mxu0 0.0
    %2335 = vmatprep.subr.mxu0 0.0
    %2336 = vmatpush1.msra.mxu0 0.0
    %2337 = vmatprep.subr.mxu0 0.0
    %2338 = vmatpush1.msra.mxu0 0.0
    %2339 = vmatprep.subr.mxu0 0.0
    %2340 = vmatpush1.msra.mxu0 0.0
    %2341 = vmatprep.subr.mxu0 0.0
    %2342 = vmatpush1.msra.mxu0 0.0
    %2343 = vmatprep.subr.mxu0 0.0
    %2344 = vmatpush1.msra.mxu0 0.0
    %2345 = vmatprep.subr.mxu0 0.0
    %2346 = vmatpush1.msra.mxu0 0.0
    %2347 = vmatprep.subr.mxu0 0.0
    %2348 = vmatpush1.msra.mxu0 0.0
    %2349 = vmatprep.subr.mxu0 0.0
    %2350 = vmatpush1.msra.mxu0 0.0
    %2351 = vmatprep.subr.mxu0 0.0
    %2352 = vmatpush1.msra.mxu0 0.0
    %2353 = vmatprep.subr.mxu0 0.0
    %2354 = vmatpush1.msra.mxu0 0.0
    %2355 = vmatprep.subr.mxu0 0.0
    %2356 = vmatpush1.msra.mxu0 0.0
    %2357 = vmatprep.subr.mxu0 0.0
    %2358 = vmatpush1.msra.mxu0 0.0
    %2359 = vmatprep.subr.mxu0 0.0
    %2360 = vmatpush1.msra.mxu0 0.0
    %2361 = vmatprep.subr.mxu0 0.0
    %2362 = vmatpush1.msra.mxu0 0.0
    %2363 = vmatprep.subr.mxu0 0.0
    %2364 = vmatpush1.msra.mxu0 0.0
    %2365 = vmatprep.subr.mxu0 0.0
    %2366 = vmatpush1.msra.mxu0 0.0
    %2367 = vmatprep.subr.mxu0 0.0
    %2368 = vmatpush1.msra.mxu0 0.0
    %2369 = vmatprep.subr.mxu0 0.0
    %2370 = vmatpush1.msra.mxu0 0.0
    %2371 = vmatprep.subr.mxu0 0.0
    %2372 = vmatpush1.msra.mxu0 0.0
    %2373 = vmatprep.mubr.f32.mxu0 0.0
    %2374 = vmatmul.mubr.f32.gmra.mrb[0].mxu0 %v934
    %v2375 = vpop.f32.mrb[0].mxu0
    %v2376 = vadd.f32 0.0, %v2375
    %v2377 = vpop.f32.mrb[0].mxu0
    %v2378 = vadd.f32 0.0, %v2377
    %2379 = vmatprep.mubr.f32.mxu0 0.0
    %2380 = vmatmul.mubr.f32.gmra.mrb[0].mxu0 %v937
    %v2381 = vpop.f32.mrb[0].mxu0
    %v2382 = vadd.f32 0.0, %v2381
    %v2383 = vpop.f32.mrb[0].mxu0
    %v2384 = vadd.f32 0.0, %v2383
    %2385 = vdwg.mxu0
    %2386 = vmatprep.subr.mxu0 %v2303
    %2387 = vmatpush1.msra.mxu0 %v2301
    %2388 = vmatprep.subr.mxu0 %v2307
    %2389 = vmatpush1.msra.mxu0 %v2305
    %2390 = vmatprep.subr.mxu0 0.0
    %2391 = vmatpush1.msra.mxu0 0.0
    %2392 = vmatprep.subr.mxu0 0.0
    %2393 = vmatpush1.msra.mxu0 0.0
    %2394 = vmatprep.subr.mxu0 0.0
    %2395 = vmatpush1.msra.mxu0 0.0
    %2396 = vmatprep.subr.mxu0 0.0
    %2397 = vmatpush1.msra.mxu0 0.0
    %2398 = vmatprep.subr.mxu0 0.0
    %2399 = vmatpush1.msra.mxu0 0.0
    %2400 = vmatprep.subr.mxu0 0.0
    %2401 = vmatpush1.msra.mxu0 0.0
    %2402 = vmatprep.subr.mxu0 0.0
    %2403 = vmatpush1.msra.mxu0 0.0
    %2404 = vmatprep.subr.mxu0 0.0
    %2405 = vmatpush1.msra.mxu0 0.0
    %2406 = vmatprep.subr.mxu0 0.0
    %2407 = vmatpush1.msra.mxu0 0.0
    %2408 = vmatprep.subr.mxu0 0.0
    %2409 = vmatpush1.msra.mxu0 0.0
    %2410 = vmatprep.subr.mxu0 0.0
    %2411 = vmatpush1.msra.mxu0 0.0
    %2412 = vmatprep.subr.mxu0 0.0
    %2413 = vmatpush1.msra.mxu0 0.0
    %2414 = vmatprep.subr.mxu0 0.0
    %2415 = vmatpush1.msra.mxu0 0.0
    %2416 = vmatprep.subr.mxu0 0.0
    %2417 = vmatpush1.msra.mxu0 0.0
    %2418 = vmatprep.subr.mxu0 0.0
    %2419 = vmatpush1.msra.mxu0 0.0
    %2420 = vmatprep.subr.mxu0 0.0
    %2421 = vmatpush1.msra.mxu0 0.0
    %2422 = vmatprep.subr.mxu0 0.0
    %2423 = vmatpush1.msra.mxu0 0.0
    %2424 = vmatprep.subr.mxu0 0.0
    %2425 = vmatpush1.msra.mxu0 0.0
    %2426 = vmatprep.subr.mxu0 0.0
    %2427 = vmatpush1.msra.mxu0 0.0
    %2428 = vmatprep.subr.mxu0 0.0
    %2429 = vmatpush1.msra.mxu0 0.0
    %2430 = vmatprep.subr.mxu0 0.0
    %2431 = vmatpush1.msra.mxu0 0.0
    %2432 = vmatprep.subr.mxu0 0.0
    %2433 = vmatpush1.msra.mxu0 0.0
    %2434 = vmatprep.subr.mxu0 0.0
    %2435 = vmatpush1.msra.mxu0 0.0
    %2436 = vmatprep.subr.mxu0 0.0
    %2437 = vmatpush1.msra.mxu0 0.0
    %2438 = vmatprep.subr.mxu0 0.0
    %2439 = vmatpush1.msra.mxu0 0.0
    %2440 = vmatprep.subr.mxu0 0.0
    %2441 = vmatpush1.msra.mxu0 0.0
    %2442 = vmatprep.subr.mxu0 0.0
    %2443 = vmatpush1.msra.mxu0 0.0
    %2444 = vmatprep.subr.mxu0 0.0
    %2445 = vmatpush1.msra.mxu0 0.0
    %2446 = vmatprep.subr.mxu0 0.0
    %2447 = vmatpush1.msra.mxu0 0.0
    %2448 = vmatprep.subr.mxu0 0.0
    %2449 = vmatpush1.msra.mxu0 0.0
    %2450 = vmatprep.mubr.f32.mxu0 0.0
    %2451 = vmatmul.mubr.f32.gmra.mrb[0].mxu0 %v934
    %v2452 = vpop.f32.mrb[0].mxu0
    %v2453 = vadd.f32 0.0, %v2452
    %v2454 = vpop.f32.mrb[0].mxu0
    %v2455 = vadd.f32 0.0, %v2454
    %2456 = vmatprep.mubr.f32.mxu0 0.0
    %2457 = vmatmul.mubr.f32.gmra.mrb[0].mxu0 %v937
    %v2458 = vpop.f32.mrb[0].mxu0
    %v2459 = vadd.f32 0.0, %v2458
    %v2460 = vpop.f32.mrb[0].mxu0
    %v2461 = vadd.f32 0.0, %v2460
    %2462 = vdwg.mxu0
    %v2463 = vadd.f32 %v2376, %v2378
    %v2464 = vadd.f32 %v2463, %v2453
    %v2465 = vadd.f32 %v2464, %v2455
    %2466 = vadd.xlane.f32.xlu0 %v2465
    %v2467 = vpop.xlane.xlu0 %2466
    %v2468 = vadd.f32 %v2382, %v2384
    %v2469 = vadd.f32 %v2468, %v2459
    %v2470 = vadd.f32 %v2469, %v2461
    %2471 = vadd.xlane.f32.xlu0 %v2470
    %v2472 = vpop.xlane.xlu0 %2471
    %v2473 = vmul.f32 %v2376, %v2376
    %v2474 = vmul.f32 %v2378, %v2378
    %v2475 = vmul.f32 %v2453, %v2453
    %v2476 = vmul.f32 %v2455, %v2455
    %v2477 = vmul.f32 %v2382, %v2382
    %v2478 = vmul.f32 %v2384, %v2384
    %v2479 = vmul.f32 %v2459, %v2459
    %v2480 = vmul.f32 %v2461, %v2461
    %v2481 = vadd.f32 %v2473, %v2474
    %v2482 = vadd.f32 %v2481, %v2475
    %v2483 = vadd.f32 %v2482, %v2476
    %2484 = vadd.xlane.f32.xlu0 %v2483
    %v2485 = vpop.xlane.xlu0 %2484
    %v2486 = vadd.f32 %v2477, %v2478
    %v2487 = vadd.f32 %v2486, %v2479
    %v2488 = vadd.f32 %v2487, %v2480
    %2489 = vadd.xlane.f32.xlu0 %v2488
    %v2490 = vpop.xlane.xlu0 %2489
    %v2491 = vadd.f32 %v2467, %v2472
    %v2492 = vadd.f32 %v2485, %v2490
    %v2493 = vmul.f32 %v2491, 0.0009765625
    %v2494 = vmul.f32 %v2492, 0.0009765625
    %v2495 = vmul.f32 %v2493, %v2493
    %v2496 = vsub.f32 %v2494, %v2495
    %v2497 = vmax.f32 %v2496, 0.0
    %v2498 = vadd.f32 %v2497, 1e-05
    %v2499 = vrsqrt.pop %v2498
    %v2500 = vmul.f32 %v260, %v2499
    %v2501 = vmul.f32 %v2493, %v2500
    %v2502 = vsub.f32 %v261, %v2501
    %2504 = vset.pattern.permute.xlu0 2
    %2505 = vperm.xlu0 %2504, %v2500
    %v2506 = vpop.permute.xlu0 %2505
    %v2508 = vmul.f32 %v2376, %v2506
    %v2509 = vmul.f32 %v2378, %v2506
    %v2510 = vmul.f32 %v2453, %v2506
    %v2511 = vmul.f32 %v2455, %v2506
    %v2512 = vmul.f32 %v2382, %v2506
    %v2513 = vmul.f32 %v2384, %v2506
    %v2514 = vmul.f32 %v2459, %v2506
    %v2515 = vmul.f32 %v2461, %v2506
    %2517 = vset.pattern.permute.xlu0 2
    %2518 = vperm.xlu0 %2517, %v2502
    %v2519 = vpop.permute.xlu0 %2518
    %v2521 = vadd.f32 %v2508, %v2519
    %v2522 = vadd.f32 %v2509, %v2519
    %v2523 = vadd.f32 %v2510, %v2519
    %v2524 = vadd.f32 %v2511, %v2519
    %v2525 = vadd.f32 %v2512, %v2519
    %v2526 = vadd.f32 %v2513, %v2519
    %v2527 = vadd.f32 %v2514, %v2519
    %v2528 = vadd.f32 %v2515, %v2519
    %v2529 = vadd.f32 %v2521, %v1271
    %v2530 = vadd.f32 %v2522, %v1272
    %v2531 = vadd.f32 %v2523, %v1273
    %v2532 = vadd.f32 %v2524, %v1274
    %v2533 = vadd.f32 %v2525, %v1275
    %v2534 = vadd.f32 %v2526, %v1276
    %v2535 = vadd.f32 %v2527, %v1277
    %v2536 = vadd.f32 %v2528, %v1278
    %v2537 = vmax.f32 %v2529, 0.0
    %v2538 = vmax.f32 %v2530, 0.0
    %v2539 = vmax.f32 %v2531, 0.0
    %v2540 = vmax.f32 %v2532, 0.0
    %v2541 = vmax.f32 %v2533, 0.0
    %v2542 = vmax.f32 %v2534, 0.0
    %v2543 = vmax.f32 %v2535, 0.0
    %v2544 = vmax.f32 %v2536, 0.0
    %v2545 = vand.u32 2147483647, %v2529
    %v2546 = vand.u32 2147483647, %v2530
    %v2547 = vand.u32 2147483647, %v2531
    %v2548 = vand.u32 2147483647, %v2532
    %v2549 = vand.u32 2147483647, %v2533
    %v2550 = vand.u32 2147483647, %v2534
    %v2551 = vand.u32 2147483647, %v2535
    %v2552 = vand.u32 2147483647, %v2536
    %v2553 = vsub.f32 0.0, %v2545
    %v2554 = vsub.f32 0.0, %v2546
    %v2555 = vsub.f32 0.0, %v2547
    %v2556 = vsub.f32 0.0, %v2548
    %v2557 = vsub.f32 0.0, %v2549
    %v2558 = vsub.f32 0.0, %v2550
    %v2559 = vsub.f32 0.0, %v2551
    %v2560 = vsub.f32 0.0, %v2552
    %v2561 = vmul.f32 %v2553, 1.442695
    %v2562 = vpow.pop %v2561
    %v2563 = vmul.f32 %v2554, 1.442695
    %v2564 = vpow.pop %v2563
    %v2565 = vmul.f32 %v2555, 1.442695
    %v2566 = vpow.pop %v2565
    %v2567 = vmul.f32 %v2556, 1.442695
    %v2568 = vpow.pop %v2567
    %v2569 = vmul.f32 %v2557, 1.442695
    %v2570 = vpow.pop %v2569
    %v2571 = vmul.f32 %v2558, 1.442695
    %v2572 = vpow.pop %v2571
    %v2573 = vmul.f32 %v2559, 1.442695
    %v2574 = vpow.pop %v2573
    %v2575 = vmul.f32 %v2560, 1.442695
    %v2576 = vpow.pop %v2575
    %v2577 = vadd.f32 %v2562, 1.0
    %v2578 = vlog2.pop %v2577
    %v2579 = vmul.f32 %v2578, 0.6931472
    %v2580 = vmul.f32 -0.5, %v2562
    %v2581 = vadd.f32 %v2580, 1.0
    %v2582 = vmul.f32 %v2581, %v2562
    %v2583 = vand.u32 2147483647, %v2562
    %vm2584 = vcmp.lt.f32.partialorder %v2583, 0.0004427343
    %v2585 = vsel %vm2584, %v2582, %v2579
    %v2586 = vadd.f32 %v2564, 1.0
    %v2587 = vlog2.pop %v2586
    %v2588 = vmul.f32 %v2587, 0.6931472
    %v2589 = vmul.f32 -0.5, %v2564
    %v2590 = vadd.f32 %v2589, 1.0
    %v2591 = vmul.f32 %v2590, %v2564
    %v2592 = vand.u32 2147483647, %v2564
    %vm2593 = vcmp.lt.f32.partialorder %v2592, 0.0004427343
    %v2594 = vsel %vm2593, %v2591, %v2588
    %v2595 = vadd.f32 %v2566, 1.0
    %v2596 = vlog2.pop %v2595
    %v2597 = vmul.f32 %v2596, 0.6931472
    %v2598 = vmul.f32 -0.5, %v2566
    %v2599 = vadd.f32 %v2598, 1.0
    %v2600 = vmul.f32 %v2599, %v2566
    %v2601 = vand.u32 2147483647, %v2566
    %vm2602 = vcmp.lt.f32.partialorder %v2601, 0.0004427343
    %v2603 = vsel %vm2602, %v2600, %v2597
    %v2604 = vadd.f32 %v2568, 1.0
    %v2605 = vlog2.pop %v2604
    %v2606 = vmul.f32 %v2605, 0.6931472
    %v2607 = vmul.f32 -0.5, %v2568
    %v2608 = vadd.f32 %v2607, 1.0
    %v2609 = vmul.f32 %v2608, %v2568
    %v2610 = vand.u32 2147483647, %v2568
    %vm2611 = vcmp.lt.f32.partialorder %v2610, 0.0004427343
    %v2612 = vsel %vm2611, %v2609, %v2606
    %v2613 = vadd.f32 %v2570, 1.0
    %v2614 = vlog2.pop %v2613
    %v2615 = vmul.f32 %v2614, 0.6931472
    %v2616 = vmul.f32 -0.5, %v2570
    %v2617 = vadd.f32 %v2616, 1.0
    %v2618 = vmul.f32 %v2617, %v2570
    %v2619 = vand.u32 2147483647, %v2570
    %vm2620 = vcmp.lt.f32.partialorder %v2619, 0.0004427343
    %v2621 = vsel %vm2620, %v2618, %v2615
    %v2622 = vadd.f32 %v2572, 1.0
    %v2623 = vlog2.pop %v2622
    %v2624 = vmul.f32 %v2623, 0.6931472
    %v2625 = vmul.f32 -0.5, %v2572
    %v2626 = vadd.f32 %v2625, 1.0
    %v2627 = vmul.f32 %v2626, %v2572
    %v2628 = vand.u32 2147483647, %v2572
    %vm2629 = vcmp.lt.f32.partialorder %v2628, 0.0004427343
    %v2630 = vsel %vm2629, %v2627, %v2624
    %v2631 = vadd.f32 %v2574, 1.0
    %v2632 = vlog2.pop %v2631
    %v2633 = vmul.f32 %v2632, 0.6931472
    %v2634 = vmul.f32 -0.5, %v2574
    %v2635 = vadd.f32 %v2634, 1.0
    %v2636 = vmul.f32 %v2635, %v2574
    %v2637 = vand.u32 2147483647, %v2574
    %vm2638 = vcmp.lt.f32.partialorder %v2637, 0.0004427343
    %v2639 = vsel %vm2638, %v2636, %v2633
    %v2640 = vadd.f32 %v2576, 1.0
    %v2641 = vlog2.pop %v2640
    %v2642 = vmul.f32 %v2641, 0.6931472
    %v2643 = vmul.f32 -0.5, %v2576
    %v2644 = vadd.f32 %v2643, 1.0
    %v2645 = vmul.f32 %v2644, %v2576
    %v2646 = vand.u32 2147483647, %v2576
    %vm2647 = vcmp.lt.f32.partialorder %v2646, 0.0004427343
    %v2648 = vsel %vm2647, %v2645, %v2642
    %v2649 = vadd.f32 %v2537, %v2585
    %v2650 = vadd.f32 %v2538, %v2594
    %v2651 = vadd.f32 %v2539, %v2603
    %v2652 = vadd.f32 %v2540, %v2612
    %v2653 = vadd.f32 %v2541, %v2621
    %v2654 = vadd.f32 %v2542, %v2630
    %v2655 = vadd.f32 %v2543, %v2639
    %v2656 = vadd.f32 %v2544, %v2648
    %s2658 = sshll.u32 1, 14
    %s2659 = sxor.u32 4294967295, %s2658
    %s2661 = sadd.s32 2, %s100
    %s2663 = sshll.u32 7, 26
    %s2664 = sxor.u32 4294967295, %s2663
    %s2665 = sand.u32 0, %s2664
    %s2666 = sshll.u32 %s2661, 26
    %s2667 = sor.u32 %s2665, %s2666
    %s2668 = sshll.u32 [#allocation2], 4
    %s2669 = int_to_ptr.vmem [resolvable:$true] %s2668
    %2672 = sst [smem:[#allocation27]] 256
    %s2673 = scalar_lea.smem [#allocation27], 1
    %2674 = sst [smem:[%s2673]] 512
    %s2675 = scalar_lea.smem [#allocation27], 2
    %2676 = sst [smem:[%s2675]] 2
    %s2677 = scalar_lea.smem [#allocation27], 3
    %2678 = sst [smem:[%s2677]] 64
    %s2679 = scalar_lea.smem [#allocation27], 4
    %2680 = sst [smem:[%s2679]] 128
    %s2681 = scalar_lea.smem [#allocation27], 5
    %2682 = sst [smem:[%s2681]] 2
    %s2683 = scalar_lea.smem [#allocation27], 6
    %2684 = sst [smem:[%s2683]] 128
    %s2685 = scalar_lea.smem [#allocation27], 7
    %2686 = sst [smem:[%s2685]] 64
    %s2687 = scalar_lea.smem [#allocation27], 8
    %2688 = sst [smem:[%s2687]] 4
    %2690 = dma.general %s8, 8192, %s2669, [#allocation3], [#allocation26], [#allocation27], %s2667, 0
    %s2691 = sshll.u32 %s1314, 4
    %2692 = dma.done %s263, %s2691
    %v2693 = vld [vmem:[#allocation2 + $0x800] sm:$0xff]
    %v2694 = vld [vmem:[#allocation2 + $0x808] sm:$0xff]
    %v2695 = vld [vmem:[#allocation2 + $0x810] sm:$0xff]
    %v2696 = vld [vmem:[#allocation2 + $0x818] sm:$0xff]
    %v2697 = vld [vmem:[#allocation2 + $0x820] sm:$0xff]
    %v2698 = vld [vmem:[#allocation2 + $0x828] sm:$0xff]
    %v2699 = vld [vmem:[#allocation2 + $0x830] sm:$0xff]
    %v2700 = vld [vmem:[#allocation2 + $0x838] sm:$0xff]
    %v2701 = vld [vmem:[#allocation2 + $0x840] sm:$0xff]
    %v2702 = vld [vmem:[#allocation2 + $0x848] sm:$0xff]
    %v2703 = vld [vmem:[#allocation2 + $0x850] sm:$0xff]
    %v2704 = vld [vmem:[#allocation2 + $0x858] sm:$0xff]
    %v2705 = vld [vmem:[#allocation2 + $0x860] sm:$0xff]
    %v2706 = vld [vmem:[#allocation2 + $0x868] sm:$0xff]
    %v2707 = vld [vmem:[#allocation2 + $0x870] sm:$0xff]
    %v2708 = vld [vmem:[#allocation2 + $0x878] sm:$0xff]
    %v2709 = vld [vmem:[#allocation2 + $0x880] sm:$0xff]
    %v2710 = vld [vmem:[#allocation2 + $0x888] sm:$0xff]
    %v2711 = vld [vmem:[#allocation2 + $0x890] sm:$0xff]
    %v2712 = vld [vmem:[#allocation2 + $0x898] sm:$0xff]
    %v2713 = vld [vmem:[#allocation2 + $0x8a0] sm:$0xff]
    %v2714 = vld [vmem:[#allocation2 + $0x8a8] sm:$0xff]
    %v2715 = vld [vmem:[#allocation2 + $0x8b0] sm:$0xff]
    %v2716 = vld [vmem:[#allocation2 + $0x8b8] sm:$0xff]
    %v2717 = vld [vmem:[#allocation2 + $0x8c0] sm:$0xff]
    %v2718 = vld [vmem:[#allocation2 + $0x8c8] sm:$0xff]
    %v2719 = vld [vmem:[#allocation2 + $0x8d0] sm:$0xff]
    %v2720 = vld [vmem:[#allocation2 + $0x8d8] sm:$0xff]
    %v2721 = vld [vmem:[#allocation2 + $0x8e0] sm:$0xff]
    %v2722 = vld [vmem:[#allocation2 + $0x8e8] sm:$0xff]
    %v2723 = vld [vmem:[#allocation2 + $0x8f0] sm:$0xff]
    %v2724 = vld [vmem:[#allocation2 + $0x8f8] sm:$0xff]
    %v2725 = vld [vmem:[#allocation2 + $0x900] sm:$0xff]
    %v2726 = vld [vmem:[#allocation2 + $0x908] sm:$0xff]
    %v2727 = vld [vmem:[#allocation2 + $0x910] sm:$0xff]
    %v2728 = vld [vmem:[#allocation2 + $0x918] sm:$0xff]
    %v2729 = vld [vmem:[#allocation2 + $0x920] sm:$0xff]
    %v2730 = vld [vmem:[#allocation2 + $0x928] sm:$0xff]
    %v2731 = vld [vmem:[#allocation2 + $0x930] sm:$0xff]
    %v2732 = vld [vmem:[#allocation2 + $0x938] sm:$0xff]
    %v2733 = vld [vmem:[#allocation2 + $0x940] sm:$0xff]
    %v2734 = vld [vmem:[#allocation2 + $0x948] sm:$0xff]
    %v2735 = vld [vmem:[#allocation2 + $0x950] sm:$0xff]
    %v2736 = vld [vmem:[#allocation2 + $0x958] sm:$0xff]
    %v2737 = vld [vmem:[#allocation2 + $0x960] sm:$0xff]
    %v2738 = vld [vmem:[#allocation2 + $0x968] sm:$0xff]
    %v2739 = vld [vmem:[#allocation2 + $0x970] sm:$0xff]
    %v2740 = vld [vmem:[#allocation2 + $0x978] sm:$0xff]
    %v2741 = vld [vmem:[#allocation2 + $0x980] sm:$0xff]
    %v2742 = vld [vmem:[#allocation2 + $0x988] sm:$0xff]
    %v2743 = vld [vmem:[#allocation2 + $0x990] sm:$0xff]
    %v2744 = vld [vmem:[#allocation2 + $0x998] sm:$0xff]
    %v2745 = vld [vmem:[#allocation2 + $0x9a0] sm:$0xff]
    %v2746 = vld [vmem:[#allocation2 + $0x9a8] sm:$0xff]
    %v2747 = vld [vmem:[#allocation2 + $0x9b0] sm:$0xff]
    %v2748 = vld [vmem:[#allocation2 + $0x9b8] sm:$0xff]
    %v2749 = vld [vmem:[#allocation2 + $0x9c0] sm:$0xff]
    %v2750 = vld [vmem:[#allocation2 + $0x9c8] sm:$0xff]
    %v2751 = vld [vmem:[#allocation2 + $0x9d0] sm:$0xff]
    %v2752 = vld [vmem:[#allocation2 + $0x9d8] sm:$0xff]
    %v2753 = vld [vmem:[#allocation2 + $0x9e0] sm:$0xff]
    %v2754 = vld [vmem:[#allocation2 + $0x9e8] sm:$0xff]
    %v2755 = vld [vmem:[#allocation2 + $0x9f0] sm:$0xff]
    %v2756 = vld [vmem:[#allocation2 + $0x9f8] sm:$0xff]
    %v2757 = vld [vmem:[#allocation2 + $0xa00] sm:$0xff]
    %v2758 = vld [vmem:[#allocation2 + $0xa08] sm:$0xff]
    %v2759 = vld [vmem:[#allocation2 + $0xa10] sm:$0xff]
    %v2760 = vld [vmem:[#allocation2 + $0xa18] sm:$0xff]
    %v2761 = vld [vmem:[#allocation2 + $0xa20] sm:$0xff]
    %v2762 = vld [vmem:[#allocation2 + $0xa28] sm:$0xff]
    %v2763 = vld [vmem:[#allocation2 + $0xa30] sm:$0xff]
    %v2764 = vld [vmem:[#allocation2 + $0xa38] sm:$0xff]
    %v2765 = vld [vmem:[#allocation2 + $0xa40] sm:$0xff]
    %v2766 = vld [vmem:[#allocation2 + $0xa48] sm:$0xff]
    %v2767 = vld [vmem:[#allocation2 + $0xa50] sm:$0xff]
    %v2768 = vld [vmem:[#allocation2 + $0xa58] sm:$0xff]
    %v2769 = vld [vmem:[#allocation2 + $0xa60] sm:$0xff]
    %v2770 = vld [vmem:[#allocation2 + $0xa68] sm:$0xff]
    %v2771 = vld [vmem:[#allocation2 + $0xa70] sm:$0xff]
    %v2772 = vld [vmem:[#allocation2 + $0xa78] sm:$0xff]
    %v2773 = vld [vmem:[#allocation2 + $0xa80] sm:$0xff]
    %v2774 = vld [vmem:[#allocation2 + $0xa88] sm:$0xff]
    %v2775 = vld [vmem:[#allocation2 + $0xa90] sm:$0xff]
    %v2776 = vld [vmem:[#allocation2 + $0xa98] sm:$0xff]
    %v2777 = vld [vmem:[#allocation2 + $0xaa0] sm:$0xff]
    %v2778 = vld [vmem:[#allocation2 + $0xaa8] sm:$0xff]
    %v2779 = vld [vmem:[#allocation2 + $0xab0] sm:$0xff]
    %v2780 = vld [vmem:[#allocation2 + $0xab8] sm:$0xff]
    %v2781 = vld [vmem:[#allocation2 + $0xac0] sm:$0xff]
    %v2782 = vld [vmem:[#allocation2 + $0xac8] sm:$0xff]
    %v2783 = vld [vmem:[#allocation2 + $0xad0] sm:$0xff]
    %v2784 = vld [vmem:[#allocation2 + $0xad8] sm:$0xff]
    %v2785 = vld [vmem:[#allocation2 + $0xae0] sm:$0xff]
    %v2786 = vld [vmem:[#allocation2 + $0xae8] sm:$0xff]
    %v2787 = vld [vmem:[#allocation2 + $0xaf0] sm:$0xff]
    %v2788 = vld [vmem:[#allocation2 + $0xaf8] sm:$0xff]
    %v2789 = vld [vmem:[#allocation2 + $0xb00] sm:$0xff]
    %v2790 = vld [vmem:[#allocation2 + $0xb08] sm:$0xff]
    %v2791 = vld [vmem:[#allocation2 + $0xb10] sm:$0xff]
    %v2792 = vld [vmem:[#allocation2 + $0xb18] sm:$0xff]
    %v2793 = vld [vmem:[#allocation2 + $0xb20] sm:$0xff]
    %v2794 = vld [vmem:[#allocation2 + $0xb28] sm:$0xff]
    %v2795 = vld [vmem:[#allocation2 + $0xb30] sm:$0xff]
    %v2796 = vld [vmem:[#allocation2 + $0xb38] sm:$0xff]
    %v2797 = vld [vmem:[#allocation2 + $0xb40] sm:$0xff]
    %v2798 = vld [vmem:[#allocation2 + $0xb48] sm:$0xff]
    %v2799 = vld [vmem:[#allocation2 + $0xb50] sm:$0xff]
    %v2800 = vld [vmem:[#allocation2 + $0xb58] sm:$0xff]
    %v2801 = vld [vmem:[#allocation2 + $0xb60] sm:$0xff]
    %v2802 = vld [vmem:[#allocation2 + $0xb68] sm:$0xff]
    %v2803 = vld [vmem:[#allocation2 + $0xb70] sm:$0xff]
    %v2804 = vld [vmem:[#allocation2 + $0xb78] sm:$0xff]
    %v2805 = vld [vmem:[#allocation2 + $0xb80] sm:$0xff]
    %v2806 = vld [vmem:[#allocation2 + $0xb88] sm:$0xff]
    %v2807 = vld [vmem:[#allocation2 + $0xb90] sm:$0xff]
    %v2808 = vld [vmem:[#allocation2 + $0xb98] sm:$0xff]
    %v2809 = vld [vmem:[#allocation2 + $0xba0] sm:$0xff]
    %v2810 = vld [vmem:[#allocation2 + $0xba8] sm:$0xff]
    %v2811 = vld [vmem:[#allocation2 + $0xbb0] sm:$0xff]
    %v2812 = vld [vmem:[#allocation2 + $0xbb8] sm:$0xff]
    %v2813 = vld [vmem:[#allocation2 + $0xbc0] sm:$0xff]
    %v2814 = vld [vmem:[#allocation2 + $0xbc8] sm:$0xff]
    %v2815 = vld [vmem:[#allocation2 + $0xbd0] sm:$0xff]
    %v2816 = vld [vmem:[#allocation2 + $0xbd8] sm:$0xff]
    %v2817 = vld [vmem:[#allocation2 + $0xbe0] sm:$0xff]
    %v2818 = vld [vmem:[#allocation2 + $0xbe8] sm:$0xff]
    %v2819 = vld [vmem:[#allocation2 + $0xbf0] sm:$0xff]
    %v2820 = vld [vmem:[#allocation2 + $0xbf8] sm:$0xff]
    %v2821 = vpack.c.bf16 %v2653, %v2649
    %v2822 = vpack.c.bf16 %v2654, %v2650
    %v2823 = vpack.c.bf16 %v2655, %v2651
    %v2824 = vpack.c.bf16 %v2656, %v2652
    %2825 = vmatprep.subr.bf16.mxu0 %v2694
    %2826 = vmatpush1.bf16.msra.mxu0 %v2693
    %2827 = vmatprep.subr.bf16.mxu0 %v2698
    %2828 = vmatpush1.bf16.msra.mxu0 %v2697
    %2829 = vmatprep.subr.bf16.mxu0 %v2702
    %2830 = vmatpush1.bf16.msra.mxu0 %v2701
    %2831 = vmatprep.subr.bf16.mxu0 %v2706
    %2832 = vmatpush1.bf16.msra.mxu0 %v2705
    %2833 = vmatprep.subr.bf16.mxu0 %v2710
    %2834 = vmatpush1.bf16.msra.mxu0 %v2709
    %2835 = vmatprep.subr.bf16.mxu0 %v2714
    %2836 = vmatpush1.bf16.msra.mxu0 %v2713
    %2837 = vmatprep.subr.bf16.mxu0 %v2718
    %2838 = vmatpush1.bf16.msra.mxu0 %v2717
    %2839 = vmatprep.subr.bf16.mxu0 %v2722
    %2840 = vmatpush1.bf16.msra.mxu0 %v2721
    %2841 = vmatprep.subr.bf16.mxu0 %v2726
    %2842 = vmatpush1.bf16.msra.mxu0 %v2725
    %2843 = vmatprep.subr.bf16.mxu0 %v2730
    %2844 = vmatpush1.bf16.msra.mxu0 %v2729
    %2845 = vmatprep.subr.bf16.mxu0 %v2734
    %2846 = vmatpush1.bf16.msra.mxu0 %v2733
    %2847 = vmatprep.subr.bf16.mxu0 %v2738
    %2848 = vmatpush1.bf16.msra.mxu0 %v2737
    %2849 = vmatprep.subr.bf16.mxu0 %v2742
    %2850 = vmatpush1.bf16.msra.mxu0 %v2741
    %2851 = vmatprep.subr.bf16.mxu0 %v2746
    %2852 = vmatpush1.bf16.msra.mxu0 %v2745
    %2853 = vmatprep.subr.bf16.mxu0 %v2750
    %2854 = vmatpush1.bf16.msra.mxu0 %v2749
    %2855 = vmatprep.subr.bf16.mxu0 %v2754
    %2856 = vmatpush1.bf16.msra.mxu0 %v2753
    %2857 = vmatprep.mubr.bf16.mxu0 %v2822
    %2858 = vmatmul.mubr.bf16.gmra.mrb[0].mxu0 %v2821
    %v2859 = vpop.f32.mrb[0].mxu0
    %v2860 = vadd.f32 0.0, %v2859
    %v2861 = vpop.f32.mrb[0].mxu0
    %v2862 = vadd.f32 0.0, %v2861
    %v2863 = vpop.f32.mrb[0].mxu0
    %v2864 = vadd.f32 0.0, %v2863
    %v2865 = vpop.f32.mrb[0].mxu0
    %v2866 = vadd.f32 0.0, %v2865
    %2867 = vdwg.mxu0
    %2868 = vmatprep.subr.bf16.mxu0 %v2758
    %2869 = vmatpush1.bf16.msra.mxu0 %v2757
    %2870 = vmatprep.subr.bf16.mxu0 %v2762
    %2871 = vmatpush1.bf16.msra.mxu0 %v2761
    %2872 = vmatprep.subr.bf16.mxu0 %v2766
    %2873 = vmatpush1.bf16.msra.mxu0 %v2765
    %2874 = vmatprep.subr.bf16.mxu0 %v2770
    %2875 = vmatpush1.bf16.msra.mxu0 %v2769
    %2876 = vmatprep.subr.bf16.mxu0 %v2774
    %2877 = vmatpush1.bf16.msra.mxu0 %v2773
    %2878 = vmatprep.subr.bf16.mxu0 %v2778
    %2879 = vmatpush1.bf16.msra.mxu0 %v2777
    %2880 = vmatprep.subr.bf16.mxu0 %v2782
    %2881 = vmatpush1.bf16.msra.mxu0 %v2781
    %2882 = vmatprep.subr.bf16.mxu0 %v2786
    %2883 = vmatpush1.bf16.msra.mxu0 %v2785
    %2884 = vmatprep.subr.bf16.mxu0 %v2790
    %2885 = vmatpush1.bf16.msra.mxu0 %v2789
    %2886 = vmatprep.subr.bf16.mxu0 %v2794
    %2887 = vmatpush1.bf16.msra.mxu0 %v2793
    %2888 = vmatprep.subr.bf16.mxu0 %v2798
    %2889 = vmatpush1.bf16.msra.mxu0 %v2797
    %2890 = vmatprep.subr.bf16.mxu0 %v2802
    %2891 = vmatpush1.bf16.msra.mxu0 %v2801
    %2892 = vmatprep.subr.bf16.mxu0 %v2806
    %2893 = vmatpush1.bf16.msra.mxu0 %v2805
    %2894 = vmatprep.subr.bf16.mxu0 %v2810
    %2895 = vmatpush1.bf16.msra.mxu0 %v2809
    %2896 = vmatprep.subr.bf16.mxu0 %v2814
    %2897 = vmatpush1.bf16.msra.mxu0 %v2813
    %2898 = vmatprep.subr.bf16.mxu0 %v2818
    %2899 = vmatpush1.bf16.msra.mxu0 %v2817
    %2900 = vmatprep.mubr.bf16.mxu0 %v2824
    %2901 = vmatmul.mubr.bf16.gmra.mrb[0].mxu0 %v2823
    %v2902 = vpop.f32.mrb[0].mxu0
    %v2903 = vadd.f32 %v2860, %v2902
    %v2904 = vpop.f32.mrb[0].mxu0
    %v2905 = vadd.f32 %v2862, %v2904
    %v2906 = vpop.f32.mrb[0].mxu0
    %v2907 = vadd.f32 %v2864, %v2906
    %v2908 = vpop.f32.mrb[0].mxu0
    %v2909 = vadd.f32 %v2866, %v2908
    %2910 = vdwg.mxu0
    %2911 = vmatprep.subr.bf16.mxu0 %v2696
    %2912 = vmatpush1.bf16.msra.mxu0 %v2695
    %2913 = vmatprep.subr.bf16.mxu0 %v2700
    %2914 = vmatpush1.bf16.msra.mxu0 %v2699
    %2915 = vmatprep.subr.bf16.mxu0 %v2704
    %2916 = vmatpush1.bf16.msra.mxu0 %v2703
    %2917 = vmatprep.subr.bf16.mxu0 %v2708
    %2918 = vmatpush1.bf16.msra.mxu0 %v2707
    %2919 = vmatprep.subr.bf16.mxu0 %v2712
    %2920 = vmatpush1.bf16.msra.mxu0 %v2711
    %2921 = vmatprep.subr.bf16.mxu0 %v2716
    %2922 = vmatpush1.bf16.msra.mxu0 %v2715
    %2923 = vmatprep.subr.bf16.mxu0 %v2720
    %2924 = vmatpush1.bf16.msra.mxu0 %v2719
    %2925 = vmatprep.subr.bf16.mxu0 %v2724
    %2926 = vmatpush1.bf16.msra.mxu0 %v2723
    %2927 = vmatprep.subr.bf16.mxu0 %v2728
    %2928 = vmatpush1.bf16.msra.mxu0 %v2727
    %2929 = vmatprep.subr.bf16.mxu0 %v2732
    %2930 = vmatpush1.bf16.msra.mxu0 %v2731
    %2931 = vmatprep.subr.bf16.mxu0 %v2736
    %2932 = vmatpush1.bf16.msra.mxu0 %v2735
    %2933 = vmatprep.subr.bf16.mxu0 %v2740
    %2934 = vmatpush1.bf16.msra.mxu0 %v2739
    %2935 = vmatprep.subr.bf16.mxu0 %v2744
    %2936 = vmatpush1.bf16.msra.mxu0 %v2743
    %2937 = vmatprep.subr.bf16.mxu0 %v2748
    %2938 = vmatpush1.bf16.msra.mxu0 %v2747
    %2939 = vmatprep.subr.bf16.mxu0 %v2752
    %2940 = vmatpush1.bf16.msra.mxu0 %v2751
    %2941 = vmatprep.subr.bf16.mxu0 %v2756
    %2942 = vmatpush1.bf16.msra.mxu0 %v2755
    %2943 = vmatprep.mubr.bf16.mxu0 %v2822
    %2944 = vmatmul.mubr.bf16.gmra.mrb[0].mxu0 %v2821
    %v2945 = vpop.f32.mrb[0].mxu0
    %v2946 = vadd.f32 0.0, %v2945
    %v2947 = vpop.f32.mrb[0].mxu0
    %v2948 = vadd.f32 0.0, %v2947
    %v2949 = vpop.f32.mrb[0].mxu0
    %v2950 = vadd.f32 0.0, %v2949
    %v2951 = vpop.f32.mrb[0].mxu0
    %v2952 = vadd.f32 0.0, %v2951
    %2953 = vdwg.mxu0
    %2954 = vmatprep.subr.bf16.mxu0 %v2760
    %2955 = vmatpush1.bf16.msra.mxu0 %v2759
    %2956 = vmatprep.subr.bf16.mxu0 %v2764
    %2957 = vmatpush1.bf16.msra.mxu0 %v2763
    %2958 = vmatprep.subr.bf16.mxu0 %v2768
    %2959 = vmatpush1.bf16.msra.mxu0 %v2767
    %2960 = vmatprep.subr.bf16.mxu0 %v2772
    %2961 = vmatpush1.bf16.msra.mxu0 %v2771
    %2962 = vmatprep.subr.bf16.mxu0 %v2776
    %2963 = vmatpush1.bf16.msra.mxu0 %v2775
    %2964 = vmatprep.subr.bf16.mxu0 %v2780
    %2965 = vmatpush1.bf16.msra.mxu0 %v2779
    %2966 = vmatprep.subr.bf16.mxu0 %v2784
    %2967 = vmatpush1.bf16.msra.mxu0 %v2783
    %2968 = vmatprep.subr.bf16.mxu0 %v2788
    %2969 = vmatpush1.bf16.msra.mxu0 %v2787
    %2970 = vmatprep.subr.bf16.mxu0 %v2792
    %2971 = vmatpush1.bf16.msra.mxu0 %v2791
    %2972 = vmatprep.subr.bf16.mxu0 %v2796
    %2973 = vmatpush1.bf16.msra.mxu0 %v2795
    %2974 = vmatprep.subr.bf16.mxu0 %v2800
    %2975 = vmatpush1.bf16.msra.mxu0 %v2799
    %2976 = vmatprep.subr.bf16.mxu0 %v2804
    %2977 = vmatpush1.bf16.msra.mxu0 %v2803
    %2978 = vmatprep.subr.bf16.mxu0 %v2808
    %2979 = vmatpush1.bf16.msra.mxu0 %v2807
    %2980 = vmatprep.subr.bf16.mxu0 %v2812
    %2981 = vmatpush1.bf16.msra.mxu0 %v2811
    %2982 = vmatprep.subr.bf16.mxu0 %v2816
    %2983 = vmatpush1.bf16.msra.mxu0 %v2815
    %2984 = vmatprep.subr.bf16.mxu0 %v2820
    %2985 = vmatpush1.bf16.msra.mxu0 %v2819
    %2986 = vmatprep.mubr.bf16.mxu0 %v2824
    %2987 = vmatmul.mubr.bf16.gmra.mrb[0].mxu0 %v2823
    %v2988 = vpop.f32.mrb[0].mxu0
    %v2989 = vadd.f32 %v2946, %v2988
    %v2990 = vpop.f32.mrb[0].mxu0
    %v2991 = vadd.f32 %v2948, %v2990
    %v2992 = vpop.f32.mrb[0].mxu0
    %v2993 = vadd.f32 %v2950, %v2992
    %v2994 = vpop.f32.mrb[0].mxu0
    %v2995 = vadd.f32 %v2952, %v2994
    %2996 = vdwg.mxu0
    %2997 = vmatprep.subr.mxu0 %v2905
    %2998 = vmatpush1.msra.mxu0 %v2903
    %2999 = vmatprep.subr.mxu0 %v2909
    %3000 = vmatpush1.msra.mxu0 %v2907
    %3001 = vmatprep.subr.mxu0 0.0
    %3002 = vmatpush1.msra.mxu0 0.0
    %3003 = vmatprep.subr.mxu0 0.0
    %3004 = vmatpush1.msra.mxu0 0.0
    %3005 = vmatprep.subr.mxu0 0.0
    %3006 = vmatpush1.msra.mxu0 0.0
    %3007 = vmatprep.subr.mxu0 0.0
    %3008 = vmatpush1.msra.mxu0 0.0
    %3009 = vmatprep.subr.mxu0 0.0
    %3010 = vmatpush1.msra.mxu0 0.0
    %3011 = vmatprep.subr.mxu0 0.0
    %3012 = vmatpush1.msra.mxu0 0.0
    %3013 = vmatprep.subr.mxu0 0.0
    %3014 = vmatpush1.msra.mxu0 0.0
    %3015 = vmatprep.subr.mxu0 0.0
    %3016 = vmatpush1.msra.mxu0 0.0
    %3017 = vmatprep.subr.mxu0 0.0
    %3018 = vmatpush1.msra.mxu0 0.0
    %3019 = vmatprep.subr.mxu0 0.0
    %3020 = vmatpush1.msra.mxu0 0.0
    %3021 = vmatprep.subr.mxu0 0.0
    %3022 = vmatpush1.msra.mxu0 0.0
    %3023 = vmatprep.subr.mxu0 0.0
    %3024 = vmatpush1.msra.mxu0 0.0
    %3025 = vmatprep.subr.mxu0 0.0
    %3026 = vmatpush1.msra.mxu0 0.0
    %3027 = vmatprep.subr.mxu0 0.0
    %3028 = vmatpush1.msra.mxu0 0.0
    %3029 = vmatprep.subr.mxu0 0.0
    %3030 = vmatpush1.msra.mxu0 0.0
    %3031 = vmatprep.subr.mxu0 0.0
    %3032 = vmatpush1.msra.mxu0 0.0
    %3033 = vmatprep.subr.mxu0 0.0
    %3034 = vmatpush1.msra.mxu0 0.0
    %3035 = vmatprep.subr.mxu0 0.0
    %3036 = vmatpush1.msra.mxu0 0.0
    %3037 = vmatprep.subr.mxu0 0.0
    %3038 = vmatpush1.msra.mxu0 0.0
    %3039 = vmatprep.subr.mxu0 0.0
    %3040 = vmatpush1.msra.mxu0 0.0
    %3041 = vmatprep.subr.mxu0 0.0
    %3042 = vmatpush1.msra.mxu0 0.0
    %3043 = vmatprep.subr.mxu0 0.0
    %3044 = vmatpush1.msra.mxu0 0.0
    %3045 = vmatprep.subr.mxu0 0.0
    %3046 = vmatpush1.msra.mxu0 0.0
    %3047 = vmatprep.subr.mxu0 0.0
    %3048 = vmatpush1.msra.mxu0 0.0
    %3049 = vmatprep.subr.mxu0 0.0
    %3050 = vmatpush1.msra.mxu0 0.0
    %3051 = vmatprep.subr.mxu0 0.0
    %3052 = vmatpush1.msra.mxu0 0.0
    %3053 = vmatprep.subr.mxu0 0.0
    %3054 = vmatpush1.msra.mxu0 0.0
    %3055 = vmatprep.subr.mxu0 0.0
    %3056 = vmatpush1.msra.mxu0 0.0
    %3057 = vmatprep.subr.mxu0 0.0
    %3058 = vmatpush1.msra.mxu0 0.0
    %3059 = vmatprep.subr.mxu0 0.0
    %3060 = vmatpush1.msra.mxu0 0.0
    %3061 = vmatprep.mubr.f32.mxu0 0.0
    %3062 = vmatmul.mubr.f32.gmra.mrb[0].mxu0 %v934
    %v3063 = vpop.f32.mrb[0].mxu0
    %v3064 = vadd.f32 0.0, %v3063
    %v3065 = vpop.f32.mrb[0].mxu0
    %v3066 = vadd.f32 0.0, %v3065
    %3067 = vmatprep.mubr.f32.mxu0 0.0
    %3068 = vmatmul.mubr.f32.gmra.mrb[0].mxu0 %v937
    %v3069 = vpop.f32.mrb[0].mxu0
    %v3070 = vadd.f32 0.0, %v3069
    %v3071 = vpop.f32.mrb[0].mxu0
    %v3072 = vadd.f32 0.0, %v3071
    %3073 = vdwg.mxu0
    %3074 = vmatprep.subr.mxu0 %v2991
    %3075 = vmatpush1.msra.mxu0 %v2989
    %3076 = vmatprep.subr.mxu0 %v2995
    %3077 = vmatpush1.msra.mxu0 %v2993
    %3078 = vmatprep.subr.mxu0 0.0
    %3079 = vmatpush1.msra.mxu0 0.0
    %3080 = vmatprep.subr.mxu0 0.0
    %3081 = vmatpush1.msra.mxu0 0.0
    %3082 = vmatprep.subr.mxu0 0.0
    %3083 = vmatpush1.msra.mxu0 0.0
    %3084 = vmatprep.subr.mxu0 0.0
    %3085 = vmatpush1.msra.mxu0 0.0
    %3086 = vmatprep.subr.mxu0 0.0
    %3087 = vmatpush1.msra.mxu0 0.0
    %3088 = vmatprep.subr.mxu0 0.0
    %3089 = vmatpush1.msra.mxu0 0.0
    %3090 = vmatprep.subr.mxu0 0.0
    %3091 = vmatpush1.msra.mxu0 0.0
    %3092 = vmatprep.subr.mxu0 0.0
    %3093 = vmatpush1.msra.mxu0 0.0
    %3094 = vmatprep.subr.mxu0 0.0
    %3095 = vmatpush1.msra.mxu0 0.0
    %3096 = vmatprep.subr.mxu0 0.0
    %3097 = vmatpush1.msra.mxu0 0.0
    %3098 = vmatprep.subr.mxu0 0.0
    %3099 = vmatpush1.msra.mxu0 0.0
    %3100 = vmatprep.subr.mxu0 0.0
    %3101 = vmatpush1.msra.mxu0 0.0
    %3102 = vmatprep.subr.mxu0 0.0
    %3103 = vmatpush1.msra.mxu0 0.0
    %3104 = vmatprep.subr.mxu0 0.0
    %3105 = vmatpush1.msra.mxu0 0.0
    %3106 = vmatprep.subr.mxu0 0.0
    %3107 = vmatpush1.msra.mxu0 0.0
    %3108 = vmatprep.subr.mxu0 0.0
    %3109 = vmatpush1.msra.mxu0 0.0
    %3110 = vmatprep.subr.mxu0 0.0
    %3111 = vmatpush1.msra.mxu0 0.0
    %3112 = vmatprep.subr.mxu0 0.0
    %3113 = vmatpush1.msra.mxu0 0.0
    %3114 = vmatprep.subr.mxu0 0.0
    %3115 = vmatpush1.msra.mxu0 0.0
    %3116 = vmatprep.subr.mxu0 0.0
    %3117 = vmatpush1.msra.mxu0 0.0
    %3118 = vmatprep.subr.mxu0 0.0
    %3119 = vmatpush1.msra.mxu0 0.0
    %3120 = vmatprep.subr.mxu0 0.0
    %3121 = vmatpush1.msra.mxu0 0.0
    %3122 = vmatprep.subr.mxu0 0.0
    %3123 = vmatpush1.msra.mxu0 0.0
    %3124 = vmatprep.subr.mxu0 0.0
    %3125 = vmatpush1.msra.mxu0 0.0
    %3126 = vmatprep.subr.mxu0 0.0
    %3127 = vmatpush1.msra.mxu0 0.0
    %3128 = vmatprep.subr.mxu0 0.0
    %3129 = vmatpush1.msra.mxu0 0.0
    %3130 = vmatprep.subr.mxu0 0.0
    %3131 = vmatpush1.msra.mxu0 0.0
    %3132 = vmatprep.subr.mxu0 0.0
    %3133 = vmatpush1.msra.mxu0 0.0
    %3134 = vmatprep.subr.mxu0 0.0
    %3135 = vmatpush1.msra.mxu0 0.0
    %3136 = vmatprep.subr.mxu0 0.0
    %3137 = vmatpush1.msra.mxu0 0.0
    %3138 = vmatprep.mubr.f32.mxu0 0.0
    %3139 = vmatmul.mubr.f32.gmra.mrb[0].mxu0 %v934
    %v3140 = vpop.f32.mrb[0].mxu0
    %v3141 = vadd.f32 0.0, %v3140
    %v3142 = vpop.f32.mrb[0].mxu0
    %v3143 = vadd.f32 0.0, %v3142
    %3144 = vmatprep.mubr.f32.mxu0 0.0
    %3145 = vmatmul.mubr.f32.gmra.mrb[0].mxu0 %v937
    %v3146 = vpop.f32.mrb[0].mxu0
    %v3147 = vadd.f32 0.0, %v3146
    %v3148 = vpop.f32.mrb[0].mxu0
    %v3149 = vadd.f32 0.0, %v3148
    %3150 = vdwg.mxu0
    %v3151 = vadd.f32 %v3064, %v3066
    %v3152 = vadd.f32 %v3151, %v3141
    %v3153 = vadd.f32 %v3152, %v3143
    %3154 = vadd.xlane.f32.xlu0 %v3153
    %v3155 = vpop.xlane.xlu0 %3154
    %v3156 = vadd.f32 %v3070, %v3072
    %v3157 = vadd.f32 %v3156, %v3147
    %v3158 = vadd.f32 %v3157, %v3149
    %3159 = vadd.xlane.f32.xlu0 %v3158
    %v3160 = vpop.xlane.xlu0 %3159
    %v3161 = vmul.f32 %v3064, %v3064
    %v3162 = vmul.f32 %v3066, %v3066
    %v3163 = vmul.f32 %v3141, %v3141
    %v3164 = vmul.f32 %v3143, %v3143
    %v3165 = vmul.f32 %v3070, %v3070
    %v3166 = vmul.f32 %v3072, %v3072
    %v3167 = vmul.f32 %v3147, %v3147
    %v3168 = vmul.f32 %v3149, %v3149
    %v3169 = vadd.f32 %v3161, %v3162
    %v3170 = vadd.f32 %v3169, %v3163
    %v3171 = vadd.f32 %v3170, %v3164
    %3172 = vadd.xlane.f32.xlu0 %v3171
    %v3173 = vpop.xlane.xlu0 %3172
    %v3174 = vadd.f32 %v3165, %v3166
    %v3175 = vadd.f32 %v3174, %v3167
    %v3176 = vadd.f32 %v3175, %v3168
    %3177 = vadd.xlane.f32.xlu0 %v3176
    %v3178 = vpop.xlane.xlu0 %3177
    %v3179 = vadd.f32 %v3155, %v3160
    %v3180 = vadd.f32 %v3173, %v3178
    %v3181 = vmul.f32 %v3179, 0.0009765625
    %v3182 = vmul.f32 %v3180, 0.0009765625
    %v3183 = vmul.f32 %v3181, %v3181
    %v3184 = vsub.f32 %v3182, %v3183
    %v3185 = vmax.f32 %v3184, 0.0
    %v3186 = vadd.f32 %v3185, 1e-05
    %v3187 = vrsqrt.pop %v3186
    %v3188 = vmul.f32 %v260, %v3187
    %v3189 = vmul.f32 %v3181, %v3188
    %v3190 = vsub.f32 %v261, %v3189
    %3192 = vset.pattern.permute.xlu0 3
    %3193 = vperm.xlu0 %3192, %v3188
    %v3194 = vpop.permute.xlu0 %3193
    %v3196 = vmul.f32 %v3064, %v3194
    %v3197 = vmul.f32 %v3066, %v3194
    %v3198 = vmul.f32 %v3141, %v3194
    %v3199 = vmul.f32 %v3143, %v3194
    %v3200 = vmul.f32 %v3070, %v3194
    %v3201 = vmul.f32 %v3072, %v3194
    %v3202 = vmul.f32 %v3147, %v3194
    %v3203 = vmul.f32 %v3149, %v3194
    %3205 = vset.pattern.permute.xlu0 3
    %3206 = vperm.xlu0 %3205, %v3190
    %v3207 = vpop.permute.xlu0 %3206
    %v3209 = vadd.f32 %v3196, %v3207
    %v3210 = vadd.f32 %v3197, %v3207
    %v3211 = vadd.f32 %v3198, %v3207
    %v3212 = vadd.f32 %v3199, %v3207
    %v3213 = vadd.f32 %v3200, %v3207
    %v3214 = vadd.f32 %v3201, %v3207
    %v3215 = vadd.f32 %v3202, %v3207
    %v3216 = vadd.f32 %v3203, %v3207
    %v3217 = vadd.f32 %v3209, %v1271
    %v3218 = vadd.f32 %v3210, %v1272
    %v3219 = vadd.f32 %v3211, %v1273
    %v3220 = vadd.f32 %v3212, %v1274
    %v3221 = vadd.f32 %v3213, %v1275
    %v3222 = vadd.f32 %v3214, %v1276
    %v3223 = vadd.f32 %v3215, %v1277
    %v3224 = vadd.f32 %v3216, %v1278
    %v3225 = vmax.f32 %v3217, 0.0
    %v3226 = vmax.f32 %v3218, 0.0
    %v3227 = vmax.f32 %v3219, 0.0
    %v3228 = vmax.f32 %v3220, 0.0
    %v3229 = vmax.f32 %v3221, 0.0
    %v3230 = vmax.f32 %v3222, 0.0
    %v3231 = vmax.f32 %v3223, 0.0
    %v3232 = vmax.f32 %v3224, 0.0
    %v3233 = vand.u32 2147483647, %v3217
    %v3234 = vand.u32 2147483647, %v3218
    %v3235 = vand.u32 2147483647, %v3219
    %v3236 = vand.u32 2147483647, %v3220
    %v3237 = vand.u32 2147483647, %v3221
    %v3238 = vand.u32 2147483647, %v3222
    %v3239 = vand.u32 2147483647, %v3223
    %v3240 = vand.u32 2147483647, %v3224
    %v3241 = vsub.f32 0.0, %v3233
    %v3242 = vsub.f32 0.0, %v3234
    %v3243 = vsub.f32 0.0, %v3235
    %v3244 = vsub.f32 0.0, %v3236
    %v3245 = vsub.f32 0.0, %v3237
    %v3246 = vsub.f32 0.0, %v3238
    %v3247 = vsub.f32 0.0, %v3239
    %v3248 = vsub.f32 0.0, %v3240
    %v3249 = vmul.f32 %v3241, 1.442695
    %v3250 = vpow.pop %v3249
    %v3251 = vmul.f32 %v3242, 1.442695
    %v3252 = vpow.pop %v3251
    %v3253 = vmul.f32 %v3243, 1.442695
    %v3254 = vpow.pop %v3253
    %v3255 = vmul.f32 %v3244, 1.442695
    %v3256 = vpow.pop %v3255
    %v3257 = vmul.f32 %v3245, 1.442695
    %v3258 = vpow.pop %v3257
    %v3259 = vmul.f32 %v3246, 1.442695
    %v3260 = vpow.pop %v3259
    %v3261 = vmul.f32 %v3247, 1.442695
    %v3262 = vpow.pop %v3261
    %v3263 = vmul.f32 %v3248, 1.442695
    %v3264 = vpow.pop %v3263
    %v3265 = vadd.f32 %v3250, 1.0
    %v3266 = vlog2.pop %v3265
    %v3267 = vmul.f32 %v3266, 0.6931472
    %v3268 = vmul.f32 -0.5, %v3250
    %v3269 = vadd.f32 %v3268, 1.0
    %v3270 = vmul.f32 %v3269, %v3250
    %v3271 = vand.u32 2147483647, %v3250
    %vm3272 = vcmp.lt.f32.partialorder %v3271, 0.0004427343
    %v3273 = vsel %vm3272, %v3270, %v3267
    %v3274 = vadd.f32 %v3252, 1.0
    %v3275 = vlog2.pop %v3274
    %v3276 = vmul.f32 %v3275, 0.6931472
    %v3277 = vmul.f32 -0.5, %v3252
    %v3278 = vadd.f32 %v3277, 1.0
    %v3279 = vmul.f32 %v3278, %v3252
    %v3280 = vand.u32 2147483647, %v3252
    %vm3281 = vcmp.lt.f32.partialorder %v3280, 0.0004427343
    %v3282 = vsel %vm3281, %v3279, %v3276
    %v3283 = vadd.f32 %v3254, 1.0
    %v3284 = vlog2.pop %v3283
    %v3285 = vmul.f32 %v3284, 0.6931472
    %v3286 = vmul.f32 -0.5, %v3254
    %v3287 = vadd.f32 %v3286, 1.0
    %v3288 = vmul.f32 %v3287, %v3254
    %v3289 = vand.u32 2147483647, %v3254
    %vm3290 = vcmp.lt.f32.partialorder %v3289, 0.0004427343
    %v3291 = vsel %vm3290, %v3288, %v3285
    %v3292 = vadd.f32 %v3256, 1.0
    %v3293 = vlog2.pop %v3292
    %v3294 = vmul.f32 %v3293, 0.6931472
    %v3295 = vmul.f32 -0.5, %v3256
    %v3296 = vadd.f32 %v3295, 1.0
    %v3297 = vmul.f32 %v3296, %v3256
    %v3298 = vand.u32 2147483647, %v3256
    %vm3299 = vcmp.lt.f32.partialorder %v3298, 0.0004427343
    %v3300 = vsel %vm3299, %v3297, %v3294
    %v3301 = vadd.f32 %v3258, 1.0
    %v3302 = vlog2.pop %v3301
    %v3303 = vmul.f32 %v3302, 0.6931472
    %v3304 = vmul.f32 -0.5, %v3258
    %v3305 = vadd.f32 %v3304, 1.0
    %v3306 = vmul.f32 %v3305, %v3258
    %v3307 = vand.u32 2147483647, %v3258
    %vm3308 = vcmp.lt.f32.partialorder %v3307, 0.0004427343
    %v3309 = vsel %vm3308, %v3306, %v3303
    %v3310 = vadd.f32 %v3260, 1.0
    %v3311 = vlog2.pop %v3310
    %v3312 = vmul.f32 %v3311, 0.6931472
    %v3313 = vmul.f32 -0.5, %v3260
    %v3314 = vadd.f32 %v3313, 1.0
    %v3315 = vmul.f32 %v3314, %v3260
    %v3316 = vand.u32 2147483647, %v3260
    %vm3317 = vcmp.lt.f32.partialorder %v3316, 0.0004427343
    %v3318 = vsel %vm3317, %v3315, %v3312
    %v3319 = vadd.f32 %v3262, 1.0
    %v3320 = vlog2.pop %v3319
    %v3321 = vmul.f32 %v3320, 0.6931472
    %v3322 = vmul.f32 -0.5, %v3262
    %v3323 = vadd.f32 %v3322, 1.0
    %v3324 = vmul.f32 %v3323, %v3262
    %v3325 = vand.u32 2147483647, %v3262
    %vm3326 = vcmp.lt.f32.partialorder %v3325, 0.0004427343
    %v3327 = vsel %vm3326, %v3324, %v3321
    %v3328 = vadd.f32 %v3264, 1.0
    %v3329 = vlog2.pop %v3328
    %v3330 = vmul.f32 %v3329, 0.6931472
    %v3331 = vmul.f32 -0.5, %v3264
    %v3332 = vadd.f32 %v3331, 1.0
    %v3333 = vmul.f32 %v3332, %v3264
    %v3334 = vand.u32 2147483647, %v3264
    %vm3335 = vcmp.lt.f32.partialorder %v3334, 0.0004427343
    %v3336 = vsel %vm3335, %v3333, %v3330
    %v3337 = vadd.f32 %v3225, %v3273
    %v3338 = vadd.f32 %v3226, %v3282
    %v3339 = vadd.f32 %v3227, %v3291
    %v3340 = vadd.f32 %v3228, %v3300
    %v3341 = vadd.f32 %v3229, %v3309
    %v3342 = vadd.f32 %v3230, %v3318
    %v3343 = vadd.f32 %v3231, %v3327
    %v3344 = vadd.f32 %v3232, %v3336
    %s3346 = sshll.u32 1, 14
    %s3347 = sxor.u32 4294967295, %s3346
    %s3349 = sadd.s32 2, %s100
    %s3351 = sshll.u32 7, 26
    %s3352 = sxor.u32 4294967295, %s3351
    %s3353 = sand.u32 0, %s3352
    %s3354 = sshll.u32 %s3349, 26
    %s3355 = sor.u32 %s3353, %s3354
    %s3356 = sshll.u32 %s262, 4
    %s3357 = int_to_ptr.vmem [resolvable:$true] %s3356
    %3360 = sst [smem:[#allocation29]] 256
    %s3361 = scalar_lea.smem [#allocation29], 1
    %3362 = sst [smem:[%s3361]] 512
    %s3363 = scalar_lea.smem [#allocation29], 2
    %3364 = sst [smem:[%s3363]] 2
    %s3365 = scalar_lea.smem [#allocation29], 3
    %3366 = sst [smem:[%s3365]] 64
    %s3367 = scalar_lea.smem [#allocation29], 4
    %3368 = sst [smem:[%s3367]] 128
    %s3369 = scalar_lea.smem [#allocation29], 5
    %3370 = sst [smem:[%s3369]] 2
    %s3371 = scalar_lea.smem [#allocation29], 6
    %3372 = sst [smem:[%s3371]] 128
    %s3373 = scalar_lea.smem [#allocation29], 7
    %3374 = sst [smem:[%s3373]] 64
    %s3375 = scalar_lea.smem [#allocation29], 8
    %3376 = sst [smem:[%s3375]] 4
    %3378 = dma.general %s9, 4096, %s3357, %s263, [#allocation28], [#allocation29], %s3355, 0
    %s3379 = smul.u32 %s1313, 2
    %s3380 = sshll.u32 %s3379, 4
    %3381 = dma.done [#allocation3], %s3380
    %v3382 = vld [vmem:[#allocation2] sm:$0xff]
    %v3383 = vld [vmem:[#allocation2 + $0x8] sm:$0xff]
    %v3384 = vld [vmem:[#allocation2 + $0x20] sm:$0xff]
    %v3385 = vld [vmem:[#allocation2 + $0x28] sm:$0xff]
    %v3386 = vld [vmem:[#allocation2 + $0x40] sm:$0xff]
    %v3387 = vld [vmem:[#allocation2 + $0x48] sm:$0xff]
    %v3388 = vld [vmem:[#allocation2 + $0x60] sm:$0xff]
    %v3389 = vld [vmem:[#allocation2 + $0x68] sm:$0xff]
    %v3390 = vld [vmem:[#allocation2 + $0x80] sm:$0xff]
    %v3391 = vld [vmem:[#allocation2 + $0x88] sm:$0xff]
    %v3392 = vld [vmem:[#allocation2 + $0xa0] sm:$0xff]
    %v3393 = vld [vmem:[#allocation2 + $0xa8] sm:$0xff]
    %v3394 = vld [vmem:[#allocation2 + $0xc0] sm:$0xff]
    %v3395 = vld [vmem:[#allocation2 + $0xc8] sm:$0xff]
    %v3396 = vld [vmem:[#allocation2 + $0xe0] sm:$0xff]
    %v3397 = vld [vmem:[#allocation2 + $0xe8] sm:$0xff]
    %v3398 = vld [vmem:[#allocation2 + $0x100] sm:$0xff]
    %v3399 = vld [vmem:[#allocation2 + $0x108] sm:$0xff]
    %v3400 = vld [vmem:[#allocation2 + $0x120] sm:$0xff]
    %v3401 = vld [vmem:[#allocation2 + $0x128] sm:$0xff]
    %v3402 = vld [vmem:[#allocation2 + $0x140] sm:$0xff]
    %v3403 = vld [vmem:[#allocation2 + $0x148] sm:$0xff]
    %v3404 = vld [vmem:[#allocation2 + $0x160] sm:$0xff]
    %v3405 = vld [vmem:[#allocation2 + $0x168] sm:$0xff]
    %v3406 = vld [vmem:[#allocation2 + $0x180] sm:$0xff]
    %v3407 = vld [vmem:[#allocation2 + $0x188] sm:$0xff]
    %v3408 = vld [vmem:[#allocation2 + $0x1a0] sm:$0xff]
    %v3409 = vld [vmem:[#allocation2 + $0x1a8] sm:$0xff]
    %v3410 = vld [vmem:[#allocation2 + $0x1c0] sm:$0xff]
    %v3411 = vld [vmem:[#allocation2 + $0x1c8] sm:$0xff]
    %v3412 = vld [vmem:[#allocation2 + $0x1e0] sm:$0xff]
    %v3413 = vld [vmem:[#allocation2 + $0x1e8] sm:$0xff]
    %v3414 = vld [vmem:[#allocation2 + $0x200] sm:$0xff]
    %v3415 = vld [vmem:[#allocation2 + $0x208] sm:$0xff]
    %v3416 = vld [vmem:[#allocation2 + $0x220] sm:$0xff]
    %v3417 = vld [vmem:[#allocation2 + $0x228] sm:$0xff]
    %v3418 = vld [vmem:[#allocation2 + $0x240] sm:$0xff]
    %v3419 = vld [vmem:[#allocation2 + $0x248] sm:$0xff]
    %v3420 = vld [vmem:[#allocation2 + $0x260] sm:$0xff]
    %v3421 = vld [vmem:[#allocation2 + $0x268] sm:$0xff]
    %v3422 = vld [vmem:[#allocation2 + $0x280] sm:$0xff]
    %v3423 = vld [vmem:[#allocation2 + $0x288] sm:$0xff]
    %v3424 = vld [vmem:[#allocation2 + $0x2a0] sm:$0xff]
    %v3425 = vld [vmem:[#allocation2 + $0x2a8] sm:$0xff]
    %v3426 = vld [vmem:[#allocation2 + $0x2c0] sm:$0xff]
    %v3427 = vld [vmem:[#allocation2 + $0x2c8] sm:$0xff]
    %v3428 = vld [vmem:[#allocation2 + $0x2e0] sm:$0xff]
    %v3429 = vld [vmem:[#allocation2 + $0x2e8] sm:$0xff]
    %v3430 = vld [vmem:[#allocation2 + $0x300] sm:$0xff]
    %v3431 = vld [vmem:[#allocation2 + $0x308] sm:$0xff]
    %v3432 = vld [vmem:[#allocation2 + $0x320] sm:$0xff]
    %v3433 = vld [vmem:[#allocation2 + $0x328] sm:$0xff]
    %v3434 = vld [vmem:[#allocation2 + $0x340] sm:$0xff]
    %v3435 = vld [vmem:[#allocation2 + $0x348] sm:$0xff]
    %v3436 = vld [vmem:[#allocation2 + $0x360] sm:$0xff]
    %v3437 = vld [vmem:[#allocation2 + $0x368] sm:$0xff]
    %v3438 = vld [vmem:[#allocation2 + $0x380] sm:$0xff]
    %v3439 = vld [vmem:[#allocation2 + $0x388] sm:$0xff]
    %v3440 = vld [vmem:[#allocation2 + $0x3a0] sm:$0xff]
    %v3441 = vld [vmem:[#allocation2 + $0x3a8] sm:$0xff]
    %v3442 = vld [vmem:[#allocation2 + $0x3c0] sm:$0xff]
    %v3443 = vld [vmem:[#allocation2 + $0x3c8] sm:$0xff]
    %v3444 = vld [vmem:[#allocation2 + $0x3e0] sm:$0xff]
    %v3445 = vld [vmem:[#allocation2 + $0x3e8] sm:$0xff]
    %v3446 = vpack.c.bf16 %v3341, %v3337
    %v3447 = vpack.c.bf16 %v3342, %v3338
    %v3448 = vpack.c.bf16 %v3343, %v3339
    %v3449 = vpack.c.bf16 %v3344, %v3340
    %3450 = vmatprep.subr.bf16.mxu0 %v3383
    %3451 = vmatpush1.bf16.msra.mxu0 %v3382
    %3452 = vmatprep.subr.bf16.mxu0 %v3385
    %3453 = vmatpush1.bf16.msra.mxu0 %v3384
    %3454 = vmatprep.subr.bf16.mxu0 %v3387
    %3455 = vmatpush1.bf16.msra.mxu0 %v3386
    %3456 = vmatprep.subr.bf16.mxu0 %v3389
    %3457 = vmatpush1.bf16.msra.mxu0 %v3388
    %3458 = vmatprep.subr.bf16.mxu0 %v3391
    %3459 = vmatpush1.bf16.msra.mxu0 %v3390
    %3460 = vmatprep.subr.bf16.mxu0 %v3393
    %3461 = vmatpush1.bf16.msra.mxu0 %v3392
    %3462 = vmatprep.subr.bf16.mxu0 %v3395
    %3463 = vmatpush1.bf16.msra.mxu0 %v3394
    %3464 = vmatprep.subr.bf16.mxu0 %v3397
    %3465 = vmatpush1.bf16.msra.mxu0 %v3396
    %3466 = vmatprep.subr.bf16.mxu0 %v3399
    %3467 = vmatpush1.bf16.msra.mxu0 %v3398
    %3468 = vmatprep.subr.bf16.mxu0 %v3401
    %3469 = vmatpush1.bf16.msra.mxu0 %v3400
    %3470 = vmatprep.subr.bf16.mxu0 %v3403
    %3471 = vmatpush1.bf16.msra.mxu0 %v3402
    %3472 = vmatprep.subr.bf16.mxu0 %v3405
    %3473 = vmatpush1.bf16.msra.mxu0 %v3404
    %3474 = vmatprep.subr.bf16.mxu0 %v3407
    %3475 = vmatpush1.bf16.msra.mxu0 %v3406
    %3476 = vmatprep.subr.bf16.mxu0 %v3409
    %3477 = vmatpush1.bf16.msra.mxu0 %v3408
    %3478 = vmatprep.subr.bf16.mxu0 %v3411
    %3479 = vmatpush1.bf16.msra.mxu0 %v3410
    %3480 = vmatprep.subr.bf16.mxu0 %v3413
    %3481 = vmatpush1.bf16.msra.mxu0 %v3412
    %3482 = vmatprep.mubr.bf16.mxu0 %v3447
    %3483 = vmatmul.mubr.bf16.gmra.mrb[0].mxu0 %v3446
    %v3484 = vpop.f32.mrb[0].mxu0
    %v3485 = vadd.f32 0.0, %v3484
    %v3486 = vpop.f32.mrb[0].mxu0
    %v3487 = vadd.f32 0.0, %v3486
    %v3488 = vpop.f32.mrb[0].mxu0
    %v3489 = vadd.f32 0.0, %v3488
    %v3490 = vpop.f32.mrb[0].mxu0
    %v3491 = vadd.f32 0.0, %v3490
    %3492 = vdwg.mxu0
    %3493 = vmatprep.subr.bf16.mxu0 %v3415
    %3494 = vmatpush1.bf16.msra.mxu0 %v3414
    %3495 = vmatprep.subr.bf16.mxu0 %v3417
    %3496 = vmatpush1.bf16.msra.mxu0 %v3416
    %3497 = vmatprep.subr.bf16.mxu0 %v3419
    %3498 = vmatpush1.bf16.msra.mxu0 %v3418
    %3499 = vmatprep.subr.bf16.mxu0 %v3421
    %3500 = vmatpush1.bf16.msra.mxu0 %v3420
    %3501 = vmatprep.subr.bf16.mxu0 %v3423
    %3502 = vmatpush1.bf16.msra.mxu0 %v3422
    %3503 = vmatprep.subr.bf16.mxu0 %v3425
    %3504 = vmatpush1.bf16.msra.mxu0 %v3424
    %3505 = vmatprep.subr.bf16.mxu0 %v3427
    %3506 = vmatpush1.bf16.msra.mxu0 %v3426
    %3507 = vmatprep.subr.bf16.mxu0 %v3429
    %3508 = vmatpush1.bf16.msra.mxu0 %v3428
    %3509 = vmatprep.subr.bf16.mxu0 %v3431
    %3510 = vmatpush1.bf16.msra.mxu0 %v3430
    %3511 = vmatprep.subr.bf16.mxu0 %v3433
    %3512 = vmatpush1.bf16.msra.mxu0 %v3432
    %3513 = vmatprep.subr.bf16.mxu0 %v3435
    %3514 = vmatpush1.bf16.msra.mxu0 %v3434
    %3515 = vmatprep.subr.bf16.mxu0 %v3437
    %3516 = vmatpush1.bf16.msra.mxu0 %v3436
    %3517 = vmatprep.subr.bf16.mxu0 %v3439
    %3518 = vmatpush1.bf16.msra.mxu0 %v3438
    %3519 = vmatprep.subr.bf16.mxu0 %v3441
    %3520 = vmatpush1.bf16.msra.mxu0 %v3440
    %3521 = vmatprep.subr.bf16.mxu0 %v3443
    %3522 = vmatpush1.bf16.msra.mxu0 %v3442
    %3523 = vmatprep.subr.bf16.mxu0 %v3445
    %3524 = vmatpush1.bf16.msra.mxu0 %v3444
    %3525 = vmatprep.mubr.bf16.mxu0 %v3449
    %3526 = vmatmul.mubr.bf16.gmra.mrb[0].mxu0 %v3448
    %v3527 = vpop.f32.mrb[0].mxu0
    %v3528 = vadd.f32 %v3485, %v3527
    %v3529 = vpop.f32.mrb[0].mxu0
    %v3530 = vadd.f32 %v3487, %v3529
    %v3531 = vpop.f32.mrb[0].mxu0
    %v3532 = vadd.f32 %v3489, %v3531
    %v3533 = vpop.f32.mrb[0].mxu0
    %v3534 = vadd.f32 %v3491, %v3533
    %3535 = vdwg.mxu0
    %3536 = vmatprep.subr.mxu0 %v3530
    %3537 = vmatpush1.msra.mxu0 %v3528
    %3538 = vmatprep.subr.mxu0 %v3534
    %3539 = vmatpush1.msra.mxu0 %v3532
    %3540 = vmatprep.subr.mxu0 0.0
    %3541 = vmatpush1.msra.mxu0 0.0
    %3542 = vmatprep.subr.mxu0 0.0
    %3543 = vmatpush1.msra.mxu0 0.0
    %3544 = vmatprep.subr.mxu0 0.0
    %3545 = vmatpush1.msra.mxu0 0.0
    %3546 = vmatprep.subr.mxu0 0.0
    %3547 = vmatpush1.msra.mxu0 0.0
    %3548 = vmatprep.subr.mxu0 0.0
    %3549 = vmatpush1.msra.mxu0 0.0
    %3550 = vmatprep.subr.mxu0 0.0
    %3551 = vmatpush1.msra.mxu0 0.0
    %3552 = vmatprep.subr.mxu0 0.0
    %3553 = vmatpush1.msra.mxu0 0.0
    %3554 = vmatprep.subr.mxu0 0.0
    %3555 = vmatpush1.msra.mxu0 0.0
    %3556 = vmatprep.subr.mxu0 0.0
    %3557 = vmatpush1.msra.mxu0 0.0
    %3558 = vmatprep.subr.mxu0 0.0
    %3559 = vmatpush1.msra.mxu0 0.0
    %3560 = vmatprep.subr.mxu0 0.0
    %3561 = vmatpush1.msra.mxu0 0.0
    %3562 = vmatprep.subr.mxu0 0.0
    %3563 = vmatpush1.msra.mxu0 0.0
    %3564 = vmatprep.subr.mxu0 0.0
    %3565 = vmatpush1.msra.mxu0 0.0
    %3566 = vmatprep.subr.mxu0 0.0
    %3567 = vmatpush1.msra.mxu0 0.0
    %3568 = vmatprep.subr.mxu0 0.0
    %3569 = vmatpush1.msra.mxu0 0.0
    %3570 = vmatprep.subr.mxu0 0.0
    %3571 = vmatpush1.msra.mxu0 0.0
    %3572 = vmatprep.subr.mxu0 0.0
    %3573 = vmatpush1.msra.mxu0 0.0
    %3574 = vmatprep.subr.mxu0 0.0
    %3575 = vmatpush1.msra.mxu0 0.0
    %3576 = vmatprep.subr.mxu0 0.0
    %3577 = vmatpush1.msra.mxu0 0.0
    %3578 = vmatprep.subr.mxu0 0.0
    %3579 = vmatpush1.msra.mxu0 0.0
    %3580 = vmatprep.subr.mxu0 0.0
    %3581 = vmatpush1.msra.mxu0 0.0
    %3582 = vmatprep.subr.mxu0 0.0
    %3583 = vmatpush1.msra.mxu0 0.0
    %3584 = vmatprep.subr.mxu0 0.0
    %3585 = vmatpush1.msra.mxu0 0.0
    %3586 = vmatprep.subr.mxu0 0.0
    %3587 = vmatpush1.msra.mxu0 0.0
    %3588 = vmatprep.subr.mxu0 0.0
    %3589 = vmatpush1.msra.mxu0 0.0
    %3590 = vmatprep.subr.mxu0 0.0
    %3591 = vmatpush1.msra.mxu0 0.0
    %3592 = vmatprep.subr.mxu0 0.0
    %3593 = vmatpush1.msra.mxu0 0.0
    %3594 = vmatprep.subr.mxu0 0.0
    %3595 = vmatpush1.msra.mxu0 0.0
    %3596 = vmatprep.subr.mxu0 0.0
    %3597 = vmatpush1.msra.mxu0 0.0
    %3598 = vmatprep.subr.mxu0 0.0
    %3599 = vmatpush1.msra.mxu0 0.0
    %3600 = vmatprep.mubr.f32.mxu0 0.0
    %3601 = vmatmul.mubr.f32.gmra.mrb[0].mxu0 %v934
    %v3602 = vpop.f32.mrb[0].mxu0
    %v3603 = vadd.f32 0.0, %v3602
    %v3604 = vpop.f32.mrb[0].mxu0
    %v3605 = vadd.f32 0.0, %v3604
    %3606 = vmatprep.mubr.f32.mxu0 0.0
    %3607 = vmatmul.mubr.f32.gmra.mrb[0].mxu0 %v937
    %v3608 = vpop.f32.mrb[0].mxu0
    %v3609 = vadd.f32 0.0, %v3608
    %v3610 = vpop.f32.mrb[0].mxu0
    %v3611 = vadd.f32 0.0, %v3610
    %3612 = vdwg.mxu0
    %v3613 = vadd.f32 %v3603, %v3605
    %3614 = vadd.xlane.f32.xlu0 %v3613
    %v3615 = vpop.xlane.xlu0 %3614
    %v3616 = vadd.f32 %v3609, %v3611
    %3617 = vadd.xlane.f32.xlu0 %v3616
    %v3618 = vpop.xlane.xlu0 %3617
    %v3619 = vmul.f32 %v3603, %v3603
    %v3620 = vmul.f32 %v3605, %v3605
    %v3621 = vmul.f32 %v3609, %v3609
    %v3622 = vmul.f32 %v3611, %v3611
    %v3623 = vadd.f32 %v3619, %v3620
    %3624 = vadd.xlane.f32.xlu0 %v3623
    %v3625 = vpop.xlane.xlu0 %3624
    %v3626 = vadd.f32 %v3621, %v3622
    %3627 = vadd.xlane.f32.xlu0 %v3626
    %v3628 = vpop.xlane.xlu0 %3627
    %v3629 = vadd.f32 %v3615, %v3618
    %v3630 = vadd.f32 %v3625, %v3628
    %v3631 = vmul.f32 %v3629, 0.001953125
    %v3632 = vmul.f32 %v3630, 0.001953125
    %v3633 = vmul.f32 %v3631, %v3631
    %v3634 = vsub.f32 %v3632, %v3633
    %v3635 = vmax.f32 %v3634, 0.0
    %v3636 = vadd.f32 %v3635, 1e-05
    %v3637 = vrsqrt.pop %v3636
    %v3638 = vmul.f32 %v260, %v3637
    %v3639 = vmul.f32 %v3631, %v3638
    %v3640 = vsub.f32 %v261, %v3639
    %3642 = vset.pattern.permute.xlu0 4
    %3643 = vperm.xlu0 %3642, %v3638
    %v3644 = vpop.permute.xlu0 %3643
    %v3646 = vmul.f32 %v3603, %v3644
    %v3647 = vmul.f32 %v3605, %v3644
    %v3648 = vmul.f32 %v3609, %v3644
    %v3649 = vmul.f32 %v3611, %v3644
    %3651 = vset.pattern.permute.xlu0 4
    %3652 = vperm.xlu0 %3651, %v3640
    %v3653 = vpop.permute.xlu0 %3652
    %v3655 = vadd.f32 %v3646, %v3653
    %v3656 = vadd.f32 %v3647, %v3653
    %v3657 = vadd.f32 %v3648, %v3653
    %v3658 = vadd.f32 %v3649, %v3653
    %v3659 = vmax.f32 %v3655, 0.0
    %v3660 = vmax.f32 %v3656, 0.0
    %v3661 = vmax.f32 %v3657, 0.0
    %v3662 = vmax.f32 %v3658, 0.0
    %v3663 = vand.u32 2147483647, %v3655
    %v3664 = vand.u32 2147483647, %v3656
    %v3665 = vand.u32 2147483647, %v3657
    %v3666 = vand.u32 2147483647, %v3658
    %v3667 = vsub.f32 0.0, %v3663
    %v3668 = vsub.f32 0.0, %v3664
    %v3669 = vsub.f32 0.0, %v3665
    %v3670 = vsub.f32 0.0, %v3666
    %v3671 = vmul.f32 %v3667, 1.442695
    %v3672 = vpow.pop %v3671
    %v3673 = vmul.f32 %v3668, 1.442695
    %v3674 = vpow.pop %v3673
    %v3675 = vmul.f32 %v3669, 1.442695
    %v3676 = vpow.pop %v3675
    %v3677 = vmul.f32 %v3670, 1.442695
    %v3678 = vpow.pop %v3677
    %v3679 = vadd.f32 %v3672, 1.0
    %v3680 = vlog2.pop %v3679
    %v3681 = vmul.f32 %v3680, 0.6931472
    %v3682 = vmul.f32 -0.5, %v3672
    %v3683 = vadd.f32 %v3682, 1.0
    %v3684 = vmul.f32 %v3683, %v3672
    %v3685 = vand.u32 2147483647, %v3672
    %vm3686 = vcmp.lt.f32.partialorder %v3685, 0.0004427343
    %v3687 = vsel %vm3686, %v3684, %v3681
    %v3688 = vadd.f32 %v3674, 1.0
    %v3689 = vlog2.pop %v3688
    %v3690 = vmul.f32 %v3689, 0.6931472
    %v3691 = vmul.f32 -0.5, %v3674
    %v3692 = vadd.f32 %v3691, 1.0
    %v3693 = vmul.f32 %v3692, %v3674
    %v3694 = vand.u32 2147483647, %v3674
    %vm3695 = vcmp.lt.f32.partialorder %v3694, 0.0004427343
    %v3696 = vsel %vm3695, %v3693, %v3690
    %v3697 = vadd.f32 %v3676, 1.0
    %v3698 = vlog2.pop %v3697
    %v3699 = vmul.f32 %v3698, 0.6931472
    %v3700 = vmul.f32 -0.5, %v3676
    %v3701 = vadd.f32 %v3700, 1.0
    %v3702 = vmul.f32 %v3701, %v3676
    %v3703 = vand.u32 2147483647, %v3676
    %vm3704 = vcmp.lt.f32.partialorder %v3703, 0.0004427343
    %v3705 = vsel %vm3704, %v3702, %v3699
    %v3706 = vadd.f32 %v3678, 1.0
    %v3707 = vlog2.pop %v3706
    %v3708 = vmul.f32 %v3707, 0.6931472
    %v3709 = vmul.f32 -0.5, %v3678
    %v3710 = vadd.f32 %v3709, 1.0
    %v3711 = vmul.f32 %v3710, %v3678
    %v3712 = vand.u32 2147483647, %v3678
    %vm3713 = vcmp.lt.f32.partialorder %v3712, 0.0004427343
    %v3714 = vsel %vm3713, %v3711, %v3708
    %v3715 = vadd.f32 %v3659, %v3687
    %v3716 = vadd.f32 %v3660, %v3696
    %v3717 = vadd.f32 %v3661, %v3705
    %v3718 = vadd.f32 %v3662, %v3714
    %s3720 = sshll.u32 1, 14
    %s3721 = sxor.u32 4294967295, %s3720
    %s3723 = sadd.s32 2, %s100
    %s3725 = sshll.u32 7, 26
    %s3726 = sxor.u32 4294967295, %s3725
    %s3727 = sand.u32 0, %s3726
    %s3728 = sshll.u32 %s3723, 26
    %s3729 = sor.u32 %s3727, %s3728
    %s3730 = sshll.u32 [#allocation2], 4
    %s3731 = int_to_ptr.vmem [resolvable:$true] %s3730
    %3734 = sst [smem:[#allocation31]] 256
    %s3735 = scalar_lea.smem [#allocation31], 1
    %3736 = sst [smem:[%s3735]] 512
    %s3737 = scalar_lea.smem [#allocation31], 2
    %3738 = sst [smem:[%s3737]] 2
    %s3739 = scalar_lea.smem [#allocation31], 3
    %3740 = sst [smem:[%s3739]] 64
    %s3741 = scalar_lea.smem [#allocation31], 4
    %3742 = sst [smem:[%s3741]] 128
    %s3743 = scalar_lea.smem [#allocation31], 5
    %3744 = sst [smem:[%s3743]] 2
    %s3745 = scalar_lea.smem [#allocation31], 6
    %3746 = sst [smem:[%s3745]] 128
    %s3747 = scalar_lea.smem [#allocation31], 7
    %3748 = sst [smem:[%s3747]] 64
    %s3749 = scalar_lea.smem [#allocation31], 8
    %3750 = sst [smem:[%s3749]] 4
    %3752 = dma.general %s10, 4096, %s3731, [#allocation3], [#allocation30], [#allocation31], %s3729, 0
    %s3753 = smul.u32 %s298, 2
    %s3754 = sshll.u32 %s3753, 4
    %3755 = dma.done %s263, %s3754
    %v3756 = vld [vmem:[#allocation2 + $0x800] sm:$0xff]
    %v3757 = vld [vmem:[#allocation2 + $0x808] sm:$0xff]
    %v3758 = vld [vmem:[#allocation2 + $0x820] sm:$0xff]
    %v3759 = vld [vmem:[#allocation2 + $0x828] sm:$0xff]
    %v3760 = vld [vmem:[#allocation2 + $0x840] sm:$0xff]
    %v3761 = vld [vmem:[#allocation2 + $0x848] sm:$0xff]
    %v3762 = vld [vmem:[#allocation2 + $0x860] sm:$0xff]
    %v3763 = vld [vmem:[#allocation2 + $0x868] sm:$0xff]
    %v3764 = vld [vmem:[#allocation2 + $0x880] sm:$0xff]
    %v3765 = vld [vmem:[#allocation2 + $0x888] sm:$0xff]
    %v3766 = vld [vmem:[#allocation2 + $0x8a0] sm:$0xff]
    %v3767 = vld [vmem:[#allocation2 + $0x8a8] sm:$0xff]
    %v3768 = vld [vmem:[#allocation2 + $0x8c0] sm:$0xff]
    %v3769 = vld [vmem:[#allocation2 + $0x8c8] sm:$0xff]
    %v3770 = vld [vmem:[#allocation2 + $0x8e0] sm:$0xff]
    %v3771 = vld [vmem:[#allocation2 + $0x8e8] sm:$0xff]
    %v3772 = vld [vmem:[#allocation2 + $0x900] sm:$0xff]
    %v3773 = vld [vmem:[#allocation2 + $0x908] sm:$0xff]
    %v3774 = vld [vmem:[#allocation2 + $0x920] sm:$0xff]
    %v3775 = vld [vmem:[#allocation2 + $0x928] sm:$0xff]
    %v3776 = vld [vmem:[#allocation2 + $0x940] sm:$0xff]
    %v3777 = vld [vmem:[#allocation2 + $0x948] sm:$0xff]
    %v3778 = vld [vmem:[#allocation2 + $0x960] sm:$0xff]
    %v3779 = vld [vmem:[#allocation2 + $0x968] sm:$0xff]
    %v3780 = vld [vmem:[#allocation2 + $0x980] sm:$0xff]
    %v3781 = vld [vmem:[#allocation2 + $0x988] sm:$0xff]
    %v3782 = vld [vmem:[#allocation2 + $0x9a0] sm:$0xff]
    %v3783 = vld [vmem:[#allocation2 + $0x9a8] sm:$0xff]
    %v3784 = vld [vmem:[#allocation2 + $0x9c0] sm:$0xff]
    %v3785 = vld [vmem:[#allocation2 + $0x9c8] sm:$0xff]
    %v3786 = vld [vmem:[#allocation2 + $0x9e0] sm:$0xff]
    %v3787 = vld [vmem:[#allocation2 + $0x9e8] sm:$0xff]
    %v3788 = vpack.c.bf16 %v3717, %v3715
    %v3789 = vpack.c.bf16 %v3718, %v3716
    %3790 = vmatprep.subr.bf16.mxu0 %v3757
    %3791 = vmatpush1.bf16.msra.mxu0 %v3756
    %3792 = vmatprep.subr.bf16.mxu0 %v3759
    %3793 = vmatpush1.bf16.msra.mxu0 %v3758
    %3794 = vmatprep.subr.bf16.mxu0 %v3761
    %3795 = vmatpush1.bf16.msra.mxu0 %v3760
    %3796 = vmatprep.subr.bf16.mxu0 %v3763
    %3797 = vmatpush1.bf16.msra.mxu0 %v3762
    %3798 = vmatprep.subr.bf16.mxu0 %v3765
    %3799 = vmatpush1.bf16.msra.mxu0 %v3764
    %3800 = vmatprep.subr.bf16.mxu0 %v3767
    %3801 = vmatpush1.bf16.msra.mxu0 %v3766
    %3802 = vmatprep.subr.bf16.mxu0 %v3769
    %3803 = vmatpush1.bf16.msra.mxu0 %v3768
    %3804 = vmatprep.subr.bf16.mxu0 %v3771
    %3805 = vmatpush1.bf16.msra.mxu0 %v3770
    %3806 = vmatprep.subr.bf16.mxu0 %v3773
    %3807 = vmatpush1.bf16.msra.mxu0 %v3772
    %3808 = vmatprep.subr.bf16.mxu0 %v3775
    %3809 = vmatpush1.bf16.msra.mxu0 %v3774
    %3810 = vmatprep.subr.bf16.mxu0 %v3777
    %3811 = vmatpush1.bf16.msra.mxu0 %v3776
    %3812 = vmatprep.subr.bf16.mxu0 %v3779
    %3813 = vmatpush1.bf16.msra.mxu0 %v3778
    %3814 = vmatprep.subr.bf16.mxu0 %v3781
    %3815 = vmatpush1.bf16.msra.mxu0 %v3780
    %3816 = vmatprep.subr.bf16.mxu0 %v3783
    %3817 = vmatpush1.bf16.msra.mxu0 %v3782
    %3818 = vmatprep.subr.bf16.mxu0 %v3785
    %3819 = vmatpush1.bf16.msra.mxu0 %v3784
    %3820 = vmatprep.subr.bf16.mxu0 %v3787
    %3821 = vmatpush1.bf16.msra.mxu0 %v3786
    %3822 = vmatprep.mubr.bf16.mxu0 %v3789
    %3823 = vmatmul.mubr.bf16.gmra.mrb[0].mxu0 %v3788
    %v3824 = vpop.f32.mrb[0].mxu0
    %v3825 = vadd.f32 0.0, %v3824
    %v3826 = vpop.f32.mrb[0].mxu0
    %v3827 = vadd.f32 0.0, %v3826
    %v3828 = vpop.f32.mrb[0].mxu0
    %v3829 = vadd.f32 0.0, %v3828
    %v3830 = vpop.f32.mrb[0].mxu0
    %v3831 = vadd.f32 0.0, %v3830
    %3832 = vdwg.mxu0
    %3833 = vmatprep.subr.mxu0 %v3827
    %3834 = vmatpush1.msra.mxu0 %v3825
    %3835 = vmatprep.subr.mxu0 %v3831
    %3836 = vmatpush1.msra.mxu0 %v3829
    %3837 = vmatprep.subr.mxu0 0.0
    %3838 = vmatpush1.msra.mxu0 0.0
    %3839 = vmatprep.subr.mxu0 0.0
    %3840 = vmatpush1.msra.mxu0 0.0
    %3841 = vmatprep.subr.mxu0 0.0
    %3842 = vmatpush1.msra.mxu0 0.0
    %3843 = vmatprep.subr.mxu0 0.0
    %3844 = vmatpush1.msra.mxu0 0.0
    %3845 = vmatprep.subr.mxu0 0.0
    %3846 = vmatpush1.msra.mxu0 0.0
    %3847 = vmatprep.subr.mxu0 0.0
    %3848 = vmatpush1.msra.mxu0 0.0
    %3849 = vmatprep.subr.mxu0 0.0
    %3850 = vmatpush1.msra.mxu0 0.0
    %3851 = vmatprep.subr.mxu0 0.0
    %3852 = vmatpush1.msra.mxu0 0.0
    %3853 = vmatprep.subr.mxu0 0.0
    %3854 = vmatpush1.msra.mxu0 0.0
    %3855 = vmatprep.subr.mxu0 0.0
    %3856 = vmatpush1.msra.mxu0 0.0
    %3857 = vmatprep.subr.mxu0 0.0
    %3858 = vmatpush1.msra.mxu0 0.0
    %3859 = vmatprep.subr.mxu0 0.0
    %3860 = vmatpush1.msra.mxu0 0.0
    %3861 = vmatprep.subr.mxu0 0.0
    %3862 = vmatpush1.msra.mxu0 0.0
    %3863 = vmatprep.subr.mxu0 0.0
    %3864 = vmatpush1.msra.mxu0 0.0
    %3865 = vmatprep.subr.mxu0 0.0
    %3866 = vmatpush1.msra.mxu0 0.0
    %3867 = vmatprep.subr.mxu0 0.0
    %3868 = vmatpush1.msra.mxu0 0.0
    %3869 = vmatprep.subr.mxu0 0.0
    %3870 = vmatpush1.msra.mxu0 0.0
    %3871 = vmatprep.subr.mxu0 0.0
    %3872 = vmatpush1.msra.mxu0 0.0
    %3873 = vmatprep.subr.mxu0 0.0
    %3874 = vmatpush1.msra.mxu0 0.0
    %3875 = vmatprep.subr.mxu0 0.0
    %3876 = vmatpush1.msra.mxu0 0.0
    %3877 = vmatprep.subr.mxu0 0.0
    %3878 = vmatpush1.msra.mxu0 0.0
    %3879 = vmatprep.subr.mxu0 0.0
    %3880 = vmatpush1.msra.mxu0 0.0
    %3881 = vmatprep.subr.mxu0 0.0
    %3882 = vmatpush1.msra.mxu0 0.0
    %3883 = vmatprep.subr.mxu0 0.0
    %3884 = vmatpush1.msra.mxu0 0.0
    %3885 = vmatprep.subr.mxu0 0.0
    %3886 = vmatpush1.msra.mxu0 0.0
    %3887 = vmatprep.subr.mxu0 0.0
    %3888 = vmatpush1.msra.mxu0 0.0
    %3889 = vmatprep.subr.mxu0 0.0
    %3890 = vmatpush1.msra.mxu0 0.0
    %3891 = vmatprep.subr.mxu0 0.0
    %3892 = vmatpush1.msra.mxu0 0.0
    %3893 = vmatprep.subr.mxu0 0.0
    %3894 = vmatpush1.msra.mxu0 0.0
    %3895 = vmatprep.subr.mxu0 0.0
    %3896 = vmatpush1.msra.mxu0 0.0
    %3897 = vmatprep.mubr.f32.mxu0 0.0
    %3898 = vmatmul.mubr.f32.gmra.mrb[0].mxu0 %v934
    %v3899 = vpop.f32.mrb[0].mxu0
    %v3900 = vadd.f32 0.0, %v3899
    %v3901 = vpop.f32.mrb[0].mxu0
    %v3902 = vadd.f32 0.0, %v3901
    %3903 = vmatprep.mubr.f32.mxu0 0.0
    %3904 = vmatmul.mubr.f32.gmra.mrb[0].mxu0 %v937
    %v3905 = vpop.f32.mrb[0].mxu0
    %v3906 = vadd.f32 0.0, %v3905
    %v3907 = vpop.f32.mrb[0].mxu0
    %v3908 = vadd.f32 0.0, %v3907
    %3909 = vdwg.mxu0
    %v3910 = vadd.f32 %v3900, %v3902
    %3911 = vadd.xlane.f32.xlu0 %v3910
    %v3912 = vpop.xlane.xlu0 %3911
    %v3913 = vadd.f32 %v3906, %v3908
    %3914 = vadd.xlane.f32.xlu0 %v3913
    %v3915 = vpop.xlane.xlu0 %3914
    %v3916 = vmul.f32 %v3900, %v3900
    %v3917 = vmul.f32 %v3902, %v3902
    %v3918 = vmul.f32 %v3906, %v3906
    %v3919 = vmul.f32 %v3908, %v3908
    %v3920 = vadd.f32 %v3916, %v3917
    %3921 = vadd.xlane.f32.xlu0 %v3920
    %v3922 = vpop.xlane.xlu0 %3921
    %v3923 = vadd.f32 %v3918, %v3919
    %3924 = vadd.xlane.f32.xlu0 %v3923
    %v3925 = vpop.xlane.xlu0 %3924
    %v3926 = vadd.f32 %v3912, %v3915
    %v3927 = vadd.f32 %v3922, %v3925
    %v3928 = vmul.f32 %v3926, 0.001953125
    %v3929 = vmul.f32 %v3927, 0.001953125
    %v3930 = vmul.f32 %v3928, %v3928
    %v3931 = vsub.f32 %v3929, %v3930
    %v3932 = vmax.f32 %v3931, 0.0
    %v3933 = vadd.f32 %v3932, 1e-05
    %v3934 = vrsqrt.pop %v3933
    %v3935 = vmul.f32 %v260, %v3934
    %v3936 = vmul.f32 %v3928, %v3935
    %v3937 = vsub.f32 %v261, %v3936
    %3939 = vset.pattern.permute.xlu0 5
    %3940 = vperm.xlu0 %3939, %v3935
    %v3941 = vpop.permute.xlu0 %3940
    %v3943 = vmul.f32 %v3900, %v3941
    %v3944 = vmul.f32 %v3902, %v3941
    %v3945 = vmul.f32 %v3906, %v3941
    %v3946 = vmul.f32 %v3908, %v3941
    %3948 = vset.pattern.permute.xlu0 5
    %3949 = vperm.xlu0 %3948, %v3937
    %v3950 = vpop.permute.xlu0 %3949
    %v3952 = vadd.f32 %v3943, %v3950
    %v3953 = vadd.f32 %v3944, %v3950
    %v3954 = vadd.f32 %v3945, %v3950
    %v3955 = vadd.f32 %v3946, %v3950
    %v3956 = vadd.f32 %v3952, %v3715
    %v3957 = vadd.f32 %v3953, %v3716
    %v3958 = vadd.f32 %v3954, %v3717
    %v3959 = vadd.f32 %v3955, %v3718
    %v3960 = vmax.f32 %v3956, 0.0
    %v3961 = vmax.f32 %v3957, 0.0
    %v3962 = vmax.f32 %v3958, 0.0
    %v3963 = vmax.f32 %v3959, 0.0
    %v3964 = vand.u32 2147483647, %v3956
    %v3965 = vand.u32 2147483647, %v3957
    %v3966 = vand.u32 2147483647, %v3958
    %v3967 = vand.u32 2147483647, %v3959
    %v3968 = vsub.f32 0.0, %v3964
    %v3969 = vsub.f32 0.0, %v3965
    %v3970 = vsub.f32 0.0, %v3966
    %v3971 = vsub.f32 0.0, %v3967
    %v3972 = vmul.f32 %v3968, 1.442695
    %v3973 = vpow.pop %v3972
    %v3974 = vmul.f32 %v3969, 1.442695
    %v3975 = vpow.pop %v3974
    %v3976 = vmul.f32 %v3970, 1.442695
    %v3977 = vpow.pop %v3976
    %v3978 = vmul.f32 %v3971, 1.442695
    %v3979 = vpow.pop %v3978
    %v3980 = vadd.f32 %v3973, 1.0
    %v3981 = vlog2.pop %v3980
    %v3982 = vmul.f32 %v3981, 0.6931472
    %v3983 = vmul.f32 -0.5, %v3973
    %v3984 = vadd.f32 %v3983, 1.0
    %v3985 = vmul.f32 %v3984, %v3973
    %v3986 = vand.u32 2147483647, %v3973
    %vm3987 = vcmp.lt.f32.partialorder %v3986, 0.0004427343
    %v3988 = vsel %vm3987, %v3985, %v3982
    %v3989 = vadd.f32 %v3975, 1.0
    %v3990 = vlog2.pop %v3989
    %v3991 = vmul.f32 %v3990, 0.6931472
    %v3992 = vmul.f32 -0.5, %v3975
    %v3993 = vadd.f32 %v3992, 1.0
    %v3994 = vmul.f32 %v3993, %v3975
    %v3995 = vand.u32 2147483647, %v3975
    %vm3996 = vcmp.lt.f32.partialorder %v3995, 0.0004427343
    %v3997 = vsel %vm3996, %v3994, %v3991
    %v3998 = vadd.f32 %v3977, 1.0
    %v3999 = vlog2.pop %v3998
    %v4000 = vmul.f32 %v3999, 0.6931472
    %v4001 = vmul.f32 -0.5, %v3977
    %v4002 = vadd.f32 %v4001, 1.0
    %v4003 = vmul.f32 %v4002, %v3977
    %v4004 = vand.u32 2147483647, %v3977
    %vm4005 = vcmp.lt.f32.partialorder %v4004, 0.0004427343
    %v4006 = vsel %vm4005, %v4003, %v4000
    %v4007 = vadd.f32 %v3979, 1.0
    %v4008 = vlog2.pop %v4007
    %v4009 = vmul.f32 %v4008, 0.6931472
    %v4010 = vmul.f32 -0.5, %v3979
    %v4011 = vadd.f32 %v4010, 1.0
    %v4012 = vmul.f32 %v4011, %v3979
    %v4013 = vand.u32 2147483647, %v3979
    %vm4014 = vcmp.lt.f32.partialorder %v4013, 0.0004427343
    %v4015 = vsel %vm4014, %v4012, %v4009
    %v4016 = vadd.f32 %v3960, %v3988
    %v4017 = vadd.f32 %v3961, %v3997
    %v4018 = vadd.f32 %v3962, %v4006
    %v4019 = vadd.f32 %v3963, %v4015
    %s4021 = sshll.u32 1, 14
    %s4022 = sxor.u32 4294967295, %s4021
    %s4024 = sadd.s32 2, %s100
    %s4026 = sshll.u32 7, 26
    %s4027 = sxor.u32 4294967295, %s4026
    %s4028 = sand.u32 0, %s4027
    %s4029 = sshll.u32 %s4024, 26
    %s4030 = sor.u32 %s4028, %s4029
    %s4031 = sshll.u32 %s262, 4
    %s4032 = int_to_ptr.vmem [resolvable:$true] %s4031
    %4035 = sst [smem:[#allocation33]] 256
    %s4036 = scalar_lea.smem [#allocation33], 1
    %4037 = sst [smem:[%s4036]] 512
    %s4038 = scalar_lea.smem [#allocation33], 2
    %4039 = sst [smem:[%s4038]] 2
    %s4040 = scalar_lea.smem [#allocation33], 3
    %4041 = sst [smem:[%s4040]] 64
    %s4042 = scalar_lea.smem [#allocation33], 4
    %4043 = sst [smem:[%s4042]] 128
    %s4044 = scalar_lea.smem [#allocation33], 5
    %4045 = sst [smem:[%s4044]] 2
    %s4046 = scalar_lea.smem [#allocation33], 6
    %4047 = sst [smem:[%s4046]] 128
    %s4048 = scalar_lea.smem [#allocation33], 7
    %4049 = sst [smem:[%s4048]] 64
    %s4050 = scalar_lea.smem [#allocation33], 8
    %4051 = sst [smem:[%s4050]] 4
    %4053 = dma.general %s11, 4096, %s4032, %s263, [#allocation32], [#allocation33], %s4030, 0
    %s4054 = sshll.u32 %s3753, 4
    %4055 = dma.done [#allocation3], %s4054
    %v4056 = vld [vmem:[#allocation2] sm:$0xff]
    %v4057 = vld [vmem:[#allocation2 + $0x8] sm:$0xff]
    %v4058 = vld [vmem:[#allocation2 + $0x20] sm:$0xff]
    %v4059 = vld [vmem:[#allocation2 + $0x28] sm:$0xff]
    %v4060 = vld [vmem:[#allocation2 + $0x40] sm:$0xff]
    %v4061 = vld [vmem:[#allocation2 + $0x48] sm:$0xff]
    %v4062 = vld [vmem:[#allocation2 + $0x60] sm:$0xff]
    %v4063 = vld [vmem:[#allocation2 + $0x68] sm:$0xff]
    %v4064 = vld [vmem:[#allocation2 + $0x80] sm:$0xff]
    %v4065 = vld [vmem:[#allocation2 + $0x88] sm:$0xff]
    %v4066 = vld [vmem:[#allocation2 + $0xa0] sm:$0xff]
    %v4067 = vld [vmem:[#allocation2 + $0xa8] sm:$0xff]
    %v4068 = vld [vmem:[#allocation2 + $0xc0] sm:$0xff]
    %v4069 = vld [vmem:[#allocation2 + $0xc8] sm:$0xff]
    %v4070 = vld [vmem:[#allocation2 + $0xe0] sm:$0xff]
    %v4071 = vld [vmem:[#allocation2 + $0xe8] sm:$0xff]
    %v4072 = vld [vmem:[#allocation2 + $0x100] sm:$0xff]
    %v4073 = vld [vmem:[#allocation2 + $0x108] sm:$0xff]
    %v4074 = vld [vmem:[#allocation2 + $0x120] sm:$0xff]
    %v4075 = vld [vmem:[#allocation2 + $0x128] sm:$0xff]
    %v4076 = vld [vmem:[#allocation2 + $0x140] sm:$0xff]
    %v4077 = vld [vmem:[#allocation2 + $0x148] sm:$0xff]
    %v4078 = vld [vmem:[#allocation2 + $0x160] sm:$0xff]
    %v4079 = vld [vmem:[#allocation2 + $0x168] sm:$0xff]
    %v4080 = vld [vmem:[#allocation2 + $0x180] sm:$0xff]
    %v4081 = vld [vmem:[#allocation2 + $0x188] sm:$0xff]
    %v4082 = vld [vmem:[#allocation2 + $0x1a0] sm:$0xff]
    %v4083 = vld [vmem:[#allocation2 + $0x1a8] sm:$0xff]
    %v4084 = vld [vmem:[#allocation2 + $0x1c0] sm:$0xff]
    %v4085 = vld [vmem:[#allocation2 + $0x1c8] sm:$0xff]
    %v4086 = vld [vmem:[#allocation2 + $0x1e0] sm:$0xff]
    %v4087 = vld [vmem:[#allocation2 + $0x1e8] sm:$0xff]
    %v4088 = vpack.c.bf16 %v4018, %v4016
    %v4089 = vpack.c.bf16 %v4019, %v4017
    %4090 = vmatprep.subr.bf16.mxu0 %v4057
    %4091 = vmatpush1.bf16.msra.mxu0 %v4056
    %4092 = vmatprep.subr.bf16.mxu0 %v4059
    %4093 = vmatpush1.bf16.msra.mxu0 %v4058
    %4094 = vmatprep.subr.bf16.mxu0 %v4061
    %4095 = vmatpush1.bf16.msra.mxu0 %v4060
    %4096 = vmatprep.subr.bf16.mxu0 %v4063
    %4097 = vmatpush1.bf16.msra.mxu0 %v4062
    %4098 = vmatprep.subr.bf16.mxu0 %v4065
    %4099 = vmatpush1.bf16.msra.mxu0 %v4064
    %4100 = vmatprep.subr.bf16.mxu0 %v4067
    %4101 = vmatpush1.bf16.msra.mxu0 %v4066
    %4102 = vmatprep.subr.bf16.mxu0 %v4069
    %4103 = vmatpush1.bf16.msra.mxu0 %v4068
    %4104 = vmatprep.subr.bf16.mxu0 %v4071
    %4105 = vmatpush1.bf16.msra.mxu0 %v4070
    %4106 = vmatprep.subr.bf16.mxu0 %v4073
    %4107 = vmatpush1.bf16.msra.mxu0 %v4072
    %4108 = vmatprep.subr.bf16.mxu0 %v4075
    %4109 = vmatpush1.bf16.msra.mxu0 %v4074
    %4110 = vmatprep.subr.bf16.mxu0 %v4077
    %4111 = vmatpush1.bf16.msra.mxu0 %v4076
    %4112 = vmatprep.subr.bf16.mxu0 %v4079
    %4113 = vmatpush1.bf16.msra.mxu0 %v4078
    %4114 = vmatprep.subr.bf16.mxu0 %v4081
    %4115 = vmatpush1.bf16.msra.mxu0 %v4080
    %4116 = vmatprep.subr.bf16.mxu0 %v4083
    %4117 = vmatpush1.bf16.msra.mxu0 %v4082
    %4118 = vmatprep.subr.bf16.mxu0 %v4085
    %4119 = vmatpush1.bf16.msra.mxu0 %v4084
    %4120 = vmatprep.subr.bf16.mxu0 %v4087
    %4121 = vmatpush1.bf16.msra.mxu0 %v4086
    %4122 = vmatprep.mubr.bf16.mxu0 %v4089
    %4123 = vmatmul.mubr.bf16.gmra.mrb[0].mxu0 %v4088
    %v4124 = vpop.f32.mrb[0].mxu0
    %v4125 = vadd.f32 0.0, %v4124
    %v4126 = vpop.f32.mrb[0].mxu0
    %v4127 = vadd.f32 0.0, %v4126
    %v4128 = vpop.f32.mrb[0].mxu0
    %v4129 = vadd.f32 0.0, %v4128
    %v4130 = vpop.f32.mrb[0].mxu0
    %v4131 = vadd.f32 0.0, %v4130
    %4132 = vdwg.mxu0
    %4133 = vmatprep.subr.mxu0 %v4127
    %4134 = vmatpush1.msra.mxu0 %v4125
    %4135 = vmatprep.subr.mxu0 %v4131
    %4136 = vmatpush1.msra.mxu0 %v4129
    %4137 = vmatprep.subr.mxu0 0.0
    %4138 = vmatpush1.msra.mxu0 0.0
    %4139 = vmatprep.subr.mxu0 0.0
    %4140 = vmatpush1.msra.mxu0 0.0
    %4141 = vmatprep.subr.mxu0 0.0
    %4142 = vmatpush1.msra.mxu0 0.0
    %4143 = vmatprep.subr.mxu0 0.0
    %4144 = vmatpush1.msra.mxu0 0.0
    %4145 = vmatprep.subr.mxu0 0.0
    %4146 = vmatpush1.msra.mxu0 0.0
    %4147 = vmatprep.subr.mxu0 0.0
    %4148 = vmatpush1.msra.mxu0 0.0
    %4149 = vmatprep.subr.mxu0 0.0
    %4150 = vmatpush1.msra.mxu0 0.0
    %4151 = vmatprep.subr.mxu0 0.0
    %4152 = vmatpush1.msra.mxu0 0.0
    %4153 = vmatprep.subr.mxu0 0.0
    %4154 = vmatpush1.msra.mxu0 0.0
    %4155 = vmatprep.subr.mxu0 0.0
    %4156 = vmatpush1.msra.mxu0 0.0
    %4157 = vmatprep.subr.mxu0 0.0
    %4158 = vmatpush1.msra.mxu0 0.0
    %4159 = vmatprep.subr.mxu0 0.0
    %4160 = vmatpush1.msra.mxu0 0.0
    %4161 = vmatprep.subr.mxu0 0.0
    %4162 = vmatpush1.msra.mxu0 0.0
    %4163 = vmatprep.subr.mxu0 0.0
    %4164 = vmatpush1.msra.mxu0 0.0
    %4165 = vmatprep.subr.mxu0 0.0
    %4166 = vmatpush1.msra.mxu0 0.0
    %4167 = vmatprep.subr.mxu0 0.0
    %4168 = vmatpush1.msra.mxu0 0.0
    %4169 = vmatprep.subr.mxu0 0.0
    %4170 = vmatpush1.msra.mxu0 0.0
    %4171 = vmatprep.subr.mxu0 0.0
    %4172 = vmatpush1.msra.mxu0 0.0
    %4173 = vmatprep.subr.mxu0 0.0
    %4174 = vmatpush1.msra.mxu0 0.0
    %4175 = vmatprep.subr.mxu0 0.0
    %4176 = vmatpush1.msra.mxu0 0.0
    %4177 = vmatprep.subr.mxu0 0.0
    %4178 = vmatpush1.msra.mxu0 0.0
    %4179 = vmatprep.subr.mxu0 0.0
    %4180 = vmatpush1.msra.mxu0 0.0
    %4181 = vmatprep.subr.mxu0 0.0
    %4182 = vmatpush1.msra.mxu0 0.0
    %4183 = vmatprep.subr.mxu0 0.0
    %4184 = vmatpush1.msra.mxu0 0.0
    %4185 = vmatprep.subr.mxu0 0.0
    %4186 = vmatpush1.msra.mxu0 0.0
    %4187 = vmatprep.subr.mxu0 0.0
    %4188 = vmatpush1.msra.mxu0 0.0
    %4189 = vmatprep.subr.mxu0 0.0
    %4190 = vmatpush1.msra.mxu0 0.0
    %4191 = vmatprep.subr.mxu0 0.0
    %4192 = vmatpush1.msra.mxu0 0.0
    %4193 = vmatprep.subr.mxu0 0.0
    %4194 = vmatpush1.msra.mxu0 0.0
    %4195 = vmatprep.subr.mxu0 0.0
    %4196 = vmatpush1.msra.mxu0 0.0
    %4197 = vmatprep.mubr.f32.mxu0 0.0
    %4198 = vmatmul.mubr.f32.gmra.mrb[0].mxu0 %v934
    %v4199 = vpop.f32.mrb[0].mxu0
    %v4200 = vadd.f32 0.0, %v4199
    %v4201 = vpop.f32.mrb[0].mxu0
    %v4202 = vadd.f32 0.0, %v4201
    %4203 = vmatprep.mubr.f32.mxu0 0.0
    %4204 = vmatmul.mubr.f32.gmra.mrb[0].mxu0 %v937
    %v4205 = vpop.f32.mrb[0].mxu0
    %v4206 = vadd.f32 0.0, %v4205
    %v4207 = vpop.f32.mrb[0].mxu0
    %v4208 = vadd.f32 0.0, %v4207
    %4209 = vdwg.mxu0
    %v4210 = vadd.f32 %v4200, %v4202
    %4211 = vadd.xlane.f32.xlu0 %v4210
    %v4212 = vpop.xlane.xlu0 %4211
    %v4213 = vadd.f32 %v4206, %v4208
    %4214 = vadd.xlane.f32.xlu0 %v4213
    %v4215 = vpop.xlane.xlu0 %4214
    %v4216 = vmul.f32 %v4200, %v4200
    %v4217 = vmul.f32 %v4202, %v4202
    %v4218 = vmul.f32 %v4206, %v4206
    %v4219 = vmul.f32 %v4208, %v4208
    %v4220 = vadd.f32 %v4216, %v4217
    %4221 = vadd.xlane.f32.xlu0 %v4220
    %v4222 = vpop.xlane.xlu0 %4221
    %v4223 = vadd.f32 %v4218, %v4219
    %4224 = vadd.xlane.f32.xlu0 %v4223
    %v4225 = vpop.xlane.xlu0 %4224
    %v4226 = vadd.f32 %v4212, %v4215
    %v4227 = vadd.f32 %v4222, %v4225
    %v4228 = vmul.f32 %v4226, 0.001953125
    %v4229 = vmul.f32 %v4227, 0.001953125
    %v4230 = vmul.f32 %v4228, %v4228
    %v4231 = vsub.f32 %v4229, %v4230
    %v4232 = vmax.f32 %v4231, 0.0
    %v4233 = vadd.f32 %v4232, 1e-05
    %v4234 = vrsqrt.pop %v4233
    %v4235 = vmul.f32 %v260, %v4234
    %v4236 = vmul.f32 %v4228, %v4235
    %v4237 = vsub.f32 %v261, %v4236
    %4239 = vset.pattern.permute.xlu0 6
    %4240 = vperm.xlu0 %4239, %v4235
    %v4241 = vpop.permute.xlu0 %4240
    %v4243 = vmul.f32 %v4200, %v4241
    %v4244 = vmul.f32 %v4202, %v4241
    %v4245 = vmul.f32 %v4206, %v4241
    %v4246 = vmul.f32 %v4208, %v4241
    %4248 = vset.pattern.permute.xlu0 6
    %4249 = vperm.xlu0 %4248, %v4237
    %v4250 = vpop.permute.xlu0 %4249
    %v4252 = vadd.f32 %v4243, %v4250
    %v4253 = vadd.f32 %v4244, %v4250
    %v4254 = vadd.f32 %v4245, %v4250
    %v4255 = vadd.f32 %v4246, %v4250
    %v4256 = vadd.f32 %v4252, %v3715
    %v4257 = vadd.f32 %v4253, %v3716
    %v4258 = vadd.f32 %v4254, %v3717
    %v4259 = vadd.f32 %v4255, %v3718
    %v4260 = vmax.f32 %v4256, 0.0
    %v4261 = vmax.f32 %v4257, 0.0
    %v4262 = vmax.f32 %v4258, 0.0
    %v4263 = vmax.f32 %v4259, 0.0
    %v4264 = vand.u32 2147483647, %v4256
    %v4265 = vand.u32 2147483647, %v4257
    %v4266 = vand.u32 2147483647, %v4258
    %v4267 = vand.u32 2147483647, %v4259
    %v4268 = vsub.f32 0.0, %v4264
    %v4269 = vsub.f32 0.0, %v4265
    %v4270 = vsub.f32 0.0, %v4266
    %v4271 = vsub.f32 0.0, %v4267
    %v4272 = vmul.f32 %v4268, 1.442695
    %v4273 = vpow.pop %v4272
    %v4274 = vmul.f32 %v4269, 1.442695
    %v4275 = vpow.pop %v4274
    %v4276 = vmul.f32 %v4270, 1.442695
    %v4277 = vpow.pop %v4276
    %v4278 = vmul.f32 %v4271, 1.442695
    %v4279 = vpow.pop %v4278
    %v4280 = vadd.f32 %v4273, 1.0
    %v4281 = vlog2.pop %v4280
    %v4282 = vmul.f32 %v4281, 0.6931472
    %v4283 = vmul.f32 -0.5, %v4273
    %v4284 = vadd.f32 %v4283, 1.0
    %v4285 = vmul.f32 %v4284, %v4273
    %v4286 = vand.u32 2147483647, %v4273
    %vm4287 = vcmp.lt.f32.partialorder %v4286, 0.0004427343
    %v4288 = vsel %vm4287, %v4285, %v4282
    %v4289 = vadd.f32 %v4275, 1.0
    %v4290 = vlog2.pop %v4289
    %v4291 = vmul.f32 %v4290, 0.6931472
    %v4292 = vmul.f32 -0.5, %v4275
    %v4293 = vadd.f32 %v4292, 1.0
    %v4294 = vmul.f32 %v4293, %v4275
    %v4295 = vand.u32 2147483647, %v4275
    %vm4296 = vcmp.lt.f32.partialorder %v4295, 0.0004427343
    %v4297 = vsel %vm4296, %v4294, %v4291
    %v4298 = vadd.f32 %v4277, 1.0
    %v4299 = vlog2.pop %v4298
    %v4300 = vmul.f32 %v4299, 0.6931472
    %v4301 = vmul.f32 -0.5, %v4277
    %v4302 = vadd.f32 %v4301, 1.0
    %v4303 = vmul.f32 %v4302, %v4277
    %v4304 = vand.u32 2147483647, %v4277
    %vm4305 = vcmp.lt.f32.partialorder %v4304, 0.0004427343
    %v4306 = vsel %vm4305, %v4303, %v4300
    %v4307 = vadd.f32 %v4279, 1.0
    %v4308 = vlog2.pop %v4307
    %v4309 = vmul.f32 %v4308, 0.6931472
    %v4310 = vmul.f32 -0.5, %v4279
    %v4311 = vadd.f32 %v4310, 1.0
    %v4312 = vmul.f32 %v4311, %v4279
    %v4313 = vand.u32 2147483647, %v4279
    %vm4314 = vcmp.lt.f32.partialorder %v4313, 0.0004427343
    %v4315 = vsel %vm4314, %v4312, %v4309
    %v4316 = vadd.f32 %v4260, %v4288
    %v4317 = vadd.f32 %v4261, %v4297
    %v4318 = vadd.f32 %v4262, %v4306
    %v4319 = vadd.f32 %v4263, %v4315
    %s4321 = sshll.u32 [#allocation2], 4
    %s4322 = int_to_ptr.vmem [resolvable:$true] %s4321
    %4324 = dma.hbm_to_vmem [thread:$0]  %s12, 2048, %s4322, [#allocation3], 128, 512, 8
    %s4325 = sshll.u32 %s3753, 4
    %4326 = dma.done %s263, %s4325
    %v4327 = vld [vmem:[#allocation2 + $0x800] sm:$0xff]
    %v4328 = vld [vmem:[#allocation2 + $0x808] sm:$0xff]
    %v4329 = vld [vmem:[#allocation2 + $0x820] sm:$0xff]
    %v4330 = vld [vmem:[#allocation2 + $0x828] sm:$0xff]
    %v4331 = vld [vmem:[#allocation2 + $0x840] sm:$0xff]
    %v4332 = vld [vmem:[#allocation2 + $0x848] sm:$0xff]
    %v4333 = vld [vmem:[#allocation2 + $0x860] sm:$0xff]
    %v4334 = vld [vmem:[#allocation2 + $0x868] sm:$0xff]
    %v4335 = vld [vmem:[#allocation2 + $0x880] sm:$0xff]
    %v4336 = vld [vmem:[#allocation2 + $0x888] sm:$0xff]
    %v4337 = vld [vmem:[#allocation2 + $0x8a0] sm:$0xff]
    %v4338 = vld [vmem:[#allocation2 + $0x8a8] sm:$0xff]
    %v4339 = vld [vmem:[#allocation2 + $0x8c0] sm:$0xff]
    %v4340 = vld [vmem:[#allocation2 + $0x8c8] sm:$0xff]
    %v4341 = vld [vmem:[#allocation2 + $0x8e0] sm:$0xff]
    %v4342 = vld [vmem:[#allocation2 + $0x8e8] sm:$0xff]
    %v4343 = vld [vmem:[#allocation2 + $0x900] sm:$0xff]
    %v4344 = vld [vmem:[#allocation2 + $0x908] sm:$0xff]
    %v4345 = vld [vmem:[#allocation2 + $0x920] sm:$0xff]
    %v4346 = vld [vmem:[#allocation2 + $0x928] sm:$0xff]
    %v4347 = vld [vmem:[#allocation2 + $0x940] sm:$0xff]
    %v4348 = vld [vmem:[#allocation2 + $0x948] sm:$0xff]
    %v4349 = vld [vmem:[#allocation2 + $0x960] sm:$0xff]
    %v4350 = vld [vmem:[#allocation2 + $0x968] sm:$0xff]
    %v4351 = vld [vmem:[#allocation2 + $0x980] sm:$0xff]
    %v4352 = vld [vmem:[#allocation2 + $0x988] sm:$0xff]
    %v4353 = vld [vmem:[#allocation2 + $0x9a0] sm:$0xff]
    %v4354 = vld [vmem:[#allocation2 + $0x9a8] sm:$0xff]
    %v4355 = vld [vmem:[#allocation2 + $0x9c0] sm:$0xff]
    %v4356 = vld [vmem:[#allocation2 + $0x9c8] sm:$0xff]
    %v4357 = vld [vmem:[#allocation2 + $0x9e0] sm:$0xff]
    %v4358 = vld [vmem:[#allocation2 + $0x9e8] sm:$0xff]
    %v4359 = vpack.c.bf16 %v4318, %v4316
    %v4360 = vpack.c.bf16 %v4319, %v4317
    %4361 = vmatprep.subr.bf16.mxu0 %v4328
    %4362 = vmatpush1.bf16.msra.mxu0 %v4327
    %4363 = vmatprep.subr.bf16.mxu0 %v4330
    %4364 = vmatpush1.bf16.msra.mxu0 %v4329
    %4365 = vmatprep.subr.bf16.mxu0 %v4332
    %4366 = vmatpush1.bf16.msra.mxu0 %v4331
    %4367 = vmatprep.subr.bf16.mxu0 %v4334
    %4368 = vmatpush1.bf16.msra.mxu0 %v4333
    %4369 = vmatprep.subr.bf16.mxu0 %v4336
    %4370 = vmatpush1.bf16.msra.mxu0 %v4335
    %4371 = vmatprep.subr.bf16.mxu0 %v4338
    %4372 = vmatpush1.bf16.msra.mxu0 %v4337
    %4373 = vmatprep.subr.bf16.mxu0 %v4340
    %4374 = vmatpush1.bf16.msra.mxu0 %v4339
    %4375 = vmatprep.subr.bf16.mxu0 %v4342
    %4376 = vmatpush1.bf16.msra.mxu0 %v4341
    %4377 = vmatprep.subr.bf16.mxu0 %v4344
    %4378 = vmatpush1.bf16.msra.mxu0 %v4343
    %4379 = vmatprep.subr.bf16.mxu0 %v4346
    %4380 = vmatpush1.bf16.msra.mxu0 %v4345
    %4381 = vmatprep.subr.bf16.mxu0 %v4348
    %4382 = vmatpush1.bf16.msra.mxu0 %v4347
    %4383 = vmatprep.subr.bf16.mxu0 %v4350
    %4384 = vmatpush1.bf16.msra.mxu0 %v4349
    %4385 = vmatprep.subr.bf16.mxu0 %v4352
    %4386 = vmatpush1.bf16.msra.mxu0 %v4351
    %4387 = vmatprep.subr.bf16.mxu0 %v4354
    %4388 = vmatpush1.bf16.msra.mxu0 %v4353
    %4389 = vmatprep.subr.bf16.mxu0 %v4356
    %4390 = vmatpush1.bf16.msra.mxu0 %v4355
    %4391 = vmatprep.subr.bf16.mxu0 %v4358
    %4392 = vmatpush1.bf16.msra.mxu0 %v4357
    %4393 = vmatprep.mubr.bf16.mxu0 %v4360
    %4394 = vmatmul.mubr.bf16.gmra.mrb[0].mxu0 %v4359
    %v4395 = vpop.f32.mrb[0].mxu0
    %v4396 = vadd.f32 0.0, %v4395
    %v4397 = vpop.f32.mrb[0].mxu0
    %v4398 = vadd.f32 0.0, %v4397
    %v4399 = vpop.f32.mrb[0].mxu0
    %v4400 = vadd.f32 0.0, %v4399
    %v4401 = vpop.f32.mrb[0].mxu0
    %v4402 = vadd.f32 0.0, %v4401
    %4403 = vdwg.mxu0
    %4404 = vmatprep.subr.mxu0 %v4398
    %4405 = vmatpush1.msra.mxu0 %v4396
    %4406 = vmatprep.subr.mxu0 %v4402
    %4407 = vmatpush1.msra.mxu0 %v4400
    %4408 = vmatprep.subr.mxu0 0.0
    %4409 = vmatpush1.msra.mxu0 0.0
    %4410 = vmatprep.subr.mxu0 0.0
    %4411 = vmatpush1.msra.mxu0 0.0
    %4412 = vmatprep.subr.mxu0 0.0
    %4413 = vmatpush1.msra.mxu0 0.0
    %4414 = vmatprep.subr.mxu0 0.0
    %4415 = vmatpush1.msra.mxu0 0.0
    %4416 = vmatprep.subr.mxu0 0.0
    %4417 = vmatpush1.msra.mxu0 0.0
    %4418 = vmatprep.subr.mxu0 0.0
    %4419 = vmatpush1.msra.mxu0 0.0
    %4420 = vmatprep.subr.mxu0 0.0
    %4421 = vmatpush1.msra.mxu0 0.0
    %4422 = vmatprep.subr.mxu0 0.0
    %4423 = vmatpush1.msra.mxu0 0.0
    %4424 = vmatprep.subr.mxu0 0.0
    %4425 = vmatpush1.msra.mxu0 0.0
    %4426 = vmatprep.subr.mxu0 0.0
    %4427 = vmatpush1.msra.mxu0 0.0
    %4428 = vmatprep.subr.mxu0 0.0
    %4429 = vmatpush1.msra.mxu0 0.0
    %4430 = vmatprep.subr.mxu0 0.0
    %4431 = vmatpush1.msra.mxu0 0.0
    %4432 = vmatprep.subr.mxu0 0.0
    %4433 = vmatpush1.msra.mxu0 0.0
    %4434 = vmatprep.subr.mxu0 0.0
    %4435 = vmatpush1.msra.mxu0 0.0
    %4436 = vmatprep.subr.mxu0 0.0
    %4437 = vmatpush1.msra.mxu0 0.0
    %4438 = vmatprep.subr.mxu0 0.0
    %4439 = vmatpush1.msra.mxu0 0.0
    %4440 = vmatprep.subr.mxu0 0.0
    %4441 = vmatpush1.msra.mxu0 0.0
    %4442 = vmatprep.subr.mxu0 0.0
    %4443 = vmatpush1.msra.mxu0 0.0
    %4444 = vmatprep.subr.mxu0 0.0
    %4445 = vmatpush1.msra.mxu0 0.0
    %4446 = vmatprep.subr.mxu0 0.0
    %4447 = vmatpush1.msra.mxu0 0.0
    %4448 = vmatprep.subr.mxu0 0.0
    %4449 = vmatpush1.msra.mxu0 0.0
    %4450 = vmatprep.subr.mxu0 0.0
    %4451 = vmatpush1.msra.mxu0 0.0
    %4452 = vmatprep.subr.mxu0 0.0
    %4453 = vmatpush1.msra.mxu0 0.0
    %4454 = vmatprep.subr.mxu0 0.0
    %4455 = vmatpush1.msra.mxu0 0.0
    %4456 = vmatprep.subr.mxu0 0.0
    %4457 = vmatpush1.msra.mxu0 0.0
    %4458 = vmatprep.subr.mxu0 0.0
    %4459 = vmatpush1.msra.mxu0 0.0
    %4460 = vmatprep.subr.mxu0 0.0
    %4461 = vmatpush1.msra.mxu0 0.0
    %4462 = vmatprep.subr.mxu0 0.0
    %4463 = vmatpush1.msra.mxu0 0.0
    %4464 = vmatprep.subr.mxu0 0.0
    %4465 = vmatpush1.msra.mxu0 0.0
    %4466 = vmatprep.subr.mxu0 0.0
    %4467 = vmatpush1.msra.mxu0 0.0
    %4468 = vmatprep.mubr.f32.mxu0 0.0
    %4469 = vmatmul.mubr.f32.gmra.mrb[0].mxu0 %v934
    %v4470 = vpop.f32.mrb[0].mxu0
    %v4471 = vadd.f32 0.0, %v4470
    %v4472 = vpop.f32.mrb[0].mxu0
    %v4473 = vadd.f32 0.0, %v4472
    %4474 = vmatprep.mubr.f32.mxu0 0.0
    %4475 = vmatmul.mubr.f32.gmra.mrb[0].mxu0 %v937
    %v4476 = vpop.f32.mrb[0].mxu0
    %v4477 = vadd.f32 0.0, %v4476
    %v4478 = vpop.f32.mrb[0].mxu0
    %v4479 = vadd.f32 0.0, %v4478
    %4480 = vdwg.mxu0
    %v4481 = vadd.f32 %v4471, %v4473
    %4482 = vadd.xlane.f32.xlu0 %v4481
    %v4483 = vpop.xlane.xlu0 %4482
    %v4484 = vadd.f32 %v4477, %v4479
    %4485 = vadd.xlane.f32.xlu0 %v4484
    %v4486 = vpop.xlane.xlu0 %4485
    %v4487 = vmul.f32 %v4471, %v4471
    %v4488 = vmul.f32 %v4473, %v4473
    %v4489 = vmul.f32 %v4477, %v4477
    %v4490 = vmul.f32 %v4479, %v4479
    %v4491 = vadd.f32 %v4487, %v4488
    %4492 = vadd.xlane.f32.xlu0 %v4491
    %v4493 = vpop.xlane.xlu0 %4492
    %v4494 = vadd.f32 %v4489, %v4490
    %4495 = vadd.xlane.f32.xlu0 %v4494
    %v4496 = vpop.xlane.xlu0 %4495
    %v4497 = vadd.f32 %v4483, %v4486
    %v4498 = vadd.f32 %v4493, %v4496
    %v4499 = vmul.f32 %v4497, 0.001953125
    %v4500 = vmul.f32 %v4498, 0.001953125
    %v4501 = vmul.f32 %v4499, %v4499
    %v4502 = vsub.f32 %v4500, %v4501
    %v4503 = vmax.f32 %v4502, 0.0
    %v4504 = vadd.f32 %v4503, 1e-05
    %v4505 = vrsqrt.pop %v4504
    %v4506 = vmul.f32 %v260, %v4505
    %v4507 = vmul.f32 %v4499, %v4506
    %v4508 = vsub.f32 %v261, %v4507
    %4510 = vset.pattern.permute.xlu0 7
    %4511 = vperm.xlu0 %4510, %v4506
    %v4512 = vpop.permute.xlu0 %4511
    %v4514 = vmul.f32 %v4471, %v4512
    %v4515 = vmul.f32 %v4473, %v4512
    %v4516 = vmul.f32 %v4477, %v4512
    %v4517 = vmul.f32 %v4479, %v4512
    %4519 = vset.pattern.permute.xlu0 7
    %4520 = vperm.xlu0 %4519, %v4508
    %v4521 = vpop.permute.xlu0 %4520
    %v4523 = vadd.f32 %v4514, %v4521
    %v4524 = vadd.f32 %v4515, %v4521
    %v4525 = vadd.f32 %v4516, %v4521
    %v4526 = vadd.f32 %v4517, %v4521
    %v4527 = vadd.f32 %v4523, %v3715
    %v4528 = vadd.f32 %v4524, %v3716
    %v4529 = vadd.f32 %v4525, %v3717
    %v4530 = vadd.f32 %v4526, %v3718
    %v4531 = vmax.f32 %v4527, 0.0
    %v4532 = vmax.f32 %v4528, 0.0
    %v4533 = vmax.f32 %v4529, 0.0
    %v4534 = vmax.f32 %v4530, 0.0
    %v4535 = vand.u32 2147483647, %v4527
    %v4536 = vand.u32 2147483647, %v4528
    %v4537 = vand.u32 2147483647, %v4529
    %v4538 = vand.u32 2147483647, %v4530
    %v4539 = vsub.f32 0.0, %v4535
    %v4540 = vsub.f32 0.0, %v4536
    %v4541 = vsub.f32 0.0, %v4537
    %v4542 = vsub.f32 0.0, %v4538
    %v4543 = vmul.f32 %v4539, 1.442695
    %v4544 = vpow.pop %v4543
    %v4545 = vmul.f32 %v4540, 1.442695
    %v4546 = vpow.pop %v4545
    %v4547 = vmul.f32 %v4541, 1.442695
    %v4548 = vpow.pop %v4547
    %v4549 = vmul.f32 %v4542, 1.442695
    %v4550 = vpow.pop %v4549
    %v4551 = vadd.f32 %v4544, 1.0
    %v4552 = vlog2.pop %v4551
    %v4553 = vmul.f32 %v4552, 0.6931472
    %v4554 = vmul.f32 -0.5, %v4544
    %v4555 = vadd.f32 %v4554, 1.0
    %v4556 = vmul.f32 %v4555, %v4544
    %v4557 = vand.u32 2147483647, %v4544
    %vm4558 = vcmp.lt.f32.partialorder %v4557, 0.0004427343
    %v4559 = vsel %vm4558, %v4556, %v4553
    %v4560 = vadd.f32 %v4546, 1.0
    %v4561 = vlog2.pop %v4560
    %v4562 = vmul.f32 %v4561, 0.6931472
    %v4563 = vmul.f32 -0.5, %v4546
    %v4564 = vadd.f32 %v4563, 1.0
    %v4565 = vmul.f32 %v4564, %v4546
    %v4566 = vand.u32 2147483647, %v4546
    %vm4567 = vcmp.lt.f32.partialorder %v4566, 0.0004427343
    %v4568 = vsel %vm4567, %v4565, %v4562
    %v4569 = vadd.f32 %v4548, 1.0
    %v4570 = vlog2.pop %v4569
    %v4571 = vmul.f32 %v4570, 0.6931472
    %v4572 = vmul.f32 -0.5, %v4548
    %v4573 = vadd.f32 %v4572, 1.0
    %v4574 = vmul.f32 %v4573, %v4548
    %v4575 = vand.u32 2147483647, %v4548
    %vm4576 = vcmp.lt.f32.partialorder %v4575, 0.0004427343
    %v4577 = vsel %vm4576, %v4574, %v4571
    %v4578 = vadd.f32 %v4550, 1.0
    %v4579 = vlog2.pop %v4578
    %v4580 = vmul.f32 %v4579, 0.6931472
    %v4581 = vmul.f32 -0.5, %v4550
    %v4582 = vadd.f32 %v4581, 1.0
    %v4583 = vmul.f32 %v4582, %v4550
    %v4584 = vand.u32 2147483647, %v4550
    %vm4585 = vcmp.lt.f32.partialorder %v4584, 0.0004427343
    %v4586 = vsel %vm4585, %v4583, %v4580
    %v4587 = vadd.f32 %v4531, %v4559
    %v4588 = vadd.f32 %v4532, %v4568
    %v4589 = vadd.f32 %v4533, %v4577
    %v4590 = vadd.f32 %v4534, %v4586
    %p4592 = scmp.lt.u32.totalorder 8, 8
    %p4593 = pneg %p4592
    // Predicated region
    $region54: #{tpu_custom_call.1} parent=1 // pred_check
      _
    $region55: #{tpu_custom_call.1} parent=1 // pred_check_branch
      %4595 = sbr.rel (%p4592) target = $region57
    $region56: #{tpu_custom_call.1} parent=1 // pred_region
      %s4624 = sand.u32 8, 7
      %p4625 = scmp.eq.s32.totalorder %s4624, 0
      // Predicated region
      $region69: #{tpu_custom_call.1} parent=56 // pred_check
        %p4626 = pneg %p4625
      $region70: #{tpu_custom_call.1} parent=56 // pred_check_branch
        %4628 = sbr.rel (%p4626) target = $region72
      $region71: #{tpu_custom_call.1} parent=56 // pred_region
        loop: start=0, step=1, limit=1
        $region73: #{tpu_custom_call.1} parent=71 // loop_pre_header
          _
        $region74: #{tpu_custom_call.1} parent=71 // loop_header
          %s4630 = sphi 0, %s4634
          %p4631 = scmp.ge.s32.totalorder %s4630, 1
          %s4635 = sphi %s13, %s13
          %s4636 = sphi %s262, %s262
        $region75: #{tpu_custom_call.1} parent=71 // loop_header_branch
          %4633 = sbr.rel (%p4631) target = $region79
        $region76: #{tpu_custom_call.1} parent=71 // loop_body
          %v4637 = vld [vmem:[%s4635] sm:$0xff]
          %4638 = vst [vmem:[%s4636] sm:$0xff] %v4637
          %v4639 = vld [vmem:[%s4635 + $0x8] sm:$0xff]
          %4640 = vst [vmem:[%s4636 + $0x20] sm:$0xff] %v4639
          %v4641 = vld [vmem:[%s4635 + $0x10] sm:$0xff]
          %4642 = vst [vmem:[%s4636 + $0x40] sm:$0xff] %v4641
          %v4643 = vld [vmem:[%s4635 + $0x18] sm:$0xff]
          %4644 = vst [vmem:[%s4636 + $0x60] sm:$0xff] %v4643
          %v4645 = vld [vmem:[%s4635 + $0x20] sm:$0xff]
          %4646 = vst [vmem:[%s4636 + $0x80] sm:$0xff] %v4645
          %v4647 = vld [vmem:[%s4635 + $0x28] sm:$0xff]
          %4648 = vst [vmem:[%s4636 + $0xa0] sm:$0xff] %v4647
          %v4649 = vld [vmem:[%s4635 + $0x30] sm:$0xff]
          %4650 = vst [vmem:[%s4636 + $0xc0] sm:$0xff] %v4649
          %v4651 = vld [vmem:[%s4635 + $0x38] sm:$0xff]
          %4652 = vst [vmem:[%s4636 + $0xe0] sm:$0xff] %v4651
        $region77: #{tpu_custom_call.1} parent=71 // loop_footer
          %s4634 = sadd.s32 1, %s4630
        $region78: #{tpu_custom_call.1} parent=71 // loop_footer_branch
          %4629 = sbr.rel target = $region74
        $region79: #{tpu_custom_call.1} parent=71 // loop_exit
          _
      $region72: #{tpu_custom_call.1} parent=56 // pred_fallthru
        _
      %p4653 = pneg %p4625
      // Predicated region
      $region80: #{tpu_custom_call.1} parent=56 // pred_check
        _
      $region81: #{tpu_custom_call.1} parent=56 // pred_check_branch
        %4655 = sbr.rel (%p4625) target = $region83
      $region82: #{tpu_custom_call.1} parent=56 // pred_region
        %s4656 = sand.u32 8, 7
      $region83: #{tpu_custom_call.1} parent=56 // pred_fallthru
        _
    $region57: #{tpu_custom_call.1} parent=1 // pred_fallthru
      _
    // Predicated region
    $region58: #{tpu_custom_call.1} parent=1 // pred_check
      %p4596 = pneg %p4592
    $region59: #{tpu_custom_call.1} parent=1 // pred_check_branch
      %4598 = sbr.rel (%p4596) target = $region61
    $region60: #{tpu_custom_call.1} parent=1 // pred_region
      %s4599 = sshllo.u32 0, 8
      loop: start=0, step=1, limit=1
      $region62: #{tpu_custom_call.1} parent=60 // loop_pre_header
        _
      $region63: #{tpu_custom_call.1} parent=60 // loop_header
        %s4601 = sphi 0, %s4605
        %p4602 = scmp.ge.s32.totalorder %s4601, 1
        %s4606 = sphi %s13, %s13
        %s4607 = sphi %s262, %s262
      $region64: #{tpu_custom_call.1} parent=60 // loop_header_branch
        %4604 = sbr.rel (%p4602) target = $region68
      $region65: #{tpu_custom_call.1} parent=60 // loop_body
        %v4608 = vld [vmem:[%s4606] sm:%s4599]
        %4609 = vst [vmem:[%s4607] sm:%s4599] %v4608
        %v4610 = vld [vmem:[%s4606 + $0x8] sm:%s4599]
        %4611 = vst [vmem:[%s4607 + $0x20] sm:%s4599] %v4610
        %v4612 = vld [vmem:[%s4606 + $0x10] sm:%s4599]
        %4613 = vst [vmem:[%s4607 + $0x40] sm:%s4599] %v4612
        %v4614 = vld [vmem:[%s4606 + $0x18] sm:%s4599]
        %4615 = vst [vmem:[%s4607 + $0x60] sm:%s4599] %v4614
        %v4616 = vld [vmem:[%s4606 + $0x20] sm:%s4599]
        %4617 = vst [vmem:[%s4607 + $0x80] sm:%s4599] %v4616
        %v4618 = vld [vmem:[%s4606 + $0x28] sm:%s4599]
        %4619 = vst [vmem:[%s4607 + $0xa0] sm:%s4599] %v4618
        %v4620 = vld [vmem:[%s4606 + $0x30] sm:%s4599]
        %4621 = vst [vmem:[%s4607 + $0xc0] sm:%s4599] %v4620
        %v4622 = vld [vmem:[%s4606 + $0x38] sm:%s4599]
        %4623 = vst [vmem:[%s4607 + $0xe0] sm:%s4599] %v4622
      $region66: #{tpu_custom_call.1} parent=60 // loop_footer
        %s4605 = sadd.s32 1, %s4601
      $region67: #{tpu_custom_call.1} parent=60 // loop_footer_branch
        %4600 = sbr.rel target = $region63
      $region68: #{tpu_custom_call.1} parent=60 // loop_exit
        _
    $region61: #{tpu_custom_call.1} parent=1 // pred_fallthru
      _
    // Predicated region
    $region84: #{tpu_custom_call.1} parent=1 // pred_check
      _
    $region85: #{tpu_custom_call.1} parent=1 // pred_check_branch
      %4659 = sbr.rel (0) target = $region87
    $region86: #{tpu_custom_call.1} parent=1 // pred_region
      %4660 = vsyncadd %s263, 1024
    $region87: #{tpu_custom_call.1} parent=1 // pred_fallthru
      _
    %s4661 = smul.u32 %s298, 1
    %s4662 = sshll.u32 %s4661, 4
    %4663 = dma.done [#allocation3], %s4662
    %v4664 = vld [vmem:[#allocation2] sm:$0xff]
    %v4665 = vld [vmem:[#allocation2 + $0x20] sm:$0xff]
    %v4666 = vld [vmem:[#allocation2 + $0x40] sm:$0xff]
    %v4667 = vld [vmem:[#allocation2 + $0x60] sm:$0xff]
    %v4668 = vld [vmem:[#allocation2 + $0x80] sm:$0xff]
    %v4669 = vld [vmem:[#allocation2 + $0xa0] sm:$0xff]
    %v4670 = vld [vmem:[#allocation2 + $0xc0] sm:$0xff]
    %v4671 = vld [vmem:[#allocation2 + $0xe0] sm:$0xff]
    %v4672 = vld [vmem:[#allocation2 + $0x100] sm:$0xff]
    %v4673 = vld [vmem:[#allocation2 + $0x120] sm:$0xff]
    %v4674 = vld [vmem:[#allocation2 + $0x140] sm:$0xff]
    %v4675 = vld [vmem:[#allocation2 + $0x160] sm:$0xff]
    %v4676 = vld [vmem:[#allocation2 + $0x180] sm:$0xff]
    %v4677 = vld [vmem:[#allocation2 + $0x1a0] sm:$0xff]
    %v4678 = vld [vmem:[#allocation2 + $0x1c0] sm:$0xff]
    %v4679 = vld [vmem:[#allocation2 + $0x1e0] sm:$0xff]
    %v4680 = vpack.c.bf16 %v4589, %v4587
    %v4681 = vpack.c.bf16 %v4590, %v4588
    %4682 = vmatprep.subr.bf16.mxu0 0
    %4683 = vmatpush1.bf16.msra.mxu0 %v4664
    %4684 = vmatprep.subr.bf16.mxu0 0
    %4685 = vmatpush1.bf16.msra.mxu0 %v4665
    %4686 = vmatprep.subr.bf16.mxu0 0
    %4687 = vmatpush1.bf16.msra.mxu0 %v4666
    %4688 = vmatprep.subr.bf16.mxu0 0
    %4689 = vmatpush1.bf16.msra.mxu0 %v4667
    %4690 = vmatprep.subr.bf16.mxu0 0
    %4691 = vmatpush1.bf16.msra.mxu0 %v4668
    %4692 = vmatprep.subr.bf16.mxu0 0
    %4693 = vmatpush1.bf16.msra.mxu0 %v4669
    %4694 = vmatprep.subr.bf16.mxu0 0
    %4695 = vmatpush1.bf16.msra.mxu0 %v4670
    %4696 = vmatprep.subr.bf16.mxu0 0
    %4697 = vmatpush1.bf16.msra.mxu0 %v4671
    %4698 = vmatprep.subr.bf16.mxu0 0
    %4699 = vmatpush1.bf16.msra.mxu0 %v4672
    %4700 = vmatprep.subr.bf16.mxu0 0
    %4701 = vmatpush1.bf16.msra.mxu0 %v4673
    %4702 = vmatprep.subr.bf16.mxu0 0
    %4703 = vmatpush1.bf16.msra.mxu0 %v4674
    %4704 = vmatprep.subr.bf16.mxu0 0
    %4705 = vmatpush1.bf16.msra.mxu0 %v4675
    %4706 = vmatprep.subr.bf16.mxu0 0
    %4707 = vmatpush1.bf16.msra.mxu0 %v4676
    %4708 = vmatprep.subr.bf16.mxu0 0
    %4709 = vmatpush1.bf16.msra.mxu0 %v4677
    %4710 = vmatprep.subr.bf16.mxu0 0
    %4711 = vmatpush1.bf16.msra.mxu0 %v4678
    %4712 = vmatprep.subr.bf16.mxu0 0
    %4713 = vmatpush1.bf16.msra.mxu0 %v4679
    %4714 = vmatprep.mubr.bf16.mxu0 %v4681
    %4715 = vmatmul.mubr.bf16.gmra.mrb[0].mxu0 %v4680
    %v4716 = vpop.f32.mrb[0].mxu0
    %v4717 = vadd.f32 0.0, %v4716
    %v4718 = vpop.f32.mrb[0].mxu0
    %v4719 = vpop.f32.mrb[0].mxu0
    %v4720 = vadd.f32 0.0, %v4719
    %v4721 = vpop.f32.mrb[0].mxu0
    %4722 = vdwg.mxu0
    %4723 = vmatprep.subr.mxu0 0.0
    %4724 = vmatpush1.msra.mxu0 %v4717
    %4725 = vmatprep.subr.mxu0 0.0
    %4726 = vmatpush1.msra.mxu0 %v4720
    %4727 = vmatprep.subr.mxu0 0.0
    %4728 = vmatpush1.msra.mxu0 0.0
    %4729 = vmatprep.subr.mxu0 0.0
    %4730 = vmatpush1.msra.mxu0 0.0
    %4731 = vmatprep.subr.mxu0 0.0
    %4732 = vmatpush1.msra.mxu0 0.0
    %4733 = vmatprep.subr.mxu0 0.0
    %4734 = vmatpush1.msra.mxu0 0.0
    %4735 = vmatprep.subr.mxu0 0.0
    %4736 = vmatpush1.msra.mxu0 0.0
    %4737 = vmatprep.subr.mxu0 0.0
    %4738 = vmatpush1.msra.mxu0 0.0
    %4739 = vmatprep.subr.mxu0 0.0
    %4740 = vmatpush1.msra.mxu0 0.0
    %4741 = vmatprep.subr.mxu0 0.0
    %4742 = vmatpush1.msra.mxu0 0.0
    %4743 = vmatprep.subr.mxu0 0.0
    %4744 = vmatpush1.msra.mxu0 0.0
    %4745 = vmatprep.subr.mxu0 0.0
    %4746 = vmatpush1.msra.mxu0 0.0
    %4747 = vmatprep.subr.mxu0 0.0
    %4748 = vmatpush1.msra.mxu0 0.0
    %4749 = vmatprep.subr.mxu0 0.0
    %4750 = vmatpush1.msra.mxu0 0.0
    %4751 = vmatprep.subr.mxu0 0.0
    %4752 = vmatpush1.msra.mxu0 0.0
    %4753 = vmatprep.subr.mxu0 0.0
    %4754 = vmatpush1.msra.mxu0 0.0
    %4755 = vmatprep.subr.mxu0 0.0
    %4756 = vmatpush1.msra.mxu0 0.0
    %4757 = vmatprep.subr.mxu0 0.0
    %4758 = vmatpush1.msra.mxu0 0.0
    %4759 = vmatprep.subr.mxu0 0.0
    %4760 = vmatpush1.msra.mxu0 0.0
    %4761 = vmatprep.subr.mxu0 0.0
    %4762 = vmatpush1.msra.mxu0 0.0
    %4763 = vmatprep.subr.mxu0 0.0
    %4764 = vmatpush1.msra.mxu0 0.0
    %4765 = vmatprep.subr.mxu0 0.0
    %4766 = vmatpush1.msra.mxu0 0.0
    %4767 = vmatprep.subr.mxu0 0.0
    %4768 = vmatpush1.msra.mxu0 0.0
    %4769 = vmatprep.subr.mxu0 0.0
    %4770 = vmatpush1.msra.mxu0 0.0
    %4771 = vmatprep.subr.mxu0 0.0
    %4772 = vmatpush1.msra.mxu0 0.0
    %4773 = vmatprep.subr.mxu0 0.0
    %4774 = vmatpush1.msra.mxu0 0.0
    %4775 = vmatprep.subr.mxu0 0.0
    %4776 = vmatpush1.msra.mxu0 0.0
    %4777 = vmatprep.subr.mxu0 0.0
    %4778 = vmatpush1.msra.mxu0 0.0
    %4779 = vmatprep.subr.mxu0 0.0
    %4780 = vmatpush1.msra.mxu0 0.0
    %4781 = vmatprep.subr.mxu0 0.0
    %4782 = vmatpush1.msra.mxu0 0.0
    %4783 = vmatprep.subr.mxu0 0.0
    %4784 = vmatpush1.msra.mxu0 0.0
    %4785 = vmatprep.subr.mxu0 0.0
    %4786 = vmatpush1.msra.mxu0 0.0
    %4787 = vmatprep.mubr.f32.mxu0 0.0
    %4788 = vmatmul.mubr.f32.gmra.mrb[0].mxu0 %v934
    %v4789 = vpop.f32.mrb[0].mxu0
    %v4790 = vadd.f32 0.0, %v4789
    %v4791 = vpop.f32.mrb[0].mxu0
    %4792 = vmatprep.mubr.f32.mxu0 0.0
    %4793 = vmatmul.mubr.f32.gmra.mrb[0].mxu0 %v937
    %v4794 = vpop.f32.mrb[0].mxu0
    %v4795 = vadd.f32 0.0, %v4794
    %v4796 = vpop.f32.mrb[0].mxu0
    %4797 = vdwg.mxu0
    %4798 = vadd.xlane.f32.xlu0 %v4790
    %v4799 = vpop.xlane.xlu0 %4798
    %4800 = vadd.xlane.f32.xlu0 %v4795
    %v4801 = vpop.xlane.xlu0 %4800
    %v4802 = vmul.f32 %v4790, %v4790
    %v4803 = vmul.f32 %v4795, %v4795
    %4804 = vadd.xlane.f32.xlu0 %v4802
    %v4805 = vpop.xlane.xlu0 %4804
    %4806 = vadd.xlane.f32.xlu0 %v4803
    %v4807 = vpop.xlane.xlu0 %4806
    %v4808 = vadd.f32 %v4799, %v4801
    %v4809 = vadd.f32 %v4805, %v4807
    %v4810 = vmul.f32 %v4808, 0.00390625
    %v4811 = vmul.f32 %v4809, 0.00390625
    %v4812 = vmul.f32 %v4810, %v4810
    %v4813 = vsub.f32 %v4811, %v4812
    %v4814 = vmax.f32 %v4813, 0.0
    %v4815 = vadd.f32 %v4814, 1e-05
    %v4816 = vrsqrt.pop %v4815
    %v4817 = vmul.f32 %v260, %v4816
    %v4818 = vmul.f32 %v4810, %v4817
    %v4819 = vsub.f32 %v261, %v4818
    %4821 = vset.pattern.permute.xlu0 8
    %4822 = vperm.xlu0 %4821, %v4817
    %v4823 = vpop.permute.xlu0 %4822
    %v4825 = vmul.f32 %v4790, %v4823
    %v4826 = vmul.f32 %v4795, %v4823
    %4828 = vset.pattern.permute.xlu0 8
    %4829 = vperm.xlu0 %4828, %v4819
    %v4830 = vpop.permute.xlu0 %4829
    %v4832 = vadd.f32 %v4825, %v4830
    %v4833 = vadd.f32 %v4826, %v4830
    %v4834 = vmax.f32 %v4832, 0.0
    %v4835 = vmax.f32 %v4833, 0.0
    %v4836 = vand.u32 2147483647, %v4832
    %v4837 = vand.u32 2147483647, %v4833
    %v4838 = vsub.f32 0.0, %v4836
    %v4839 = vsub.f32 0.0, %v4837
    %v4840 = vmul.f32 %v4838, 1.442695
    %v4841 = vpow.pop %v4840
    %v4842 = vmul.f32 %v4839, 1.442695
    %v4843 = vpow.pop %v4842
    %v4844 = vadd.f32 %v4841, 1.0
    %v4845 = vlog2.pop %v4844
    %v4846 = vmul.f32 %v4845, 0.6931472
    %v4847 = vmul.f32 -0.5, %v4841
    %v4848 = vadd.f32 %v4847, 1.0
    %v4849 = vmul.f32 %v4848, %v4841
    %v4850 = vand.u32 2147483647, %v4841
    %vm4851 = vcmp.lt.f32.partialorder %v4850, 0.0004427343
    %v4852 = vsel %vm4851, %v4849, %v4846
    %v4853 = vadd.f32 %v4843, 1.0
    %v4854 = vlog2.pop %v4853
    %v4855 = vmul.f32 %v4854, 0.6931472
    %v4856 = vmul.f32 -0.5, %v4843
    %v4857 = vadd.f32 %v4856, 1.0
    %v4858 = vmul.f32 %v4857, %v4843
    %v4859 = vand.u32 2147483647, %v4843
    %vm4860 = vcmp.lt.f32.partialorder %v4859, 0.0004427343
    %v4861 = vsel %vm4860, %v4858, %v4855
    %v4862 = vadd.f32 %v4834, %v4852
    %v4863 = vadd.f32 %v4835, %v4861
    %s4865 = sshll.u32 [#allocation2], 4
    %s4866 = int_to_ptr.vmem [resolvable:$true] %s4865
    %4868 = dma.hbm_to_vmem [thread:$0]  %s14, 1024, %s4866, [#allocation3], 128, 512, 8
    %s4869 = smul.u32 4, 16
    %s4870 = smul.u32 %s4869, 1
    %s4871 = sshll.u32 %s4870, 4
    %4872 = dma.done %s263, %s4871
    %v4873 = vld [vmem:[#allocation2 + $0x800] sm:$0xff]
    %v4874 = vld [vmem:[#allocation2 + $0x820] sm:$0xff]
    %v4875 = vld [vmem:[#allocation2 + $0x840] sm:$0xff]
    %v4876 = vld [vmem:[#allocation2 + $0x860] sm:$0xff]
    %v4877 = vld [vmem:[#allocation2 + $0x880] sm:$0xff]
    %v4878 = vld [vmem:[#allocation2 + $0x8a0] sm:$0xff]
    %v4879 = vld [vmem:[#allocation2 + $0x8c0] sm:$0xff]
    %v4880 = vld [vmem:[#allocation2 + $0x8e0] sm:$0xff]
    %v4881 = vpack.c.bf16 %v4863, %v4862
    %4882 = vmatprep.subr.bf16.mxu0 0
    %4883 = vmatpush1.bf16.msra.mxu0 %v4873
    %4884 = vmatprep.subr.bf16.mxu0 0
    %4885 = vmatpush1.bf16.msra.mxu0 %v4874
    %4886 = vmatprep.subr.bf16.mxu0 0
    %4887 = vmatpush1.bf16.msra.mxu0 %v4875
    %4888 = vmatprep.subr.bf16.mxu0 0
    %4889 = vmatpush1.bf16.msra.mxu0 %v4876
    %4890 = vmatprep.subr.bf16.mxu0 0
    %4891 = vmatpush1.bf16.msra.mxu0 %v4877
    %4892 = vmatprep.subr.bf16.mxu0 0
    %4893 = vmatpush1.bf16.msra.mxu0 %v4878
    %4894 = vmatprep.subr.bf16.mxu0 0
    %4895 = vmatpush1.bf16.msra.mxu0 %v4879
    %4896 = vmatprep.subr.bf16.mxu0 0
    %4897 = vmatpush1.bf16.msra.mxu0 %v4880
    %4898 = vmatprep.subr.bf16.mxu0 0
    %4899 = vmatpush1.bf16.msra.mxu0 0
    %4900 = vmatprep.subr.bf16.mxu0 0
    %4901 = vmatpush1.bf16.msra.mxu0 0
    %4902 = vmatprep.subr.bf16.mxu0 0
    %4903 = vmatpush1.bf16.msra.mxu0 0
    %4904 = vmatprep.subr.bf16.mxu0 0
    %4905 = vmatpush1.bf16.msra.mxu0 0
    %4906 = vmatprep.subr.bf16.mxu0 0
    %4907 = vmatpush1.bf16.msra.mxu0 0
    %4908 = vmatprep.subr.bf16.mxu0 0
    %4909 = vmatpush1.bf16.msra.mxu0 0
    %4910 = vmatprep.subr.bf16.mxu0 0
    %4911 = vmatpush1.bf16.msra.mxu0 0
    %4912 = vmatprep.subr.bf16.mxu0 0
    %4913 = vmatpush1.bf16.msra.mxu0 0
    %4914 = vmatprep.mubr.bf16.mxu0 0
    %4915 = vmatmul.mubr.bf16.gmra.mrb[0].mxu0 %v4881
    %v4916 = vpop.f32.mrb[0].mxu0
    %v4917 = vadd.f32 0.0, %v4916
    %v4918 = vpop.f32.mrb[0].mxu0
    %v4919 = vpop.f32.mrb[0].mxu0
    %v4920 = vadd.f32 0.0, %v4919
    %v4921 = vpop.f32.mrb[0].mxu0
    %4922 = vdwg.mxu0
    %4923 = vmatprep.subr.mxu0 0.0
    %4924 = vmatpush1.msra.mxu0 %v4917
    %4925 = vmatprep.subr.mxu0 0.0
    %4926 = vmatpush1.msra.mxu0 %v4920
    %4927 = vmatprep.subr.mxu0 0.0
    %4928 = vmatpush1.msra.mxu0 0.0
    %4929 = vmatprep.subr.mxu0 0.0
    %4930 = vmatpush1.msra.mxu0 0.0
    %4931 = vmatprep.subr.mxu0 0.0
    %4932 = vmatpush1.msra.mxu0 0.0
    %4933 = vmatprep.subr.mxu0 0.0
    %4934 = vmatpush1.msra.mxu0 0.0
    %4935 = vmatprep.subr.mxu0 0.0
    %4936 = vmatpush1.msra.mxu0 0.0
    %4937 = vmatprep.subr.mxu0 0.0
    %4938 = vmatpush1.msra.mxu0 0.0
    %4939 = vmatprep.subr.mxu0 0.0
    %4940 = vmatpush1.msra.mxu0 0.0
    %4941 = vmatprep.subr.mxu0 0.0
    %4942 = vmatpush1.msra.mxu0 0.0
    %4943 = vmatprep.subr.mxu0 0.0
    %4944 = vmatpush1.msra.mxu0 0.0
    %4945 = vmatprep.subr.mxu0 0.0
    %4946 = vmatpush1.msra.mxu0 0.0
    %4947 = vmatprep.subr.mxu0 0.0
    %4948 = vmatpush1.msra.mxu0 0.0
    %4949 = vmatprep.subr.mxu0 0.0
    %4950 = vmatpush1.msra.mxu0 0.0
    %4951 = vmatprep.subr.mxu0 0.0
    %4952 = vmatpush1.msra.mxu0 0.0
    %4953 = vmatprep.subr.mxu0 0.0
    %4954 = vmatpush1.msra.mxu0 0.0
    %4955 = vmatprep.subr.mxu0 0.0
    %4956 = vmatpush1.msra.mxu0 0.0
    %4957 = vmatprep.subr.mxu0 0.0
    %4958 = vmatpush1.msra.mxu0 0.0
    %4959 = vmatprep.subr.mxu0 0.0
    %4960 = vmatpush1.msra.mxu0 0.0
    %4961 = vmatprep.subr.mxu0 0.0
    %4962 = vmatpush1.msra.mxu0 0.0
    %4963 = vmatprep.subr.mxu0 0.0
    %4964 = vmatpush1.msra.mxu0 0.0
    %4965 = vmatprep.subr.mxu0 0.0
    %4966 = vmatpush1.msra.mxu0 0.0
    %4967 = vmatprep.subr.mxu0 0.0
    %4968 = vmatpush1.msra.mxu0 0.0
    %4969 = vmatprep.subr.mxu0 0.0
    %4970 = vmatpush1.msra.mxu0 0.0
    %4971 = vmatprep.subr.mxu0 0.0
    %4972 = vmatpush1.msra.mxu0 0.0
    %4973 = vmatprep.subr.mxu0 0.0
    %4974 = vmatpush1.msra.mxu0 0.0
    %4975 = vmatprep.subr.mxu0 0.0
    %4976 = vmatpush1.msra.mxu0 0.0
    %4977 = vmatprep.subr.mxu0 0.0
    %4978 = vmatpush1.msra.mxu0 0.0
    %4979 = vmatprep.subr.mxu0 0.0
    %4980 = vmatpush1.msra.mxu0 0.0
    %4981 = vmatprep.subr.mxu0 0.0
    %4982 = vmatpush1.msra.mxu0 0.0
    %4983 = vmatprep.subr.mxu0 0.0
    %4984 = vmatpush1.msra.mxu0 0.0
    %4985 = vmatprep.subr.mxu0 0.0
    %4986 = vmatpush1.msra.mxu0 0.0
    %4987 = vmatprep.mubr.f32.mxu0 0.0
    %4988 = vmatmul.mubr.f32.gmra.mrb[0].mxu0 %v934
    %v4989 = vpop.f32.mrb[0].mxu0
    %v4990 = vadd.f32 0.0, %v4989
    %v4991 = vpop.f32.mrb[0].mxu0
    %4992 = vmatprep.mubr.f32.mxu0 0.0
    %4993 = vmatmul.mubr.f32.gmra.mrb[0].mxu0 %v937
    %v4994 = vpop.f32.mrb[0].mxu0
    %v4995 = vadd.f32 0.0, %v4994
    %v4996 = vpop.f32.mrb[0].mxu0
    %4997 = vdwg.mxu0
    %4998 = vadd.xlane.f32.xlu0 %v4990
    %v4999 = vpop.xlane.xlu0 %4998
    %5000 = vadd.xlane.f32.xlu0 %v4995
    %v5001 = vpop.xlane.xlu0 %5000
    %v5002 = vmul.f32 %v4990, %v4990
    %v5003 = vmul.f32 %v4995, %v4995
    %5004 = vadd.xlane.f32.xlu0 %v5002
    %v5005 = vpop.xlane.xlu0 %5004
    %5006 = vadd.xlane.f32.xlu0 %v5003
    %v5007 = vpop.xlane.xlu0 %5006
    %v5008 = vadd.f32 %v4999, %v5001
    %v5009 = vadd.f32 %v5005, %v5007
    %v5010 = vmul.f32 %v5008, 0.00390625
    %v5011 = vmul.f32 %v5009, 0.00390625
    %v5012 = vmul.f32 %v5010, %v5010
    %v5013 = vsub.f32 %v5011, %v5012
    %v5014 = vmax.f32 %v5013, 0.0
    %v5015 = vadd.f32 %v5014, 1e-05
    %v5016 = vrsqrt.pop %v5015
    %v5017 = vmul.f32 %v260, %v5016
    %v5018 = vmul.f32 %v5010, %v5017
    %v5019 = vsub.f32 %v261, %v5018
    %5021 = vset.pattern.permute.xlu0 9
    %5022 = vperm.xlu0 %5021, %v5017
    %v5023 = vpop.permute.xlu0 %5022
    %v5025 = vmul.f32 %v4990, %v5023
    %v5026 = vmul.f32 %v4995, %v5023
    %5028 = vset.pattern.permute.xlu0 9
    %5029 = vperm.xlu0 %5028, %v5019
    %v5030 = vpop.permute.xlu0 %5029
    %v5032 = vadd.f32 %v5025, %v5030
    %v5033 = vadd.f32 %v5026, %v5030
    %v5034 = vadd.f32 %v5032, %v4862
    %v5035 = vadd.f32 %v5033, %v4863
    %v5036 = vmax.f32 %v5034, 0.0
    %v5037 = vmax.f32 %v5035, 0.0
    %v5038 = vand.u32 2147483647, %v5034
    %v5039 = vand.u32 2147483647, %v5035
    %v5040 = vsub.f32 0.0, %v5038
    %v5041 = vsub.f32 0.0, %v5039
    %v5042 = vmul.f32 %v5040, 1.442695
    %v5043 = vpow.pop %v5042
    %v5044 = vmul.f32 %v5041, 1.442695
    %v5045 = vpow.pop %v5044
    %v5046 = vadd.f32 %v5043, 1.0
    %v5047 = vlog2.pop %v5046
    %v5048 = vmul.f32 %v5047, 0.6931472
    %v5049 = vmul.f32 -0.5, %v5043
    %v5050 = vadd.f32 %v5049, 1.0
    %v5051 = vmul.f32 %v5050, %v5043
    %v5052 = vand.u32 2147483647, %v5043
    %vm5053 = vcmp.lt.f32.partialorder %v5052, 0.0004427343
    %v5054 = vsel %vm5053, %v5051, %v5048
    %v5055 = vadd.f32 %v5045, 1.0
    %v5056 = vlog2.pop %v5055
    %v5057 = vmul.f32 %v5056, 0.6931472
    %v5058 = vmul.f32 -0.5, %v5045
    %v5059 = vadd.f32 %v5058, 1.0
    %v5060 = vmul.f32 %v5059, %v5045
    %v5061 = vand.u32 2147483647, %v5045
    %vm5062 = vcmp.lt.f32.partialorder %v5061, 0.0004427343
    %v5063 = vsel %vm5062, %v5060, %v5057
    %v5064 = vadd.f32 %v5036, %v5054
    %v5065 = vadd.f32 %v5037, %v5063
    %s5067 = sshll.u32 %s262, 4
    %s5068 = int_to_ptr.vmem [resolvable:$true] %s5067
    %5070 = dma.hbm_to_vmem [thread:$0]  %s15, 1024, %s5068, %s263, 128, 512, 8
    %s5071 = sshll.u32 %s4870, 4
    %5072 = dma.done [#allocation3], %s5071
    %v5073 = vld [vmem:[#allocation2] sm:$0xff]
    %v5074 = vld [vmem:[#allocation2 + $0x20] sm:$0xff]
    %v5075 = vld [vmem:[#allocation2 + $0x40] sm:$0xff]
    %v5076 = vld [vmem:[#allocation2 + $0x60] sm:$0xff]
    %v5077 = vld [vmem:[#allocation2 + $0x80] sm:$0xff]
    %v5078 = vld [vmem:[#allocation2 + $0xa0] sm:$0xff]
    %v5079 = vld [vmem:[#allocation2 + $0xc0] sm:$0xff]
    %v5080 = vld [vmem:[#allocation2 + $0xe0] sm:$0xff]
    %v5081 = vpack.c.bf16 %v5065, %v5064
    %5082 = vmatprep.subr.bf16.mxu0 0
    %5083 = vmatpush1.bf16.msra.mxu0 %v5073
    %5084 = vmatprep.subr.bf16.mxu0 0
    %5085 = vmatpush1.bf16.msra.mxu0 %v5074
    %5086 = vmatprep.subr.bf16.mxu0 0
    %5087 = vmatpush1.bf16.msra.mxu0 %v5075
    %5088 = vmatprep.subr.bf16.mxu0 0
    %5089 = vmatpush1.bf16.msra.mxu0 %v5076
    %5090 = vmatprep.subr.bf16.mxu0 0
    %5091 = vmatpush1.bf16.msra.mxu0 %v5077
    %5092 = vmatprep.subr.bf16.mxu0 0
    %5093 = vmatpush1.bf16.msra.mxu0 %v5078
    %5094 = vmatprep.subr.bf16.mxu0 0
    %5095 = vmatpush1.bf16.msra.mxu0 %v5079
    %5096 = vmatprep.subr.bf16.mxu0 0
    %5097 = vmatpush1.bf16.msra.mxu0 %v5080
    %5098 = vmatprep.subr.bf16.mxu0 0
    %5099 = vmatpush1.bf16.msra.mxu0 0
    %5100 = vmatprep.subr.bf16.mxu0 0
    %5101 = vmatpush1.bf16.msra.mxu0 0
    %5102 = vmatprep.subr.bf16.mxu0 0
    %5103 = vmatpush1.bf16.msra.mxu0 0
    %5104 = vmatprep.subr.bf16.mxu0 0
    %5105 = vmatpush1.bf16.msra.mxu0 0
    %5106 = vmatprep.subr.bf16.mxu0 0
    %5107 = vmatpush1.bf16.msra.mxu0 0
    %5108 = vmatprep.subr.bf16.mxu0 0
    %5109 = vmatpush1.bf16.msra.mxu0 0
    %5110 = vmatprep.subr.bf16.mxu0 0
    %5111 = vmatpush1.bf16.msra.mxu0 0
    %5112 = vmatprep.subr.bf16.mxu0 0
    %5113 = vmatpush1.bf16.msra.mxu0 0
    %5114 = vmatprep.mubr.bf16.mxu0 0
    %5115 = vmatmul.mubr.bf16.gmra.mrb[0].mxu0 %v5081
    %v5116 = vpop.f32.mrb[0].mxu0
    %v5117 = vadd.f32 0.0, %v5116
    %v5118 = vpop.f32.mrb[0].mxu0
    %v5119 = vpop.f32.mrb[0].mxu0
    %v5120 = vadd.f32 0.0, %v5119
    %v5121 = vpop.f32.mrb[0].mxu0
    %5122 = vdwg.mxu0
    %5123 = vmatprep.subr.mxu0 0.0
    %5124 = vmatpush1.msra.mxu0 %v5117
    %5125 = vmatprep.subr.mxu0 0.0
    %5126 = vmatpush1.msra.mxu0 %v5120
    %5127 = vmatprep.subr.mxu0 0.0
    %5128 = vmatpush1.msra.mxu0 0.0
    %5129 = vmatprep.subr.mxu0 0.0
    %5130 = vmatpush1.msra.mxu0 0.0
    %5131 = vmatprep.subr.mxu0 0.0
    %5132 = vmatpush1.msra.mxu0 0.0
    %5133 = vmatprep.subr.mxu0 0.0
    %5134 = vmatpush1.msra.mxu0 0.0
    %5135 = vmatprep.subr.mxu0 0.0
    %5136 = vmatpush1.msra.mxu0 0.0
    %5137 = vmatprep.subr.mxu0 0.0
    %5138 = vmatpush1.msra.mxu0 0.0
    %5139 = vmatprep.subr.mxu0 0.0
    %5140 = vmatpush1.msra.mxu0 0.0
    %5141 = vmatprep.subr.mxu0 0.0
    %5142 = vmatpush1.msra.mxu0 0.0
    %5143 = vmatprep.subr.mxu0 0.0
    %5144 = vmatpush1.msra.mxu0 0.0
    %5145 = vmatprep.subr.mxu0 0.0
    %5146 = vmatpush1.msra.mxu0 0.0
    %5147 = vmatprep.subr.mxu0 0.0
    %5148 = vmatpush1.msra.mxu0 0.0
    %5149 = vmatprep.subr.mxu0 0.0
    %5150 = vmatpush1.msra.mxu0 0.0
    %5151 = vmatprep.subr.mxu0 0.0
    %5152 = vmatpush1.msra.mxu0 0.0
    %5153 = vmatprep.subr.mxu0 0.0
    %5154 = vmatpush1.msra.mxu0 0.0
    %5155 = vmatprep.subr.mxu0 0.0
    %5156 = vmatpush1.msra.mxu0 0.0
    %5157 = vmatprep.subr.mxu0 0.0
    %5158 = vmatpush1.msra.mxu0 0.0
    %5159 = vmatprep.subr.mxu0 0.0
    %5160 = vmatpush1.msra.mxu0 0.0
    %5161 = vmatprep.subr.mxu0 0.0
    %5162 = vmatpush1.msra.mxu0 0.0
    %5163 = vmatprep.subr.mxu0 0.0
    %5164 = vmatpush1.msra.mxu0 0.0
    %5165 = vmatprep.subr.mxu0 0.0
    %5166 = vmatpush1.msra.mxu0 0.0
    %5167 = vmatprep.subr.mxu0 0.0
    %5168 = vmatpush1.msra.mxu0 0.0
    %5169 = vmatprep.subr.mxu0 0.0
    %5170 = vmatpush1.msra.mxu0 0.0
    %5171 = vmatprep.subr.mxu0 0.0
    %5172 = vmatpush1.msra.mxu0 0.0
    %5173 = vmatprep.subr.mxu0 0.0
    %5174 = vmatpush1.msra.mxu0 0.0
    %5175 = vmatprep.subr.mxu0 0.0
    %5176 = vmatpush1.msra.mxu0 0.0
    %5177 = vmatprep.subr.mxu0 0.0
    %5178 = vmatpush1.msra.mxu0 0.0
    %5179 = vmatprep.subr.mxu0 0.0
    %5180 = vmatpush1.msra.mxu0 0.0
    %5181 = vmatprep.subr.mxu0 0.0
    %5182 = vmatpush1.msra.mxu0 0.0
    %5183 = vmatprep.subr.mxu0 0.0
    %5184 = vmatpush1.msra.mxu0 0.0
    %5185 = vmatprep.subr.mxu0 0.0
    %5186 = vmatpush1.msra.mxu0 0.0
    %5187 = vmatprep.mubr.f32.mxu0 0.0
    %5188 = vmatmul.mubr.f32.gmra.mrb[0].mxu0 %v934
    %v5189 = vpop.f32.mrb[0].mxu0
    %v5190 = vadd.f32 0.0, %v5189
    %v5191 = vpop.f32.mrb[0].mxu0
    %5192 = vmatprep.mubr.f32.mxu0 0.0
    %5193 = vmatmul.mubr.f32.gmra.mrb[0].mxu0 %v937
    %v5194 = vpop.f32.mrb[0].mxu0
    %v5195 = vadd.f32 0.0, %v5194
    %v5196 = vpop.f32.mrb[0].mxu0
    %5197 = vdwg.mxu0
    %5198 = vadd.xlane.f32.xlu0 %v5190
    %v5199 = vpop.xlane.xlu0 %5198
    %5200 = vadd.xlane.f32.xlu0 %v5195
    %v5201 = vpop.xlane.xlu0 %5200
    %v5202 = vmul.f32 %v5190, %v5190
    %v5203 = vmul.f32 %v5195, %v5195
    %5204 = vadd.xlane.f32.xlu0 %v5202
    %v5205 = vpop.xlane.xlu0 %5204
    %5206 = vadd.xlane.f32.xlu0 %v5203
    %v5207 = vpop.xlane.xlu0 %5206
    %v5208 = vadd.f32 %v5199, %v5201
    %v5209 = vadd.f32 %v5205, %v5207
    %v5210 = vmul.f32 %v5208, 0.00390625
    %v5211 = vmul.f32 %v5209, 0.00390625
    %v5212 = vmul.f32 %v5210, %v5210
    %v5213 = vsub.f32 %v5211, %v5212
    %v5214 = vmax.f32 %v5213, 0.0
    %v5215 = vadd.f32 %v5214, 1e-05
    %v5216 = vrsqrt.pop %v5215
    %v5217 = vmul.f32 %v260, %v5216
    %v5218 = vmul.f32 %v5210, %v5217
    %v5219 = vsub.f32 %v261, %v5218
    %5221 = vset.pattern.permute.xlu0 10
    %5222 = vperm.xlu0 %5221, %v5217
    %v5223 = vpop.permute.xlu0 %5222
    %v5225 = vmul.f32 %v5190, %v5223
    %v5226 = vmul.f32 %v5195, %v5223
    %5228 = vset.pattern.permute.xlu0 10
    %5229 = vperm.xlu0 %5228, %v5219
    %v5230 = vpop.permute.xlu0 %5229
    %v5232 = vadd.f32 %v5225, %v5230
    %v5233 = vadd.f32 %v5226, %v5230
    %v5234 = vadd.f32 %v5232, %v4862
    %v5235 = vadd.f32 %v5233, %v4863
    %v5236 = vmax.f32 %v5234, 0.0
    %v5237 = vmax.f32 %v5235, 0.0
    %v5238 = vand.u32 2147483647, %v5234
    %v5239 = vand.u32 2147483647, %v5235
    %v5240 = vsub.f32 0.0, %v5238
    %v5241 = vsub.f32 0.0, %v5239
    %v5242 = vmul.f32 %v5240, 1.442695
    %v5243 = vpow.pop %v5242
    %v5244 = vmul.f32 %v5241, 1.442695
    %v5245 = vpow.pop %v5244
    %v5246 = vadd.f32 %v5243, 1.0
    %v5247 = vlog2.pop %v5246
    %v5248 = vmul.f32 %v5247, 0.6931472
    %v5249 = vmul.f32 -0.5, %v5243
    %v5250 = vadd.f32 %v5249, 1.0
    %v5251 = vmul.f32 %v5250, %v5243
    %v5252 = vand.u32 2147483647, %v5243
    %vm5253 = vcmp.lt.f32.partialorder %v5252, 0.0004427343
    %v5254 = vsel %vm5253, %v5251, %v5248
    %v5255 = vadd.f32 %v5245, 1.0
    %v5256 = vlog2.pop %v5255
    %v5257 = vmul.f32 %v5256, 0.6931472
    %v5258 = vmul.f32 -0.5, %v5245
    %v5259 = vadd.f32 %v5258, 1.0
    %v5260 = vmul.f32 %v5259, %v5245
    %v5261 = vand.u32 2147483647, %v5245
    %vm5262 = vcmp.lt.f32.partialorder %v5261, 0.0004427343
    %v5263 = vsel %vm5262, %v5260, %v5257
    %v5264 = vadd.f32 %v5236, %v5254
    %v5265 = vadd.f32 %v5237, %v5263
    %s5266 = sshll.u32 %s4870, 4
    %5267 = dma.done %s263, %s5266
    %v5268 = vld [vmem:[#allocation2 + $0x800] sm:$0xff]
    %v5269 = vld [vmem:[#allocation2 + $0x820] sm:$0xff]
    %v5270 = vld [vmem:[#allocation2 + $0x840] sm:$0xff]
    %v5271 = vld [vmem:[#allocation2 + $0x860] sm:$0xff]
    %v5272 = vld [vmem:[#allocation2 + $0x880] sm:$0xff]
    %v5273 = vld [vmem:[#allocation2 + $0x8a0] sm:$0xff]
    %v5274 = vld [vmem:[#allocation2 + $0x8c0] sm:$0xff]
    %v5275 = vld [vmem:[#allocation2 + $0x8e0] sm:$0xff]
    %v5276 = vpack.c.bf16 %v5265, %v5264
    %5277 = vmatprep.subr.bf16.mxu0 0
    %5278 = vmatpush1.bf16.msra.mxu0 %v5268
    %5279 = vmatprep.subr.bf16.mxu0 0
    %5280 = vmatpush1.bf16.msra.mxu0 %v5269
    %5281 = vmatprep.subr.bf16.mxu0 0
    %5282 = vmatpush1.bf16.msra.mxu0 %v5270
    %5283 = vmatprep.subr.bf16.mxu0 0
    %5284 = vmatpush1.bf16.msra.mxu0 %v5271
    %5285 = vmatprep.subr.bf16.mxu0 0
    %5286 = vmatpush1.bf16.msra.mxu0 %v5272
    %5287 = vmatprep.subr.bf16.mxu0 0
    %5288 = vmatpush1.bf16.msra.mxu0 %v5273
    %5289 = vmatprep.subr.bf16.mxu0 0
    %5290 = vmatpush1.bf16.msra.mxu0 %v5274
    %5291 = vmatprep.subr.bf16.mxu0 0
    %5292 = vmatpush1.bf16.msra.mxu0 %v5275
    %5293 = vmatprep.subr.bf16.mxu0 0
    %5294 = vmatpush1.bf16.msra.mxu0 0
    %5295 = vmatprep.subr.bf16.mxu0 0
    %5296 = vmatpush1.bf16.msra.mxu0 0
    %5297 = vmatprep.subr.bf16.mxu0 0
    %5298 = vmatpush1.bf16.msra.mxu0 0
    %5299 = vmatprep.subr.bf16.mxu0 0
    %5300 = vmatpush1.bf16.msra.mxu0 0
    %5301 = vmatprep.subr.bf16.mxu0 0
    %5302 = vmatpush1.bf16.msra.mxu0 0
    %5303 = vmatprep.subr.bf16.mxu0 0
    %5304 = vmatpush1.bf16.msra.mxu0 0
    %5305 = vmatprep.subr.bf16.mxu0 0
    %5306 = vmatpush1.bf16.msra.mxu0 0
    %5307 = vmatprep.subr.bf16.mxu0 0
    %5308 = vmatpush1.bf16.msra.mxu0 0
    %5309 = vmatprep.mubr.bf16.mxu0 0
    %5310 = vmatmul.mubr.bf16.gmra.mrb[0].mxu0 %v5276
    %v5311 = vpop.f32.mrb[0].mxu0
    %v5312 = vadd.f32 0.0, %v5311
    %v5313 = vpop.f32.mrb[0].mxu0
    %v5314 = vpop.f32.mrb[0].mxu0
    %v5315 = vadd.f32 0.0, %v5314
    %v5316 = vpop.f32.mrb[0].mxu0
    %5317 = vdwg.mxu0
    %5318 = vmatprep.subr.mxu0 0.0
    %5319 = vmatpush1.msra.mxu0 %v5312
    %5320 = vmatprep.subr.mxu0 0.0
    %5321 = vmatpush1.msra.mxu0 %v5315
    %5322 = vmatprep.subr.mxu0 0.0
    %5323 = vmatpush1.msra.mxu0 0.0
    %5324 = vmatprep.subr.mxu0 0.0
    %5325 = vmatpush1.msra.mxu0 0.0
    %5326 = vmatprep.subr.mxu0 0.0
    %5327 = vmatpush1.msra.mxu0 0.0
    %5328 = vmatprep.subr.mxu0 0.0
    %5329 = vmatpush1.msra.mxu0 0.0
    %5330 = vmatprep.subr.mxu0 0.0
    %5331 = vmatpush1.msra.mxu0 0.0
    %5332 = vmatprep.subr.mxu0 0.0
    %5333 = vmatpush1.msra.mxu0 0.0
    %5334 = vmatprep.subr.mxu0 0.0
    %5335 = vmatpush1.msra.mxu0 0.0
    %5336 = vmatprep.subr.mxu0 0.0
    %5337 = vmatpush1.msra.mxu0 0.0
    %5338 = vmatprep.subr.mxu0 0.0
    %5339 = vmatpush1.msra.mxu0 0.0
    %5340 = vmatprep.subr.mxu0 0.0
    %5341 = vmatpush1.msra.mxu0 0.0
    %5342 = vmatprep.subr.mxu0 0.0
    %5343 = vmatpush1.msra.mxu0 0.0
    %5344 = vmatprep.subr.mxu0 0.0
    %5345 = vmatpush1.msra.mxu0 0.0
    %5346 = vmatprep.subr.mxu0 0.0
    %5347 = vmatpush1.msra.mxu0 0.0
    %5348 = vmatprep.subr.mxu0 0.0
    %5349 = vmatpush1.msra.mxu0 0.0
    %5350 = vmatprep.subr.mxu0 0.0
    %5351 = vmatpush1.msra.mxu0 0.0
    %5352 = vmatprep.subr.mxu0 0.0
    %5353 = vmatpush1.msra.mxu0 0.0
    %5354 = vmatprep.subr.mxu0 0.0
    %5355 = vmatpush1.msra.mxu0 0.0
    %5356 = vmatprep.subr.mxu0 0.0
    %5357 = vmatpush1.msra.mxu0 0.0
    %5358 = vmatprep.subr.mxu0 0.0
    %5359 = vmatpush1.msra.mxu0 0.0
    %5360 = vmatprep.subr.mxu0 0.0
    %5361 = vmatpush1.msra.mxu0 0.0
    %5362 = vmatprep.subr.mxu0 0.0
    %5363 = vmatpush1.msra.mxu0 0.0
    %5364 = vmatprep.subr.mxu0 0.0
    %5365 = vmatpush1.msra.mxu0 0.0
    %5366 = vmatprep.subr.mxu0 0.0
    %5367 = vmatpush1.msra.mxu0 0.0
    %5368 = vmatprep.subr.mxu0 0.0
    %5369 = vmatpush1.msra.mxu0 0.0
    %5370 = vmatprep.subr.mxu0 0.0
    %5371 = vmatpush1.msra.mxu0 0.0
    %5372 = vmatprep.subr.mxu0 0.0
    %5373 = vmatpush1.msra.mxu0 0.0
    %5374 = vmatprep.subr.mxu0 0.0
    %5375 = vmatpush1.msra.mxu0 0.0
    %5376 = vmatprep.subr.mxu0 0.0
    %5377 = vmatpush1.msra.mxu0 0.0
    %5378 = vmatprep.subr.mxu0 0.0
    %5379 = vmatpush1.msra.mxu0 0.0
    %5380 = vmatprep.subr.mxu0 0.0
    %5381 = vmatpush1.msra.mxu0 0.0
    %5382 = vmatprep.mubr.f32.mxu0 0.0
    %5383 = vmatmul.mubr.f32.gmra.mrb[0].mxu0 %v934
    %v5384 = vpop.f32.mrb[0].mxu0
    %v5385 = vadd.f32 0.0, %v5384
    %v5386 = vpop.f32.mrb[0].mxu0
    %5387 = vmatprep.mubr.f32.mxu0 0.0
    %5388 = vmatmul.mubr.f32.gmra.mrb[0].mxu0 %v937
    %v5389 = vpop.f32.mrb[0].mxu0
    %v5390 = vadd.f32 0.0, %v5389
    %v5391 = vpop.f32.mrb[0].mxu0
    %5392 = vdwg.mxu0
    %5393 = vadd.xlane.f32.xlu0 %v5385
    %v5394 = vpop.xlane.xlu0 %5393
    %5395 = vadd.xlane.f32.xlu0 %v5390
    %v5396 = vpop.xlane.xlu0 %5395
    %v5397 = vmul.f32 %v5385, %v5385
    %v5398 = vmul.f32 %v5390, %v5390
    %5399 = vadd.xlane.f32.xlu0 %v5397
    %v5400 = vpop.xlane.xlu0 %5399
    %5401 = vadd.xlane.f32.xlu0 %v5398
    %v5402 = vpop.xlane.xlu0 %5401
    %v5403 = vadd.f32 %v5394, %v5396
    %v5404 = vadd.f32 %v5400, %v5402
    %v5405 = vmul.f32 %v5403, 0.00390625
    %v5406 = vmul.f32 %v5404, 0.00390625
    %v5407 = vmul.f32 %v5405, %v5405
    %v5408 = vsub.f32 %v5406, %v5407
    %v5409 = vmax.f32 %v5408, 0.0
    %v5410 = vadd.f32 %v5409, 1e-05
    %v5411 = vrsqrt.pop %v5410
    %v5412 = vmul.f32 %v260, %v5411
    %v5413 = vmul.f32 %v5405, %v5412
    %v5414 = vsub.f32 %v261, %v5413
    %5416 = vset.pattern.permute.xlu0 11
    %5417 = vperm.xlu0 %5416, %v5412
    %v5418 = vpop.permute.xlu0 %5417
    %v5420 = vmul.f32 %v5385, %v5418
    %v5421 = vmul.f32 %v5390, %v5418
    %5423 = vset.pattern.permute.xlu0 11
    %5424 = vperm.xlu0 %5423, %v5414
    %v5425 = vpop.permute.xlu0 %5424
    %v5427 = vadd.f32 %v5420, %v5425
    %v5428 = vadd.f32 %v5421, %v5425
    %v5429 = vadd.f32 %v5427, %v4862
    %v5430 = vadd.f32 %v5428, %v4863
    %v5431 = vmax.f32 %v5429, 0.0
    %v5432 = vmax.f32 %v5430, 0.0
    %v5433 = vand.u32 2147483647, %v5429
    %v5434 = vand.u32 2147483647, %v5430
    %v5435 = vsub.f32 0.0, %v5433
    %v5436 = vsub.f32 0.0, %v5434
    %v5437 = vmul.f32 %v5435, 1.442695
    %v5438 = vpow.pop %v5437
    %v5439 = vmul.f32 %v5436, 1.442695
    %v5440 = vpow.pop %v5439
    %v5441 = vadd.f32 %v5438, 1.0
    %v5442 = vlog2.pop %v5441
    %v5443 = vmul.f32 %v5442, 0.6931472
    %v5444 = vmul.f32 -0.5, %v5438
    %v5445 = vadd.f32 %v5444, 1.0
    %v5446 = vmul.f32 %v5445, %v5438
    %v5447 = vand.u32 2147483647, %v5438
    %vm5448 = vcmp.lt.f32.partialorder %v5447, 0.0004427343
    %v5449 = vsel %vm5448, %v5446, %v5443
    %v5450 = vadd.f32 %v5440, 1.0
    %v5451 = vlog2.pop %v5450
    %v5452 = vmul.f32 %v5451, 0.6931472
    %v5453 = vmul.f32 -0.5, %v5440
    %v5454 = vadd.f32 %v5453, 1.0
    %v5455 = vmul.f32 %v5454, %v5440
    %v5456 = vand.u32 2147483647, %v5440
    %vm5457 = vcmp.lt.f32.partialorder %v5456, 0.0004427343
    %v5458 = vsel %vm5457, %v5455, %v5452
    %v5459 = vadd.f32 %v5431, %v5449
    %v5460 = vadd.f32 %v5432, %v5458
    %v5461 = vld [vmem:[%s16] sm:$0xff]
    %v5462 = vld [vmem:[%s16 + $0x8] sm:$0xff]
    %v5463 = vld [vmem:[%s16 + $0x10] sm:$0xff]
    %v5464 = vld [vmem:[%s16 + $0x18] sm:$0xff]
    %v5465 = vld [vmem:[%s16 + $0x20] sm:$0xff]
    %v5466 = vld [vmem:[%s16 + $0x28] sm:$0xff]
    %v5467 = vld [vmem:[%s16 + $0x30] sm:$0xff]
    %v5468 = vld [vmem:[%s16 + $0x38] sm:$0xff]
    %v5469 = vld [vmem:[%s16 + $0x40] sm:$0xff]
    %v5470 = vld [vmem:[%s16 + $0x48] sm:$0xff]
    %v5471 = vld [vmem:[%s16 + $0x50] sm:$0xff]
    %v5472 = vld [vmem:[%s16 + $0x58] sm:$0xff]
    %v5473 = vld [vmem:[%s16 + $0x60] sm:$0xff]
    %v5474 = vld [vmem:[%s16 + $0x68] sm:$0xff]
    %v5475 = vld [vmem:[%s16 + $0x70] sm:$0xff]
    %v5476 = vld [vmem:[%s16 + $0x78] sm:$0xff]
    %5477 = vmatprep.subr.mxu0 0.0
    %5478 = vmatpush1.msra.mxu0 %v5461
    %5479 = vmatprep.subr.mxu0 0.0
    %5480 = vmatpush1.msra.mxu0 %v5462
    %5481 = vmatprep.subr.mxu0 0.0
    %5482 = vmatpush1.msra.mxu0 %v5463
    %5483 = vmatprep.subr.mxu0 0.0
    %5484 = vmatpush1.msra.mxu0 %v5464
    %5485 = vmatprep.subr.mxu0 0.0
    %5486 = vmatpush1.msra.mxu0 %v5465
    %5487 = vmatprep.subr.mxu0 0.0
    %5488 = vmatpush1.msra.mxu0 %v5466
    %5489 = vmatprep.subr.mxu0 0.0
    %5490 = vmatpush1.msra.mxu0 %v5467
    %5491 = vmatprep.subr.mxu0 0.0
    %5492 = vmatpush1.msra.mxu0 %v5468
    %5493 = vmatprep.subr.mxu0 0.0
    %5494 = vmatpush1.msra.mxu0 %v5469
    %5495 = vmatprep.subr.mxu0 0.0
    %5496 = vmatpush1.msra.mxu0 %v5470
    %5497 = vmatprep.subr.mxu0 0.0
    %5498 = vmatpush1.msra.mxu0 %v5471
    %5499 = vmatprep.subr.mxu0 0.0
    %5500 = vmatpush1.msra.mxu0 %v5472
    %5501 = vmatprep.subr.mxu0 0.0
    %5502 = vmatpush1.msra.mxu0 %v5473
    %5503 = vmatprep.subr.mxu0 0.0
    %5504 = vmatpush1.msra.mxu0 %v5474
    %5505 = vmatprep.subr.mxu0 0.0
    %5506 = vmatpush1.msra.mxu0 %v5475
    %5507 = vmatprep.subr.mxu0 0.0
    %5508 = vmatpush1.msra.mxu0 %v5476
    %5509 = vmatprep.subr.mxu0 0.0
    %5510 = vmatpush1.msra.mxu0 0.0
    %5511 = vmatprep.subr.mxu0 0.0
    %5512 = vmatpush1.msra.mxu0 0.0
    %5513 = vmatprep.subr.mxu0 0.0
    %5514 = vmatpush1.msra.mxu0 0.0
    %5515 = vmatprep.subr.mxu0 0.0
    %5516 = vmatpush1.msra.mxu0 0.0
    %5517 = vmatprep.subr.mxu0 0.0
    %5518 = vmatpush1.msra.mxu0 0.0
    %5519 = vmatprep.subr.mxu0 0.0
    %5520 = vmatpush1.msra.mxu0 0.0
    %5521 = vmatprep.subr.mxu0 0.0
    %5522 = vmatpush1.msra.mxu0 0.0
    %5523 = vmatprep.subr.mxu0 0.0
    %5524 = vmatpush1.msra.mxu0 0.0
    %5525 = vmatprep.subr.mxu0 0.0
    %5526 = vmatpush1.msra.mxu0 0.0
    %5527 = vmatprep.subr.mxu0 0.0
    %5528 = vmatpush1.msra.mxu0 0.0
    %5529 = vmatprep.subr.mxu0 0.0
    %5530 = vmatpush1.msra.mxu0 0.0
    %5531 = vmatprep.subr.mxu0 0.0
    %5532 = vmatpush1.msra.mxu0 0.0
    %5533 = vmatprep.subr.mxu0 0.0
    %5534 = vmatpush1.msra.mxu0 0.0
    %5535 = vmatprep.subr.mxu0 0.0
    %5536 = vmatpush1.msra.mxu0 0.0
    %5537 = vmatprep.subr.mxu0 0.0
    %5538 = vmatpush1.msra.mxu0 0.0
    %5539 = vmatprep.subr.mxu0 0.0
    %5540 = vmatpush1.msra.mxu0 0.0
    %5541 = vmatprep.mubr.f32.mxu0 0.0
    %5542 = vmatmul.mubr.f32.gmra.mrb[0].mxu0 %v5459
    %v5543 = vpop.f32.mrb[0].mxu0
    %v5544 = vadd.f32 0.0, %v5543
    %v5545 = vpop.f32.mrb[0].mxu0
    %5546 = vmatprep.mubr.f32.mxu0 0.0
    %5547 = vmatmul.mubr.f32.gmra.mrb[0].mxu0 %v5460
    %v5548 = vpop.f32.mrb[0].mxu0
    %v5549 = vadd.f32 0.0, %v5548
    %v5550 = vpop.f32.mrb[0].mxu0
    %5551 = vdwg.mxu0
    %5552 = vmatprep.subr.mxu0 0.0
    %5553 = vmatpush1.msra.mxu0 %v5544
    %5554 = vmatprep.subr.mxu0 0.0
    %5555 = vmatpush1.msra.mxu0 %v5549
    %5556 = vmatprep.subr.mxu0 0.0
    %5557 = vmatpush1.msra.mxu0 0.0
    %5558 = vmatprep.subr.mxu0 0.0
    %5559 = vmatpush1.msra.mxu0 0.0
    %5560 = vmatprep.subr.mxu0 0.0
    %5561 = vmatpush1.msra.mxu0 0.0
    %5562 = vmatprep.subr.mxu0 0.0
    %5563 = vmatpush1.msra.mxu0 0.0
    %5564 = vmatprep.subr.mxu0 0.0
    %5565 = vmatpush1.msra.mxu0 0.0
    %5566 = vmatprep.subr.mxu0 0.0
    %5567 = vmatpush1.msra.mxu0 0.0
    %5568 = vmatprep.subr.mxu0 0.0
    %5569 = vmatpush1.msra.mxu0 0.0
    %5570 = vmatprep.subr.mxu0 0.0
    %5571 = vmatpush1.msra.mxu0 0.0
    %5572 = vmatprep.subr.mxu0 0.0
    %5573 = vmatpush1.msra.mxu0 0.0
    %5574 = vmatprep.subr.mxu0 0.0
    %5575 = vmatpush1.msra.mxu0 0.0
    %5576 = vmatprep.subr.mxu0 0.0
    %5577 = vmatpush1.msra.mxu0 0.0
    %5578 = vmatprep.subr.mxu0 0.0
    %5579 = vmatpush1.msra.mxu0 0.0
    %5580 = vmatprep.subr.mxu0 0.0
    %5581 = vmatpush1.msra.mxu0 0.0
    %5582 = vmatprep.subr.mxu0 0.0
    %5583 = vmatpush1.msra.mxu0 0.0
    %5584 = vmatprep.subr.mxu0 0.0
    %5585 = vmatpush1.msra.mxu0 0.0
    %5586 = vmatprep.subr.mxu0 0.0
    %5587 = vmatpush1.msra.mxu0 0.0
    %5588 = vmatprep.subr.mxu0 0.0
    %5589 = vmatpush1.msra.mxu0 0.0
    %5590 = vmatprep.subr.mxu0 0.0
    %5591 = vmatpush1.msra.mxu0 0.0
    %5592 = vmatprep.subr.mxu0 0.0
    %5593 = vmatpush1.msra.mxu0 0.0
    %5594 = vmatprep.subr.mxu0 0.0
    %5595 = vmatpush1.msra.mxu0 0.0
    %5596 = vmatprep.subr.mxu0 0.0
    %5597 = vmatpush1.msra.mxu0 0.0
    %5598 = vmatprep.subr.mxu0 0.0
    %5599 = vmatpush1.msra.mxu0 0.0
    %5600 = vmatprep.subr.mxu0 0.0
    %5601 = vmatpush1.msra.mxu0 0.0
    %5602 = vmatprep.subr.mxu0 0.0
    %5603 = vmatpush1.msra.mxu0 0.0
    %5604 = vmatprep.subr.mxu0 0.0
    %5605 = vmatpush1.msra.mxu0 0.0
    %5606 = vmatprep.subr.mxu0 0.0
    %5607 = vmatpush1.msra.mxu0 0.0
    %5608 = vmatprep.subr.mxu0 0.0
    %5609 = vmatpush1.msra.mxu0 0.0
    %5610 = vmatprep.subr.mxu0 0.0
    %5611 = vmatpush1.msra.mxu0 0.0
    %5612 = vmatprep.subr.mxu0 0.0
    %5613 = vmatpush1.msra.mxu0 0.0
    %5614 = vmatprep.subr.mxu0 0.0
    %5615 = vmatpush1.msra.mxu0 0.0
    %5616 = vmatprep.mubr.f32.mxu0 0.0
    %5617 = vmatmul.mubr.f32.gmra.mrb[0].mxu0 %v934
    %v5618 = vpop.f32.mrb[0].mxu0
    %v5619 = vadd.f32 0.0, %v5618
    %v5620 = vpop.f32.mrb[0].mxu0
    %5621 = vmatprep.mubr.f32.mxu0 0.0
    %5622 = vmatmul.mubr.f32.gmra.mrb[0].mxu0 %v937
    %v5623 = vpop.f32.mrb[0].mxu0
    %v5624 = vadd.f32 0.0, %v5623
    %v5625 = vpop.f32.mrb[0].mxu0
    %5626 = vdwg.mxu0
    %vm5627 = vcmask 261120
    %v5628 = vsel %vm5627, %v5619, 0.0
    %5629 = vadd.xlane.f32.xlu0 %v5628
    %v5630 = vpop.xlane.xlu0 %5629
    %v5631 = vsel %vm5627, %v5624, 0.0
    %5632 = vadd.xlane.f32.xlu0 %v5631
    %v5633 = vpop.xlane.xlu0 %5632
    %v5634 = vmul.f32 %v5619, %v5619
    %v5635 = vmul.f32 %v5624, %v5624
    %v5636 = vsel %vm5627, %v5634, 0.0
    %5637 = vadd.xlane.f32.xlu0 %v5636
    %v5638 = vpop.xlane.xlu0 %5637
    %v5639 = vsel %vm5627, %v5635, 0.0
    %5640 = vadd.xlane.f32.xlu0 %v5639
    %v5641 = vpop.xlane.xlu0 %5640
    %v5642 = vadd.f32 %v5630, %v5633
    %v5643 = vadd.f32 %v5638, %v5641
    %v5644 = vmul.f32 %v5642, 0.015625
    %v5645 = vmul.f32 %v5643, 0.015625
    %v5646 = vmul.f32 %v5644, %v5644
    %v5647 = vsub.f32 %v5645, %v5646
    %v5648 = vmax.f32 %v5647, 0.0
    %v5649 = vadd.f32 %v5648, 1e-05
    %v5650 = vrsqrt.pop %v5649
    %v5651 = vmul.f32 %v260, %v5650
    %v5652 = vmul.f32 %v5644, %v5651
    %v5653 = vsub.f32 %v261, %v5652
    %5655 = vset.pattern.permute.xlu0 12
    %5656 = vperm.xlu0 %5655, %v5651
    %v5657 = vpop.permute.xlu0 %5656
    %v5659 = vmul.f32 %v5619, %v5657
    %v5660 = vmul.f32 %v5624, %v5657
    %5662 = vset.pattern.permute.xlu0 12
    %5663 = vperm.xlu0 %5662, %v5653
    %v5664 = vpop.permute.xlu0 %5663
    %v5666 = vadd.f32 %v5659, %v5664
    %v5667 = vadd.f32 %v5660, %v5664
    %v5668 = vmax.f32 %v5666, 0.0
    %v5669 = vmax.f32 %v5667, 0.0
    %v5670 = vand.u32 2147483647, %v5666
    %v5671 = vand.u32 2147483647, %v5667
    %v5672 = vsub.f32 0.0, %v5670
    %v5673 = vsub.f32 0.0, %v5671
    %v5674 = vmul.f32 %v5672, 1.442695
    %v5675 = vpow.pop %v5674
    %v5676 = vmul.f32 %v5673, 1.442695
    %v5677 = vpow.pop %v5676
    %v5678 = vadd.f32 %v5675, 1.0
    %v5679 = vlog2.pop %v5678
    %v5680 = vmul.f32 %v5679, 0.6931472
    %v5681 = vmul.f32 -0.5, %v5675
    %v5682 = vadd.f32 %v5681, 1.0
    %v5683 = vmul.f32 %v5682, %v5675
    %v5684 = vand.u32 2147483647, %v5675
    %vm5685 = vcmp.lt.f32.partialorder %v5684, 0.0004427343
    %v5686 = vsel %vm5685, %v5683, %v5680
    %v5687 = vadd.f32 %v5677, 1.0
    %v5688 = vlog2.pop %v5687
    %v5689 = vmul.f32 %v5688, 0.6931472
    %v5690 = vmul.f32 -0.5, %v5677
    %v5691 = vadd.f32 %v5690, 1.0
    %v5692 = vmul.f32 %v5691, %v5677
    %v5693 = vand.u32 2147483647, %v5677
    %vm5694 = vcmp.lt.f32.partialorder %v5693, 0.0004427343
    %v5695 = vsel %vm5694, %v5692, %v5689
    %v5696 = vadd.f32 %v5668, %v5686
    %v5697 = vadd.f32 %v5669, %v5695
    %v5698 = vld [vmem:[%s17] sm:$0xff]
    %v5699 = vld [vmem:[%s17 + $0x8] sm:$0xff]
    %v5700 = vld [vmem:[%s17 + $0x10] sm:$0xff]
    %v5701 = vld [vmem:[%s17 + $0x18] sm:$0xff]
    %v5703 = vsel %vm5627, %v5696, 0
    %v5706 = vsel %vm5627, %v5697, 0
    %5708 = vmatprep.subr.mxu0 0.0
    %5709 = vmatpush1.msra.mxu0 %v5698
    %5710 = vmatprep.subr.mxu0 0.0
    %5711 = vmatpush1.msra.mxu0 %v5699
    %5712 = vmatprep.subr.mxu0 0.0
    %5713 = vmatpush1.msra.mxu0 %v5700
    %5714 = vmatprep.subr.mxu0 0.0
    %5715 = vmatpush1.msra.mxu0 %v5701
    %5716 = vmatprep.subr.mxu0 0.0
    %5717 = vmatpush1.msra.mxu0 0.0
    %5718 = vmatprep.subr.mxu0 0.0
    %5719 = vmatpush1.msra.mxu0 0.0
    %5720 = vmatprep.subr.mxu0 0.0
    %5721 = vmatpush1.msra.mxu0 0.0
    %5722 = vmatprep.subr.mxu0 0.0
    %5723 = vmatpush1.msra.mxu0 0.0
    %5724 = vmatprep.subr.mxu0 0.0
    %5725 = vmatpush1.msra.mxu0 0.0
    %5726 = vmatprep.subr.mxu0 0.0
    %5727 = vmatpush1.msra.mxu0 0.0
    %5728 = vmatprep.subr.mxu0 0.0
    %5729 = vmatpush1.msra.mxu0 0.0
    %5730 = vmatprep.subr.mxu0 0.0
    %5731 = vmatpush1.msra.mxu0 0.0
    %5732 = vmatprep.subr.mxu0 0.0
    %5733 = vmatpush1.msra.mxu0 0.0
    %5734 = vmatprep.subr.mxu0 0.0
    %5735 = vmatpush1.msra.mxu0 0.0
    %5736 = vmatprep.subr.mxu0 0.0
    %5737 = vmatpush1.msra.mxu0 0.0
    %5738 = vmatprep.subr.mxu0 0.0
    %5739 = vmatpush1.msra.mxu0 0.0
    %5740 = vmatprep.subr.mxu0 0.0
    %5741 = vmatpush1.msra.mxu0 0.0
    %5742 = vmatprep.subr.mxu0 0.0
    %5743 = vmatpush1.msra.mxu0 0.0
    %5744 = vmatprep.subr.mxu0 0.0
    %5745 = vmatpush1.msra.mxu0 0.0
    %5746 = vmatprep.subr.mxu0 0.0
    %5747 = vmatpush1.msra.mxu0 0.0
    %5748 = vmatprep.subr.mxu0 0.0
    %5749 = vmatpush1.msra.mxu0 0.0
    %5750 = vmatprep.subr.mxu0 0.0
    %5751 = vmatpush1.msra.mxu0 0.0
    %5752 = vmatprep.subr.mxu0 0.0
    %5753 = vmatpush1.msra.mxu0 0.0
    %5754 = vmatprep.subr.mxu0 0.0
    %5755 = vmatpush1.msra.mxu0 0.0
    %5756 = vmatprep.subr.mxu0 0.0
    %5757 = vmatpush1.msra.mxu0 0.0
    %5758 = vmatprep.subr.mxu0 0.0
    %5759 = vmatpush1.msra.mxu0 0.0
    %5760 = vmatprep.subr.mxu0 0.0
    %5761 = vmatpush1.msra.mxu0 0.0
    %5762 = vmatprep.subr.mxu0 0.0
    %5763 = vmatpush1.msra.mxu0 0.0
    %5764 = vmatprep.subr.mxu0 0.0
    %5765 = vmatpush1.msra.mxu0 0.0
    %5766 = vmatprep.subr.mxu0 0.0
    %5767 = vmatpush1.msra.mxu0 0.0
    %5768 = vmatprep.subr.mxu0 0.0
    %5769 = vmatpush1.msra.mxu0 0.0
    %5770 = vmatprep.subr.mxu0 0.0
    %5771 = vmatpush1.msra.mxu0 0.0
    %5772 = vmatprep.mubr.f32.mxu0 0.0
    %5773 = vmatmul.mubr.f32.gmra.mrb[0].mxu0 %v5703
    %v5774 = vpop.f32.mrb[0].mxu0
    %v5775 = vadd.f32 0.0, %v5774
    %v5776 = vpop.f32.mrb[0].mxu0
    %5777 = vmatprep.mubr.f32.mxu0 0.0
    %5778 = vmatmul.mubr.f32.gmra.mrb[0].mxu0 %v5706
    %v5779 = vpop.f32.mrb[0].mxu0
    %v5780 = vadd.f32 0.0, %v5779
    %v5781 = vpop.f32.mrb[0].mxu0
    %5782 = vdwg.mxu0
    %5783 = vmatprep.subr.mxu0 0.0
    %5784 = vmatpush1.msra.mxu0 %v5775
    %5785 = vmatprep.subr.mxu0 0.0
    %5786 = vmatpush1.msra.mxu0 %v5780
    %5787 = vmatprep.subr.mxu0 0.0
    %5788 = vmatpush1.msra.mxu0 0.0
    %5789 = vmatprep.subr.mxu0 0.0
    %5790 = vmatpush1.msra.mxu0 0.0
    %5791 = vmatprep.subr.mxu0 0.0
    %5792 = vmatpush1.msra.mxu0 0.0
    %5793 = vmatprep.subr.mxu0 0.0
    %5794 = vmatpush1.msra.mxu0 0.0
    %5795 = vmatprep.subr.mxu0 0.0
    %5796 = vmatpush1.msra.mxu0 0.0
    %5797 = vmatprep.subr.mxu0 0.0
    %5798 = vmatpush1.msra.mxu0 0.0
    %5799 = vmatprep.subr.mxu0 0.0
    %5800 = vmatpush1.msra.mxu0 0.0
    %5801 = vmatprep.subr.mxu0 0.0
    %5802 = vmatpush1.msra.mxu0 0.0
    %5803 = vmatprep.subr.mxu0 0.0
    %5804 = vmatpush1.msra.mxu0 0.0
    %5805 = vmatprep.subr.mxu0 0.0
    %5806 = vmatpush1.msra.mxu0 0.0
    %5807 = vmatprep.subr.mxu0 0.0
    %5808 = vmatpush1.msra.mxu0 0.0
    %5809 = vmatprep.subr.mxu0 0.0
    %5810 = vmatpush1.msra.mxu0 0.0
    %5811 = vmatprep.subr.mxu0 0.0
    %5812 = vmatpush1.msra.mxu0 0.0
    %5813 = vmatprep.subr.mxu0 0.0
    %5814 = vmatpush1.msra.mxu0 0.0
    %5815 = vmatprep.subr.mxu0 0.0
    %5816 = vmatpush1.msra.mxu0 0.0
    %5817 = vmatprep.subr.mxu0 0.0
    %5818 = vmatpush1.msra.mxu0 0.0
    %5819 = vmatprep.subr.mxu0 0.0
    %5820 = vmatpush1.msra.mxu0 0.0
    %5821 = vmatprep.subr.mxu0 0.0
    %5822 = vmatpush1.msra.mxu0 0.0
    %5823 = vmatprep.subr.mxu0 0.0
    %5824 = vmatpush1.msra.mxu0 0.0
    %5825 = vmatprep.subr.mxu0 0.0
    %5826 = vmatpush1.msra.mxu0 0.0
    %5827 = vmatprep.subr.mxu0 0.0
    %5828 = vmatpush1.msra.mxu0 0.0
    %5829 = vmatprep.subr.mxu0 0.0
    %5830 = vmatpush1.msra.mxu0 0.0
    %5831 = vmatprep.subr.mxu0 0.0
    %5832 = vmatpush1.msra.mxu0 0.0
    %5833 = vmatprep.subr.mxu0 0.0
    %5834 = vmatpush1.msra.mxu0 0.0
    %5835 = vmatprep.subr.mxu0 0.0
    %5836 = vmatpush1.msra.mxu0 0.0
    %5837 = vmatprep.subr.mxu0 0.0
    %5838 = vmatpush1.msra.mxu0 0.0
    %5839 = vmatprep.subr.mxu0 0.0
    %5840 = vmatpush1.msra.mxu0 0.0
    %5841 = vmatprep.subr.mxu0 0.0
    %5842 = vmatpush1.msra.mxu0 0.0
    %5843 = vmatprep.subr.mxu0 0.0
    %5844 = vmatpush1.msra.mxu0 0.0
    %5845 = vmatprep.subr.mxu0 0.0
    %5846 = vmatpush1.msra.mxu0 0.0
    %5847 = vmatprep.mubr.f32.mxu0 0.0
    %5848 = vmatmul.mubr.f32.gmra.mrb[0].mxu0 %v934
    %v5849 = vpop.f32.mrb[0].mxu0
    %v5850 = vadd.f32 0.0, %v5849
    %v5851 = vpop.f32.mrb[0].mxu0
    %5852 = vmatprep.mubr.f32.mxu0 0.0
    %5853 = vmatmul.mubr.f32.gmra.mrb[0].mxu0 %v937
    %v5854 = vpop.f32.mrb[0].mxu0
    %v5855 = vadd.f32 0.0, %v5854
    %v5856 = vpop.f32.mrb[0].mxu0
    %5857 = vdwg.mxu0
    %v5858 = vsel %vm5627, %v5850, 0.0
    %5859 = vadd.xlane.f32.xlu0 %v5858
    %v5860 = vpop.xlane.xlu0 %5859
    %v5861 = vsel %vm5627, %v5855, 0.0
    %5862 = vadd.xlane.f32.xlu0 %v5861
    %v5863 = vpop.xlane.xlu0 %5862
    %v5864 = vmul.f32 %v5850, %v5850
    %v5865 = vmul.f32 %v5855, %v5855
    %v5866 = vsel %vm5627, %v5864, 0.0
    %5867 = vadd.xlane.f32.xlu0 %v5866
    %v5868 = vpop.xlane.xlu0 %5867
    %v5869 = vsel %vm5627, %v5865, 0.0
    %5870 = vadd.xlane.f32.xlu0 %v5869
    %v5871 = vpop.xlane.xlu0 %5870
    %v5872 = vadd.f32 %v5860, %v5863
    %v5873 = vadd.f32 %v5868, %v5871
    %v5874 = vmul.f32 %v5872, 0.015625
    %v5875 = vmul.f32 %v5873, 0.015625
    %v5876 = vmul.f32 %v5874, %v5874
    %v5877 = vsub.f32 %v5875, %v5876
    %v5878 = vmax.f32 %v5877, 0.0
    %v5879 = vadd.f32 %v5878, 1e-05
    %v5880 = vrsqrt.pop %v5879
    %v5881 = vmul.f32 %v260, %v5880
    %v5882 = vmul.f32 %v5874, %v5881
    %v5883 = vsub.f32 %v261, %v5882
    %5885 = vset.pattern.permute.xlu0 13
    %5886 = vperm.xlu0 %5885, %v5881
    %v5887 = vpop.permute.xlu0 %5886
    %v5889 = vmul.f32 %v5850, %v5887
    %v5890 = vmul.f32 %v5855, %v5887
    %5892 = vset.pattern.permute.xlu0 13
    %5893 = vperm.xlu0 %5892, %v5883
    %v5894 = vpop.permute.xlu0 %5893
    %v5896 = vadd.f32 %v5889, %v5894
    %v5897 = vadd.f32 %v5890, %v5894
    %v5898 = vadd.f32 %v5896, %v5696
    %v5899 = vadd.f32 %v5897, %v5697
    %v5900 = vmax.f32 %v5898, 0.0
    %v5901 = vmax.f32 %v5899, 0.0
    %v5902 = vand.u32 2147483647, %v5898
    %v5903 = vand.u32 2147483647, %v5899
    %v5904 = vsub.f32 0.0, %v5902
    %v5905 = vsub.f32 0.0, %v5903
    %v5906 = vmul.f32 %v5904, 1.442695
    %v5907 = vpow.pop %v5906
    %v5908 = vmul.f32 %v5905, 1.442695
    %v5909 = vpow.pop %v5908
    %v5910 = vadd.f32 %v5907, 1.0
    %v5911 = vlog2.pop %v5910
    %v5912 = vmul.f32 %v5911, 0.6931472
    %v5913 = vmul.f32 -0.5, %v5907
    %v5914 = vadd.f32 %v5913, 1.0
    %v5915 = vmul.f32 %v5914, %v5907
    %v5916 = vand.u32 2147483647, %v5907
    %vm5917 = vcmp.lt.f32.partialorder %v5916, 0.0004427343
    %v5918 = vsel %vm5917, %v5915, %v5912
    %v5919 = vadd.f32 %v5909, 1.0
    %v5920 = vlog2.pop %v5919
    %v5921 = vmul.f32 %v5920, 0.6931472
    %v5922 = vmul.f32 -0.5, %v5909
    %v5923 = vadd.f32 %v5922, 1.0
    %v5924 = vmul.f32 %v5923, %v5909
    %v5925 = vand.u32 2147483647, %v5909
    %vm5926 = vcmp.lt.f32.partialorder %v5925, 0.0004427343
    %v5927 = vsel %vm5926, %v5924, %v5921
    %v5928 = vadd.f32 %v5900, %v5918
    %v5929 = vadd.f32 %v5901, %v5927
    %v5930 = vld [vmem:[%s18] sm:$0xff]
    %v5931 = vld [vmem:[%s18 + $0x8] sm:$0xff]
    %v5932 = vld [vmem:[%s18 + $0x10] sm:$0xff]
    %v5933 = vld [vmem:[%s18 + $0x18] sm:$0xff]
    %v5935 = vsel %vm5627, %v5928, 0
    %v5938 = vsel %vm5627, %v5929, 0
    %5940 = vmatprep.subr.mxu0 0.0
    %5941 = vmatpush1.msra.mxu0 %v5930
    %5942 = vmatprep.subr.mxu0 0.0
    %5943 = vmatpush1.msra.mxu0 %v5931
    %5944 = vmatprep.subr.mxu0 0.0
    %5945 = vmatpush1.msra.mxu0 %v5932
    %5946 = vmatprep.subr.mxu0 0.0
    %5947 = vmatpush1.msra.mxu0 %v5933
    %5948 = vmatprep.subr.mxu0 0.0
    %5949 = vmatpush1.msra.mxu0 0.0
    %5950 = vmatprep.subr.mxu0 0.0
    %5951 = vmatpush1.msra.mxu0 0.0
    %5952 = vmatprep.subr.mxu0 0.0
    %5953 = vmatpush1.msra.mxu0 0.0
    %5954 = vmatprep.subr.mxu0 0.0
    %5955 = vmatpush1.msra.mxu0 0.0
    %5956 = vmatprep.subr.mxu0 0.0
    %5957 = vmatpush1.msra.mxu0 0.0
    %5958 = vmatprep.subr.mxu0 0.0
    %5959 = vmatpush1.msra.mxu0 0.0
    %5960 = vmatprep.subr.mxu0 0.0
    %5961 = vmatpush1.msra.mxu0 0.0
    %5962 = vmatprep.subr.mxu0 0.0
    %5963 = vmatpush1.msra.mxu0 0.0
    %5964 = vmatprep.subr.mxu0 0.0
    %5965 = vmatpush1.msra.mxu0 0.0
    %5966 = vmatprep.subr.mxu0 0.0
    %5967 = vmatpush1.msra.mxu0 0.0
    %5968 = vmatprep.subr.mxu0 0.0
    %5969 = vmatpush1.msra.mxu0 0.0
    %5970 = vmatprep.subr.mxu0 0.0
    %5971 = vmatpush1.msra.mxu0 0.0
    %5972 = vmatprep.subr.mxu0 0.0
    %5973 = vmatpush1.msra.mxu0 0.0
    %5974 = vmatprep.subr.mxu0 0.0
    %5975 = vmatpush1.msra.mxu0 0.0
    %5976 = vmatprep.subr.mxu0 0.0
    %5977 = vmatpush1.msra.mxu0 0.0
    %5978 = vmatprep.subr.mxu0 0.0
    %5979 = vmatpush1.msra.mxu0 0.0
    %5980 = vmatprep.subr.mxu0 0.0
    %5981 = vmatpush1.msra.mxu0 0.0
    %5982 = vmatprep.subr.mxu0 0.0
    %5983 = vmatpush1.msra.mxu0 0.0
    %5984 = vmatprep.subr.mxu0 0.0
    %5985 = vmatpush1.msra.mxu0 0.0
    %5986 = vmatprep.subr.mxu0 0.0
    %5987 = vmatpush1.msra.mxu0 0.0
    %5988 = vmatprep.subr.mxu0 0.0
    %5989 = vmatpush1.msra.mxu0 0.0
    %5990 = vmatprep.subr.mxu0 0.0
    %5991 = vmatpush1.msra.mxu0 0.0
    %5992 = vmatprep.subr.mxu0 0.0
    %5993 = vmatpush1.msra.mxu0 0.0
    %5994 = vmatprep.subr.mxu0 0.0
    %5995 = vmatpush1.msra.mxu0 0.0
    %5996 = vmatprep.subr.mxu0 0.0
    %5997 = vmatpush1.msra.mxu0 0.0
    %5998 = vmatprep.subr.mxu0 0.0
    %5999 = vmatpush1.msra.mxu0 0.0
    %6000 = vmatprep.subr.mxu0 0.0
    %6001 = vmatpush1.msra.mxu0 0.0
    %6002 = vmatprep.subr.mxu0 0.0
    %6003 = vmatpush1.msra.mxu0 0.0
    %6004 = vmatprep.mubr.f32.mxu0 0.0
    %6005 = vmatmul.mubr.f32.gmra.mrb[0].mxu0 %v5935
    %v6006 = vpop.f32.mrb[0].mxu0
    %v6007 = vadd.f32 0.0, %v6006
    %v6008 = vpop.f32.mrb[0].mxu0
    %6009 = vmatprep.mubr.f32.mxu0 0.0
    %6010 = vmatmul.mubr.f32.gmra.mrb[0].mxu0 %v5938
    %v6011 = vpop.f32.mrb[0].mxu0
    %v6012 = vadd.f32 0.0, %v6011
    %v6013 = vpop.f32.mrb[0].mxu0
    %6014 = vdwg.mxu0
    %6015 = vmatprep.subr.mxu0 0.0
    %6016 = vmatpush1.msra.mxu0 %v6007
    %6017 = vmatprep.subr.mxu0 0.0
    %6018 = vmatpush1.msra.mxu0 %v6012
    %6019 = vmatprep.subr.mxu0 0.0
    %6020 = vmatpush1.msra.mxu0 0.0
    %6021 = vmatprep.subr.mxu0 0.0
    %6022 = vmatpush1.msra.mxu0 0.0
    %6023 = vmatprep.subr.mxu0 0.0
    %6024 = vmatpush1.msra.mxu0 0.0
    %6025 = vmatprep.subr.mxu0 0.0
    %6026 = vmatpush1.msra.mxu0 0.0
    %6027 = vmatprep.subr.mxu0 0.0
    %6028 = vmatpush1.msra.mxu0 0.0
    %6029 = vmatprep.subr.mxu0 0.0
    %6030 = vmatpush1.msra.mxu0 0.0
    %6031 = vmatprep.subr.mxu0 0.0
    %6032 = vmatpush1.msra.mxu0 0.0
    %6033 = vmatprep.subr.mxu0 0.0
    %6034 = vmatpush1.msra.mxu0 0.0
    %6035 = vmatprep.subr.mxu0 0.0
    %6036 = vmatpush1.msra.mxu0 0.0
    %6037 = vmatprep.subr.mxu0 0.0
    %6038 = vmatpush1.msra.mxu0 0.0
    %6039 = vmatprep.subr.mxu0 0.0
    %6040 = vmatpush1.msra.mxu0 0.0
    %6041 = vmatprep.subr.mxu0 0.0
    %6042 = vmatpush1.msra.mxu0 0.0
    %6043 = vmatprep.subr.mxu0 0.0
    %6044 = vmatpush1.msra.mxu0 0.0
    %6045 = vmatprep.subr.mxu0 0.0
    %6046 = vmatpush1.msra.mxu0 0.0
    %6047 = vmatprep.subr.mxu0 0.0
    %6048 = vmatpush1.msra.mxu0 0.0
    %6049 = vmatprep.subr.mxu0 0.0
    %6050 = vmatpush1.msra.mxu0 0.0
    %6051 = vmatprep.subr.mxu0 0.0
    %6052 = vmatpush1.msra.mxu0 0.0
    %6053 = vmatprep.subr.mxu0 0.0
    %6054 = vmatpush1.msra.mxu0 0.0
    %6055 = vmatprep.subr.mxu0 0.0
    %6056 = vmatpush1.msra.mxu0 0.0
    %6057 = vmatprep.subr.mxu0 0.0
    %6058 = vmatpush1.msra.mxu0 0.0
    %6059 = vmatprep.subr.mxu0 0.0
    %6060 = vmatpush1.msra.mxu0 0.0
    %6061 = vmatprep.subr.mxu0 0.0
    %6062 = vmatpush1.msra.mxu0 0.0
    %6063 = vmatprep.subr.mxu0 0.0
    %6064 = vmatpush1.msra.mxu0 0.0
    %6065 = vmatprep.subr.mxu0 0.0
    %6066 = vmatpush1.msra.mxu0 0.0
    %6067 = vmatprep.subr.mxu0 0.0
    %6068 = vmatpush1.msra.mxu0 0.0
    %6069 = vmatprep.subr.mxu0 0.0
    %6070 = vmatpush1.msra.mxu0 0.0
    %6071 = vmatprep.subr.mxu0 0.0
    %6072 = vmatpush1.msra.mxu0 0.0
    %6073 = vmatprep.subr.mxu0 0.0
    %6074 = vmatpush1.msra.mxu0 0.0
    %6075 = vmatprep.subr.mxu0 0.0
    %6076 = vmatpush1.msra.mxu0 0.0
    %6077 = vmatprep.subr.mxu0 0.0
    %6078 = vmatpush1.msra.mxu0 0.0
    %6079 = vmatprep.mubr.f32.mxu0 0.0
    %6080 = vmatmul.mubr.f32.gmra.mrb[0].mxu0 %v934
    %v6081 = vpop.f32.mrb[0].mxu0
    %v6082 = vadd.f32 0.0, %v6081
    %v6083 = vpop.f32.mrb[0].mxu0
    %6084 = vmatprep.mubr.f32.mxu0 0.0
    %6085 = vmatmul.mubr.f32.gmra.mrb[0].mxu0 %v937
    %v6086 = vpop.f32.mrb[0].mxu0
    %v6087 = vadd.f32 0.0, %v6086
    %v6088 = vpop.f32.mrb[0].mxu0
    %6089 = vdwg.mxu0
    %v6090 = vsel %vm5627, %v6082, 0.0
    %6091 = vadd.xlane.f32.xlu0 %v6090
    %v6092 = vpop.xlane.xlu0 %6091
    %v6093 = vsel %vm5627, %v6087, 0.0
    %6094 = vadd.xlane.f32.xlu0 %v6093
    %v6095 = vpop.xlane.xlu0 %6094
    %v6096 = vmul.f32 %v6082, %v6082
    %v6097 = vmul.f32 %v6087, %v6087
    %v6098 = vsel %vm5627, %v6096, 0.0
    %6099 = vadd.xlane.f32.xlu0 %v6098
    %v6100 = vpop.xlane.xlu0 %6099
    %v6101 = vsel %vm5627, %v6097, 0.0
    %6102 = vadd.xlane.f32.xlu0 %v6101
    %v6103 = vpop.xlane.xlu0 %6102
    %v6104 = vadd.f32 %v6092, %v6095
    %v6105 = vadd.f32 %v6100, %v6103
    %v6106 = vmul.f32 %v6104, 0.015625
    %v6107 = vmul.f32 %v6105, 0.015625
    %v6108 = vmul.f32 %v6106, %v6106
    %v6109 = vsub.f32 %v6107, %v6108
    %v6110 = vmax.f32 %v6109, 0.0
    %v6111 = vadd.f32 %v6110, 1e-05
    %v6112 = vrsqrt.pop %v6111
    %v6113 = vmul.f32 %v260, %v6112
    %v6114 = vmul.f32 %v6106, %v6113
    %v6115 = vsub.f32 %v261, %v6114
    %6117 = vset.pattern.permute.xlu0 14
    %6118 = vperm.xlu0 %6117, %v6113
    %v6119 = vpop.permute.xlu0 %6118
    %v6121 = vmul.f32 %v6082, %v6119
    %v6122 = vmul.f32 %v6087, %v6119
    %6124 = vset.pattern.permute.xlu0 14
    %6125 = vperm.xlu0 %6124, %v6115
    %v6126 = vpop.permute.xlu0 %6125
    %v6128 = vadd.f32 %v6121, %v6126
    %v6129 = vadd.f32 %v6122, %v6126
    %v6130 = vadd.f32 %v6128, %v5696
    %v6131 = vadd.f32 %v6129, %v5697
    %v6132 = vmax.f32 %v6130, 0.0
    %v6133 = vmax.f32 %v6131, 0.0
    %v6134 = vand.u32 2147483647, %v6130
    %v6135 = vand.u32 2147483647, %v6131
    %v6136 = vsub.f32 0.0, %v6134
    %v6137 = vsub.f32 0.0, %v6135
    %v6138 = vmul.f32 %v6136, 1.442695
    %v6139 = vpow.pop %v6138
    %v6140 = vmul.f32 %v6137, 1.442695
    %v6141 = vpow.pop %v6140
    %v6142 = vadd.f32 %v6139, 1.0
    %v6143 = vlog2.pop %v6142
    %v6144 = vmul.f32 %v6143, 0.6931472
    %v6145 = vmul.f32 -0.5, %v6139
    %v6146 = vadd.f32 %v6145, 1.0
    %v6147 = vmul.f32 %v6146, %v6139
    %v6148 = vand.u32 2147483647, %v6139
    %vm6149 = vcmp.lt.f32.partialorder %v6148, 0.0004427343
    %v6150 = vsel %vm6149, %v6147, %v6144
    %v6151 = vadd.f32 %v6141, 1.0
    %v6152 = vlog2.pop %v6151
    %v6153 = vmul.f32 %v6152, 0.6931472
    %v6154 = vmul.f32 -0.5, %v6141
    %v6155 = vadd.f32 %v6154, 1.0
    %v6156 = vmul.f32 %v6155, %v6141
    %v6157 = vand.u32 2147483647, %v6141
    %vm6158 = vcmp.lt.f32.partialorder %v6157, 0.0004427343
    %v6159 = vsel %vm6158, %v6156, %v6153
    %v6160 = vadd.f32 %v6132, %v6150
    %v6161 = vadd.f32 %v6133, %v6159
    %v6162 = vld [vmem:[#allocation10] sm:$0xff]
    %v6163 = vld [vmem:[#allocation10 + $0x8] sm:$0xff]
    %v6164 = vld [vmem:[#allocation10 + $0x10] sm:$0xff]
    %v6165 = vld [vmem:[#allocation10 + $0x18] sm:$0xff]
    %v6167 = vsel %vm5627, %v6160, 0
    %v6170 = vsel %vm5627, %v6161, 0
    %6172 = vmatprep.subr.mxu0 0.0
    %6173 = vmatpush1.msra.mxu0 %v6162
    %6174 = vmatprep.subr.mxu0 0.0
    %6175 = vmatpush1.msra.mxu0 %v6163
    %6176 = vmatprep.subr.mxu0 0.0
    %6177 = vmatpush1.msra.mxu0 %v6164
    %6178 = vmatprep.subr.mxu0 0.0
    %6179 = vmatpush1.msra.mxu0 %v6165
    %6180 = vmatprep.subr.mxu0 0.0
    %6181 = vmatpush1.msra.mxu0 0.0
    %6182 = vmatprep.subr.mxu0 0.0
    %6183 = vmatpush1.msra.mxu0 0.0
    %6184 = vmatprep.subr.mxu0 0.0
    %6185 = vmatpush1.msra.mxu0 0.0
    %6186 = vmatprep.subr.mxu0 0.0
    %6187 = vmatpush1.msra.mxu0 0.0
    %6188 = vmatprep.subr.mxu0 0.0
    %6189 = vmatpush1.msra.mxu0 0.0
    %6190 = vmatprep.subr.mxu0 0.0
    %6191 = vmatpush1.msra.mxu0 0.0
    %6192 = vmatprep.subr.mxu0 0.0
    %6193 = vmatpush1.msra.mxu0 0.0
    %6194 = vmatprep.subr.mxu0 0.0
    %6195 = vmatpush1.msra.mxu0 0.0
    %6196 = vmatprep.subr.mxu0 0.0
    %6197 = vmatpush1.msra.mxu0 0.0
    %6198 = vmatprep.subr.mxu0 0.0
    %6199 = vmatpush1.msra.mxu0 0.0
    %6200 = vmatprep.subr.mxu0 0.0
    %6201 = vmatpush1.msra.mxu0 0.0
    %6202 = vmatprep.subr.mxu0 0.0
    %6203 = vmatpush1.msra.mxu0 0.0
    %6204 = vmatprep.subr.mxu0 0.0
    %6205 = vmatpush1.msra.mxu0 0.0
    %6206 = vmatprep.subr.mxu0 0.0
    %6207 = vmatpush1.msra.mxu0 0.0
    %6208 = vmatprep.subr.mxu0 0.0
    %6209 = vmatpush1.msra.mxu0 0.0
    %6210 = vmatprep.subr.mxu0 0.0
    %6211 = vmatpush1.msra.mxu0 0.0
    %6212 = vmatprep.subr.mxu0 0.0
    %6213 = vmatpush1.msra.mxu0 0.0
    %6214 = vmatprep.subr.mxu0 0.0
    %6215 = vmatpush1.msra.mxu0 0.0
    %6216 = vmatprep.subr.mxu0 0.0
    %6217 = vmatpush1.msra.mxu0 0.0
    %6218 = vmatprep.subr.mxu0 0.0
    %6219 = vmatpush1.msra.mxu0 0.0
    %6220 = vmatprep.subr.mxu0 0.0
    %6221 = vmatpush1.msra.mxu0 0.0
    %6222 = vmatprep.subr.mxu0 0.0
    %6223 = vmatpush1.msra.mxu0 0.0
    %6224 = vmatprep.subr.mxu0 0.0
    %6225 = vmatpush1.msra.mxu0 0.0
    %6226 = vmatprep.subr.mxu0 0.0
    %6227 = vmatpush1.msra.mxu0 0.0
    %6228 = vmatprep.subr.mxu0 0.0
    %6229 = vmatpush1.msra.mxu0 0.0
    %6230 = vmatprep.subr.mxu0 0.0
    %6231 = vmatpush1.msra.mxu0 0.0
    %6232 = vmatprep.subr.mxu0 0.0
    %6233 = vmatpush1.msra.mxu0 0.0
    %6234 = vmatprep.subr.mxu0 0.0
    %6235 = vmatpush1.msra.mxu0 0.0
    %6236 = vmatprep.mubr.f32.mxu0 0.0
    %6237 = vmatmul.mubr.f32.gmra.mrb[0].mxu0 %v6167
    %v6238 = vpop.f32.mrb[0].mxu0
    %v6239 = vadd.f32 0.0, %v6238
    %v6240 = vpop.f32.mrb[0].mxu0
    %6241 = vmatprep.mubr.f32.mxu0 0.0
    %6242 = vmatmul.mubr.f32.gmra.mrb[0].mxu0 %v6170
    %v6243 = vpop.f32.mrb[0].mxu0
    %v6244 = vadd.f32 0.0, %v6243
    %v6245 = vpop.f32.mrb[0].mxu0
    %6246 = vdwg.mxu0
    %6247 = vmatprep.subr.mxu0 0.0
    %6248 = vmatpush1.msra.mxu0 %v6239
    %6249 = vmatprep.subr.mxu0 0.0
    %6250 = vmatpush1.msra.mxu0 %v6244
    %6251 = vmatprep.subr.mxu0 0.0
    %6252 = vmatpush1.msra.mxu0 0.0
    %6253 = vmatprep.subr.mxu0 0.0
    %6254 = vmatpush1.msra.mxu0 0.0
    %6255 = vmatprep.subr.mxu0 0.0
    %6256 = vmatpush1.msra.mxu0 0.0
    %6257 = vmatprep.subr.mxu0 0.0
    %6258 = vmatpush1.msra.mxu0 0.0
    %6259 = vmatprep.subr.mxu0 0.0
    %6260 = vmatpush1.msra.mxu0 0.0
    %6261 = vmatprep.subr.mxu0 0.0
    %6262 = vmatpush1.msra.mxu0 0.0
    %6263 = vmatprep.subr.mxu0 0.0
    %6264 = vmatpush1.msra.mxu0 0.0
    %6265 = vmatprep.subr.mxu0 0.0
    %6266 = vmatpush1.msra.mxu0 0.0
    %6267 = vmatprep.subr.mxu0 0.0
    %6268 = vmatpush1.msra.mxu0 0.0
    %6269 = vmatprep.subr.mxu0 0.0
    %6270 = vmatpush1.msra.mxu0 0.0
    %6271 = vmatprep.subr.mxu0 0.0
    %6272 = vmatpush1.msra.mxu0 0.0
    %6273 = vmatprep.subr.mxu0 0.0
    %6274 = vmatpush1.msra.mxu0 0.0
    %6275 = vmatprep.subr.mxu0 0.0
    %6276 = vmatpush1.msra.mxu0 0.0
    %6277 = vmatprep.subr.mxu0 0.0
    %6278 = vmatpush1.msra.mxu0 0.0
    %6279 = vmatprep.subr.mxu0 0.0
    %6280 = vmatpush1.msra.mxu0 0.0
    %6281 = vmatprep.subr.mxu0 0.0
    %6282 = vmatpush1.msra.mxu0 0.0
    %6283 = vmatprep.subr.mxu0 0.0
    %6284 = vmatpush1.msra.mxu0 0.0
    %6285 = vmatprep.subr.mxu0 0.0
    %6286 = vmatpush1.msra.mxu0 0.0
    %6287 = vmatprep.subr.mxu0 0.0
    %6288 = vmatpush1.msra.mxu0 0.0
    %6289 = vmatprep.subr.mxu0 0.0
    %6290 = vmatpush1.msra.mxu0 0.0
    %6291 = vmatprep.subr.mxu0 0.0
    %6292 = vmatpush1.msra.mxu0 0.0
    %6293 = vmatprep.subr.mxu0 0.0
    %6294 = vmatpush1.msra.mxu0 0.0
    %6295 = vmatprep.subr.mxu0 0.0
    %6296 = vmatpush1.msra.mxu0 0.0
    %6297 = vmatprep.subr.mxu0 0.0
    %6298 = vmatpush1.msra.mxu0 0.0
    %6299 = vmatprep.subr.mxu0 0.0
    %6300 = vmatpush1.msra.mxu0 0.0
    %6301 = vmatprep.subr.mxu0 0.0
    %6302 = vmatpush1.msra.mxu0 0.0
    %6303 = vmatprep.subr.mxu0 0.0
    %6304 = vmatpush1.msra.mxu0 0.0
    %6305 = vmatprep.subr.mxu0 0.0
    %6306 = vmatpush1.msra.mxu0 0.0
    %6307 = vmatprep.subr.mxu0 0.0
    %6308 = vmatpush1.msra.mxu0 0.0
    %6309 = vmatprep.subr.mxu0 0.0
    %6310 = vmatpush1.msra.mxu0 0.0
    %6311 = vmatprep.mubr.f32.mxu0 0.0
    %6312 = vmatmul.mubr.f32.gmra.mrb[0].mxu0 %v934
    %v6313 = vpop.f32.mrb[0].mxu0
    %v6314 = vadd.f32 0.0, %v6313
    %v6315 = vpop.f32.mrb[0].mxu0
    %6316 = vmatprep.mubr.f32.mxu0 0.0
    %6317 = vmatmul.mubr.f32.gmra.mrb[0].mxu0 %v937
    %v6318 = vpop.f32.mrb[0].mxu0
    %v6319 = vadd.f32 0.0, %v6318
    %v6320 = vpop.f32.mrb[0].mxu0
    %6321 = vdwg.mxu0
    %v6322 = vsel %vm5627, %v6314, 0.0
    %6323 = vadd.xlane.f32.xlu0 %v6322
    %v6324 = vpop.xlane.xlu0 %6323
    %v6325 = vsel %vm5627, %v6319, 0.0
    %6326 = vadd.xlane.f32.xlu0 %v6325
    %v6327 = vpop.xlane.xlu0 %6326
    %v6328 = vmul.f32 %v6314, %v6314
    %v6329 = vmul.f32 %v6319, %v6319
    %v6330 = vsel %vm5627, %v6328, 0.0
    %6331 = vadd.xlane.f32.xlu0 %v6330
    %v6332 = vpop.xlane.xlu0 %6331
    %v6333 = vsel %vm5627, %v6329, 0.0
    %6334 = vadd.xlane.f32.xlu0 %v6333
    %v6335 = vpop.xlane.xlu0 %6334
    %v6336 = vadd.f32 %v6324, %v6327
    %v6337 = vadd.f32 %v6332, %v6335
    %v6338 = vmul.f32 %v6336, 0.015625
    %v6339 = vmul.f32 %v6337, 0.015625
    %v6340 = vmul.f32 %v6338, %v6338
    %v6341 = vsub.f32 %v6339, %v6340
    %v6342 = vmax.f32 %v6341, 0.0
    %v6343 = vadd.f32 %v6342, 1e-05
    %v6344 = vrsqrt.pop %v6343
    %v6345 = vmul.f32 %v260, %v6344
    %v6346 = vmul.f32 %v6338, %v6345
    %v6347 = vsub.f32 %v261, %v6346
    %6349 = vset.pattern.permute.xlu0 15
    %6350 = vperm.xlu0 %6349, %v6345
    %v6351 = vpop.permute.xlu0 %6350
    %v6353 = vmul.f32 %v6314, %v6351
    %v6354 = vmul.f32 %v6319, %v6351
    %6356 = vset.pattern.permute.xlu0 15
    %6357 = vperm.xlu0 %6356, %v6347
    %v6358 = vpop.permute.xlu0 %6357
    %v6360 = vadd.f32 %v6353, %v6358
    %v6361 = vadd.f32 %v6354, %v6358
    %v6362 = vadd.f32 %v6360, %v5696
    %v6363 = vadd.f32 %v6361, %v5697
    %v6364 = vmax.f32 %v6362, 0.0
    %v6365 = vmax.f32 %v6363, 0.0
    %v6366 = vand.u32 2147483647, %v6362
    %v6367 = vand.u32 2147483647, %v6363
    %v6368 = vsub.f32 0.0, %v6366
    %v6369 = vsub.f32 0.0, %v6367
    %v6370 = vmul.f32 %v6368, 1.442695
    %v6371 = vpow.pop %v6370
    %v6372 = vmul.f32 %v6369, 1.442695
    %v6373 = vpow.pop %v6372
    %v6374 = vadd.f32 %v6371, 1.0
    %v6375 = vlog2.pop %v6374
    %v6376 = vmul.f32 %v6375, 0.6931472
    %v6377 = vmul.f32 -0.5, %v6371
    %v6378 = vadd.f32 %v6377, 1.0
    %v6379 = vmul.f32 %v6378, %v6371
    %v6380 = vand.u32 2147483647, %v6371
    %vm6381 = vcmp.lt.f32.partialorder %v6380, 0.0004427343
    %v6382 = vsel %vm6381, %v6379, %v6376
    %v6383 = vadd.f32 %v6373, 1.0
    %v6384 = vlog2.pop %v6383
    %v6385 = vmul.f32 %v6384, 0.6931472
    %v6386 = vmul.f32 -0.5, %v6373
    %v6387 = vadd.f32 %v6386, 1.0
    %v6388 = vmul.f32 %v6387, %v6373
    %v6389 = vand.u32 2147483647, %v6373
    %vm6390 = vcmp.lt.f32.partialorder %v6389, 0.0004427343
    %v6391 = vsel %vm6390, %v6388, %v6385
    %v6392 = vadd.f32 %v6364, %v6382
    %v6393 = vadd.f32 %v6365, %v6391
    %v6394 = vld [vmem:[%s20] sm:$0xff]
    %v6395 = vld [vmem:[%s20 + $0x8] sm:$0xff]
    %v6396 = vld [vmem:[%s20 + $0x10] sm:$0xff]
    %v6397 = vld [vmem:[%s20 + $0x18] sm:$0xff]
    %v6399 = vsel %vm5627, %v6392, 0
    %v6402 = vsel %vm5627, %v6393, 0
    %6404 = vmatprep.subr.mxu0 0.0
    %6405 = vmatpush1.msra.mxu0 %v6394
    %6406 = vmatprep.subr.mxu0 0.0
    %6407 = vmatpush1.msra.mxu0 %v6395
    %6408 = vmatprep.subr.mxu0 0.0
    %6409 = vmatpush1.msra.mxu0 %v6396
    %6410 = vmatprep.subr.mxu0 0.0
    %6411 = vmatpush1.msra.mxu0 %v6397
    %6412 = vmatprep.subr.mxu0 0.0
    %6413 = vmatpush1.msra.mxu0 0.0
    %6414 = vmatprep.subr.mxu0 0.0
    %6415 = vmatpush1.msra.mxu0 0.0
    %6416 = vmatprep.subr.mxu0 0.0
    %6417 = vmatpush1.msra.mxu0 0.0
    %6418 = vmatprep.subr.mxu0 0.0
    %6419 = vmatpush1.msra.mxu0 0.0
    %6420 = vmatprep.subr.mxu0 0.0
    %6421 = vmatpush1.msra.mxu0 0.0
    %6422 = vmatprep.subr.mxu0 0.0
    %6423 = vmatpush1.msra.mxu0 0.0
    %6424 = vmatprep.subr.mxu0 0.0
    %6425 = vmatpush1.msra.mxu0 0.0
    %6426 = vmatprep.subr.mxu0 0.0
    %6427 = vmatpush1.msra.mxu0 0.0
    %6428 = vmatprep.subr.mxu0 0.0
    %6429 = vmatpush1.msra.mxu0 0.0
    %6430 = vmatprep.subr.mxu0 0.0
    %6431 = vmatpush1.msra.mxu0 0.0
    %6432 = vmatprep.subr.mxu0 0.0
    %6433 = vmatpush1.msra.mxu0 0.0
    %6434 = vmatprep.subr.mxu0 0.0
    %6435 = vmatpush1.msra.mxu0 0.0
    %6436 = vmatprep.subr.mxu0 0.0
    %6437 = vmatpush1.msra.mxu0 0.0
    %6438 = vmatprep.subr.mxu0 0.0
    %6439 = vmatpush1.msra.mxu0 0.0
    %6440 = vmatprep.subr.mxu0 0.0
    %6441 = vmatpush1.msra.mxu0 0.0
    %6442 = vmatprep.subr.mxu0 0.0
    %6443 = vmatpush1.msra.mxu0 0.0
    %6444 = vmatprep.subr.mxu0 0.0
    %6445 = vmatpush1.msra.mxu0 0.0
    %6446 = vmatprep.subr.mxu0 0.0
    %6447 = vmatpush1.msra.mxu0 0.0
    %6448 = vmatprep.subr.mxu0 0.0
    %6449 = vmatpush1.msra.mxu0 0.0
    %6450 = vmatprep.subr.mxu0 0.0
    %6451 = vmatpush1.msra.mxu0 0.0
    %6452 = vmatprep.subr.mxu0 0.0
    %6453 = vmatpush1.msra.mxu0 0.0
    %6454 = vmatprep.subr.mxu0 0.0
    %6455 = vmatpush1.msra.mxu0 0.0
    %6456 = vmatprep.subr.mxu0 0.0
    %6457 = vmatpush1.msra.mxu0 0.0
    %6458 = vmatprep.subr.mxu0 0.0
    %6459 = vmatpush1.msra.mxu0 0.0
    %6460 = vmatprep.subr.mxu0 0.0
    %6461 = vmatpush1.msra.mxu0 0.0
    %6462 = vmatprep.subr.mxu0 0.0
    %6463 = vmatpush1.msra.mxu0 0.0
    %6464 = vmatprep.subr.mxu0 0.0
    %6465 = vmatpush1.msra.mxu0 0.0
    %6466 = vmatprep.subr.mxu0 0.0
    %6467 = vmatpush1.msra.mxu0 0.0
    %6468 = vmatprep.mubr.f32.mxu0 0.0
    %6469 = vmatmul.mubr.f32.gmra.mrb[0].mxu0 %v6399
    %v6470 = vpop.f32.mrb[0].mxu0
    %v6471 = vadd.f32 0.0, %v6470
    %v6472 = vpop.f32.mrb[0].mxu0
    %6473 = vmatprep.mubr.f32.mxu0 0.0
    %6474 = vmatmul.mubr.f32.gmra.mrb[0].mxu0 %v6402
    %v6475 = vpop.f32.mrb[0].mxu0
    %v6476 = vadd.f32 0.0, %v6475
    %v6477 = vpop.f32.mrb[0].mxu0
    %6478 = vdwg.mxu0
    %6479 = vmatprep.subr.mxu0 0.0
    %6480 = vmatpush1.msra.mxu0 %v6471
    %6481 = vmatprep.subr.mxu0 0.0
    %6482 = vmatpush1.msra.mxu0 %v6476
    %6483 = vmatprep.subr.mxu0 0.0
    %6484 = vmatpush1.msra.mxu0 0.0
    %6485 = vmatprep.subr.mxu0 0.0
    %6486 = vmatpush1.msra.mxu0 0.0
    %6487 = vmatprep.subr.mxu0 0.0
    %6488 = vmatpush1.msra.mxu0 0.0
    %6489 = vmatprep.subr.mxu0 0.0
    %6490 = vmatpush1.msra.mxu0 0.0
    %6491 = vmatprep.subr.mxu0 0.0
    %6492 = vmatpush1.msra.mxu0 0.0
    %6493 = vmatprep.subr.mxu0 0.0
    %6494 = vmatpush1.msra.mxu0 0.0
    %6495 = vmatprep.subr.mxu0 0.0
    %6496 = vmatpush1.msra.mxu0 0.0
    %6497 = vmatprep.subr.mxu0 0.0
    %6498 = vmatpush1.msra.mxu0 0.0
    %6499 = vmatprep.subr.mxu0 0.0
    %6500 = vmatpush1.msra.mxu0 0.0
    %6501 = vmatprep.subr.mxu0 0.0
    %6502 = vmatpush1.msra.mxu0 0.0
    %6503 = vmatprep.subr.mxu0 0.0
    %6504 = vmatpush1.msra.mxu0 0.0
    %6505 = vmatprep.subr.mxu0 0.0
    %6506 = vmatpush1.msra.mxu0 0.0
    %6507 = vmatprep.subr.mxu0 0.0
    %6508 = vmatpush1.msra.mxu0 0.0
    %6509 = vmatprep.subr.mxu0 0.0
    %6510 = vmatpush1.msra.mxu0 0.0
    %6511 = vmatprep.subr.mxu0 0.0
    %6512 = vmatpush1.msra.mxu0 0.0
    %6513 = vmatprep.subr.mxu0 0.0
    %6514 = vmatpush1.msra.mxu0 0.0
    %6515 = vmatprep.subr.mxu0 0.0
    %6516 = vmatpush1.msra.mxu0 0.0
    %6517 = vmatprep.subr.mxu0 0.0
    %6518 = vmatpush1.msra.mxu0 0.0
    %6519 = vmatprep.subr.mxu0 0.0
    %6520 = vmatpush1.msra.mxu0 0.0
    %6521 = vmatprep.subr.mxu0 0.0
    %6522 = vmatpush1.msra.mxu0 0.0
    %6523 = vmatprep.subr.mxu0 0.0
    %6524 = vmatpush1.msra.mxu0 0.0
    %6525 = vmatprep.subr.mxu0 0.0
    %6526 = vmatpush1.msra.mxu0 0.0
    %6527 = vmatprep.subr.mxu0 0.0
    %6528 = vmatpush1.msra.mxu0 0.0
    %6529 = vmatprep.subr.mxu0 0.0
    %6530 = vmatpush1.msra.mxu0 0.0
    %6531 = vmatprep.subr.mxu0 0.0
    %6532 = vmatpush1.msra.mxu0 0.0
    %6533 = vmatprep.subr.mxu0 0.0
    %6534 = vmatpush1.msra.mxu0 0.0
    %6535 = vmatprep.subr.mxu0 0.0
    %6536 = vmatpush1.msra.mxu0 0.0
    %6537 = vmatprep.subr.mxu0 0.0
    %6538 = vmatpush1.msra.mxu0 0.0
    %6539 = vmatprep.subr.mxu0 0.0
    %6540 = vmatpush1.msra.mxu0 0.0
    %6541 = vmatprep.subr.mxu0 0.0
    %6542 = vmatpush1.msra.mxu0 0.0
    %6543 = vmatprep.mubr.f32.mxu0 0.0
    %6544 = vmatmul.mubr.f32.gmra.mrb[0].mxu0 %v934
    %v6545 = vpop.f32.mrb[0].mxu0
    %v6546 = vadd.f32 0.0, %v6545
    %v6547 = vpop.f32.mrb[0].mxu0
    %6548 = vmatprep.mubr.f32.mxu0 0.0
    %6549 = vmatmul.mubr.f32.gmra.mrb[0].mxu0 %v937
    %v6550 = vpop.f32.mrb[0].mxu0
    %v6551 = vadd.f32 0.0, %v6550
    %v6552 = vpop.f32.mrb[0].mxu0
    %6553 = vdwg.mxu0
    %v6554 = vmax.f32 %v6546, 0.0
    %v6555 = vmax.f32 %v6551, 0.0
    %v6556 = vand.u32 2147483647, %v6546
    %v6557 = vand.u32 2147483647, %v6551
    %v6558 = vsub.f32 0.0, %v6556
    %v6559 = vsub.f32 0.0, %v6557
    %v6560 = vmul.f32 %v6558, 1.442695
    %v6561 = vpow.pop %v6560
    %v6562 = vmul.f32 %v6559, 1.442695
    %v6563 = vpow.pop %v6562
    %v6564 = vadd.f32 %v6561, 1.0
    %v6565 = vlog2.pop %v6564
    %v6566 = vmul.f32 %v6565, 0.6931472
    %v6567 = vmul.f32 -0.5, %v6561
    %v6568 = vadd.f32 %v6567, 1.0
    %v6569 = vmul.f32 %v6568, %v6561
    %v6570 = vand.u32 2147483647, %v6561
    %vm6571 = vcmp.lt.f32.partialorder %v6570, 0.0004427343
    %v6572 = vsel %vm6571, %v6569, %v6566
    %v6573 = vadd.f32 %v6563, 1.0
    %v6574 = vlog2.pop %v6573
    %v6575 = vmul.f32 %v6574, 0.6931472
    %v6576 = vmul.f32 -0.5, %v6563
    %v6577 = vadd.f32 %v6576, 1.0
    %v6578 = vmul.f32 %v6577, %v6563
    %v6579 = vand.u32 2147483647, %v6563
    %vm6580 = vcmp.lt.f32.partialorder %v6579, 0.0004427343
    %v6581 = vsel %vm6580, %v6578, %v6575
    %v6582 = vadd.f32 %v6554, %v6572
    %v6583 = vadd.f32 %v6555, %v6581
    %vm6584 = vcmask 5120
    %v6585 = vsel %vm6584, %v6582, 0.0
    %v6586 = vrot.slane %v6585, 4
    %v6587 = vadd.f32 %v6585, %v6586
    %v6588 = vrot.slane %v6587, 2
    %v6589 = vadd.f32 %v6587, %v6588
    %v6590 = vrot.slane %v6589, 1
    %v6591 = vadd.f32 %v6589, %v6590
    %v6592 = vmul.f32 %v6591, 0.16666667
    %v6593 = vsel %vm6584, %v6583, 0.0
    %v6594 = vrot.slane %v6593, 4
    %v6595 = vadd.f32 %v6593, %v6594
    %v6596 = vrot.slane %v6595, 2
    %v6597 = vadd.f32 %v6595, %v6596
    %v6598 = vrot.slane %v6597, 1
    %v6599 = vadd.f32 %v6597, %v6598
    %v6600 = vmul.f32 %v6599, 0.16666667
    %vm6601 = vcmask 1040384
    %v6602 = vsel %vm6601, %v6592, %v6600
    %vm6603 = vcmask 1024
    %6604 = vst.msk [vmem:[%s21] sm:$0x3] %vm6603, %v6602
    // Predicated region
    $region88: #{tpu_custom_call.1} parent=1 // pred_check
      _
    $region89: #{tpu_custom_call.1} parent=1 // pred_check_branch
      %6606 = sbr.rel (0) target = $region91
    $region90: #{tpu_custom_call.1} parent=1 // pred_region
      _
    $region91: #{tpu_custom_call.1} parent=1 // pred_fallthru
      _
    // Predicated region
    $region92: #{tpu_custom_call.1} parent=1 // pred_check
      _
    $region93: #{tpu_custom_call.1} parent=1 // pred_check_branch
      %6608 = sbr.rel (0) target = $region95
    $region94: #{tpu_custom_call.1} parent=1 // pred_region
      _
    $region95: #{tpu_custom_call.1} parent=1 // pred_fallthru
      _
    %6609 = vsyncpa [#allocation6], 1
    %6610 = vsyncpa [#allocation8], 1
    %6611 = vsyncpa [#allocation11], 1
  %6612 = vsyncmov [#allocation3]
  %s6613 = vpop.sfrf %6612
  %p6614 = scmp.eq.s32.totalorder %s6613, 0
  %p6615 = pneg %p6614
  %6617 = shalt.err (%p6615)
  %s6618 = scalar_lea.sflag [#allocation3], 1
  %6619 = vsyncmov %s6618
  %s6620 = vpop.sfrf %6619
  %p6621 = scmp.eq.s32.totalorder %s6620, 0
  %p6622 = pneg %p6621
  %6624 = shalt.err (%p6622)
  %6625 = vsyncmov [#allocation4]
  %s6626 = vpop.sfrf %6625
  %p6627 = scmp.eq.s32.totalorder %s6626, 0
  %p6628 = pneg %p6627
  %6630 = shalt.err (%p6628)
  %s6631 = scalar_lea.sflag [#allocation4], 1
  %6632 = vsyncmov %s6631
  %s6633 = vpop.sfrf %6632
  %p6634 = scmp.eq.s32.totalorder %s6633, 0
  %p6635 = pneg %p6634
  %6637 = shalt.err (%p6635)
  %s6638 = scalar_lea.sflag [#allocation4], 2
  %6639 = vsyncmov %s6638
  %s6640 = vpop.sfrf %6639
  %p6641 = scmp.eq.s32.totalorder %s6640, 0
  %p6642 = pneg %p6641
  %6644 = shalt.err (%p6642)
  %s6645 = scalar_lea.sflag [#allocation4], 3
  %6646 = vsyncmov %s6645
  %s6647 = vpop.sfrf %6646
  %p6648 = scmp.eq.s32.totalorder %s6647, 0
  %p6649 = pneg %p6648
  %6651 = shalt.err (%p6649)

</llo_original>
